<compile_context>
chip_gen: v7x
topology: tpu7x:2x2x1
jax: 0.10.0
libtpu: 0.0.40
codegen_flags: <defaults>
</compile_context>

<pallas_src>
import math

import numpy as np
import jax
import jax.numpy as jnp
from jax.experimental import pallas as pl
from jax.experimental.pallas import tpu as pltpu

EPS = 1e-5                      # torch.nn.InstanceNorm2d default
ACT_DTYPE = jnp.bfloat16        # inter-block activation storage dtype (deep levels)

_TAPS = tuple((dy, dx) for dy in (-1, 0, 1) for dx in (-1, 0, 1))


# ----------------------------------------------------------------------------
# Hardware-aware configuration
# ----------------------------------------------------------------------------
_VMEM_LIMIT = None


def _vmem_limit_bytes():
    """Generation-aware scoped-VMEM budget (~100 MiB v5e/v6e, ~50 MiB v7x)."""
    global _VMEM_LIMIT
    if _VMEM_LIMIT is None:
        try:
            cap = int(pltpu.get_tpu_info().vmem_capacity_bytes)
        except Exception:
            cap = 0
        if cap <= 0:
            cap = 64 * 1024 * 1024          # conservative fallback (v7x per-TC)
        _VMEM_LIMIT = min(int(cap * 0.78), 110 * 1024 * 1024)
    return _VMEM_LIMIT


# 0: concat-of-slices fallback; +1: pltpu.roll matches jnp.roll; -1: opposite.
_ROLL_MODE = 0


def probe_roll_mode():
    """Detect pltpu.roll availability/sign on this backend (run eagerly, NOT under jit)."""
    global _ROLL_MODE
    try:
        def _probe(x_ref, o_ref):
            o_ref[...] = pltpu.roll(x_ref[...], 17, axis=1)

        x = jnp.arange(2 * 384, dtype=jnp.float32).reshape(2, 384).astype(jnp.bfloat16)
        y = np.asarray(pl.pallas_call(
            _probe, out_shape=jax.ShapeDtypeStruct((2, 384), jnp.bfloat16))(x))
        if np.array_equal(y, np.asarray(jnp.roll(x, 17, axis=1))):
            _ROLL_MODE = 1
        elif np.array_equal(y, np.asarray(jnp.roll(x, -17, axis=1))):
            _ROLL_MODE = -1
        else:
            _ROLL_MODE = 0
    except Exception:
        _ROLL_MODE = 0
    return _ROLL_MODE


def _storage_dtype(cout):
    # Cout >= 16 fills a native bf16 (16,128) tile; below that, f32's exact
    # (8,128) tile keeps stores unmasked (shallow levels have the largest H*W).
    return ACT_DTYPE if cout >= 16 else jnp.float32


# ----------------------------------------------------------------------------
# Host-precomputed per-tap boundary masks (implements the 3x3 conv zero-pad)
# ----------------------------------------------------------------------------
_MASK_CACHE = {}


def _tap_masks(H, W):
    """(9, H*W) bf16 validity mask per 3x3 tap; constant per (H, W)."""
    key = (H, W)
    if key not in _MASK_CACHE:
        yy, xx = np.divmod(np.arange(H * W), W)
        rows = []
        for dy, dx in _TAPS:
            v = np.ones(H * W, np.float32)
            if dy == -1:
                v *= (yy >= 1)
            if dy == 1:
                v *= (yy <= H - 2)
            if dx == -1:
                v *= (xx >= 1)
            if dx == 1:
                v *= (xx <= W - 2)
            rows.append(v)
        _MASK_CACHE[key] = jnp.asarray(np.stack(rows, 0), dtype=jnp.bfloat16)
    return _MASK_CACHE[key]


# ----------------------------------------------------------------------------
# Fused conv-block kernel: (conv3x3 -> InstanceNorm -> ReLU -> Dropout(0)) x 2
# ----------------------------------------------------------------------------
def _make_block_kernel(H, W, cins, cout, roll_mode):
    HW = H * W
    n_in = len(cins)
    inv_hw = 1.0 / float(HW)

    def shift_lanes(x, s):
        # y[..., i] = x[..., (i + s) % HW]; wrapped lanes are zeroed by the tap mask.
        s = s % HW
        if s == 0:
            return x
        if roll_mode == 1:        # pltpu.roll follows jnp.roll semantics
            return pltpu.roll(x, HW - s, axis=1)
        if roll_mode == -1:       # opposite sign convention
            return pltpu.roll(x, s, axis=1)
        # Known-good fallback: concat of two lane slices.
        return jnp.concatenate([x[:, s:], x[:, :s]], axis=1)

    def tap_pieces(x, mask_ref):
        # x: (C, HW) bf16 -> list of 9 shifted+masked (C, HW) bf16 pieces,
        # tap-major order matching the packed weight columns.
        pieces = []
        for k, (dy, dx) in enumerate(_TAPS):
            t = shift_lanes(x, dy * W + dx)
            if (dy, dx) != (0, 0):
                t = t * mask_ref[pl.ds(k, 1), :]
            pieces.append(t)
        return pieces

    def instance_norm_relu(a):
        # Single-pass stats: sum & sum-of-squares in f32, biased variance.
        s1 = jnp.sum(a, axis=1, keepdims=True)
        s2 = jnp.sum(a * a, axis=1, keepdims=True)
        mu = s1 * inv_hw
        var = jnp.maximum(s2 * inv_hw - mu * mu, 0.0)
        scale = jax.lax.rsqrt(var + EPS)          # EUP slot
        shift = -mu * scale
        return jnp.maximum(a * scale + shift, 0.0)

    def kernel(*refs):
        mask_ref = refs[0]
        x_refs = refs[1:1 + n_in]
        w1_ref = refs[1 + n_in]
        w2_ref = refs[2 + n_in]
        o_ref = refs[3 + n_in]

        # conv1: skip-concat fused via part ordering; ONE matmul, K = 9*sum(Cin).
        pieces = []
        for r in x_refs:
            pieces.extend(tap_pieces(r[0].astype(jnp.bfloat16), mask_ref))
        op1 = pieces[0] if len(pieces) == 1 else jnp.concatenate(pieces, axis=0)
        h = instance_norm_relu(
            jnp.dot(w1_ref[...], op1, preferred_element_type=jnp.float32))

        # Dropout2d(drop_prob=0.0) is the identity.

        # conv2: ONE matmul, K = 9*Cout.
        pieces2 = tap_pieces(h.astype(jnp.bfloat16), mask_ref)
        op2 = jnp.concatenate(pieces2, axis=0)
        h2 = instance_norm_relu(
            jnp.dot(w2_ref[...], op2, preferred_element_type=jnp.float32))
        o_ref[0] = h2.astype(o_ref.dtype)

    return kernel


def _prep_w3x3_stacked(w):
    """(Cout, Cin, 3, 3) torch layout -> (Cout, 9*Cin) bf16, columns (tap, cin)."""
    cout, cin = w.shape[0], w.shape[1]
    return jnp.transpose(w, (0, 2, 3, 1)).reshape(cout, 9 * cin).astype(jnp.bfloat16)


def conv_block(xs, p):
    """xs: list of (N, Ci, H, W); returns (N, Cout, H, W)."""
    N, _, H, W = xs[0].shape
    HW = H * W
    w1_full, w2 = p["w1"], p["w2"]
    cout = int(w1_full.shape[0])
    cins = [int(a.shape[1]) for a in xs]
    cin_total = sum(cins)
    out_dtype = _storage_dtype(cout)

    # Pack conv weights tap-major along the contraction axis; split conv1 along
    # Cin so the up-path skip concat never materializes in HBM.
    parts, off = [], 0
    for c in cins:
        parts.append(_prep_w3x3_stacked(w1_full[:, off:off + c]))
        off += c
    w1_packed = parts[0] if len(parts) == 1 else jnp.concatenate(parts, axis=1)
    w2_packed = _prep_w3x3_stacked(w2)

    masks = _tap_masks(H, W)
    x_flat = [a.reshape(N, c, HW) for a, c in zip(xs, cins)]

    in_specs = (
        [pl.BlockSpec((9, HW), lambda n: (0, 0))]                      # tap masks
        + [pl.BlockSpec((1, c, HW), lambda n: (n, 0, 0)) for c in cins]
        + [pl.BlockSpec((cout, 9 * cin_total), lambda n: (0, 0)),      # w1 packed
           pl.BlockSpec((cout, 9 * cout), lambda n: (0, 0))]           # w2 packed
    )

    out = pl.pallas_call(
        _make_block_kernel(H, W, cins, cout, _ROLL_MODE),
        out_shape=jax.ShapeDtypeStruct((N, cout, HW), out_dtype),
        grid_spec=pltpu.PrefetchScalarGridSpec(
            num_scalar_prefetch=0,
            grid=(N,),
            in_specs=in_specs,
            out_specs=pl.BlockSpec((1, cout, HW), lambda n: (n, 0, 0)),
        ),
        compiler_params=pltpu.CompilerParams(
            dimension_semantics=("parallel",),
            vmem_limit_bytes=_vmem_limit_bytes(),
        ),
    )(masks, *x_flat, w1_packed, w2_packed)
    return out.reshape(N, cout, H, W)


# ----------------------------------------------------------------------------
# Fused 1x1-conv chain kernel (the model's final nn.Sequential of 3 Conv2d(k=1))
# ----------------------------------------------------------------------------
def _c1x1_chain_kernel(x_ref, w1_ref, b1_ref, w2_ref, b2_ref, w3_ref, b3_ref,
                       o_ref):
    x = x_ref[0].astype(jnp.bfloat16)
    y = jnp.dot(w1_ref[...], x, preferred_element_type=jnp.float32) + b1_ref[...]
    y = jnp.dot(w2_ref[...], y.astype(jnp.bfloat16),
                preferred_element_type=jnp.float32) + b2_ref[...]
    y = jnp.dot(w3_ref[...], y.astype(jnp.bfloat16),
                preferred_element_type=jnp.float32) + b3_ref[...]
    o_ref[0] = y.astype(o_ref.dtype)


def _lane_tile(HW, cap=8192):
    """Largest power-of-two lane tile <= cap that divides HW (else full HW)."""
    if HW <= cap:
        return HW
    t = cap
    while t >= 128:
        if HW % t == 0:
            return t
        t //= 2
    return HW


def conv1x1_chain(x, final_params):
    N, C, H, W = x.shape
    HW = H * W
    (w1, b1), (w2, b2), (w3, b3) = final_params
    c1, c2, c3 = int(w1.shape[0]), int(w2.shape[0]), int(w3.shape[0])
    x_flat = x.reshape(N, C, HW)

    thw = _lane_tile(HW)
    grid = (N, HW // thw)

    out = pl.pallas_call(
        _c1x1_chain_kernel,
        out_shape=jax.ShapeDtypeStruct((N, c3, HW), jnp.float32),
        grid_spec=pltpu.PrefetchScalarGridSpec(
            num_scalar_prefetch=0,
            grid=grid,
            in_specs=[
                pl.BlockSpec((1, C, thw), lambda n, t: (n, 0, t)),
                pl.BlockSpec((c1, C), lambda n, t: (0, 0)),
                pl.BlockSpec((c1, 1), lambda n, t: (0, 0)),
                pl.BlockSpec((c2, c1), lambda n, t: (0, 0)),
                pl.BlockSpec((c2, 1), lambda n, t: (0, 0)),
                pl.BlockSpec((c3, c2), lambda n, t: (0, 0)),
                pl.BlockSpec((c3, 1), lambda n, t: (0, 0)),
            ],
            out_specs=pl.BlockSpec((1, c3, thw), lambda n, t: (n, 0, t)),
        ),
        compiler_params=pltpu.CompilerParams(
            dimension_semantics=("parallel", "parallel"),
            vmem_limit_bytes=_vmem_limit_bytes(),
        ),
    )(x_flat,
      w1.astype(jnp.bfloat16), b1.reshape(c1, 1).astype(jnp.float32),
      w2.astype(jnp.bfloat16), b2.reshape(c2, 1).astype(jnp.float32),
      w3.astype(jnp.bfloat16), b3.reshape(c3, 1).astype(jnp.float32))
    return out.reshape(N, c3, H, W)


# ----------------------------------------------------------------------------
# Plain-JAX glue (data movement only)
# ----------------------------------------------------------------------------
def max_pool2x2(x):  # (N, C, H, W)
    N, C, H, W = x.shape
    assert H % 2 == 0 and W % 2 == 0, "max_pool2x2 expects even spatial dims"
    return x.reshape(N, C, H // 2, 2, W // 2, 2).max(axis=(3, 5))


def upsample_x2(x):
    # Matches F.interpolate(scale_factor=2, mode='bilinear', align_corners=False)
    N, C, H, W = x.shape
    return jax.image.resize(x, (N, C, 2 * H, 2 * W), method="bilinear")


# ----------------------------------------------------------------------------
# Parameter initialization (deterministic, PyTorch-like default init)
# ----------------------------------------------------------------------------
def _uniform(key, shape, bound):
    return jax.random.uniform(key, shape, jnp.float32, -bound, bound)


def _block_params(key, cin, cout):
    k1, k2 = jax.random.split(key)
    b1 = 1.0 / math.sqrt(cin * 9)
    b2 = 1.0 / math.sqrt(cout * 9)
    # NOTE: Conv2d bias before InstanceNorm2d(affine=False) is exactly
    # cancelled by the mean subtraction, so 3x3-conv biases are omitted.
    return {"w1": _uniform(k1, (cout, cin, 3, 3), b1),
            "w2": _uniform(k2, (cout, cout, 3, 3), b2)}


def _conv1x1_params(key, cin, cout):
    kw, kb = jax.random.split(key)
    bound = 1.0 / math.sqrt(cin)
    return _uniform(kw, (cout, cin), bound), _uniform(kb, (cout,), bound)


def init_unet_params(key, in_chans, out_chans, chans, num_pool_layers):
    keys = iter(jax.random.split(key, 2 * num_pool_layers + 4))
    params = {"down": [], "up": []}
    params["down"].append(_block_params(next(keys), in_chans, chans))
    ch = chans
    for _ in range(num_pool_layers - 1):
        params["down"].append(_block_params(next(keys), ch, ch * 2))
        ch *= 2
    params["conv"] = _block_params(next(keys), ch, ch)
    for _ in range(num_pool_layers - 1):
        params["up"].append(_block_params(next(keys), ch * 2, ch // 2))
        ch //= 2
    params["up"].append(_block_params(next(keys), ch * 2, ch))
    params["final"] = [
        _conv1x1_params(next(keys), ch, ch // 2),
        _conv1x1_params(next(keys), ch // 2, out_chans),
        _conv1x1_params(next(keys), out_chans, out_chans),
    ]
    return params


# ----------------------------------------------------------------------------
# UNet forward (Pallas path)
# ----------------------------------------------------------------------------
def unet_forward(params, x):  # x: (N, in_chans, H, W) f32, NCHW
    stack = []
    out = x
    for p in params["down"]:
        out = conv_block([out], p)
        stack.append(out)
        out = max_pool2x2(out)
    out = conv_block([out], params["conv"])
    for p in params["up"]:
        out = upsample_x2(out)
        out = conv_block([out, stack.pop()], p)  # concat fused via weight split
    return conv1x1_chain(out, params["final"])


# ----------------------------------------------------------------------------
# Pure-JAX reference (mirrors the kernel's bf16 rounding points) for checking
# ----------------------------------------------------------------------------
def _bf(x):
    return x.astype(jnp.bfloat16).astype(jnp.float32)


def _ref_conv3x3(x, w):
    return jax.lax.conv_general_dilated(
        x, w, window_strides=(1, 1), padding=((1, 1), (1, 1)),
        dimension_numbers=("NCHW", "OIHW", "NCHW"),
        precision=jax.lax.Precision.HIGHEST)


def _ref_in_relu(a):
    m = jnp.mean(a, axis=(2, 3), keepdims=True)
    v = jnp.mean((a - m) ** 2, axis=(2, 3), keepdims=True)
    return jnp.maximum((a - m) * jax.lax.rsqrt(v + EPS), 0.0)


def _ref_block(xs, p):
    cout = int(p["w1"].shape[0])
    x = jnp.concatenate([_bf(a.astype(jnp.float32)) for a in xs], axis=1)
    h = _ref_in_relu(_ref_conv3x3(x, _bf(p["w1"])))
    h = _ref_in_relu(_ref_conv3x3(_bf(h), _bf(p["w2"])))
    return h.astype(_storage_dtype(cout))


def unet_reference(params, x):
    stack = []
    out = x
    for p in params["down"]:
        out = _ref_block([out], p)
        stack.append(out)
        out = max_pool2x2(out)
    out = _ref_block([out], params["conv"])
    for p in params["up"]:
        out = upsample_x2(out)
        out = _ref_block([out, stack.pop()], p)
    y = out.astype(jnp.float32)
    for w, b in params["final"]:
        y = jnp.einsum("oc,nchw->nohw", _bf(w), _bf(y),
                       precision=jax.lax.Precision.HIGHEST)
        y = y + b[None, :, None, None]
    return y


# ----------------------------------------------------------------------------
if __name__ == "__main__":
    probe_roll_mode()   # pick pltpu.roll (with detected sign) vs concat fallback

    key = jax.random.PRNGKey(0)
    kp, kx = jax.random.split(key)

    in_chans, out_chans, chans, num_pool_layers, drop_prob = 2, 2, 8, 3, 0.0
    params = init_unet_params(kp, in_chans, out_chans, chans, num_pool_layers)
    x = jax.random.normal(kx, (2, in_chans, 16, 16), jnp.float32)

    y = jax.block_until_ready(jax.jit(unet_forward)(params, x))
    assert y.shape == (2, out_chans, 16, 16), y.shape
    assert bool(jnp.all(jnp.isfinite(y)))

    # Cross-check against a pure-JAX reference with matching bf16 rounding.
    y_ref = jax.block_until_ready(jax.jit(unet_reference)(params, x))
    max_err = float(jnp.max(jnp.abs(y - y_ref)))
    assert bool(jnp.allclose(y, y_ref, atol=3e-2, rtol=3e-2)), max_err

    print("KERNEL_OK")
</pallas_src>

<mosaic_0001>
module attributes {stable_mosaic.version = 11 : i64} {
  func.func @_probe(%arg0: memref<2x384xbf16, #tpu.memory_space<vmem>>, %arg1: memref<2x384xbf16, #tpu.memory_space<vmem>>) attributes {dimension_semantics = [], scalar_prefetch = 0 : i64, scratch_operands = 0 : i64, tpu.core_type = #tpu.core_type<tc>} {
    %c0 = arith.constant 0 : index
    %c0_0 = arith.constant 0 : index
    %0 = vector.load %arg0[%c0, %c0_0] : memref<2x384xbf16, #tpu.memory_space<vmem>>, vector<2x384xbf16>
    %c17_i32 = arith.constant 17 : i32
    %1 = tpu.dynamic_rotate %0 by %c17_i32 dim 1 : vector<2x384xbf16>, i32 -> vector<2x384xbf16>
    %c0_1 = arith.constant 0 : index
    %c0_2 = arith.constant 0 : index
    %2 = vector.load %arg1[%c0_1, %c0_2] : memref<2x384xbf16, #tpu.memory_space<vmem>>, vector<2x384xbf16>
    tpu.vector_store %arg1[%c0_1, %c0_2], %1 {strides = array<i32>} : memref<2x384xbf16, #tpu.memory_space<vmem>>, vector<2x384xbf16>,
    return
  }
}

module attributes {stable_mosaic.version = 11 : i64} {
  func.func @kernel(%arg0: i32, %arg1: memref<9x256xbf16, #tpu.memory_space<vmem>>, %arg2: memref<1x2x256xf32, #tpu.memory_space<vmem>>, %arg3: memref<8x18xbf16, #tpu.memory_space<vmem>>, %arg4: memref<8x72xbf16, #tpu.memory_space<vmem>>, %arg5: memref<1x8x256xf32, #tpu.memory_space<vmem>>) attributes {dimension_semantics = [#tpu.dimension_semantics<parallel>], iteration_bounds = array<i64: 2>, scalar_prefetch = 0 : i64, scratch_operands = 0 : i64, tpu.core_type = #tpu.core_type<tc>, window_params = [{pipeline_mode = #tpu.pipeline_mode<synchronous>, transform_indices = @transform_0, window_bounds = array<i64: 9, 256>}, {transform_indices = @transform_1, window_bounds = array<i64: 1, 2, 256>}, {pipeline_mode = #tpu.pipeline_mode<synchronous>, transform_indices = @transform_2, window_bounds = array<i64: 8, 18>}, {pipeline_mode = #tpu.pipeline_mode<synchronous>, transform_indices = @transform_3, window_bounds = array<i64: 8, 72>}, {transform_indices = @transform_4, window_bounds = array<i64: 1, 8, 256>}]} {
    %c0 = arith.constant 0 : index
    %c0_0 = arith.constant 0 : index
    %c0_1 = arith.constant 0 : index
    %0 = vector.load %arg2[%c0, %c0_0, %c0_1] : memref<1x2x256xf32, #tpu.memory_space<vmem>>, vector<1x2x256xf32>
    %1 = vector.shape_cast %0 : vector<1x2x256xf32> to vector<2x256xf32>
    %2 = arith.truncf %1 : vector<2x256xf32> to vector<2x256xbf16>
    %3 = vector.extract_strided_slice %2 {offsets = [0, 239], sizes = [2, 17], strides = [1, 1]} : vector<2x256xbf16> to vector<2x17xbf16>
    %4 = vector.extract_strided_slice %2 {offsets = [0, 0], sizes = [2, 239], strides = [1, 1]} : vector<2x256xbf16> to vector<2x239xbf16>
    %5 = tpu.concatenate %3, %4 in 1 : vector<2x17xbf16>, vector<2x239xbf16> -> vector<2x256xbf16>
    %c0_2 = arith.constant 0 : index
    %c0_3 = arith.constant 0 : index
    %6 = vector.load %arg1[%c0_2, %c0_3] : memref<9x256xbf16, #tpu.memory_space<vmem>>, vector<1x256xbf16>
    %7 = vector.broadcast %6 : vector<1x256xbf16> to vector<2x256xbf16>
    %8 = arith.mulf %5, %7 : vector<2x256xbf16>
    %9 = vector.extract_strided_slice %2 {offsets = [0, 240], sizes = [2, 16], strides = [1, 1]} : vector<2x256xbf16> to vector<2x16xbf16>
    %10 = vector.extract_strided_slice %2 {offsets = [0, 0], sizes = [2, 240], strides = [1, 1]} : vector<2x256xbf16> to vector<2x240xbf16>
    %11 = tpu.concatenate %9, %10 in 1 : vector<2x16xbf16>, vector<2x240xbf16> -> vector<2x256xbf16>
    %c1 = arith.constant 1 : index
    %c0_4 = arith.constant 0 : index
    %12 = vector.load %arg1[%c1, %c0_4] : memref<9x256xbf16, #tpu.memory_space<vmem>>, vector<1x256xbf16>
    %13 = vector.broadcast %12 : vector<1x256xbf16> to vector<2x256xbf16>
    %14 = arith.mulf %11, %13 : vector<2x256xbf16>
    %15 = vector.extract_strided_slice %2 {offsets = [0, 241], sizes = [2, 15], strides = [1, 1]} : vector<2x256xbf16> to vector<2x15xbf16>
    %16 = vector.extract_strided_slice %2 {offsets = [0, 0], sizes = [2, 241], strides = [1, 1]} : vector<2x256xbf16> to vector<2x241xbf16>
    %17 = tpu.concatenate %15, %16 in 1 : vector<2x15xbf16>, vector<2x241xbf16> -> vector<2x256xbf16>
    %c2 = arith.constant 2 : index
    %c0_5 = arith.constant 0 : index
    %18 = vector.load %arg1[%c2, %c0_5] : memref<9x256xbf16, #tpu.memory_space<vmem>>, vector<1x256xbf16>
    %19 = vector.broadcast %18 : vector<1x256xbf16> to vector<2x256xbf16>
    %20 = arith.mulf %17, %19 : vector<2x256xbf16>
    %21 = vector.extract_strided_slice %2 {offsets = [0, 255], sizes = [2, 1], strides = [1, 1]} : vector<2x256xbf16> to vector<2x1xbf16>
    %22 = vector.extract_strided_slice %2 {offsets = [0, 0], sizes = [2, 255], strides = [1, 1]} : vector<2x256xbf16> to vector<2x255xbf16>
    %23 = tpu.concatenate %21, %22 in 1 : vector<2x1xbf16>, vector<2x255xbf16> -> vector<2x256xbf16>
    %c3 = arith.constant 3 : index
    %c0_6 = arith.constant 0 : index
    %24 = vector.load %arg1[%c3, %c0_6] : memref<9x256xbf16, #tpu.memory_space<vmem>>, vector<1x256xbf16>
    %25 = vector.broadcast %24 : vector<1x256xbf16> to vector<2x256xbf16>
    %26 = arith.mulf %23, %25 : vector<2x256xbf16>
    %27 = vector.extract_strided_slice %2 {offsets = [0, 1], sizes = [2, 255], strides = [1, 1]} : vector<2x256xbf16> to vector<2x255xbf16>
    %28 = vector.extract_strided_slice %2 {offsets = [0, 0], sizes = [2, 1], strides = [1, 1]} : vector<2x256xbf16> to vector<2x1xbf16>
    %29 = tpu.concatenate %27, %28 in 1 : vector<2x255xbf16>, vector<2x1xbf16> -> vector<2x256xbf16>
    %c5 = arith.constant 5 : index
    %c0_7 = arith.constant 0 : index
    %30 = vector.load %arg1[%c5, %c0_7] : memref<9x256xbf16, #tpu.memory_space<vmem>>, vector<1x256xbf16>
    %31 = vector.broadcast %30 : vector<1x256xbf16> to vector<2x256xbf16>
    %32 = arith.mulf %29, %31 : vector<2x256xbf16>
    %33 = vector.extract_strided_slice %2 {offsets = [0, 15], sizes = [2, 241], strides = [1, 1]} : vector<2x256xbf16> to vector<2x241xbf16>
    %34 = vector.extract_strided_slice %2 {offsets = [0, 0], sizes = [2, 15], strides = [1, 1]} : vector<2x256xbf16> to vector<2x15xbf16>
    %35 = tpu.concatenate %33, %34 in 1 : vector<2x241xbf16>, vector<2x15xbf16> -> vector<2x256xbf16>
    %c6 = arith.constant 6 : index
    %c0_8 = arith.constant 0 : index
    %36 = vector.load %arg1[%c6, %c0_8] : memref<9x256xbf16, #tpu.memory_space<vmem>>, vector<1x256xbf16>
    %37 = vector.broadcast %36 : vector<1x256xbf16> to vector<2x256xbf16>
    %38 = arith.mulf %35, %37 : vector<2x256xbf16>
    %39 = vector.extract_strided_slice %2 {offsets = [0, 16], sizes = [2, 240], strides = [1, 1]} : vector<2x256xbf16> to vector<2x240xbf16>
    %40 = vector.extract_strided_slice %2 {offsets = [0, 0], sizes = [2, 16], strides = [1, 1]} : vector<2x256xbf16> to vector<2x16xbf16>
    %41 = tpu.concatenate %39, %40 in 1 : vector<2x240xbf16>, vector<2x16xbf16> -> vector<2x256xbf16>
    %c7 = arith.constant 7 : index
    %c0_9 = arith.constant 0 : index
    %42 = vector.load %arg1[%c7, %c0_9] : memref<9x256xbf16, #tpu.memory_space<vmem>>, vector<1x256xbf16>
    %43 = vector.broadcast %42 : vector<1x256xbf16> to vector<2x256xbf16>
    %44 = arith.mulf %41, %43 : vector<2x256xbf16>
    %45 = vector.extract_strided_slice %2 {offsets = [0, 17], sizes = [2, 239], strides = [1, 1]} : vector<2x256xbf16> to vector<2x239xbf16>
    %46 = vector.extract_strided_slice %2 {offsets = [0, 0], sizes = [2, 17], strides = [1, 1]} : vector<2x256xbf16> to vector<2x17xbf16>
    %47 = tpu.concatenate %45, %46 in 1 : vector<2x239xbf16>, vector<2x17xbf16> -> vector<2x256xbf16>
    %c8 = arith.constant 8 : index
    %c0_10 = arith.constant 0 : index
    %48 = vector.load %arg1[%c8, %c0_10] : memref<9x256xbf16, #tpu.memory_space<vmem>>, vector<1x256xbf16>
    %49 = vector.broadcast %48 : vector<1x256xbf16> to vector<2x256xbf16>
    %50 = arith.mulf %47, %49 : vector<2x256xbf16>
    %51 = tpu.concatenate %8, %14, %20, %26, %2, %32, %38, %44, %50 in 0 : vector<2x256xbf16>, vector<2x256xbf16>, vector<2x256xbf16>, vector<2x256xbf16>, vector<2x256xbf16>, vector<2x256xbf16>, vector<2x256xbf16>, vector<2x256xbf16>, vector<2x256xbf16> -> vector<18x256xbf16>
    %c0_11 = arith.constant 0 : index
    %c0_12 = arith.constant 0 : index
    %52 = vector.load %arg3[%c0_11, %c0_12] : memref<8x18xbf16, #tpu.memory_space<vmem>>, vector<8x18xbf16>
    %cst = arith.constant dense<0.000000e+00> : vector<8x256xf32>
    %53 = tpu.matmul %52, %51, %cst {dimension_numbers = #tpu.dot_dimension_numbers<[1], [0], [0], [1], [0, 0, 1, 1], [], []>} : vector<8x18xbf16>, vector<18x256xbf16>, vector<8x256xf32> -> vector<8x256xf32>
    %cst_13 = arith.constant dense<0.000000e+00> : vector<8xf32>
    %54 = vector.multi_reduction <add>, %53, %cst_13 [1] : vector<8x256xf32> to vector<8xf32>
    %55 = vector.shape_cast %54 : vector<8xf32> to vector<8x1xf32>
    %56 = arith.mulf %53, %53 : vector<8x256xf32>
    %cst_14 = arith.constant dense<0.000000e+00> : vector<8xf32>
    %57 = vector.multi_reduction <add>, %56, %cst_14 [1] : vector<8x256xf32> to vector<8xf32>
    %58 = vector.shape_cast %57 : vector<8xf32> to vector<8x1xf32>
    %cst_15 = arith.constant 3.906250e-03 : f32
    %59 = vector.broadcast %cst_15 : f32 to vector<8x1xf32>
    %60 = arith.mulf %55, %59 : vector<8x1xf32>
    %cst_16 = arith.constant 3.906250e-03 : f32
    %61 = vector.broadcast %cst_16 : f32 to vector<8x1xf32>
    %62 = arith.mulf %58, %61 : vector<8x1xf32>
    %63 = arith.mulf %60, %60 : vector<8x1xf32>
    %64 = arith.subf %62, %63 : vector<8x1xf32>
    %cst_17 = arith.constant 0.000000e+00 : f32
    %65 = vector.broadcast %cst_17 : f32 to vector<8x1xf32>
    %66 = arith.maximumf %64, %65 : vector<8x1xf32>
    %cst_18 = arith.constant 9.99999974E-6 : f32
    %67 = vector.broadcast %cst_18 : f32 to vector<8x1xf32>
    %68 = arith.addf %66, %67 : vector<8x1xf32>
    %69 = math.rsqrt %68 : vector<8x1xf32>
    %cst_19 = arith.constant 0.000000e+00 : f32
    %70 = vector.broadcast %cst_19 : f32 to vector<8x1xf32>
    %71 = arith.subf %70, %60 : vector<8x1xf32>
    %72 = arith.mulf %71, %69 : vector<8x1xf32>
    %73 = vector.broadcast %69 : vector<8x1xf32> to vector<8x256xf32>
    %74 = arith.mulf %53, %73 : vector<8x256xf32>
    %75 = vector.broadcast %72 : vector<8x1xf32> to vector<8x256xf32>
    %76 = arith.addf %74, %75 : vector<8x256xf32>
    %cst_20 = arith.constant 0.000000e+00 : f32
    %77 = vector.broadcast %cst_20 : f32 to vector<8x256xf32>
    %78 = arith.maximumf %76, %77 : vector<8x256xf32>
    %79 = arith.truncf %78 : vector<8x256xf32> to vector<8x256xbf16>
    %80 = vector.extract_strided_slice %79 {offsets = [0, 239], sizes = [8, 17], strides = [1, 1]} : vector<8x256xbf16> to vector<8x17xbf16>
    %81 = vector.extract_strided_slice %79 {offsets = [0, 0], sizes = [8, 239], strides = [1, 1]} : vector<8x256xbf16> to vector<8x239xbf16>
    %82 = tpu.concatenate %80, %81 in 1 : vector<8x17xbf16>, vector<8x239xbf16> -> vector<8x256xbf16>
    %c0_21 = arith.constant 0 : index
    %c0_22 = arith.constant 0 : index
    %83 = vector.load %arg1[%c0_21, %c0_22] : memref<9x256xbf16, #tpu.memory_space<vmem>>, vector<1x256xbf16>
    %84 = vector.broadcast %83 : vector<1x256xbf16> to vector<8x256xbf16>
    %85 = arith.mulf %82, %84 : vector<8x256xbf16>
    %86 = vector.extract_strided_slice %79 {offsets = [0, 240], sizes = [8, 16], strides = [1, 1]} : vector<8x256xbf16> to vector<8x16xbf16>
    %87 = vector.extract_strided_slice %79 {offsets = [0, 0], sizes = [8, 240], strides = [1, 1]} : vector<8x256xbf16> to vector<8x240xbf16>
    %88 = tpu.concatenate %86, %87 in 1 : vector<8x16xbf16>, vector<8x240xbf16> -> vector<8x256xbf16>
    %c1_23 = arith.constant 1 : index
    %c0_24 = arith.constant 0 : index
    %89 = vector.load %arg1[%c1_23, %c0_24] : memref<9x256xbf16, #tpu.memory_space<vmem>>, vector<1x256xbf16>
    %90 = vector.broadcast %89 : vector<1x256xbf16> to vector<8x256xbf16>
    %91 = arith.mulf %88, %90 : vector<8x256xbf16>
    %92 = vector.extract_strided_slice %79 {offsets = [0, 241], sizes = [8, 15], strides = [1, 1]} : vector<8x256xbf16> to vector<8x15xbf16>
    %93 = vector.extract_strided_slice %79 {offsets = [0, 0], sizes = [8, 241], strides = [1, 1]} : vector<8x256xbf16> to vector<8x241xbf16>
    %94 = tpu.concatenate %92, %93 in 1 : vector<8x15xbf16>, vector<8x241xbf16> -> vector<8x256xbf16>
    %c2_25 = arith.constant 2 : index
    %c0_26 = arith.constant 0 : index
    %95 = vector.load %arg1[%c2_25, %c0_26] : memref<9x256xbf16, #tpu.memory_space<vmem>>, vector<1x256xbf16>
    %96 = vector.broadcast %95 : vector<1x256xbf16> to vector<8x256xbf16>
    %97 = arith.mulf %94, %96 : vector<8x256xbf16>
    %98 = vector.extract_strided_slice %79 {offsets = [0, 255], sizes = [8, 1], strides = [1, 1]} : vector<8x256xbf16> to vector<8x1xbf16>
    %99 = vector.extract_strided_slice %79 {offsets = [0, 0], sizes = [8, 255], strides = [1, 1]} : vector<8x256xbf16> to vector<8x255xbf16>
    %100 = tpu.concatenate %98, %99 in 1 : vector<8x1xbf16>, vector<8x255xbf16> -> vector<8x256xbf16>
    %c3_27 = arith.constant 3 : index
    %c0_28 = arith.constant 0 : index
    %101 = vector.load %arg1[%c3_27, %c0_28] : memref<9x256xbf16, #tpu.memory_space<vmem>>, vector<1x256xbf16>
    %102 = vector.broadcast %101 : vector<1x256xbf16> to vector<8x256xbf16>
    %103 = arith.mulf %100, %102 : vector<8x256xbf16>
    %104 = vector.extract_strided_slice %79 {offsets = [0, 1], sizes = [8, 255], strides = [1, 1]} : vector<8x256xbf16> to vector<8x255xbf16>
    %105 = vector.extract_strided_slice %79 {offsets = [0, 0], sizes = [8, 1], strides = [1, 1]} : vector<8x256xbf16> to vector<8x1xbf16>
    %106 = tpu.concatenate %104, %105 in 1 : vector<8x255xbf16>, vector<8x1xbf16> -> vector<8x256xbf16>
    %c5_29 = arith.constant 5 : index
    %c0_30 = arith.constant 0 : index
    %107 = vector.load %arg1[%c5_29, %c0_30] : memref<9x256xbf16, #tpu.memory_space<vmem>>, vector<1x256xbf16>
    %108 = vector.broadcast %107 : vector<1x256xbf16> to vector<8x256xbf16>
    %109 = arith.mulf %106, %108 : vector<8x256xbf16>
    %110 = vector.extract_strided_slice %79 {offsets = [0, 15], sizes = [8, 241], strides = [1, 1]} : vector<8x256xbf16> to vector<8x241xbf16>
    %111 = vector.extract_strided_slice %79 {offsets = [0, 0], sizes = [8, 15], strides = [1, 1]} : vector<8x256xbf16> to vector<8x15xbf16>
    %112 = tpu.concatenate %110, %111 in 1 : vector<8x241xbf16>, vector<8x15xbf16> -> vector<8x256xbf16>
    %c6_31 = arith.constant 6 : index
    %c0_32 = arith.constant 0 : index
    %113 = vector.load %arg1[%c6_31, %c0_32] : memref<9x256xbf16, #tpu.memory_space<vmem>>, vector<1x256xbf16>
    %114 = vector.broadcast %113 : vector<1x256xbf16> to vector<8x256xbf16>
    %115 = arith.mulf %112, %114 : vector<8x256xbf16>
    %116 = vector.extract_strided_slice %79 {offsets = [0, 16], sizes = [8, 240], strides = [1, 1]} : vector<8x256xbf16> to vector<8x240xbf16>
    %117 = vector.extract_strided_slice %79 {offsets = [0, 0], sizes = [8, 16], strides = [1, 1]} : vector<8x256xbf16> to vector<8x16xbf16>
    %118 = tpu.concatenate %116, %117 in 1 : vector<8x240xbf16>, vector<8x16xbf16> -> vector<8x256xbf16>
    %c7_33 = arith.constant 7 : index
    %c0_34 = arith.constant 0 : index
    %119 = vector.load %arg1[%c7_33, %c0_34] : memref<9x256xbf16, #tpu.memory_space<vmem>>, vector<1x256xbf16>
    %120 = vector.broadcast %119 : vector<1x256xbf16> to vector<8x256xbf16>
    %121 = arith.mulf %118, %120 : vector<8x256xbf16>
    %122 = vector.extract_strided_slice %79 {offsets = [0, 17], sizes = [8, 239], strides = [1, 1]} : vector<8x256xbf16> to vector<8x239xbf16>
    %123 = vector.extract_strided_slice %79 {offsets = [0, 0], sizes = [8, 17], strides = [1, 1]} : vector<8x256xbf16> to vector<8x17xbf16>
    %124 = tpu.concatenate %122, %123 in 1 : vector<8x239xbf16>, vector<8x17xbf16> -> vector<8x256xbf16>
    %c8_35 = arith.constant 8 : index
    %c0_36 = arith.constant 0 : index
    %125 = vector.load %arg1[%c8_35, %c0_36] : memref<9x256xbf16, #tpu.memory_space<vmem>>, vector<1x256xbf16>
    %126 = vector.broadcast %125 : vector<1x256xbf16> to vector<8x256xbf16>
    %127 = arith.mulf %124, %126 : vector<8x256xbf16>
    %128 = tpu.concatenate %85, %91, %97, %103, %79, %109, %115, %121, %127 in 0 : vector<8x256xbf16>, vector<8x256xbf16>, vector<8x256xbf16>, vector<8x256xbf16>, vector<8x256xbf16>, vector<8x256xbf16>, vector<8x256xbf16>, vector<8x256xbf16>, vector<8x256xbf16> -> vector<72x256xbf16>
    %c0_37 = arith.constant 0 : index
    %c0_38 = arith.constant 0 : index
    %129 = vector.load %arg4[%c0_37, %c0_38] : memref<8x72xbf16, #tpu.memory_space<vmem>>, vector<8x72xbf16>
    %cst_39 = arith.constant dense<0.000000e+00> : vector<8x256xf32>
    %130 = tpu.matmul %129, %128, %cst_39 {dimension_numbers = #tpu.dot_dimension_numbers<[1], [0], [0], [1], [0, 0, 1, 1], [], []>} : vector<8x72xbf16>, vector<72x256xbf16>, vector<8x256xf32> -> vector<8x256xf32>
    %cst_40 = arith.constant dense<0.000000e+00> : vector<8xf32>
    %131 = vector.multi_reduction <add>, %130, %cst_40 [1] : vector<8x256xf32> to vector<8xf32>
    %132 = vector.shape_cast %131 : vector<8xf32> to vector<8x1xf32>
    %133 = arith.mulf %130, %130 : vector<8x256xf32>
    %cst_41 = arith.constant dense<0.000000e+00> : vector<8xf32>
    %134 = vector.multi_reduction <add>, %133, %cst_41 [1] : vector<8x256xf32> to vector<8xf32>
    %135 = vector.shape_cast %134 : vector<8xf32> to vector<8x1xf32>
    %cst_42 = arith.constant 3.906250e-03 : f32
    %136 = vector.broadcast %cst_42 : f32 to vector<8x1xf32>
    %137 = arith.mulf %132, %136 : vector<8x1xf32>
    %cst_43 = arith.constant 3.906250e-03 : f32
    %138 = vector.broadcast %cst_43 : f32 to vector<8x1xf32>
    %139 = arith.mulf %135, %138 : vector<8x1xf32>
    %140 = arith.mulf %137, %137 : vector<8x1xf32>
    %141 = arith.subf %139, %140 : vector<8x1xf32>
    %cst_44 = arith.constant 0.000000e+00 : f32
    %142 = vector.broadcast %cst_44 : f32 to vector<8x1xf32>
    %143 = arith.maximumf %141, %142 : vector<8x1xf32>
    %cst_45 = arith.constant 9.99999974E-6 : f32
    %144 = vector.broadcast %cst_45 : f32 to vector<8x1xf32>
    %145 = arith.addf %143, %144 : vector<8x1xf32>
    %146 = math.rsqrt %145 : vector<8x1xf32>
    %cst_46 = arith.constant 0.000000e+00 : f32
    %147 = vector.broadcast %cst_46 : f32 to vector<8x1xf32>
    %148 = arith.subf %147, %137 : vector<8x1xf32>
    %149 = arith.mulf %148, %146 : vector<8x1xf32>
    %150 = vector.broadcast %146 : vector<8x1xf32> to vector<8x256xf32>
    %151 = arith.mulf %130, %150 : vector<8x256xf32>
    %152 = vector.broadcast %149 : vector<8x1xf32> to vector<8x256xf32>
    %153 = arith.addf %151, %152 : vector<8x256xf32>
    %cst_47 = arith.constant 0.000000e+00 : f32
    %154 = vector.broadcast %cst_47 : f32 to vector<8x256xf32>
    %155 = arith.maximumf %153, %154 : vector<8x256xf32>
    %c0_48 = arith.constant 0 : index
    %c0_49 = arith.constant 0 : index
    %c0_50 = arith.constant 0 : index
    %156 = vector.load %arg5[%c0_48, %c0_49, %c0_50] : memref<1x8x256xf32, #tpu.memory_space<vmem>>, vector<1x8x256xf32>
    %157 = vector.shape_cast %156 : vector<1x8x256xf32> to vector<8x256xf32>
    %158 = vector.shape_cast %155 : vector<8x256xf32> to vector<1x8x256xf32>
    tpu.vector_store %arg5[%c0_48, %c0_49, %c0_50], %158 {strides = array<i32>} : memref<1x8x256xf32, #tpu.memory_space<vmem>>, vector<1x8x256xf32>,
    return
  }
  func.func @transform_0(%arg0: i32) -> (i32, i32) {
    %c0_i32 = arith.constant 0 : i32
    %c0_i32_0 = arith.constant 0 : i32
    %c0_i32_1 = arith.constant 0 : i32
    return %c0_i32, %c0_i32_0 : i32, i32
  }
  func.func @transform_1(%arg0: i32) -> (i32, i32, i32) {
    %c0_i32 = arith.constant 0 : i32
    %c0_i32_0 = arith.constant 0 : i32
    %c0_i32_1 = arith.constant 0 : i32
    return %arg0, %c0_i32, %c0_i32_0 : i32, i32, i32
  }
  func.func @transform_2(%arg0: i32) -> (i32, i32) {
    %c0_i32 = arith.constant 0 : i32
    %c0_i32_0 = arith.constant 0 : i32
    %c0_i32_1 = arith.constant 0 : i32
    return %c0_i32, %c0_i32_0 : i32, i32
  }
  func.func @transform_3(%arg0: i32) -> (i32, i32) {
    %c0_i32 = arith.constant 0 : i32
    %c0_i32_0 = arith.constant 0 : i32
    %c0_i32_1 = arith.constant 0 : i32
    return %c0_i32, %c0_i32_0 : i32, i32
  }
  func.func @transform_4(%arg0: i32) -> (i32, i32, i32) {
    %c0_i32 = arith.constant 0 : i32
    %c0_i32_0 = arith.constant 0 : i32
    %c0_i32_1 = arith.constant 0 : i32
    return %arg0, %c0_i32, %c0_i32_0 : i32, i32, i32
  }
}

module attributes {stable_mosaic.version = 11 : i64} {
  func.func @kernel(%arg0: i32, %arg1: memref<9x64xbf16, #tpu.memory_space<vmem>>, %arg2: memref<1x8x64xf32, #tpu.memory_space<vmem>>, %arg3: memref<16x72xbf16, #tpu.memory_space<vmem>>, %arg4: memref<16x144xbf16, #tpu.memory_space<vmem>>, %arg5: memref<1x16x64xbf16, #tpu.memory_space<vmem>>) attributes {dimension_semantics = [#tpu.dimension_semantics<parallel>], iteration_bounds = array<i64: 2>, scalar_prefetch = 0 : i64, scratch_operands = 0 : i64, tpu.core_type = #tpu.core_type<tc>, window_params = [{pipeline_mode = #tpu.pipeline_mode<synchronous>, transform_indices = @transform_0, window_bounds = array<i64: 9, 64>}, {transform_indices = @transform_1, window_bounds = array<i64: 1, 8, 64>}, {pipeline_mode = #tpu.pipeline_mode<synchronous>, transform_indices = @transform_2, window_bounds = array<i64: 16, 72>}, {pipeline_mode = #tpu.pipeline_mode<synchronous>, transform_indices = @transform_3, window_bounds = array<i64: 16, 144>}, {transform_indices = @transform_4, window_bounds = array<i64: 1, 16, 64>}]} {
    %c0 = arith.constant 0 : index
    %c0_0 = arith.constant 0 : index
    %c0_1 = arith.constant 0 : index
    %0 = vector.load %arg2[%c0, %c0_0, %c0_1] : memref<1x8x64xf32, #tpu.memory_space<vmem>>, vector<1x8x64xf32>
    %1 = vector.shape_cast %0 : vector<1x8x64xf32> to vector<8x64xf32>
    %2 = arith.truncf %1 : vector<8x64xf32> to vector<8x64xbf16>
    %3 = vector.extract_strided_slice %2 {offsets = [0, 55], sizes = [8, 9], strides = [1, 1]} : vector<8x64xbf16> to vector<8x9xbf16>
    %4 = vector.extract_strided_slice %2 {offsets = [0, 0], sizes = [8, 55], strides = [1, 1]} : vector<8x64xbf16> to vector<8x55xbf16>
    %5 = tpu.concatenate %3, %4 in 1 : vector<8x9xbf16>, vector<8x55xbf16> -> vector<8x64xbf16>
    %c0_2 = arith.constant 0 : index
    %c0_3 = arith.constant 0 : index
    %6 = vector.load %arg1[%c0_2, %c0_3] : memref<9x64xbf16, #tpu.memory_space<vmem>>, vector<1x64xbf16>
    %7 = vector.broadcast %6 : vector<1x64xbf16> to vector<8x64xbf16>
    %8 = arith.mulf %5, %7 : vector<8x64xbf16>
    %9 = vector.extract_strided_slice %2 {offsets = [0, 56], sizes = [8, 8], strides = [1, 1]} : vector<8x64xbf16> to vector<8x8xbf16>
    %10 = vector.extract_strided_slice %2 {offsets = [0, 0], sizes = [8, 56], strides = [1, 1]} : vector<8x64xbf16> to vector<8x56xbf16>
    %11 = tpu.concatenate %9, %10 in 1 : vector<8x8xbf16>, vector<8x56xbf16> -> vector<8x64xbf16>
    %c1 = arith.constant 1 : index
    %c0_4 = arith.constant 0 : index
    %12 = vector.load %arg1[%c1, %c0_4] : memref<9x64xbf16, #tpu.memory_space<vmem>>, vector<1x64xbf16>
    %13 = vector.broadcast %12 : vector<1x64xbf16> to vector<8x64xbf16>
    %14 = arith.mulf %11, %13 : vector<8x64xbf16>
    %15 = vector.extract_strided_slice %2 {offsets = [0, 57], sizes = [8, 7], strides = [1, 1]} : vector<8x64xbf16> to vector<8x7xbf16>
    %16 = vector.extract_strided_slice %2 {offsets = [0, 0], sizes = [8, 57], strides = [1, 1]} : vector<8x64xbf16> to vector<8x57xbf16>
    %17 = tpu.concatenate %15, %16 in 1 : vector<8x7xbf16>, vector<8x57xbf16> -> vector<8x64xbf16>
    %c2 = arith.constant 2 : index
    %c0_5 = arith.constant 0 : index
    %18 = vector.load %arg1[%c2, %c0_5] : memref<9x64xbf16, #tpu.memory_space<vmem>>, vector<1x64xbf16>
    %19 = vector.broadcast %18 : vector<1x64xbf16> to vector<8x64xbf16>
    %20 = arith.mulf %17, %19 : vector<8x64xbf16>
    %21 = vector.extract_strided_slice %2 {offsets = [0, 63], sizes = [8, 1], strides = [1, 1]} : vector<8x64xbf16> to vector<8x1xbf16>
    %22 = vector.extract_strided_slice %2 {offsets = [0, 0], sizes = [8, 63], strides = [1, 1]} : vector<8x64xbf16> to vector<8x63xbf16>
    %23 = tpu.concatenate %21, %22 in 1 : vector<8x1xbf16>, vector<8x63xbf16> -> vector<8x64xbf16>
    %c3 = arith.constant 3 : index
    %c0_6 = arith.constant 0 : index
    %24 = vector.load %arg1[%c3, %c0_6] : memref<9x64xbf16, #tpu.memory_space<vmem>>, vector<1x64xbf16>
    %25 = vector.broadcast %24 : vector<1x64xbf16> to vector<8x64xbf16>
    %26 = arith.mulf %23, %25 : vector<8x64xbf16>
    %27 = vector.extract_strided_slice %2 {offsets = [0, 1], sizes = [8, 63], strides = [1, 1]} : vector<8x64xbf16> to vector<8x63xbf16>
    %28 = vector.extract_strided_slice %2 {offsets = [0, 0], sizes = [8, 1], strides = [1, 1]} : vector<8x64xbf16> to vector<8x1xbf16>
    %29 = tpu.concatenate %27, %28 in 1 : vector<8x63xbf16>, vector<8x1xbf16> -> vector<8x64xbf16>
    %c5 = arith.constant 5 : index
    %c0_7 = arith.constant 0 : index
    %30 = vector.load %arg1[%c5, %c0_7] : memref<9x64xbf16, #tpu.memory_space<vmem>>, vector<1x64xbf16>
    %31 = vector.broadcast %30 : vector<1x64xbf16> to vector<8x64xbf16>
    %32 = arith.mulf %29, %31 : vector<8x64xbf16>
    %33 = vector.extract_strided_slice %2 {offsets = [0, 7], sizes = [8, 57], strides = [1, 1]} : vector<8x64xbf16> to vector<8x57xbf16>
    %34 = vector.extract_strided_slice %2 {offsets = [0, 0], sizes = [8, 7], strides = [1, 1]} : vector<8x64xbf16> to vector<8x7xbf16>
    %35 = tpu.concatenate %33, %34 in 1 : vector<8x57xbf16>, vector<8x7xbf16> -> vector<8x64xbf16>
    %c6 = arith.constant 6 : index
    %c0_8 = arith.constant 0 : index
    %36 = vector.load %arg1[%c6, %c0_8] : memref<9x64xbf16, #tpu.memory_space<vmem>>, vector<1x64xbf16>
    %37 = vector.broadcast %36 : vector<1x64xbf16> to vector<8x64xbf16>
    %38 = arith.mulf %35, %37 : vector<8x64xbf16>
    %39 = vector.extract_strided_slice %2 {offsets = [0, 8], sizes = [8, 56], strides = [1, 1]} : vector<8x64xbf16> to vector<8x56xbf16>
    %40 = vector.extract_strided_slice %2 {offsets = [0, 0], sizes = [8, 8], strides = [1, 1]} : vector<8x64xbf16> to vector<8x8xbf16>
    %41 = tpu.concatenate %39, %40 in 1 : vector<8x56xbf16>, vector<8x8xbf16> -> vector<8x64xbf16>
    %c7 = arith.constant 7 : index
    %c0_9 = arith.constant 0 : index
    %42 = vector.load %arg1[%c7, %c0_9] : memref<9x64xbf16, #tpu.memory_space<vmem>>, vector<1x64xbf16>
    %43 = vector.broadcast %42 : vector<1x64xbf16> to vector<8x64xbf16>
    %44 = arith.mulf %41, %43 : vector<8x64xbf16>
    %45 = vector.extract_strided_slice %2 {offsets = [0, 9], sizes = [8, 55], strides = [1, 1]} : vector<8x64xbf16> to vector<8x55xbf16>
    %46 = vector.extract_strided_slice %2 {offsets = [0, 0], sizes = [8, 9], strides = [1, 1]} : vector<8x64xbf16> to vector<8x9xbf16>
    %47 = tpu.concatenate %45, %46 in 1 : vector<8x55xbf16>, vector<8x9xbf16> -> vector<8x64xbf16>
    %c8 = arith.constant 8 : index
    %c0_10 = arith.constant 0 : index
    %48 = vector.load %arg1[%c8, %c0_10] : memref<9x64xbf16, #tpu.memory_space<vmem>>, vector<1x64xbf16>
    %49 = vector.broadcast %48 : vector<1x64xbf16> to vector<8x64xbf16>
    %50 = arith.mulf %47, %49 : vector<8x64xbf16>
    %51 = tpu.concatenate %8, %14, %20, %26, %2, %32, %38, %44, %50 in 0 : vector<8x64xbf16>, vector<8x64xbf16>, vector<8x64xbf16>, vector<8x64xbf16>, vector<8x64xbf16>, vector<8x64xbf16>, vector<8x64xbf16>, vector<8x64xbf16>, vector<8x64xbf16> -> vector<72x64xbf16>
    %c0_11 = arith.constant 0 : index
    %c0_12 = arith.constant 0 : index
    %52 = vector.load %arg3[%c0_11, %c0_12] : memref<16x72xbf16, #tpu.memory_space<vmem>>, vector<16x72xbf16>
    %cst = arith.constant dense<0.000000e+00> : vector<16x64xf32>
    %53 = tpu.matmul %52, %51, %cst {dimension_numbers = #tpu.dot_dimension_numbers<[1], [0], [0], [1], [0, 0, 1, 1], [], []>} : vector<16x72xbf16>, vector<72x64xbf16>, vector<16x64xf32> -> vector<16x64xf32>
    %cst_13 = arith.constant dense<0.000000e+00> : vector<16xf32>
    %54 = vector.multi_reduction <add>, %53, %cst_13 [1] : vector<16x64xf32> to vector<16xf32>
    %55 = vector.shape_cast %54 : vector<16xf32> to vector<16x1xf32>
    %56 = arith.mulf %53, %53 : vector<16x64xf32>
    %cst_14 = arith.constant dense<0.000000e+00> : vector<16xf32>
    %57 = vector.multi_reduction <add>, %56, %cst_14 [1] : vector<16x64xf32> to vector<16xf32>
    %58 = vector.shape_cast %57 : vector<16xf32> to vector<16x1xf32>
    %cst_15 = arith.constant 1.562500e-02 : f32
    %59 = vector.broadcast %cst_15 : f32 to vector<16x1xf32>
    %60 = arith.mulf %55, %59 : vector<16x1xf32>
    %cst_16 = arith.constant 1.562500e-02 : f32
    %61 = vector.broadcast %cst_16 : f32 to vector<16x1xf32>
    %62 = arith.mulf %58, %61 : vector<16x1xf32>
    %63 = arith.mulf %60, %60 : vector<16x1xf32>
    %64 = arith.subf %62, %63 : vector<16x1xf32>
    %cst_17 = arith.constant 0.000000e+00 : f32
    %65 = vector.broadcast %cst_17 : f32 to vector<16x1xf32>
    %66 = arith.maximumf %64, %65 : vector<16x1xf32>
    %cst_18 = arith.constant 9.99999974E-6 : f32
    %67 = vector.broadcast %cst_18 : f32 to vector<16x1xf32>
    %68 = arith.addf %66, %67 : vector<16x1xf32>
    %69 = math.rsqrt %68 : vector<16x1xf32>
    %cst_19 = arith.constant 0.000000e+00 : f32
    %70 = vector.broadcast %cst_19 : f32 to vector<16x1xf32>
    %71 = arith.subf %70, %60 : vector<16x1xf32>
    %72 = arith.mulf %71, %69 : vector<16x1xf32>
    %73 = vector.broadcast %69 : vector<16x1xf32> to vector<16x64xf32>
    %74 = arith.mulf %53, %73 : vector<16x64xf32>
    %75 = vector.broadcast %72 : vector<16x1xf32> to vector<16x64xf32>
    %76 = arith.addf %74, %75 : vector<16x64xf32>
    %cst_20 = arith.constant 0.000000e+00 : f32
    %77 = vector.broadcast %cst_20 : f32 to vector<16x64xf32>
    %78 = arith.maximumf %76, %77 : vector<16x64xf32>
    %79 = arith.truncf %78 : vector<16x64xf32> to vector<16x64xbf16>
    %80 = vector.extract_strided_slice %79 {offsets = [0, 55], sizes = [16, 9], strides = [1, 1]} : vector<16x64xbf16> to vector<16x9xbf16>
    %81 = vector.extract_strided_slice %79 {offsets = [0, 0], sizes = [16, 55], strides = [1, 1]} : vector<16x64xbf16> to vector<16x55xbf16>
    %82 = tpu.concatenate %80, %81 in 1 : vector<16x9xbf16>, vector<16x55xbf16> -> vector<16x64xbf16>
    %c0_21 = arith.constant 0 : index
    %c0_22 = arith.constant 0 : index
    %83 = vector.load %arg1[%c0_21, %c0_22] : memref<9x64xbf16, #tpu.memory_space<vmem>>, vector<1x64xbf16>
    %84 = vector.broadcast %83 : vector<1x64xbf16> to vector<16x64xbf16>
    %85 = arith.mulf %82, %84 : vector<16x64xbf16>
    %86 = vector.extract_strided_slice %79 {offsets = [0, 56], sizes = [16, 8], strides = [1, 1]} : vector<16x64xbf16> to vector<16x8xbf16>
    %87 = vector.extract_strided_slice %79 {offsets = [0, 0], sizes = [16, 56], strides = [1, 1]} : vector<16x64xbf16> to vector<16x56xbf16>
    %88 = tpu.concatenate %86, %87 in 1 : vector<16x8xbf16>, vector<16x56xbf16> -> vector<16x64xbf16>
    %c1_23 = arith.constant 1 : index
    %c0_24 = arith.constant 0 : index
    %89 = vector.load %arg1[%c1_23, %c0_24] : memref<9x64xbf16, #tpu.memory_space<vmem>>, vector<1x64xbf16>
    %90 = vector.broadcast %89 : vector<1x64xbf16> to vector<16x64xbf16>
    %91 = arith.mulf %88, %90 : vector<16x64xbf16>
    %92 = vector.extract_strided_slice %79 {offsets = [0, 57], sizes = [16, 7], strides = [1, 1]} : vector<16x64xbf16> to vector<16x7xbf16>
    %93 = vector.extract_strided_slice %79 {offsets = [0, 0], sizes = [16, 57], strides = [1, 1]} : vector<16x64xbf16> to vector<16x57xbf16>
    %94 = tpu.concatenate %92, %93 in 1 : vector<16x7xbf16>, vector<16x57xbf16> -> vector<16x64xbf16>
    %c2_25 = arith.constant 2 : index
    %c0_26 = arith.constant 0 : index
    %95 = vector.load %arg1[%c2_25, %c0_26] : memref<9x64xbf16, #tpu.memory_space<vmem>>, vector<1x64xbf16>
    %96 = vector.broadcast %95 : vector<1x64xbf16> to vector<16x64xbf16>
    %97 = arith.mulf %94, %96 : vector<16x64xbf16>
    %98 = vector.extract_strided_slice %79 {offsets = [0, 63], sizes = [16, 1], strides = [1, 1]} : vector<16x64xbf16> to vector<16x1xbf16>
    %99 = vector.extract_strided_slice %79 {offsets = [0, 0], sizes = [16, 63], strides = [1, 1]} : vector<16x64xbf16> to vector<16x63xbf16>
    %100 = tpu.concatenate %98, %99 in 1 : vector<16x1xbf16>, vector<16x63xbf16> -> vector<16x64xbf16>
    %c3_27 = arith.constant 3 : index
    %c0_28 = arith.constant 0 : index
    %101 = vector.load %arg1[%c3_27, %c0_28] : memref<9x64xbf16, #tpu.memory_space<vmem>>, vector<1x64xbf16>
    %102 = vector.broadcast %101 : vector<1x64xbf16> to vector<16x64xbf16>
    %103 = arith.mulf %100, %102 : vector<16x64xbf16>
    %104 = vector.extract_strided_slice %79 {offsets = [0, 1], sizes = [16, 63], strides = [1, 1]} : vector<16x64xbf16> to vector<16x63xbf16>
    %105 = vector.extract_strided_slice %79 {offsets = [0, 0], sizes = [16, 1], strides = [1, 1]} : vector<16x64xbf16> to vector<16x1xbf16>
    %106 = tpu.concatenate %104, %105 in 1 : vector<16x63xbf16>, vector<16x1xbf16> -> vector<16x64xbf16>
    %c5_29 = arith.constant 5 : index
    %c0_30 = arith.constant 0 : index
    %107 = vector.load %arg1[%c5_29, %c0_30] : memref<9x64xbf16, #tpu.memory_space<vmem>>, vector<1x64xbf16>
    %108 = vector.broadcast %107 : vector<1x64xbf16> to vector<16x64xbf16>
    %109 = arith.mulf %106, %108 : vector<16x64xbf16>
    %110 = vector.extract_strided_slice %79 {offsets = [0, 7], sizes = [16, 57], strides = [1, 1]} : vector<16x64xbf16> to vector<16x57xbf16>
    %111 = vector.extract_strided_slice %79 {offsets = [0, 0], sizes = [16, 7], strides = [1, 1]} : vector<16x64xbf16> to vector<16x7xbf16>
    %112 = tpu.concatenate %110, %111 in 1 : vector<16x57xbf16>, vector<16x7xbf16> -> vector<16x64xbf16>
    %c6_31 = arith.constant 6 : index
    %c0_32 = arith.constant 0 : index
    %113 = vector.load %arg1[%c6_31, %c0_32] : memref<9x64xbf16, #tpu.memory_space<vmem>>, vector<1x64xbf16>
    %114 = vector.broadcast %113 : vector<1x64xbf16> to vector<16x64xbf16>
    %115 = arith.mulf %112, %114 : vector<16x64xbf16>
    %116 = vector.extract_strided_slice %79 {offsets = [0, 8], sizes = [16, 56], strides = [1, 1]} : vector<16x64xbf16> to vector<16x56xbf16>
    %117 = vector.extract_strided_slice %79 {offsets = [0, 0], sizes = [16, 8], strides = [1, 1]} : vector<16x64xbf16> to vector<16x8xbf16>
    %118 = tpu.concatenate %116, %117 in 1 : vector<16x56xbf16>, vector<16x8xbf16> -> vector<16x64xbf16>
    %c7_33 = arith.constant 7 : index
    %c0_34 = arith.constant 0 : index
    %119 = vector.load %arg1[%c7_33, %c0_34] : memref<9x64xbf16, #tpu.memory_space<vmem>>, vector<1x64xbf16>
    %120 = vector.broadcast %119 : vector<1x64xbf16> to vector<16x64xbf16>
    %121 = arith.mulf %118, %120 : vector<16x64xbf16>
    %122 = vector.extract_strided_slice %79 {offsets = [0, 9], sizes = [16, 55], strides = [1, 1]} : vector<16x64xbf16> to vector<16x55xbf16>
    %123 = vector.extract_strided_slice %79 {offsets = [0, 0], sizes = [16, 9], strides = [1, 1]} : vector<16x64xbf16> to vector<16x9xbf16>
    %124 = tpu.concatenate %122, %123 in 1 : vector<16x55xbf16>, vector<16x9xbf16> -> vector<16x64xbf16>
    %c8_35 = arith.constant 8 : index
    %c0_36 = arith.constant 0 : index
    %125 = vector.load %arg1[%c8_35, %c0_36] : memref<9x64xbf16, #tpu.memory_space<vmem>>, vector<1x64xbf16>
    %126 = vector.broadcast %125 : vector<1x64xbf16> to vector<16x64xbf16>
    %127 = arith.mulf %124, %126 : vector<16x64xbf16>
    %128 = tpu.concatenate %85, %91, %97, %103, %79, %109, %115, %121, %127 in 0 : vector<16x64xbf16>, vector<16x64xbf16>, vector<16x64xbf16>, vector<16x64xbf16>, vector<16x64xbf16>, vector<16x64xbf16>, vector<16x64xbf16>, vector<16x64xbf16>, vector<16x64xbf16> -> vector<144x64xbf16>
    %c0_37 = arith.constant 0 : index
    %c0_38 = arith.constant 0 : index
    %129 = vector.load %arg4[%c0_37, %c0_38] : memref<16x144xbf16, #tpu.memory_space<vmem>>, vector<16x144xbf16>
    %cst_39 = arith.constant dense<0.000000e+00> : vector<16x64xf32>
    %130 = tpu.matmul %129, %128, %cst_39 {dimension_numbers = #tpu.dot_dimension_numbers<[1], [0], [0], [1], [0, 0, 1, 1], [], []>} : vector<16x144xbf16>, vector<144x64xbf16>, vector<16x64xf32> -> vector<16x64xf32>
    %cst_40 = arith.constant dense<0.000000e+00> : vector<16xf32>
    %131 = vector.multi_reduction <add>, %130, %cst_40 [1] : vector<16x64xf32> to vector<16xf32>
    %132 = vector.shape_cast %131 : vector<16xf32> to vector<16x1xf32>
    %133 = arith.mulf %130, %130 : vector<16x64xf32>
    %cst_41 = arith.constant dense<0.000000e+00> : vector<16xf32>
    %134 = vector.multi_reduction <add>, %133, %cst_41 [1] : vector<16x64xf32> to vector<16xf32>
    %135 = vector.shape_cast %134 : vector<16xf32> to vector<16x1xf32>
    %cst_42 = arith.constant 1.562500e-02 : f32
    %136 = vector.broadcast %cst_42 : f32 to vector<16x1xf32>
    %137 = arith.mulf %132, %136 : vector<16x1xf32>
    %cst_43 = arith.constant 1.562500e-02 : f32
    %138 = vector.broadcast %cst_43 : f32 to vector<16x1xf32>
    %139 = arith.mulf %135, %138 : vector<16x1xf32>
    %140 = arith.mulf %137, %137 : vector<16x1xf32>
    %141 = arith.subf %139, %140 : vector<16x1xf32>
    %cst_44 = arith.constant 0.000000e+00 : f32
    %142 = vector.broadcast %cst_44 : f32 to vector<16x1xf32>
    %143 = arith.maximumf %141, %142 : vector<16x1xf32>
    %cst_45 = arith.constant 9.99999974E-6 : f32
    %144 = vector.broadcast %cst_45 : f32 to vector<16x1xf32>
    %145 = arith.addf %143, %144 : vector<16x1xf32>
    %146 = math.rsqrt %145 : vector<16x1xf32>
    %cst_46 = arith.constant 0.000000e+00 : f32
    %147 = vector.broadcast %cst_46 : f32 to vector<16x1xf32>
    %148 = arith.subf %147, %137 : vector<16x1xf32>
    %149 = arith.mulf %148, %146 : vector<16x1xf32>
    %150 = vector.broadcast %146 : vector<16x1xf32> to vector<16x64xf32>
    %151 = arith.mulf %130, %150 : vector<16x64xf32>
    %152 = vector.broadcast %149 : vector<16x1xf32> to vector<16x64xf32>
    %153 = arith.addf %151, %152 : vector<16x64xf32>
    %cst_47 = arith.constant 0.000000e+00 : f32
    %154 = vector.broadcast %cst_47 : f32 to vector<16x64xf32>
    %155 = arith.maximumf %153, %154 : vector<16x64xf32>
    %156 = arith.truncf %155 : vector<16x64xf32> to vector<16x64xbf16>
    %c0_48 = arith.constant 0 : index
    %c0_49 = arith.constant 0 : index
    %c0_50 = arith.constant 0 : index
    %157 = vector.load %arg5[%c0_48, %c0_49, %c0_50] : memref<1x16x64xbf16, #tpu.memory_space<vmem>>, vector<1x16x64xbf16>
    %158 = vector.shape_cast %157 : vector<1x16x64xbf16> to vector<16x64xbf16>
    %159 = vector.shape_cast %156 : vector<16x64xbf16> to vector<1x16x64xbf16>
    tpu.vector_store %arg5[%c0_48, %c0_49, %c0_50], %159 {strides = array<i32>} : memref<1x16x64xbf16, #tpu.memory_space<vmem>>, vector<1x16x64xbf16>,
    return
  }
  func.func @transform_0(%arg0: i32) -> (i32, i32) {
    %c0_i32 = arith.constant 0 : i32
    %c0_i32_0 = arith.constant 0 : i32
    %c0_i32_1 = arith.constant 0 : i32
    return %c0_i32, %c0_i32_0 : i32, i32
  }
  func.func @transform_1(%arg0: i32) -> (i32, i32, i32) {
    %c0_i32 = arith.constant 0 : i32
    %c0_i32_0 = arith.constant 0 : i32
    %c0_i32_1 = arith.constant 0 : i32
    return %arg0, %c0_i32, %c0_i32_0 : i32, i32, i32
  }
  func.func @transform_2(%arg0: i32) -> (i32, i32) {
    %c0_i32 = arith.constant 0 : i32
    %c0_i32_0 = arith.constant 0 : i32
    %c0_i32_1 = arith.constant 0 : i32
    return %c0_i32, %c0_i32_0 : i32, i32
  }
  func.func @transform_3(%arg0: i32) -> (i32, i32) {
    %c0_i32 = arith.constant 0 : i32
    %c0_i32_0 = arith.constant 0 : i32
    %c0_i32_1 = arith.constant 0 : i32
    return %c0_i32, %c0_i32_0 : i32, i32
  }
  func.func @transform_4(%arg0: i32) -> (i32, i32, i32) {
    %c0_i32 = arith.constant 0 : i32
    %c0_i32_0 = arith.constant 0 : i32
    %c0_i32_1 = arith.constant 0 : i32
    return %arg0, %c0_i32, %c0_i32_0 : i32, i32, i32
  }
}

module attributes {stable_mosaic.version = 11 : i64} {
  func.func @kernel(%arg0: i32, %arg1: memref<9x16xbf16, #tpu.memory_space<vmem>>, %arg2: memref<1x16x16xbf16, #tpu.memory_space<vmem>>, %arg3: memref<32x144xbf16, #tpu.memory_space<vmem>>, %arg4: memref<32x288xbf16, #tpu.memory_space<vmem>>, %arg5: memref<1x32x16xbf16, #tpu.memory_space<vmem>>) attributes {dimension_semantics = [#tpu.dimension_semantics<parallel>], iteration_bounds = array<i64: 2>, scalar_prefetch = 0 : i64, scratch_operands = 0 : i64, tpu.core_type = #tpu.core_type<tc>, window_params = [{pipeline_mode = #tpu.pipeline_mode<synchronous>, transform_indices = @transform_0, window_bounds = array<i64: 9, 16>}, {transform_indices = @transform_1, window_bounds = array<i64: 1, 16, 16>}, {pipeline_mode = #tpu.pipeline_mode<synchronous>, transform_indices = @transform_2, window_bounds = array<i64: 32, 144>}, {pipeline_mode = #tpu.pipeline_mode<synchronous>, transform_indices = @transform_3, window_bounds = array<i64: 32, 288>}, {transform_indices = @transform_4, window_bounds = array<i64: 1, 32, 16>}]} {
    %c0 = arith.constant 0 : index
    %c0_0 = arith.constant 0 : index
    %c0_1 = arith.constant 0 : index
    %0 = vector.load %arg2[%c0, %c0_0, %c0_1] : memref<1x16x16xbf16, #tpu.memory_space<vmem>>, vector<1x16x16xbf16>
    %1 = vector.shape_cast %0 : vector<1x16x16xbf16> to vector<16x16xbf16>
    %2 = vector.extract_strided_slice %1 {offsets = [0, 11], sizes = [16, 5], strides = [1, 1]} : vector<16x16xbf16> to vector<16x5xbf16>
    %3 = vector.extract_strided_slice %1 {offsets = [0, 0], sizes = [16, 11], strides = [1, 1]} : vector<16x16xbf16> to vector<16x11xbf16>
    %4 = tpu.concatenate %2, %3 in 1 : vector<16x5xbf16>, vector<16x11xbf16> -> vector<16x16xbf16>
    %c0_2 = arith.constant 0 : index
    %c0_3 = arith.constant 0 : index
    %5 = vector.load %arg1[%c0_2, %c0_3] : memref<9x16xbf16, #tpu.memory_space<vmem>>, vector<1x16xbf16>
    %6 = vector.broadcast %5 : vector<1x16xbf16> to vector<16x16xbf16>
    %7 = arith.mulf %4, %6 : vector<16x16xbf16>
    %8 = vector.extract_strided_slice %1 {offsets = [0, 12], sizes = [16, 4], strides = [1, 1]} : vector<16x16xbf16> to vector<16x4xbf16>
    %9 = vector.extract_strided_slice %1 {offsets = [0, 0], sizes = [16, 12], strides = [1, 1]} : vector<16x16xbf16> to vector<16x12xbf16>
    %10 = tpu.concatenate %8, %9 in 1 : vector<16x4xbf16>, vector<16x12xbf16> -> vector<16x16xbf16>
    %c1 = arith.constant 1 : index
    %c0_4 = arith.constant 0 : index
    %11 = vector.load %arg1[%c1, %c0_4] : memref<9x16xbf16, #tpu.memory_space<vmem>>, vector<1x16xbf16>
    %12 = vector.broadcast %11 : vector<1x16xbf16> to vector<16x16xbf16>
    %13 = arith.mulf %10, %12 : vector<16x16xbf16>
    %14 = vector.extract_strided_slice %1 {offsets = [0, 13], sizes = [16, 3], strides = [1, 1]} : vector<16x16xbf16> to vector<16x3xbf16>
    %15 = vector.extract_strided_slice %1 {offsets = [0, 0], sizes = [16, 13], strides = [1, 1]} : vector<16x16xbf16> to vector<16x13xbf16>
    %16 = tpu.concatenate %14, %15 in 1 : vector<16x3xbf16>, vector<16x13xbf16> -> vector<16x16xbf16>
    %c2 = arith.constant 2 : index
    %c0_5 = arith.constant 0 : index
    %17 = vector.load %arg1[%c2, %c0_5] : memref<9x16xbf16, #tpu.memory_space<vmem>>, vector<1x16xbf16>
    %18 = vector.broadcast %17 : vector<1x16xbf16> to vector<16x16xbf16>
    %19 = arith.mulf %16, %18 : vector<16x16xbf16>
    %20 = vector.extract_strided_slice %1 {offsets = [0, 15], sizes = [16, 1], strides = [1, 1]} : vector<16x16xbf16> to vector<16x1xbf16>
    %21 = vector.extract_strided_slice %1 {offsets = [0, 0], sizes = [16, 15], strides = [1, 1]} : vector<16x16xbf16> to vector<16x15xbf16>
    %22 = tpu.concatenate %20, %21 in 1 : vector<16x1xbf16>, vector<16x15xbf16> -> vector<16x16xbf16>
    %c3 = arith.constant 3 : index
    %c0_6 = arith.constant 0 : index
    %23 = vector.load %arg1[%c3, %c0_6] : memref<9x16xbf16, #tpu.memory_space<vmem>>, vector<1x16xbf16>
    %24 = vector.broadcast %23 : vector<1x16xbf16> to vector<16x16xbf16>
    %25 = arith.mulf %22, %24 : vector<16x16xbf16>
    %26 = vector.extract_strided_slice %1 {offsets = [0, 1], sizes = [16, 15], strides = [1, 1]} : vector<16x16xbf16> to vector<16x15xbf16>
    %27 = vector.extract_strided_slice %1 {offsets = [0, 0], sizes = [16, 1], strides = [1, 1]} : vector<16x16xbf16> to vector<16x1xbf16>
    %28 = tpu.concatenate %26, %27 in 1 : vector<16x15xbf16>, vector<16x1xbf16> -> vector<16x16xbf16>
    %c5 = arith.constant 5 : index
    %c0_7 = arith.constant 0 : index
    %29 = vector.load %arg1[%c5, %c0_7] : memref<9x16xbf16, #tpu.memory_space<vmem>>, vector<1x16xbf16>
    %30 = vector.broadcast %29 : vector<1x16xbf16> to vector<16x16xbf16>
    %31 = arith.mulf %28, %30 : vector<16x16xbf16>
    %32 = vector.extract_strided_slice %1 {offsets = [0, 3], sizes = [16, 13], strides = [1, 1]} : vector<16x16xbf16> to vector<16x13xbf16>
    %33 = vector.extract_strided_slice %1 {offsets = [0, 0], sizes = [16, 3], strides = [1, 1]} : vector<16x16xbf16> to vector<16x3xbf16>
    %34 = tpu.concatenate %32, %33 in 1 : vector<16x13xbf16>, vector<16x3xbf16> -> vector<16x16xbf16>
    %c6 = arith.constant 6 : index
    %c0_8 = arith.constant 0 : index
    %35 = vector.load %arg1[%c6, %c0_8] : memref<9x16xbf16, #tpu.memory_space<vmem>>, vector<1x16xbf16>
    %36 = vector.broadcast %35 : vector<1x16xbf16> to vector<16x16xbf16>
    %37 = arith.mulf %34, %36 : vector<16x16xbf16>
    %38 = vector.extract_strided_slice %1 {offsets = [0, 4], sizes = [16, 12], strides = [1, 1]} : vector<16x16xbf16> to vector<16x12xbf16>
    %39 = vector.extract_strided_slice %1 {offsets = [0, 0], sizes = [16, 4], strides = [1, 1]} : vector<16x16xbf16> to vector<16x4xbf16>
    %40 = tpu.concatenate %38, %39 in 1 : vector<16x12xbf16>, vector<16x4xbf16> -> vector<16x16xbf16>
    %c7 = arith.constant 7 : index
    %c0_9 = arith.constant 0 : index
    %41 = vector.load %arg1[%c7, %c0_9] : memref<9x16xbf16, #tpu.memory_space<vmem>>, vector<1x16xbf16>
    %42 = vector.broadcast %41 : vector<1x16xbf16> to vector<16x16xbf16>
    %43 = arith.mulf %40, %42 : vector<16x16xbf16>
    %44 = vector.extract_strided_slice %1 {offsets = [0, 5], sizes = [16, 11], strides = [1, 1]} : vector<16x16xbf16> to vector<16x11xbf16>
    %45 = vector.extract_strided_slice %1 {offsets = [0, 0], sizes = [16, 5], strides = [1, 1]} : vector<16x16xbf16> to vector<16x5xbf16>
    %46 = tpu.concatenate %44, %45 in 1 : vector<16x11xbf16>, vector<16x5xbf16> -> vector<16x16xbf16>
    %c8 = arith.constant 8 : index
    %c0_10 = arith.constant 0 : index
    %47 = vector.load %arg1[%c8, %c0_10] : memref<9x16xbf16, #tpu.memory_space<vmem>>, vector<1x16xbf16>
    %48 = vector.broadcast %47 : vector<1x16xbf16> to vector<16x16xbf16>
    %49 = arith.mulf %46, %48 : vector<16x16xbf16>
    %50 = tpu.concatenate %7, %13, %19, %25, %1, %31, %37, %43, %49 in 0 : vector<16x16xbf16>, vector<16x16xbf16>, vector<16x16xbf16>, vector<16x16xbf16>, vector<16x16xbf16>, vector<16x16xbf16>, vector<16x16xbf16>, vector<16x16xbf16>, vector<16x16xbf16> -> vector<144x16xbf16>
    %c0_11 = arith.constant 0 : index
    %c0_12 = arith.constant 0 : index
    %51 = vector.load %arg3[%c0_11, %c0_12] : memref<32x144xbf16, #tpu.memory_space<vmem>>, vector<32x144xbf16>
    %cst = arith.constant dense<0.000000e+00> : vector<32x16xf32>
    %52 = tpu.matmul %51, %50, %cst {dimension_numbers = #tpu.dot_dimension_numbers<[1], [0], [0], [1], [0, 0, 1, 1], [], []>} : vector<32x144xbf16>, vector<144x16xbf16>, vector<32x16xf32> -> vector<32x16xf32>
    %cst_13 = arith.constant dense<0.000000e+00> : vector<32xf32>
    %53 = vector.multi_reduction <add>, %52, %cst_13 [1] : vector<32x16xf32> to vector<32xf32>
    %54 = vector.shape_cast %53 : vector<32xf32> to vector<32x1xf32>
    %55 = arith.mulf %52, %52 : vector<32x16xf32>
    %cst_14 = arith.constant dense<0.000000e+00> : vector<32xf32>
    %56 = vector.multi_reduction <add>, %55, %cst_14 [1] : vector<32x16xf32> to vector<32xf32>
    %57 = vector.shape_cast %56 : vector<32xf32> to vector<32x1xf32>
    %cst_15 = arith.constant 6.250000e-02 : f32
    %58 = vector.broadcast %cst_15 : f32 to vector<32x1xf32>
    %59 = arith.mulf %54, %58 : vector<32x1xf32>
    %cst_16 = arith.constant 6.250000e-02 : f32
    %60 = vector.broadcast %cst_16 : f32 to vector<32x1xf32>
    %61 = arith.mulf %57, %60 : vector<32x1xf32>
    %62 = arith.mulf %59, %59 : vector<32x1xf32>
    %63 = arith.subf %61, %62 : vector<32x1xf32>
    %cst_17 = arith.constant 0.000000e+00 : f32
    %64 = vector.broadcast %cst_17 : f32 to vector<32x1xf32>
    %65 = arith.maximumf %63, %64 : vector<32x1xf32>
    %cst_18 = arith.constant 9.99999974E-6 : f32
    %66 = vector.broadcast %cst_18 : f32 to vector<32x1xf32>
    %67 = arith.addf %65, %66 : vector<32x1xf32>
    %68 = math.rsqrt %67 : vector<32x1xf32>
    %cst_19 = arith.constant 0.000000e+00 : f32
    %69 = vector.broadcast %cst_19 : f32 to vector<32x1xf32>
    %70 = arith.subf %69, %59 : vector<32x1xf32>
    %71 = arith.mulf %70, %68 : vector<32x1xf32>
    %72 = vector.broadcast %68 : vector<32x1xf32> to vector<32x16xf32>
    %73 = arith.mulf %52, %72 : vector<32x16xf32>
    %74 = vector.broadcast %71 : vector<32x1xf32> to vector<32x16xf32>
    %75 = arith.addf %73, %74 : vector<32x16xf32>
    %cst_20 = arith.constant 0.000000e+00 : f32
    %76 = vector.broadcast %cst_20 : f32 to vector<32x16xf32>
    %77 = arith.maximumf %75, %76 : vector<32x16xf32>
    %78 = arith.truncf %77 : vector<32x16xf32> to vector<32x16xbf16>
    %79 = vector.extract_strided_slice %78 {offsets = [0, 11], sizes = [32, 5], strides = [1, 1]} : vector<32x16xbf16> to vector<32x5xbf16>
    %80 = vector.extract_strided_slice %78 {offsets = [0, 0], sizes = [32, 11], strides = [1, 1]} : vector<32x16xbf16> to vector<32x11xbf16>
    %81 = tpu.concatenate %79, %80 in 1 : vector<32x5xbf16>, vector<32x11xbf16> -> vector<32x16xbf16>
    %c0_21 = arith.constant 0 : index
    %c0_22 = arith.constant 0 : index
    %82 = vector.load %arg1[%c0_21, %c0_22] : memref<9x16xbf16, #tpu.memory_space<vmem>>, vector<1x16xbf16>
    %83 = vector.broadcast %82 : vector<1x16xbf16> to vector<32x16xbf16>
    %84 = arith.mulf %81, %83 : vector<32x16xbf16>
    %85 = vector.extract_strided_slice %78 {offsets = [0, 12], sizes = [32, 4], strides = [1, 1]} : vector<32x16xbf16> to vector<32x4xbf16>
    %86 = vector.extract_strided_slice %78 {offsets = [0, 0], sizes = [32, 12], strides = [1, 1]} : vector<32x16xbf16> to vector<32x12xbf16>
    %87 = tpu.concatenate %85, %86 in 1 : vector<32x4xbf16>, vector<32x12xbf16> -> vector<32x16xbf16>
    %c1_23 = arith.constant 1 : index
    %c0_24 = arith.constant 0 : index
    %88 = vector.load %arg1[%c1_23, %c0_24] : memref<9x16xbf16, #tpu.memory_space<vmem>>, vector<1x16xbf16>
    %89 = vector.broadcast %88 : vector<1x16xbf16> to vector<32x16xbf16>
    %90 = arith.mulf %87, %89 : vector<32x16xbf16>
    %91 = vector.extract_strided_slice %78 {offsets = [0, 13], sizes = [32, 3], strides = [1, 1]} : vector<32x16xbf16> to vector<32x3xbf16>
    %92 = vector.extract_strided_slice %78 {offsets = [0, 0], sizes = [32, 13], strides = [1, 1]} : vector<32x16xbf16> to vector<32x13xbf16>
    %93 = tpu.concatenate %91, %92 in 1 : vector<32x3xbf16>, vector<32x13xbf16> -> vector<32x16xbf16>
    %c2_25 = arith.constant 2 : index
    %c0_26 = arith.constant 0 : index
    %94 = vector.load %arg1[%c2_25, %c0_26] : memref<9x16xbf16, #tpu.memory_space<vmem>>, vector<1x16xbf16>
    %95 = vector.broadcast %94 : vector<1x16xbf16> to vector<32x16xbf16>
    %96 = arith.mulf %93, %95 : vector<32x16xbf16>
    %97 = vector.extract_strided_slice %78 {offsets = [0, 15], sizes = [32, 1], strides = [1, 1]} : vector<32x16xbf16> to vector<32x1xbf16>
    %98 = vector.extract_strided_slice %78 {offsets = [0, 0], sizes = [32, 15], strides = [1, 1]} : vector<32x16xbf16> to vector<32x15xbf16>
    %99 = tpu.concatenate %97, %98 in 1 : vector<32x1xbf16>, vector<32x15xbf16> -> vector<32x16xbf16>
    %c3_27 = arith.constant 3 : index
    %c0_28 = arith.constant 0 : index
    %100 = vector.load %arg1[%c3_27, %c0_28] : memref<9x16xbf16, #tpu.memory_space<vmem>>, vector<1x16xbf16>
    %101 = vector.broadcast %100 : vector<1x16xbf16> to vector<32x16xbf16>
    %102 = arith.mulf %99, %101 : vector<32x16xbf16>
    %103 = vector.extract_strided_slice %78 {offsets = [0, 1], sizes = [32, 15], strides = [1, 1]} : vector<32x16xbf16> to vector<32x15xbf16>
    %104 = vector.extract_strided_slice %78 {offsets = [0, 0], sizes = [32, 1], strides = [1, 1]} : vector<32x16xbf16> to vector<32x1xbf16>
    %105 = tpu.concatenate %103, %104 in 1 : vector<32x15xbf16>, vector<32x1xbf16> -> vector<32x16xbf16>
    %c5_29 = arith.constant 5 : index
    %c0_30 = arith.constant 0 : index
    %106 = vector.load %arg1[%c5_29, %c0_30] : memref<9x16xbf16, #tpu.memory_space<vmem>>, vector<1x16xbf16>
    %107 = vector.broadcast %106 : vector<1x16xbf16> to vector<32x16xbf16>
    %108 = arith.mulf %105, %107 : vector<32x16xbf16>
    %109 = vector.extract_strided_slice %78 {offsets = [0, 3], sizes = [32, 13], strides = [1, 1]} : vector<32x16xbf16> to vector<32x13xbf16>
    %110 = vector.extract_strided_slice %78 {offsets = [0, 0], sizes = [32, 3], strides = [1, 1]} : vector<32x16xbf16> to vector<32x3xbf16>
    %111 = tpu.concatenate %109, %110 in 1 : vector<32x13xbf16>, vector<32x3xbf16> -> vector<32x16xbf16>
    %c6_31 = arith.constant 6 : index
    %c0_32 = arith.constant 0 : index
    %112 = vector.load %arg1[%c6_31, %c0_32] : memref<9x16xbf16, #tpu.memory_space<vmem>>, vector<1x16xbf16>
    %113 = vector.broadcast %112 : vector<1x16xbf16> to vector<32x16xbf16>
    %114 = arith.mulf %111, %113 : vector<32x16xbf16>
    %115 = vector.extract_strided_slice %78 {offsets = [0, 4], sizes = [32, 12], strides = [1, 1]} : vector<32x16xbf16> to vector<32x12xbf16>
    %116 = vector.extract_strided_slice %78 {offsets = [0, 0], sizes = [32, 4], strides = [1, 1]} : vector<32x16xbf16> to vector<32x4xbf16>
    %117 = tpu.concatenate %115, %116 in 1 : vector<32x12xbf16>, vector<32x4xbf16> -> vector<32x16xbf16>
    %c7_33 = arith.constant 7 : index
    %c0_34 = arith.constant 0 : index
    %118 = vector.load %arg1[%c7_33, %c0_34] : memref<9x16xbf16, #tpu.memory_space<vmem>>, vector<1x16xbf16>
    %119 = vector.broadcast %118 : vector<1x16xbf16> to vector<32x16xbf16>
    %120 = arith.mulf %117, %119 : vector<32x16xbf16>
    %121 = vector.extract_strided_slice %78 {offsets = [0, 5], sizes = [32, 11], strides = [1, 1]} : vector<32x16xbf16> to vector<32x11xbf16>
    %122 = vector.extract_strided_slice %78 {offsets = [0, 0], sizes = [32, 5], strides = [1, 1]} : vector<32x16xbf16> to vector<32x5xbf16>
    %123 = tpu.concatenate %121, %122 in 1 : vector<32x11xbf16>, vector<32x5xbf16> -> vector<32x16xbf16>
    %c8_35 = arith.constant 8 : index
    %c0_36 = arith.constant 0 : index
    %124 = vector.load %arg1[%c8_35, %c0_36] : memref<9x16xbf16, #tpu.memory_space<vmem>>, vector<1x16xbf16>
    %125 = vector.broadcast %124 : vector<1x16xbf16> to vector<32x16xbf16>
    %126 = arith.mulf %123, %125 : vector<32x16xbf16>
    %127 = tpu.concatenate %84, %90, %96, %102, %78, %108, %114, %120, %126 in 0 : vector<32x16xbf16>, vector<32x16xbf16>, vector<32x16xbf16>, vector<32x16xbf16>, vector<32x16xbf16>, vector<32x16xbf16>, vector<32x16xbf16>, vector<32x16xbf16>, vector<32x16xbf16> -> vector<288x16xbf16>
    %c0_37 = arith.constant 0 : index
    %c0_38 = arith.constant 0 : index
    %128 = vector.load %arg4[%c0_37, %c0_38] : memref<32x288xbf16, #tpu.memory_space<vmem>>, vector<32x288xbf16>
    %cst_39 = arith.constant dense<0.000000e+00> : vector<32x16xf32>
    %129 = tpu.matmul %128, %127, %cst_39 {dimension_numbers = #tpu.dot_dimension_numbers<[1], [0], [0], [1], [0, 0, 1, 1], [], []>} : vector<32x288xbf16>, vector<288x16xbf16>, vector<32x16xf32> -> vector<32x16xf32>
    %cst_40 = arith.constant dense<0.000000e+00> : vector<32xf32>
    %130 = vector.multi_reduction <add>, %129, %cst_40 [1] : vector<32x16xf32> to vector<32xf32>
    %131 = vector.shape_cast %130 : vector<32xf32> to vector<32x1xf32>
    %132 = arith.mulf %129, %129 : vector<32x16xf32>
    %cst_41 = arith.constant dense<0.000000e+00> : vector<32xf32>
    %133 = vector.multi_reduction <add>, %132, %cst_41 [1] : vector<32x16xf32> to vector<32xf32>
    %134 = vector.shape_cast %133 : vector<32xf32> to vector<32x1xf32>
    %cst_42 = arith.constant 6.250000e-02 : f32
    %135 = vector.broadcast %cst_42 : f32 to vector<32x1xf32>
    %136 = arith.mulf %131, %135 : vector<32x1xf32>
    %cst_43 = arith.constant 6.250000e-02 : f32
    %137 = vector.broadcast %cst_43 : f32 to vector<32x1xf32>
    %138 = arith.mulf %134, %137 : vector<32x1xf32>
    %139 = arith.mulf %136, %136 : vector<32x1xf32>
    %140 = arith.subf %138, %139 : vector<32x1xf32>
    %cst_44 = arith.constant 0.000000e+00 : f32
    %141 = vector.broadcast %cst_44 : f32 to vector<32x1xf32>
    %142 = arith.maximumf %140, %141 : vector<32x1xf32>
    %cst_45 = arith.constant 9.99999974E-6 : f32
    %143 = vector.broadcast %cst_45 : f32 to vector<32x1xf32>
    %144 = arith.addf %142, %143 : vector<32x1xf32>
    %145 = math.rsqrt %144 : vector<32x1xf32>
    %cst_46 = arith.constant 0.000000e+00 : f32
    %146 = vector.broadcast %cst_46 : f32 to vector<32x1xf32>
    %147 = arith.subf %146, %136 : vector<32x1xf32>
    %148 = arith.mulf %147, %145 : vector<32x1xf32>
    %149 = vector.broadcast %145 : vector<32x1xf32> to vector<32x16xf32>
    %150 = arith.mulf %129, %149 : vector<32x16xf32>
    %151 = vector.broadcast %148 : vector<32x1xf32> to vector<32x16xf32>
    %152 = arith.addf %150, %151 : vector<32x16xf32>
    %cst_47 = arith.constant 0.000000e+00 : f32
    %153 = vector.broadcast %cst_47 : f32 to vector<32x16xf32>
    %154 = arith.maximumf %152, %153 : vector<32x16xf32>
    %155 = arith.truncf %154 : vector<32x16xf32> to vector<32x16xbf16>
    %c0_48 = arith.constant 0 : index
    %c0_49 = arith.constant 0 : index
    %c0_50 = arith.constant 0 : index
    %156 = vector.load %arg5[%c0_48, %c0_49, %c0_50] : memref<1x32x16xbf16, #tpu.memory_space<vmem>>, vector<1x32x16xbf16>
    %157 = vector.shape_cast %156 : vector<1x32x16xbf16> to vector<32x16xbf16>
    %158 = vector.shape_cast %155 : vector<32x16xbf16> to vector<1x32x16xbf16>
    tpu.vector_store %arg5[%c0_48, %c0_49, %c0_50], %158 {strides = array<i32>} : memref<1x32x16xbf16, #tpu.memory_space<vmem>>, vector<1x32x16xbf16>,
    return
  }
  func.func @transform_0(%arg0: i32) -> (i32, i32) {
    %c0_i32 = arith.constant 0 : i32
    %c0_i32_0 = arith.constant 0 : i32
    %c0_i32_1 = arith.constant 0 : i32
    return %c0_i32, %c0_i32_0 : i32, i32
  }
  func.func @transform_1(%arg0: i32) -> (i32, i32, i32) {
    %c0_i32 = arith.constant 0 : i32
    %c0_i32_0 = arith.constant 0 : i32
    %c0_i32_1 = arith.constant 0 : i32
    return %arg0, %c0_i32, %c0_i32_0 : i32, i32, i32
  }
  func.func @transform_2(%arg0: i32) -> (i32, i32) {
    %c0_i32 = arith.constant 0 : i32
    %c0_i32_0 = arith.constant 0 : i32
    %c0_i32_1 = arith.constant 0 : i32
    return %c0_i32, %c0_i32_0 : i32, i32
  }
  func.func @transform_3(%arg0: i32) -> (i32, i32) {
    %c0_i32 = arith.constant 0 : i32
    %c0_i32_0 = arith.constant 0 : i32
    %c0_i32_1 = arith.constant 0 : i32
    return %c0_i32, %c0_i32_0 : i32, i32
  }
  func.func @transform_4(%arg0: i32) -> (i32, i32, i32) {
    %c0_i32 = arith.constant 0 : i32
    %c0_i32_0 = arith.constant 0 : i32
    %c0_i32_1 = arith.constant 0 : i32
    return %arg0, %c0_i32, %c0_i32_0 : i32, i32, i32
  }
}

module attributes {stable_mosaic.version = 11 : i64} {
  func.func @kernel(%arg0: i32, %arg1: memref<9x4xbf16, #tpu.memory_space<vmem>>, %arg2: memref<1x32x4xbf16, #tpu.memory_space<vmem>>, %arg3: memref<32x288xbf16, #tpu.memory_space<vmem>>, %arg4: memref<32x288xbf16, #tpu.memory_space<vmem>>, %arg5: memref<1x32x4xbf16, #tpu.memory_space<vmem>>) attributes {dimension_semantics = [#tpu.dimension_semantics<parallel>], iteration_bounds = array<i64: 2>, scalar_prefetch = 0 : i64, scratch_operands = 0 : i64, tpu.core_type = #tpu.core_type<tc>, window_params = [{pipeline_mode = #tpu.pipeline_mode<synchronous>, transform_indices = @transform_0, window_bounds = array<i64: 9, 4>}, {transform_indices = @transform_1, window_bounds = array<i64: 1, 32, 4>}, {pipeline_mode = #tpu.pipeline_mode<synchronous>, transform_indices = @transform_2, window_bounds = array<i64: 32, 288>}, {pipeline_mode = #tpu.pipeline_mode<synchronous>, transform_indices = @transform_3, window_bounds = array<i64: 32, 288>}, {transform_indices = @transform_4, window_bounds = array<i64: 1, 32, 4>}]} {
    %c0 = arith.constant 0 : index
    %c0_0 = arith.constant 0 : index
    %c0_1 = arith.constant 0 : index
    %0 = vector.load %arg2[%c0, %c0_0, %c0_1] : memref<1x32x4xbf16, #tpu.memory_space<vmem>>, vector<1x32x4xbf16>
    %1 = vector.shape_cast %0 : vector<1x32x4xbf16> to vector<32x4xbf16>
    %2 = vector.extract_strided_slice %1 {offsets = [0, 1], sizes = [32, 3], strides = [1, 1]} : vector<32x4xbf16> to vector<32x3xbf16>
    %3 = vector.extract_strided_slice %1 {offsets = [0, 0], sizes = [32, 1], strides = [1, 1]} : vector<32x4xbf16> to vector<32x1xbf16>
    %4 = tpu.concatenate %2, %3 in 1 : vector<32x3xbf16>, vector<32x1xbf16> -> vector<32x4xbf16>
    %c0_2 = arith.constant 0 : index
    %c0_3 = arith.constant 0 : index
    %5 = vector.load %arg1[%c0_2, %c0_3] : memref<9x4xbf16, #tpu.memory_space<vmem>>, vector<1x4xbf16>
    %6 = vector.broadcast %5 : vector<1x4xbf16> to vector<32x4xbf16>
    %7 = arith.mulf %4, %6 : vector<32x4xbf16>
    %8 = vector.extract_strided_slice %1 {offsets = [0, 2], sizes = [32, 2], strides = [1, 1]} : vector<32x4xbf16> to vector<32x2xbf16>
    %9 = vector.extract_strided_slice %1 {offsets = [0, 0], sizes = [32, 2], strides = [1, 1]} : vector<32x4xbf16> to vector<32x2xbf16>
    %10 = tpu.concatenate %8, %9 in 1 : vector<32x2xbf16>, vector<32x2xbf16> -> vector<32x4xbf16>
    %c1 = arith.constant 1 : index
    %c0_4 = arith.constant 0 : index
    %11 = vector.load %arg1[%c1, %c0_4] : memref<9x4xbf16, #tpu.memory_space<vmem>>, vector<1x4xbf16>
    %12 = vector.broadcast %11 : vector<1x4xbf16> to vector<32x4xbf16>
    %13 = arith.mulf %10, %12 : vector<32x4xbf16>
    %14 = vector.extract_strided_slice %1 {offsets = [0, 3], sizes = [32, 1], strides = [1, 1]} : vector<32x4xbf16> to vector<32x1xbf16>
    %15 = vector.extract_strided_slice %1 {offsets = [0, 0], sizes = [32, 3], strides = [1, 1]} : vector<32x4xbf16> to vector<32x3xbf16>
    %16 = tpu.concatenate %14, %15 in 1 : vector<32x1xbf16>, vector<32x3xbf16> -> vector<32x4xbf16>
    %c2 = arith.constant 2 : index
    %c0_5 = arith.constant 0 : index
    %17 = vector.load %arg1[%c2, %c0_5] : memref<9x4xbf16, #tpu.memory_space<vmem>>, vector<1x4xbf16>
    %18 = vector.broadcast %17 : vector<1x4xbf16> to vector<32x4xbf16>
    %19 = arith.mulf %16, %18 : vector<32x4xbf16>
    %20 = vector.extract_strided_slice %1 {offsets = [0, 3], sizes = [32, 1], strides = [1, 1]} : vector<32x4xbf16> to vector<32x1xbf16>
    %21 = vector.extract_strided_slice %1 {offsets = [0, 0], sizes = [32, 3], strides = [1, 1]} : vector<32x4xbf16> to vector<32x3xbf16>
    %22 = tpu.concatenate %20, %21 in 1 : vector<32x1xbf16>, vector<32x3xbf16> -> vector<32x4xbf16>
    %c3 = arith.constant 3 : index
    %c0_6 = arith.constant 0 : index
    %23 = vector.load %arg1[%c3, %c0_6] : memref<9x4xbf16, #tpu.memory_space<vmem>>, vector<1x4xbf16>
    %24 = vector.broadcast %23 : vector<1x4xbf16> to vector<32x4xbf16>
    %25 = arith.mulf %22, %24 : vector<32x4xbf16>
    %26 = vector.extract_strided_slice %1 {offsets = [0, 1], sizes = [32, 3], strides = [1, 1]} : vector<32x4xbf16> to vector<32x3xbf16>
    %27 = vector.extract_strided_slice %1 {offsets = [0, 0], sizes = [32, 1], strides = [1, 1]} : vector<32x4xbf16> to vector<32x1xbf16>
    %28 = tpu.concatenate %26, %27 in 1 : vector<32x3xbf16>, vector<32x1xbf16> -> vector<32x4xbf16>
    %c5 = arith.constant 5 : index
    %c0_7 = arith.constant 0 : index
    %29 = vector.load %arg1[%c5, %c0_7] : memref<9x4xbf16, #tpu.memory_space<vmem>>, vector<1x4xbf16>
    %30 = vector.broadcast %29 : vector<1x4xbf16> to vector<32x4xbf16>
    %31 = arith.mulf %28, %30 : vector<32x4xbf16>
    %32 = vector.extract_strided_slice %1 {offsets = [0, 1], sizes = [32, 3], strides = [1, 1]} : vector<32x4xbf16> to vector<32x3xbf16>
    %33 = vector.extract_strided_slice %1 {offsets = [0, 0], sizes = [32, 1], strides = [1, 1]} : vector<32x4xbf16> to vector<32x1xbf16>
    %34 = tpu.concatenate %32, %33 in 1 : vector<32x3xbf16>, vector<32x1xbf16> -> vector<32x4xbf16>
    %c6 = arith.constant 6 : index
    %c0_8 = arith.constant 0 : index
    %35 = vector.load %arg1[%c6, %c0_8] : memref<9x4xbf16, #tpu.memory_space<vmem>>, vector<1x4xbf16>
    %36 = vector.broadcast %35 : vector<1x4xbf16> to vector<32x4xbf16>
    %37 = arith.mulf %34, %36 : vector<32x4xbf16>
    %38 = vector.extract_strided_slice %1 {offsets = [0, 2], sizes = [32, 2], strides = [1, 1]} : vector<32x4xbf16> to vector<32x2xbf16>
    %39 = vector.extract_strided_slice %1 {offsets = [0, 0], sizes = [32, 2], strides = [1, 1]} : vector<32x4xbf16> to vector<32x2xbf16>
    %40 = tpu.concatenate %38, %39 in 1 : vector<32x2xbf16>, vector<32x2xbf16> -> vector<32x4xbf16>
    %c7 = arith.constant 7 : index
    %c0_9 = arith.constant 0 : index
    %41 = vector.load %arg1[%c7, %c0_9] : memref<9x4xbf16, #tpu.memory_space<vmem>>, vector<1x4xbf16>
    %42 = vector.broadcast %41 : vector<1x4xbf16> to vector<32x4xbf16>
    %43 = arith.mulf %40, %42 : vector<32x4xbf16>
    %44 = vector.extract_strided_slice %1 {offsets = [0, 3], sizes = [32, 1], strides = [1, 1]} : vector<32x4xbf16> to vector<32x1xbf16>
    %45 = vector.extract_strided_slice %1 {offsets = [0, 0], sizes = [32, 3], strides = [1, 1]} : vector<32x4xbf16> to vector<32x3xbf16>
    %46 = tpu.concatenate %44, %45 in 1 : vector<32x1xbf16>, vector<32x3xbf16> -> vector<32x4xbf16>
    %c8 = arith.constant 8 : index
    %c0_10 = arith.constant 0 : index
    %47 = vector.load %arg1[%c8, %c0_10] : memref<9x4xbf16, #tpu.memory_space<vmem>>, vector<1x4xbf16>
    %48 = vector.broadcast %47 : vector<1x4xbf16> to vector<32x4xbf16>
    %49 = arith.mulf %46, %48 : vector<32x4xbf16>
    %50 = tpu.concatenate %7, %13, %19, %25, %1, %31, %37, %43, %49 in 0 : vector<32x4xbf16>, vector<32x4xbf16>, vector<32x4xbf16>, vector<32x4xbf16>, vector<32x4xbf16>, vector<32x4xbf16>, vector<32x4xbf16>, vector<32x4xbf16>, vector<32x4xbf16> -> vector<288x4xbf16>
    %c0_11 = arith.constant 0 : index
    %c0_12 = arith.constant 0 : index
    %51 = vector.load %arg3[%c0_11, %c0_12] : memref<32x288xbf16, #tpu.memory_space<vmem>>, vector<32x288xbf16>
    %cst = arith.constant dense<0.000000e+00> : vector<32x4xf32>
    %52 = tpu.matmul %51, %50, %cst {dimension_numbers = #tpu.dot_dimension_numbers<[1], [0], [0], [1], [0, 0, 1, 1], [], []>} : vector<32x288xbf16>, vector<288x4xbf16>, vector<32x4xf32> -> vector<32x4xf32>
    %cst_13 = arith.constant dense<0.000000e+00> : vector<32xf32>
    %53 = vector.multi_reduction <add>, %52, %cst_13 [1] : vector<32x4xf32> to vector<32xf32>
    %54 = vector.shape_cast %53 : vector<32xf32> to vector<32x1xf32>
    %55 = arith.mulf %52, %52 : vector<32x4xf32>
    %cst_14 = arith.constant dense<0.000000e+00> : vector<32xf32>
    %56 = vector.multi_reduction <add>, %55, %cst_14 [1] : vector<32x4xf32> to vector<32xf32>
    %57 = vector.shape_cast %56 : vector<32xf32> to vector<32x1xf32>
    %cst_15 = arith.constant 2.500000e-01 : f32
    %58 = vector.broadcast %cst_15 : f32 to vector<32x1xf32>
    %59 = arith.mulf %54, %58 : vector<32x1xf32>
    %cst_16 = arith.constant 2.500000e-01 : f32
    %60 = vector.broadcast %cst_16 : f32 to vector<32x1xf32>
    %61 = arith.mulf %57, %60 : vector<32x1xf32>
    %62 = arith.mulf %59, %59 : vector<32x1xf32>
    %63 = arith.subf %61, %62 : vector<32x1xf32>
    %cst_17 = arith.constant 0.000000e+00 : f32
    %64 = vector.broadcast %cst_17 : f32 to vector<32x1xf32>
    %65 = arith.maximumf %63, %64 : vector<32x1xf32>
    %cst_18 = arith.constant 9.99999974E-6 : f32
    %66 = vector.broadcast %cst_18 : f32 to vector<32x1xf32>
    %67 = arith.addf %65, %66 : vector<32x1xf32>
    %68 = math.rsqrt %67 : vector<32x1xf32>
    %cst_19 = arith.constant 0.000000e+00 : f32
    %69 = vector.broadcast %cst_19 : f32 to vector<32x1xf32>
    %70 = arith.subf %69, %59 : vector<32x1xf32>
    %71 = arith.mulf %70, %68 : vector<32x1xf32>
    %72 = vector.broadcast %68 : vector<32x1xf32> to vector<32x4xf32>
    %73 = arith.mulf %52, %72 : vector<32x4xf32>
    %74 = vector.broadcast %71 : vector<32x1xf32> to vector<32x4xf32>
    %75 = arith.addf %73, %74 : vector<32x4xf32>
    %cst_20 = arith.constant 0.000000e+00 : f32
    %76 = vector.broadcast %cst_20 : f32 to vector<32x4xf32>
    %77 = arith.maximumf %75, %76 : vector<32x4xf32>
    %78 = arith.truncf %77 : vector<32x4xf32> to vector<32x4xbf16>
    %79 = vector.extract_strided_slice %78 {offsets = [0, 1], sizes = [32, 3], strides = [1, 1]} : vector<32x4xbf16> to vector<32x3xbf16>
    %80 = vector.extract_strided_slice %78 {offsets = [0, 0], sizes = [32, 1], strides = [1, 1]} : vector<32x4xbf16> to vector<32x1xbf16>
    %81 = tpu.concatenate %79, %80 in 1 : vector<32x3xbf16>, vector<32x1xbf16> -> vector<32x4xbf16>
    %c0_21 = arith.constant 0 : index
    %c0_22 = arith.constant 0 : index
    %82 = vector.load %arg1[%c0_21, %c0_22] : memref<9x4xbf16, #tpu.memory_space<vmem>>, vector<1x4xbf16>
    %83 = vector.broadcast %82 : vector<1x4xbf16> to vector<32x4xbf16>
    %84 = arith.mulf %81, %83 : vector<32x4xbf16>
    %85 = vector.extract_strided_slice %78 {offsets = [0, 2], sizes = [32, 2], strides = [1, 1]} : vector<32x4xbf16> to vector<32x2xbf16>
    %86 = vector.extract_strided_slice %78 {offsets = [0, 0], sizes = [32, 2], strides = [1, 1]} : vector<32x4xbf16> to vector<32x2xbf16>
    %87 = tpu.concatenate %85, %86 in 1 : vector<32x2xbf16>, vector<32x2xbf16> -> vector<32x4xbf16>
    %c1_23 = arith.constant 1 : index
    %c0_24 = arith.constant 0 : index
    %88 = vector.load %arg1[%c1_23, %c0_24] : memref<9x4xbf16, #tpu.memory_space<vmem>>, vector<1x4xbf16>
    %89 = vector.broadcast %88 : vector<1x4xbf16> to vector<32x4xbf16>
    %90 = arith.mulf %87, %89 : vector<32x4xbf16>
    %91 = vector.extract_strided_slice %78 {offsets = [0, 3], sizes = [32, 1], strides = [1, 1]} : vector<32x4xbf16> to vector<32x1xbf16>
    %92 = vector.extract_strided_slice %78 {offsets = [0, 0], sizes = [32, 3], strides = [1, 1]} : vector<32x4xbf16> to vector<32x3xbf16>
    %93 = tpu.concatenate %91, %92 in 1 : vector<32x1xbf16>, vector<32x3xbf16> -> vector<32x4xbf16>
    %c2_25 = arith.constant 2 : index
    %c0_26 = arith.constant 0 : index
    %94 = vector.load %arg1[%c2_25, %c0_26] : memref<9x4xbf16, #tpu.memory_space<vmem>>, vector<1x4xbf16>
    %95 = vector.broadcast %94 : vector<1x4xbf16> to vector<32x4xbf16>
    %96 = arith.mulf %93, %95 : vector<32x4xbf16>
    %97 = vector.extract_strided_slice %78 {offsets = [0, 3], sizes = [32, 1], strides = [1, 1]} : vector<32x4xbf16> to vector<32x1xbf16>
    %98 = vector.extract_strided_slice %78 {offsets = [0, 0], sizes = [32, 3], strides = [1, 1]} : vector<32x4xbf16> to vector<32x3xbf16>
    %99 = tpu.concatenate %97, %98 in 1 : vector<32x1xbf16>, vector<32x3xbf16> -> vector<32x4xbf16>
    %c3_27 = arith.constant 3 : index
    %c0_28 = arith.constant 0 : index
    %100 = vector.load %arg1[%c3_27, %c0_28] : memref<9x4xbf16, #tpu.memory_space<vmem>>, vector<1x4xbf16>
    %101 = vector.broadcast %100 : vector<1x4xbf16> to vector<32x4xbf16>
    %102 = arith.mulf %99, %101 : vector<32x4xbf16>
    %103 = vector.extract_strided_slice %78 {offsets = [0, 1], sizes = [32, 3], strides = [1, 1]} : vector<32x4xbf16> to vector<32x3xbf16>
    %104 = vector.extract_strided_slice %78 {offsets = [0, 0], sizes = [32, 1], strides = [1, 1]} : vector<32x4xbf16> to vector<32x1xbf16>
    %105 = tpu.concatenate %103, %104 in 1 : vector<32x3xbf16>, vector<32x1xbf16> -> vector<32x4xbf16>
    %c5_29 = arith.constant 5 : index
    %c0_30 = arith.constant 0 : index
    %106 = vector.load %arg1[%c5_29, %c0_30] : memref<9x4xbf16, #tpu.memory_space<vmem>>, vector<1x4xbf16>
    %107 = vector.broadcast %106 : vector<1x4xbf16> to vector<32x4xbf16>
    %108 = arith.mulf %105, %107 : vector<32x4xbf16>
    %109 = vector.extract_strided_slice %78 {offsets = [0, 1], sizes = [32, 3], strides = [1, 1]} : vector<32x4xbf16> to vector<32x3xbf16>
    %110 = vector.extract_strided_slice %78 {offsets = [0, 0], sizes = [32, 1], strides = [1, 1]} : vector<32x4xbf16> to vector<32x1xbf16>
    %111 = tpu.concatenate %109, %110 in 1 : vector<32x3xbf16>, vector<32x1xbf16> -> vector<32x4xbf16>
    %c6_31 = arith.constant 6 : index
    %c0_32 = arith.constant 0 : index
    %112 = vector.load %arg1[%c6_31, %c0_32] : memref<9x4xbf16, #tpu.memory_space<vmem>>, vector<1x4xbf16>
    %113 = vector.broadcast %112 : vector<1x4xbf16> to vector<32x4xbf16>
    %114 = arith.mulf %111, %113 : vector<32x4xbf16>
    %115 = vector.extract_strided_slice %78 {offsets = [0, 2], sizes = [32, 2], strides = [1, 1]} : vector<32x4xbf16> to vector<32x2xbf16>
    %116 = vector.extract_strided_slice %78 {offsets = [0, 0], sizes = [32, 2], strides = [1, 1]} : vector<32x4xbf16> to vector<32x2xbf16>
    %117 = tpu.concatenate %115, %116 in 1 : vector<32x2xbf16>, vector<32x2xbf16> -> vector<32x4xbf16>
    %c7_33 = arith.constant 7 : index
    %c0_34 = arith.constant 0 : index
    %118 = vector.load %arg1[%c7_33, %c0_34] : memref<9x4xbf16, #tpu.memory_space<vmem>>, vector<1x4xbf16>
    %119 = vector.broadcast %118 : vector<1x4xbf16> to vector<32x4xbf16>
    %120 = arith.mulf %117, %119 : vector<32x4xbf16>
    %121 = vector.extract_strided_slice %78 {offsets = [0, 3], sizes = [32, 1], strides = [1, 1]} : vector<32x4xbf16> to vector<32x1xbf16>
    %122 = vector.extract_strided_slice %78 {offsets = [0, 0], sizes = [32, 3], strides = [1, 1]} : vector<32x4xbf16> to vector<32x3xbf16>
    %123 = tpu.concatenate %121, %122 in 1 : vector<32x1xbf16>, vector<32x3xbf16> -> vector<32x4xbf16>
    %c8_35 = arith.constant 8 : index
    %c0_36 = arith.constant 0 : index
    %124 = vector.load %arg1[%c8_35, %c0_36] : memref<9x4xbf16, #tpu.memory_space<vmem>>, vector<1x4xbf16>
    %125 = vector.broadcast %124 : vector<1x4xbf16> to vector<32x4xbf16>
    %126 = arith.mulf %123, %125 : vector<32x4xbf16>
    %127 = tpu.concatenate %84, %90, %96, %102, %78, %108, %114, %120, %126 in 0 : vector<32x4xbf16>, vector<32x4xbf16>, vector<32x4xbf16>, vector<32x4xbf16>, vector<32x4xbf16>, vector<32x4xbf16>, vector<32x4xbf16>, vector<32x4xbf16>, vector<32x4xbf16> -> vector<288x4xbf16>
    %c0_37 = arith.constant 0 : index
    %c0_38 = arith.constant 0 : index
    %128 = vector.load %arg4[%c0_37, %c0_38] : memref<32x288xbf16, #tpu.memory_space<vmem>>, vector<32x288xbf16>
    %cst_39 = arith.constant dense<0.000000e+00> : vector<32x4xf32>
    %129 = tpu.matmul %128, %127, %cst_39 {dimension_numbers = #tpu.dot_dimension_numbers<[1], [0], [0], [1], [0, 0, 1, 1], [], []>} : vector<32x288xbf16>, vector<288x4xbf16>, vector<32x4xf32> -> vector<32x4xf32>
    %cst_40 = arith.constant dense<0.000000e+00> : vector<32xf32>
    %130 = vector.multi_reduction <add>, %129, %cst_40 [1] : vector<32x4xf32> to vector<32xf32>
    %131 = vector.shape_cast %130 : vector<32xf32> to vector<32x1xf32>
    %132 = arith.mulf %129, %129 : vector<32x4xf32>
    %cst_41 = arith.constant dense<0.000000e+00> : vector<32xf32>
    %133 = vector.multi_reduction <add>, %132, %cst_41 [1] : vector<32x4xf32> to vector<32xf32>
    %134 = vector.shape_cast %133 : vector<32xf32> to vector<32x1xf32>
    %cst_42 = arith.constant 2.500000e-01 : f32
    %135 = vector.broadcast %cst_42 : f32 to vector<32x1xf32>
    %136 = arith.mulf %131, %135 : vector<32x1xf32>
    %cst_43 = arith.constant 2.500000e-01 : f32
    %137 = vector.broadcast %cst_43 : f32 to vector<32x1xf32>
    %138 = arith.mulf %134, %137 : vector<32x1xf32>
    %139 = arith.mulf %136, %136 : vector<32x1xf32>
    %140 = arith.subf %138, %139 : vector<32x1xf32>
    %cst_44 = arith.constant 0.000000e+00 : f32
    %141 = vector.broadcast %cst_44 : f32 to vector<32x1xf32>
    %142 = arith.maximumf %140, %141 : vector<32x1xf32>
    %cst_45 = arith.constant 9.99999974E-6 : f32
    %143 = vector.broadcast %cst_45 : f32 to vector<32x1xf32>
    %144 = arith.addf %142, %143 : vector<32x1xf32>
    %145 = math.rsqrt %144 : vector<32x1xf32>
    %cst_46 = arith.constant 0.000000e+00 : f32
    %146 = vector.broadcast %cst_46 : f32 to vector<32x1xf32>
    %147 = arith.subf %146, %136 : vector<32x1xf32>
    %148 = arith.mulf %147, %145 : vector<32x1xf32>
    %149 = vector.broadcast %145 : vector<32x1xf32> to vector<32x4xf32>
    %150 = arith.mulf %129, %149 : vector<32x4xf32>
    %151 = vector.broadcast %148 : vector<32x1xf32> to vector<32x4xf32>
    %152 = arith.addf %150, %151 : vector<32x4xf32>
    %cst_47 = arith.constant 0.000000e+00 : f32
    %153 = vector.broadcast %cst_47 : f32 to vector<32x4xf32>
    %154 = arith.maximumf %152, %153 : vector<32x4xf32>
    %155 = arith.truncf %154 : vector<32x4xf32> to vector<32x4xbf16>
    %c0_48 = arith.constant 0 : index
    %c0_49 = arith.constant 0 : index
    %c0_50 = arith.constant 0 : index
    %156 = vector.load %arg5[%c0_48, %c0_49, %c0_50] : memref<1x32x4xbf16, #tpu.memory_space<vmem>>, vector<1x32x4xbf16>
    %157 = vector.shape_cast %156 : vector<1x32x4xbf16> to vector<32x4xbf16>
    %158 = vector.shape_cast %155 : vector<32x4xbf16> to vector<1x32x4xbf16>
    tpu.vector_store %arg5[%c0_48, %c0_49, %c0_50], %158 {strides = array<i32>} : memref<1x32x4xbf16, #tpu.memory_space<vmem>>, vector<1x32x4xbf16>,
    return
  }
  func.func @transform_0(%arg0: i32) -> (i32, i32) {
    %c0_i32 = arith.constant 0 : i32
    %c0_i32_0 = arith.constant 0 : i32
    %c0_i32_1 = arith.constant 0 : i32
    return %c0_i32, %c0_i32_0 : i32, i32
  }
  func.func @transform_1(%arg0: i32) -> (i32, i32, i32) {
    %c0_i32 = arith.constant 0 : i32
    %c0_i32_0 = arith.constant 0 : i32
    %c0_i32_1 = arith.constant 0 : i32
    return %arg0, %c0_i32, %c0_i32_0 : i32, i32, i32
  }
  func.func @transform_2(%arg0: i32) -> (i32, i32) {
    %c0_i32 = arith.constant 0 : i32
    %c0_i32_0 = arith.constant 0 : i32
    %c0_i32_1 = arith.constant 0 : i32
    return %c0_i32, %c0_i32_0 : i32, i32
  }
  func.func @transform_3(%arg0: i32) -> (i32, i32) {
    %c0_i32 = arith.constant 0 : i32
    %c0_i32_0 = arith.constant 0 : i32
    %c0_i32_1 = arith.constant 0 : i32
    return %c0_i32, %c0_i32_0 : i32, i32
  }
  func.func @transform_4(%arg0: i32) -> (i32, i32, i32) {
    %c0_i32 = arith.constant 0 : i32
    %c0_i32_0 = arith.constant 0 : i32
    %c0_i32_1 = arith.constant 0 : i32
    return %arg0, %c0_i32, %c0_i32_0 : i32, i32, i32
  }
}

module attributes {stable_mosaic.version = 11 : i64} {
  func.func @kernel(%arg0: i32, %arg1: memref<9x16xbf16, #tpu.memory_space<vmem>>, %arg2: memref<1x32x16xbf16, #tpu.memory_space<vmem>>, %arg3: memref<1x32x16xbf16, #tpu.memory_space<vmem>>, %arg4: memref<16x576xbf16, #tpu.memory_space<vmem>>, %arg5: memref<16x144xbf16, #tpu.memory_space<vmem>>, %arg6: memref<1x16x16xbf16, #tpu.memory_space<vmem>>) attributes {dimension_semantics = [#tpu.dimension_semantics<parallel>], iteration_bounds = array<i64: 2>, scalar_prefetch = 0 : i64, scratch_operands = 0 : i64, tpu.core_type = #tpu.core_type<tc>, window_params = [{pipeline_mode = #tpu.pipeline_mode<synchronous>, transform_indices = @transform_0, window_bounds = array<i64: 9, 16>}, {transform_indices = @transform_1, window_bounds = array<i64: 1, 32, 16>}, {transform_indices = @transform_2, window_bounds = array<i64: 1, 32, 16>}, {pipeline_mode = #tpu.pipeline_mode<synchronous>, transform_indices = @transform_3, window_bounds = array<i64: 16, 576>}, {pipeline_mode = #tpu.pipeline_mode<synchronous>, transform_indices = @transform_4, window_bounds = array<i64: 16, 144>}, {transform_indices = @transform_5, window_bounds = array<i64: 1, 16, 16>}]} {
    %c0 = arith.constant 0 : index
    %c0_0 = arith.constant 0 : index
    %c0_1 = arith.constant 0 : index
    %0 = vector.load %arg2[%c0, %c0_0, %c0_1] : memref<1x32x16xbf16, #tpu.memory_space<vmem>>, vector<1x32x16xbf16>
    %1 = vector.shape_cast %0 : vector<1x32x16xbf16> to vector<32x16xbf16>
    %2 = vector.extract_strided_slice %1 {offsets = [0, 11], sizes = [32, 5], strides = [1, 1]} : vector<32x16xbf16> to vector<32x5xbf16>
    %3 = vector.extract_strided_slice %1 {offsets = [0, 0], sizes = [32, 11], strides = [1, 1]} : vector<32x16xbf16> to vector<32x11xbf16>
    %4 = tpu.concatenate %2, %3 in 1 : vector<32x5xbf16>, vector<32x11xbf16> -> vector<32x16xbf16>
    %c0_2 = arith.constant 0 : index
    %c0_3 = arith.constant 0 : index
    %5 = vector.load %arg1[%c0_2, %c0_3] : memref<9x16xbf16, #tpu.memory_space<vmem>>, vector<1x16xbf16>
    %6 = vector.broadcast %5 : vector<1x16xbf16> to vector<32x16xbf16>
    %7 = arith.mulf %4, %6 : vector<32x16xbf16>
    %8 = vector.extract_strided_slice %1 {offsets = [0, 12], sizes = [32, 4], strides = [1, 1]} : vector<32x16xbf16> to vector<32x4xbf16>
    %9 = vector.extract_strided_slice %1 {offsets = [0, 0], sizes = [32, 12], strides = [1, 1]} : vector<32x16xbf16> to vector<32x12xbf16>
    %10 = tpu.concatenate %8, %9 in 1 : vector<32x4xbf16>, vector<32x12xbf16> -> vector<32x16xbf16>
    %c1 = arith.constant 1 : index
    %c0_4 = arith.constant 0 : index
    %11 = vector.load %arg1[%c1, %c0_4] : memref<9x16xbf16, #tpu.memory_space<vmem>>, vector<1x16xbf16>
    %12 = vector.broadcast %11 : vector<1x16xbf16> to vector<32x16xbf16>
    %13 = arith.mulf %10, %12 : vector<32x16xbf16>
    %14 = vector.extract_strided_slice %1 {offsets = [0, 13], sizes = [32, 3], strides = [1, 1]} : vector<32x16xbf16> to vector<32x3xbf16>
    %15 = vector.extract_strided_slice %1 {offsets = [0, 0], sizes = [32, 13], strides = [1, 1]} : vector<32x16xbf16> to vector<32x13xbf16>
    %16 = tpu.concatenate %14, %15 in 1 : vector<32x3xbf16>, vector<32x13xbf16> -> vector<32x16xbf16>
    %c2 = arith.constant 2 : index
    %c0_5 = arith.constant 0 : index
    %17 = vector.load %arg1[%c2, %c0_5] : memref<9x16xbf16, #tpu.memory_space<vmem>>, vector<1x16xbf16>
    %18 = vector.broadcast %17 : vector<1x16xbf16> to vector<32x16xbf16>
    %19 = arith.mulf %16, %18 : vector<32x16xbf16>
    %20 = vector.extract_strided_slice %1 {offsets = [0, 15], sizes = [32, 1], strides = [1, 1]} : vector<32x16xbf16> to vector<32x1xbf16>
    %21 = vector.extract_strided_slice %1 {offsets = [0, 0], sizes = [32, 15], strides = [1, 1]} : vector<32x16xbf16> to vector<32x15xbf16>
    %22 = tpu.concatenate %20, %21 in 1 : vector<32x1xbf16>, vector<32x15xbf16> -> vector<32x16xbf16>
    %c3 = arith.constant 3 : index
    %c0_6 = arith.constant 0 : index
    %23 = vector.load %arg1[%c3, %c0_6] : memref<9x16xbf16, #tpu.memory_space<vmem>>, vector<1x16xbf16>
    %24 = vector.broadcast %23 : vector<1x16xbf16> to vector<32x16xbf16>
    %25 = arith.mulf %22, %24 : vector<32x16xbf16>
    %26 = vector.extract_strided_slice %1 {offsets = [0, 1], sizes = [32, 15], strides = [1, 1]} : vector<32x16xbf16> to vector<32x15xbf16>
    %27 = vector.extract_strided_slice %1 {offsets = [0, 0], sizes = [32, 1], strides = [1, 1]} : vector<32x16xbf16> to vector<32x1xbf16>
    %28 = tpu.concatenate %26, %27 in 1 : vector<32x15xbf16>, vector<32x1xbf16> -> vector<32x16xbf16>
    %c5 = arith.constant 5 : index
    %c0_7 = arith.constant 0 : index
    %29 = vector.load %arg1[%c5, %c0_7] : memref<9x16xbf16, #tpu.memory_space<vmem>>, vector<1x16xbf16>
    %30 = vector.broadcast %29 : vector<1x16xbf16> to vector<32x16xbf16>
    %31 = arith.mulf %28, %30 : vector<32x16xbf16>
    %32 = vector.extract_strided_slice %1 {offsets = [0, 3], sizes = [32, 13], strides = [1, 1]} : vector<32x16xbf16> to vector<32x13xbf16>
    %33 = vector.extract_strided_slice %1 {offsets = [0, 0], sizes = [32, 3], strides = [1, 1]} : vector<32x16xbf16> to vector<32x3xbf16>
    %34 = tpu.concatenate %32, %33 in 1 : vector<32x13xbf16>, vector<32x3xbf16> -> vector<32x16xbf16>
    %c6 = arith.constant 6 : index
    %c0_8 = arith.constant 0 : index
    %35 = vector.load %arg1[%c6, %c0_8] : memref<9x16xbf16, #tpu.memory_space<vmem>>, vector<1x16xbf16>
    %36 = vector.broadcast %35 : vector<1x16xbf16> to vector<32x16xbf16>
    %37 = arith.mulf %34, %36 : vector<32x16xbf16>
    %38 = vector.extract_strided_slice %1 {offsets = [0, 4], sizes = [32, 12], strides = [1, 1]} : vector<32x16xbf16> to vector<32x12xbf16>
    %39 = vector.extract_strided_slice %1 {offsets = [0, 0], sizes = [32, 4], strides = [1, 1]} : vector<32x16xbf16> to vector<32x4xbf16>
    %40 = tpu.concatenate %38, %39 in 1 : vector<32x12xbf16>, vector<32x4xbf16> -> vector<32x16xbf16>
    %c7 = arith.constant 7 : index
    %c0_9 = arith.constant 0 : index
    %41 = vector.load %arg1[%c7, %c0_9] : memref<9x16xbf16, #tpu.memory_space<vmem>>, vector<1x16xbf16>
    %42 = vector.broadcast %41 : vector<1x16xbf16> to vector<32x16xbf16>
    %43 = arith.mulf %40, %42 : vector<32x16xbf16>
    %44 = vector.extract_strided_slice %1 {offsets = [0, 5], sizes = [32, 11], strides = [1, 1]} : vector<32x16xbf16> to vector<32x11xbf16>
    %45 = vector.extract_strided_slice %1 {offsets = [0, 0], sizes = [32, 5], strides = [1, 1]} : vector<32x16xbf16> to vector<32x5xbf16>
    %46 = tpu.concatenate %44, %45 in 1 : vector<32x11xbf16>, vector<32x5xbf16> -> vector<32x16xbf16>
    %c8 = arith.constant 8 : index
    %c0_10 = arith.constant 0 : index
    %47 = vector.load %arg1[%c8, %c0_10] : memref<9x16xbf16, #tpu.memory_space<vmem>>, vector<1x16xbf16>
    %48 = vector.broadcast %47 : vector<1x16xbf16> to vector<32x16xbf16>
    %49 = arith.mulf %46, %48 : vector<32x16xbf16>
    %c0_11 = arith.constant 0 : index
    %c0_12 = arith.constant 0 : index
    %c0_13 = arith.constant 0 : index
    %50 = vector.load %arg3[%c0_11, %c0_12, %c0_13] : memref<1x32x16xbf16, #tpu.memory_space<vmem>>, vector<1x32x16xbf16>
    %51 = vector.shape_cast %50 : vector<1x32x16xbf16> to vector<32x16xbf16>
    %52 = vector.extract_strided_slice %51 {offsets = [0, 11], sizes = [32, 5], strides = [1, 1]} : vector<32x16xbf16> to vector<32x5xbf16>
    %53 = vector.extract_strided_slice %51 {offsets = [0, 0], sizes = [32, 11], strides = [1, 1]} : vector<32x16xbf16> to vector<32x11xbf16>
    %54 = tpu.concatenate %52, %53 in 1 : vector<32x5xbf16>, vector<32x11xbf16> -> vector<32x16xbf16>
    %c0_14 = arith.constant 0 : index
    %c0_15 = arith.constant 0 : index
    %55 = vector.load %arg1[%c0_14, %c0_15] : memref<9x16xbf16, #tpu.memory_space<vmem>>, vector<1x16xbf16>
    %56 = vector.broadcast %55 : vector<1x16xbf16> to vector<32x16xbf16>
    %57 = arith.mulf %54, %56 : vector<32x16xbf16>
    %58 = vector.extract_strided_slice %51 {offsets = [0, 12], sizes = [32, 4], strides = [1, 1]} : vector<32x16xbf16> to vector<32x4xbf16>
    %59 = vector.extract_strided_slice %51 {offsets = [0, 0], sizes = [32, 12], strides = [1, 1]} : vector<32x16xbf16> to vector<32x12xbf16>
    %60 = tpu.concatenate %58, %59 in 1 : vector<32x4xbf16>, vector<32x12xbf16> -> vector<32x16xbf16>
    %c1_16 = arith.constant 1 : index
    %c0_17 = arith.constant 0 : index
    %61 = vector.load %arg1[%c1_16, %c0_17] : memref<9x16xbf16, #tpu.memory_space<vmem>>, vector<1x16xbf16>
    %62 = vector.broadcast %61 : vector<1x16xbf16> to vector<32x16xbf16>
    %63 = arith.mulf %60, %62 : vector<32x16xbf16>
    %64 = vector.extract_strided_slice %51 {offsets = [0, 13], sizes = [32, 3], strides = [1, 1]} : vector<32x16xbf16> to vector<32x3xbf16>
    %65 = vector.extract_strided_slice %51 {offsets = [0, 0], sizes = [32, 13], strides = [1, 1]} : vector<32x16xbf16> to vector<32x13xbf16>
    %66 = tpu.concatenate %64, %65 in 1 : vector<32x3xbf16>, vector<32x13xbf16> -> vector<32x16xbf16>
    %c2_18 = arith.constant 2 : index
    %c0_19 = arith.constant 0 : index
    %67 = vector.load %arg1[%c2_18, %c0_19] : memref<9x16xbf16, #tpu.memory_space<vmem>>, vector<1x16xbf16>
    %68 = vector.broadcast %67 : vector<1x16xbf16> to vector<32x16xbf16>
    %69 = arith.mulf %66, %68 : vector<32x16xbf16>
    %70 = vector.extract_strided_slice %51 {offsets = [0, 15], sizes = [32, 1], strides = [1, 1]} : vector<32x16xbf16> to vector<32x1xbf16>
    %71 = vector.extract_strided_slice %51 {offsets = [0, 0], sizes = [32, 15], strides = [1, 1]} : vector<32x16xbf16> to vector<32x15xbf16>
    %72 = tpu.concatenate %70, %71 in 1 : vector<32x1xbf16>, vector<32x15xbf16> -> vector<32x16xbf16>
    %c3_20 = arith.constant 3 : index
    %c0_21 = arith.constant 0 : index
    %73 = vector.load %arg1[%c3_20, %c0_21] : memref<9x16xbf16, #tpu.memory_space<vmem>>, vector<1x16xbf16>
    %74 = vector.broadcast %73 : vector<1x16xbf16> to vector<32x16xbf16>
    %75 = arith.mulf %72, %74 : vector<32x16xbf16>
    %76 = vector.extract_strided_slice %51 {offsets = [0, 1], sizes = [32, 15], strides = [1, 1]} : vector<32x16xbf16> to vector<32x15xbf16>
    %77 = vector.extract_strided_slice %51 {offsets = [0, 0], sizes = [32, 1], strides = [1, 1]} : vector<32x16xbf16> to vector<32x1xbf16>
    %78 = tpu.concatenate %76, %77 in 1 : vector<32x15xbf16>, vector<32x1xbf16> -> vector<32x16xbf16>
    %c5_22 = arith.constant 5 : index
    %c0_23 = arith.constant 0 : index
    %79 = vector.load %arg1[%c5_22, %c0_23] : memref<9x16xbf16, #tpu.memory_space<vmem>>, vector<1x16xbf16>
    %80 = vector.broadcast %79 : vector<1x16xbf16> to vector<32x16xbf16>
    %81 = arith.mulf %78, %80 : vector<32x16xbf16>
    %82 = vector.extract_strided_slice %51 {offsets = [0, 3], sizes = [32, 13], strides = [1, 1]} : vector<32x16xbf16> to vector<32x13xbf16>
    %83 = vector.extract_strided_slice %51 {offsets = [0, 0], sizes = [32, 3], strides = [1, 1]} : vector<32x16xbf16> to vector<32x3xbf16>
    %84 = tpu.concatenate %82, %83 in 1 : vector<32x13xbf16>, vector<32x3xbf16> -> vector<32x16xbf16>
    %c6_24 = arith.constant 6 : index
    %c0_25 = arith.constant 0 : index
    %85 = vector.load %arg1[%c6_24, %c0_25] : memref<9x16xbf16, #tpu.memory_space<vmem>>, vector<1x16xbf16>
    %86 = vector.broadcast %85 : vector<1x16xbf16> to vector<32x16xbf16>
    %87 = arith.mulf %84, %86 : vector<32x16xbf16>
    %88 = vector.extract_strided_slice %51 {offsets = [0, 4], sizes = [32, 12], strides = [1, 1]} : vector<32x16xbf16> to vector<32x12xbf16>
    %89 = vector.extract_strided_slice %51 {offsets = [0, 0], sizes = [32, 4], strides = [1, 1]} : vector<32x16xbf16> to vector<32x4xbf16>
    %90 = tpu.concatenate %88, %89 in 1 : vector<32x12xbf16>, vector<32x4xbf16> -> vector<32x16xbf16>
    %c7_26 = arith.constant 7 : index
    %c0_27 = arith.constant 0 : index
    %91 = vector.load %arg1[%c7_26, %c0_27] : memref<9x16xbf16, #tpu.memory_space<vmem>>, vector<1x16xbf16>
    %92 = vector.broadcast %91 : vector<1x16xbf16> to vector<32x16xbf16>
    %93 = arith.mulf %90, %92 : vector<32x16xbf16>
    %94 = vector.extract_strided_slice %51 {offsets = [0, 5], sizes = [32, 11], strides = [1, 1]} : vector<32x16xbf16> to vector<32x11xbf16>
    %95 = vector.extract_strided_slice %51 {offsets = [0, 0], sizes = [32, 5], strides = [1, 1]} : vector<32x16xbf16> to vector<32x5xbf16>
    %96 = tpu.concatenate %94, %95 in 1 : vector<32x11xbf16>, vector<32x5xbf16> -> vector<32x16xbf16>
    %c8_28 = arith.constant 8 : index
    %c0_29 = arith.constant 0 : index
    %97 = vector.load %arg1[%c8_28, %c0_29] : memref<9x16xbf16, #tpu.memory_space<vmem>>, vector<1x16xbf16>
    %98 = vector.broadcast %97 : vector<1x16xbf16> to vector<32x16xbf16>
    %99 = arith.mulf %96, %98 : vector<32x16xbf16>
    %100 = tpu.concatenate %7, %13, %19, %25, %1, %31, %37, %43, %49, %57, %63, %69, %75, %51, %81, %87 in 0 : vector<32x16xbf16>, vector<32x16xbf16>, vector<32x16xbf16>, vector<32x16xbf16>, vector<32x16xbf16>, vector<32x16xbf16>, vector<32x16xbf16>, vector<32x16xbf16>, vector<32x16xbf16>, vector<32x16xbf16>, vector<32x16xbf16>, vector<32x16xbf16>, vector<32x16xbf16>, vector<32x16xbf16>, vector<32x16xbf16>, vector<32x16xbf16> -> vector<512x16xbf16>
    %101 = tpu.concatenate %93, %99 in 0 : vector<32x16xbf16>, vector<32x16xbf16> -> vector<64x16xbf16>
    %102 = tpu.concatenate %100, %101 in 0 : vector<512x16xbf16>, vector<64x16xbf16> -> vector<576x16xbf16>
    %c0_30 = arith.constant 0 : index
    %c0_31 = arith.constant 0 : index
    %103 = vector.load %arg4[%c0_30, %c0_31] : memref<16x576xbf16, #tpu.memory_space<vmem>>, vector<16x576xbf16>
    %cst = arith.constant dense<0.000000e+00> : vector<16x16xf32>
    %104 = tpu.matmul %103, %102, %cst {dimension_numbers = #tpu.dot_dimension_numbers<[1], [0], [0], [1], [0, 0, 1, 1], [], []>} : vector<16x576xbf16>, vector<576x16xbf16>, vector<16x16xf32> -> vector<16x16xf32>
    %cst_32 = arith.constant dense<0.000000e+00> : vector<16xf32>
    %105 = vector.multi_reduction <add>, %104, %cst_32 [1] : vector<16x16xf32> to vector<16xf32>
    %106 = vector.shape_cast %105 : vector<16xf32> to vector<16x1xf32>
    %107 = arith.mulf %104, %104 : vector<16x16xf32>
    %cst_33 = arith.constant dense<0.000000e+00> : vector<16xf32>
    %108 = vector.multi_reduction <add>, %107, %cst_33 [1] : vector<16x16xf32> to vector<16xf32>
    %109 = vector.shape_cast %108 : vector<16xf32> to vector<16x1xf32>
    %cst_34 = arith.constant 6.250000e-02 : f32
    %110 = vector.broadcast %cst_34 : f32 to vector<16x1xf32>
    %111 = arith.mulf %106, %110 : vector<16x1xf32>
    %cst_35 = arith.constant 6.250000e-02 : f32
    %112 = vector.broadcast %cst_35 : f32 to vector<16x1xf32>
    %113 = arith.mulf %109, %112 : vector<16x1xf32>
    %114 = arith.mulf %111, %111 : vector<16x1xf32>
    %115 = arith.subf %113, %114 : vector<16x1xf32>
    %cst_36 = arith.constant 0.000000e+00 : f32
    %116 = vector.broadcast %cst_36 : f32 to vector<16x1xf32>
    %117 = arith.maximumf %115, %116 : vector<16x1xf32>
    %cst_37 = arith.constant 9.99999974E-6 : f32
    %118 = vector.broadcast %cst_37 : f32 to vector<16x1xf32>
    %119 = arith.addf %117, %118 : vector<16x1xf32>
    %120 = math.rsqrt %119 : vector<16x1xf32>
    %cst_38 = arith.constant 0.000000e+00 : f32
    %121 = vector.broadcast %cst_38 : f32 to vector<16x1xf32>
    %122 = arith.subf %121, %111 : vector<16x1xf32>
    %123 = arith.mulf %122, %120 : vector<16x1xf32>
    %124 = vector.broadcast %120 : vector<16x1xf32> to vector<16x16xf32>
    %125 = arith.mulf %104, %124 : vector<16x16xf32>
    %126 = vector.broadcast %123 : vector<16x1xf32> to vector<16x16xf32>
    %127 = arith.addf %125, %126 : vector<16x16xf32>
    %cst_39 = arith.constant 0.000000e+00 : f32
    %128 = vector.broadcast %cst_39 : f32 to vector<16x16xf32>
    %129 = arith.maximumf %127, %128 : vector<16x16xf32>
    %130 = arith.truncf %129 : vector<16x16xf32> to vector<16x16xbf16>
    %131 = vector.extract_strided_slice %130 {offsets = [0, 11], sizes = [16, 5], strides = [1, 1]} : vector<16x16xbf16> to vector<16x5xbf16>
    %132 = vector.extract_strided_slice %130 {offsets = [0, 0], sizes = [16, 11], strides = [1, 1]} : vector<16x16xbf16> to vector<16x11xbf16>
    %133 = tpu.concatenate %131, %132 in 1 : vector<16x5xbf16>, vector<16x11xbf16> -> vector<16x16xbf16>
    %c0_40 = arith.constant 0 : index
    %c0_41 = arith.constant 0 : index
    %134 = vector.load %arg1[%c0_40, %c0_41] : memref<9x16xbf16, #tpu.memory_space<vmem>>, vector<1x16xbf16>
    %135 = vector.broadcast %134 : vector<1x16xbf16> to vector<16x16xbf16>
    %136 = arith.mulf %133, %135 : vector<16x16xbf16>
    %137 = vector.extract_strided_slice %130 {offsets = [0, 12], sizes = [16, 4], strides = [1, 1]} : vector<16x16xbf16> to vector<16x4xbf16>
    %138 = vector.extract_strided_slice %130 {offsets = [0, 0], sizes = [16, 12], strides = [1, 1]} : vector<16x16xbf16> to vector<16x12xbf16>
    %139 = tpu.concatenate %137, %138 in 1 : vector<16x4xbf16>, vector<16x12xbf16> -> vector<16x16xbf16>
    %c1_42 = arith.constant 1 : index
    %c0_43 = arith.constant 0 : index
    %140 = vector.load %arg1[%c1_42, %c0_43] : memref<9x16xbf16, #tpu.memory_space<vmem>>, vector<1x16xbf16>
    %141 = vector.broadcast %140 : vector<1x16xbf16> to vector<16x16xbf16>
    %142 = arith.mulf %139, %141 : vector<16x16xbf16>
    %143 = vector.extract_strided_slice %130 {offsets = [0, 13], sizes = [16, 3], strides = [1, 1]} : vector<16x16xbf16> to vector<16x3xbf16>
    %144 = vector.extract_strided_slice %130 {offsets = [0, 0], sizes = [16, 13], strides = [1, 1]} : vector<16x16xbf16> to vector<16x13xbf16>
    %145 = tpu.concatenate %143, %144 in 1 : vector<16x3xbf16>, vector<16x13xbf16> -> vector<16x16xbf16>
    %c2_44 = arith.constant 2 : index
    %c0_45 = arith.constant 0 : index
    %146 = vector.load %arg1[%c2_44, %c0_45] : memref<9x16xbf16, #tpu.memory_space<vmem>>, vector<1x16xbf16>
    %147 = vector.broadcast %146 : vector<1x16xbf16> to vector<16x16xbf16>
    %148 = arith.mulf %145, %147 : vector<16x16xbf16>
    %149 = vector.extract_strided_slice %130 {offsets = [0, 15], sizes = [16, 1], strides = [1, 1]} : vector<16x16xbf16> to vector<16x1xbf16>
    %150 = vector.extract_strided_slice %130 {offsets = [0, 0], sizes = [16, 15], strides = [1, 1]} : vector<16x16xbf16> to vector<16x15xbf16>
    %151 = tpu.concatenate %149, %150 in 1 : vector<16x1xbf16>, vector<16x15xbf16> -> vector<16x16xbf16>
    %c3_46 = arith.constant 3 : index
    %c0_47 = arith.constant 0 : index
    %152 = vector.load %arg1[%c3_46, %c0_47] : memref<9x16xbf16, #tpu.memory_space<vmem>>, vector<1x16xbf16>
    %153 = vector.broadcast %152 : vector<1x16xbf16> to vector<16x16xbf16>
    %154 = arith.mulf %151, %153 : vector<16x16xbf16>
    %155 = vector.extract_strided_slice %130 {offsets = [0, 1], sizes = [16, 15], strides = [1, 1]} : vector<16x16xbf16> to vector<16x15xbf16>
    %156 = vector.extract_strided_slice %130 {offsets = [0, 0], sizes = [16, 1], strides = [1, 1]} : vector<16x16xbf16> to vector<16x1xbf16>
    %157 = tpu.concatenate %155, %156 in 1 : vector<16x15xbf16>, vector<16x1xbf16> -> vector<16x16xbf16>
    %c5_48 = arith.constant 5 : index
    %c0_49 = arith.constant 0 : index
    %158 = vector.load %arg1[%c5_48, %c0_49] : memref<9x16xbf16, #tpu.memory_space<vmem>>, vector<1x16xbf16>
    %159 = vector.broadcast %158 : vector<1x16xbf16> to vector<16x16xbf16>
    %160 = arith.mulf %157, %159 : vector<16x16xbf16>
    %161 = vector.extract_strided_slice %130 {offsets = [0, 3], sizes = [16, 13], strides = [1, 1]} : vector<16x16xbf16> to vector<16x13xbf16>
    %162 = vector.extract_strided_slice %130 {offsets = [0, 0], sizes = [16, 3], strides = [1, 1]} : vector<16x16xbf16> to vector<16x3xbf16>
    %163 = tpu.concatenate %161, %162 in 1 : vector<16x13xbf16>, vector<16x3xbf16> -> vector<16x16xbf16>
    %c6_50 = arith.constant 6 : index
    %c0_51 = arith.constant 0 : index
    %164 = vector.load %arg1[%c6_50, %c0_51] : memref<9x16xbf16, #tpu.memory_space<vmem>>, vector<1x16xbf16>
    %165 = vector.broadcast %164 : vector<1x16xbf16> to vector<16x16xbf16>
    %166 = arith.mulf %163, %165 : vector<16x16xbf16>
    %167 = vector.extract_strided_slice %130 {offsets = [0, 4], sizes = [16, 12], strides = [1, 1]} : vector<16x16xbf16> to vector<16x12xbf16>
    %168 = vector.extract_strided_slice %130 {offsets = [0, 0], sizes = [16, 4], strides = [1, 1]} : vector<16x16xbf16> to vector<16x4xbf16>
    %169 = tpu.concatenate %167, %168 in 1 : vector<16x12xbf16>, vector<16x4xbf16> -> vector<16x16xbf16>
    %c7_52 = arith.constant 7 : index
    %c0_53 = arith.constant 0 : index
    %170 = vector.load %arg1[%c7_52, %c0_53] : memref<9x16xbf16, #tpu.memory_space<vmem>>, vector<1x16xbf16>
    %171 = vector.broadcast %170 : vector<1x16xbf16> to vector<16x16xbf16>
    %172 = arith.mulf %169, %171 : vector<16x16xbf16>
    %173 = vector.extract_strided_slice %130 {offsets = [0, 5], sizes = [16, 11], strides = [1, 1]} : vector<16x16xbf16> to vector<16x11xbf16>
    %174 = vector.extract_strided_slice %130 {offsets = [0, 0], sizes = [16, 5], strides = [1, 1]} : vector<16x16xbf16> to vector<16x5xbf16>
    %175 = tpu.concatenate %173, %174 in 1 : vector<16x11xbf16>, vector<16x5xbf16> -> vector<16x16xbf16>
    %c8_54 = arith.constant 8 : index
    %c0_55 = arith.constant 0 : index
    %176 = vector.load %arg1[%c8_54, %c0_55] : memref<9x16xbf16, #tpu.memory_space<vmem>>, vector<1x16xbf16>
    %177 = vector.broadcast %176 : vector<1x16xbf16> to vector<16x16xbf16>
    %178 = arith.mulf %175, %177 : vector<16x16xbf16>
    %179 = tpu.concatenate %136, %142, %148, %154, %130, %160, %166, %172, %178 in 0 : vector<16x16xbf16>, vector<16x16xbf16>, vector<16x16xbf16>, vector<16x16xbf16>, vector<16x16xbf16>, vector<16x16xbf16>, vector<16x16xbf16>, vector<16x16xbf16>, vector<16x16xbf16> -> vector<144x16xbf16>
    %c0_56 = arith.constant 0 : index
    %c0_57 = arith.constant 0 : index
    %180 = vector.load %arg5[%c0_56, %c0_57] : memref<16x144xbf16, #tpu.memory_space<vmem>>, vector<16x144xbf16>
    %cst_58 = arith.constant dense<0.000000e+00> : vector<16x16xf32>
    %181 = tpu.matmul %180, %179, %cst_58 {dimension_numbers = #tpu.dot_dimension_numbers<[1], [0], [0], [1], [0, 0, 1, 1], [], []>} : vector<16x144xbf16>, vector<144x16xbf16>, vector<16x16xf32> -> vector<16x16xf32>
    %cst_59 = arith.constant dense<0.000000e+00> : vector<16xf32>
    %182 = vector.multi_reduction <add>, %181, %cst_59 [1] : vector<16x16xf32> to vector<16xf32>
    %183 = vector.shape_cast %182 : vector<16xf32> to vector<16x1xf32>
    %184 = arith.mulf %181, %181 : vector<16x16xf32>
    %cst_60 = arith.constant dense<0.000000e+00> : vector<16xf32>
    %185 = vector.multi_reduction <add>, %184, %cst_60 [1] : vector<16x16xf32> to vector<16xf32>
    %186 = vector.shape_cast %185 : vector<16xf32> to vector<16x1xf32>
    %cst_61 = arith.constant 6.250000e-02 : f32
    %187 = vector.broadcast %cst_61 : f32 to vector<16x1xf32>
    %188 = arith.mulf %183, %187 : vector<16x1xf32>
    %cst_62 = arith.constant 6.250000e-02 : f32
    %189 = vector.broadcast %cst_62 : f32 to vector<16x1xf32>
    %190 = arith.mulf %186, %189 : vector<16x1xf32>
    %191 = arith.mulf %188, %188 : vector<16x1xf32>
    %192 = arith.subf %190, %191 : vector<16x1xf32>
    %cst_63 = arith.constant 0.000000e+00 : f32
    %193 = vector.broadcast %cst_63 : f32 to vector<16x1xf32>
    %194 = arith.maximumf %192, %193 : vector<16x1xf32>
    %cst_64 = arith.constant 9.99999974E-6 : f32
    %195 = vector.broadcast %cst_64 : f32 to vector<16x1xf32>
    %196 = arith.addf %194, %195 : vector<16x1xf32>
    %197 = math.rsqrt %196 : vector<16x1xf32>
    %cst_65 = arith.constant 0.000000e+00 : f32
    %198 = vector.broadcast %cst_65 : f32 to vector<16x1xf32>
    %199 = arith.subf %198, %188 : vector<16x1xf32>
    %200 = arith.mulf %199, %197 : vector<16x1xf32>
    %201 = vector.broadcast %197 : vector<16x1xf32> to vector<16x16xf32>
    %202 = arith.mulf %181, %201 : vector<16x16xf32>
    %203 = vector.broadcast %200 : vector<16x1xf32> to vector<16x16xf32>
    %204 = arith.addf %202, %203 : vector<16x16xf32>
    %cst_66 = arith.constant 0.000000e+00 : f32
    %205 = vector.broadcast %cst_66 : f32 to vector<16x16xf32>
    %206 = arith.maximumf %204, %205 : vector<16x16xf32>
    %207 = arith.truncf %206 : vector<16x16xf32> to vector<16x16xbf16>
    %c0_67 = arith.constant 0 : index
    %c0_68 = arith.constant 0 : index
    %c0_69 = arith.constant 0 : index
    %208 = vector.load %arg6[%c0_67, %c0_68, %c0_69] : memref<1x16x16xbf16, #tpu.memory_space<vmem>>, vector<1x16x16xbf16>
    %209 = vector.shape_cast %208 : vector<1x16x16xbf16> to vector<16x16xbf16>
    %210 = vector.shape_cast %207 : vector<16x16xbf16> to vector<1x16x16xbf16>
    tpu.vector_store %arg6[%c0_67, %c0_68, %c0_69], %210 {strides = array<i32>} : memref<1x16x16xbf16, #tpu.memory_space<vmem>>, vector<1x16x16xbf16>,
    return
  }
  func.func @transform_0(%arg0: i32) -> (i32, i32) {
    %c0_i32 = arith.constant 0 : i32
    %c0_i32_0 = arith.constant 0 : i32
    %c0_i32_1 = arith.constant 0 : i32
    return %c0_i32, %c0_i32_0 : i32, i32
  }
  func.func @transform_1(%arg0: i32) -> (i32, i32, i32) {
    %c0_i32 = arith.constant 0 : i32
    %c0_i32_0 = arith.constant 0 : i32
    %c0_i32_1 = arith.constant 0 : i32
    return %arg0, %c0_i32, %c0_i32_0 : i32, i32, i32
  }
  func.func @transform_2(%arg0: i32) -> (i32, i32, i32) {
    %c0_i32 = arith.constant 0 : i32
    %c0_i32_0 = arith.constant 0 : i32
    %c0_i32_1 = arith.constant 0 : i32
    return %arg0, %c0_i32, %c0_i32_0 : i32, i32, i32
  }
  func.func @transform_3(%arg0: i32) -> (i32, i32) {
    %c0_i32 = arith.constant 0 : i32
    %c0_i32_0 = arith.constant 0 : i32
    %c0_i32_1 = arith.constant 0 : i32
    return %c0_i32, %c0_i32_0 : i32, i32
  }
  func.func @transform_4(%arg0: i32) -> (i32, i32) {
    %c0_i32 = arith.constant 0 : i32
    %c0_i32_0 = arith.constant 0 : i32
    %c0_i32_1 = arith.constant 0 : i32
    return %c0_i32, %c0_i32_0 : i32, i32
  }
  func.func @transform_5(%arg0: i32) -> (i32, i32, i32) {
    %c0_i32 = arith.constant 0 : i32
    %c0_i32_0 = arith.constant 0 : i32
    %c0_i32_1 = arith.constant 0 : i32
    return %arg0, %c0_i32, %c0_i32_0 : i32, i32, i32
  }
}

module attributes {stable_mosaic.version = 11 : i64} {
  func.func @kernel(%arg0: i32, %arg1: memref<9x64xbf16, #tpu.memory_space<vmem>>, %arg2: memref<1x16x64xbf16, #tpu.memory_space<vmem>>, %arg3: memref<1x16x64xbf16, #tpu.memory_space<vmem>>, %arg4: memref<8x288xbf16, #tpu.memory_space<vmem>>, %arg5: memref<8x72xbf16, #tpu.memory_space<vmem>>, %arg6: memref<1x8x64xf32, #tpu.memory_space<vmem>>) attributes {dimension_semantics = [#tpu.dimension_semantics<parallel>], iteration_bounds = array<i64: 2>, scalar_prefetch = 0 : i64, scratch_operands = 0 : i64, tpu.core_type = #tpu.core_type<tc>, window_params = [{pipeline_mode = #tpu.pipeline_mode<synchronous>, transform_indices = @transform_0, window_bounds = array<i64: 9, 64>}, {transform_indices = @transform_1, window_bounds = array<i64: 1, 16, 64>}, {transform_indices = @transform_2, window_bounds = array<i64: 1, 16, 64>}, {pipeline_mode = #tpu.pipeline_mode<synchronous>, transform_indices = @transform_3, window_bounds = array<i64: 8, 288>}, {pipeline_mode = #tpu.pipeline_mode<synchronous>, transform_indices = @transform_4, window_bounds = array<i64: 8, 72>}, {transform_indices = @transform_5, window_bounds = array<i64: 1, 8, 64>}]} {
    %c0 = arith.constant 0 : index
    %c0_0 = arith.constant 0 : index
    %c0_1 = arith.constant 0 : index
    %0 = vector.load %arg2[%c0, %c0_0, %c0_1] : memref<1x16x64xbf16, #tpu.memory_space<vmem>>, vector<1x16x64xbf16>
    %1 = vector.shape_cast %0 : vector<1x16x64xbf16> to vector<16x64xbf16>
    %2 = vector.extract_strided_slice %1 {offsets = [0, 55], sizes = [16, 9], strides = [1, 1]} : vector<16x64xbf16> to vector<16x9xbf16>
    %3 = vector.extract_strided_slice %1 {offsets = [0, 0], sizes = [16, 55], strides = [1, 1]} : vector<16x64xbf16> to vector<16x55xbf16>
    %4 = tpu.concatenate %2, %3 in 1 : vector<16x9xbf16>, vector<16x55xbf16> -> vector<16x64xbf16>
    %c0_2 = arith.constant 0 : index
    %c0_3 = arith.constant 0 : index
    %5 = vector.load %arg1[%c0_2, %c0_3] : memref<9x64xbf16, #tpu.memory_space<vmem>>, vector<1x64xbf16>
    %6 = vector.broadcast %5 : vector<1x64xbf16> to vector<16x64xbf16>
    %7 = arith.mulf %4, %6 : vector<16x64xbf16>
    %8 = vector.extract_strided_slice %1 {offsets = [0, 56], sizes = [16, 8], strides = [1, 1]} : vector<16x64xbf16> to vector<16x8xbf16>
    %9 = vector.extract_strided_slice %1 {offsets = [0, 0], sizes = [16, 56], strides = [1, 1]} : vector<16x64xbf16> to vector<16x56xbf16>
    %10 = tpu.concatenate %8, %9 in 1 : vector<16x8xbf16>, vector<16x56xbf16> -> vector<16x64xbf16>
    %c1 = arith.constant 1 : index
    %c0_4 = arith.constant 0 : index
    %11 = vector.load %arg1[%c1, %c0_4] : memref<9x64xbf16, #tpu.memory_space<vmem>>, vector<1x64xbf16>
    %12 = vector.broadcast %11 : vector<1x64xbf16> to vector<16x64xbf16>
    %13 = arith.mulf %10, %12 : vector<16x64xbf16>
    %14 = vector.extract_strided_slice %1 {offsets = [0, 57], sizes = [16, 7], strides = [1, 1]} : vector<16x64xbf16> to vector<16x7xbf16>
    %15 = vector.extract_strided_slice %1 {offsets = [0, 0], sizes = [16, 57], strides = [1, 1]} : vector<16x64xbf16> to vector<16x57xbf16>
    %16 = tpu.concatenate %14, %15 in 1 : vector<16x7xbf16>, vector<16x57xbf16> -> vector<16x64xbf16>
    %c2 = arith.constant 2 : index
    %c0_5 = arith.constant 0 : index
    %17 = vector.load %arg1[%c2, %c0_5] : memref<9x64xbf16, #tpu.memory_space<vmem>>, vector<1x64xbf16>
    %18 = vector.broadcast %17 : vector<1x64xbf16> to vector<16x64xbf16>
    %19 = arith.mulf %16, %18 : vector<16x64xbf16>
    %20 = vector.extract_strided_slice %1 {offsets = [0, 63], sizes = [16, 1], strides = [1, 1]} : vector<16x64xbf16> to vector<16x1xbf16>
    %21 = vector.extract_strided_slice %1 {offsets = [0, 0], sizes = [16, 63], strides = [1, 1]} : vector<16x64xbf16> to vector<16x63xbf16>
    %22 = tpu.concatenate %20, %21 in 1 : vector<16x1xbf16>, vector<16x63xbf16> -> vector<16x64xbf16>
    %c3 = arith.constant 3 : index
    %c0_6 = arith.constant 0 : index
    %23 = vector.load %arg1[%c3, %c0_6] : memref<9x64xbf16, #tpu.memory_space<vmem>>, vector<1x64xbf16>
    %24 = vector.broadcast %23 : vector<1x64xbf16> to vector<16x64xbf16>
    %25 = arith.mulf %22, %24 : vector<16x64xbf16>
    %26 = vector.extract_strided_slice %1 {offsets = [0, 1], sizes = [16, 63], strides = [1, 1]} : vector<16x64xbf16> to vector<16x63xbf16>
    %27 = vector.extract_strided_slice %1 {offsets = [0, 0], sizes = [16, 1], strides = [1, 1]} : vector<16x64xbf16> to vector<16x1xbf16>
    %28 = tpu.concatenate %26, %27 in 1 : vector<16x63xbf16>, vector<16x1xbf16> -> vector<16x64xbf16>
    %c5 = arith.constant 5 : index
    %c0_7 = arith.constant 0 : index
    %29 = vector.load %arg1[%c5, %c0_7] : memref<9x64xbf16, #tpu.memory_space<vmem>>, vector<1x64xbf16>
    %30 = vector.broadcast %29 : vector<1x64xbf16> to vector<16x64xbf16>
    %31 = arith.mulf %28, %30 : vector<16x64xbf16>
    %32 = vector.extract_strided_slice %1 {offsets = [0, 7], sizes = [16, 57], strides = [1, 1]} : vector<16x64xbf16> to vector<16x57xbf16>
    %33 = vector.extract_strided_slice %1 {offsets = [0, 0], sizes = [16, 7], strides = [1, 1]} : vector<16x64xbf16> to vector<16x7xbf16>
    %34 = tpu.concatenate %32, %33 in 1 : vector<16x57xbf16>, vector<16x7xbf16> -> vector<16x64xbf16>
    %c6 = arith.constant 6 : index
    %c0_8 = arith.constant 0 : index
    %35 = vector.load %arg1[%c6, %c0_8] : memref<9x64xbf16, #tpu.memory_space<vmem>>, vector<1x64xbf16>
    %36 = vector.broadcast %35 : vector<1x64xbf16> to vector<16x64xbf16>
    %37 = arith.mulf %34, %36 : vector<16x64xbf16>
    %38 = vector.extract_strided_slice %1 {offsets = [0, 8], sizes = [16, 56], strides = [1, 1]} : vector<16x64xbf16> to vector<16x56xbf16>
    %39 = vector.extract_strided_slice %1 {offsets = [0, 0], sizes = [16, 8], strides = [1, 1]} : vector<16x64xbf16> to vector<16x8xbf16>
    %40 = tpu.concatenate %38, %39 in 1 : vector<16x56xbf16>, vector<16x8xbf16> -> vector<16x64xbf16>
    %c7 = arith.constant 7 : index
    %c0_9 = arith.constant 0 : index
    %41 = vector.load %arg1[%c7, %c0_9] : memref<9x64xbf16, #tpu.memory_space<vmem>>, vector<1x64xbf16>
    %42 = vector.broadcast %41 : vector<1x64xbf16> to vector<16x64xbf16>
    %43 = arith.mulf %40, %42 : vector<16x64xbf16>
    %44 = vector.extract_strided_slice %1 {offsets = [0, 9], sizes = [16, 55], strides = [1, 1]} : vector<16x64xbf16> to vector<16x55xbf16>
    %45 = vector.extract_strided_slice %1 {offsets = [0, 0], sizes = [16, 9], strides = [1, 1]} : vector<16x64xbf16> to vector<16x9xbf16>
    %46 = tpu.concatenate %44, %45 in 1 : vector<16x55xbf16>, vector<16x9xbf16> -> vector<16x64xbf16>
    %c8 = arith.constant 8 : index
    %c0_10 = arith.constant 0 : index
    %47 = vector.load %arg1[%c8, %c0_10] : memref<9x64xbf16, #tpu.memory_space<vmem>>, vector<1x64xbf16>
    %48 = vector.broadcast %47 : vector<1x64xbf16> to vector<16x64xbf16>
    %49 = arith.mulf %46, %48 : vector<16x64xbf16>
    %c0_11 = arith.constant 0 : index
    %c0_12 = arith.constant 0 : index
    %c0_13 = arith.constant 0 : index
    %50 = vector.load %arg3[%c0_11, %c0_12, %c0_13] : memref<1x16x64xbf16, #tpu.memory_space<vmem>>, vector<1x16x64xbf16>
    %51 = vector.shape_cast %50 : vector<1x16x64xbf16> to vector<16x64xbf16>
    %52 = vector.extract_strided_slice %51 {offsets = [0, 55], sizes = [16, 9], strides = [1, 1]} : vector<16x64xbf16> to vector<16x9xbf16>
    %53 = vector.extract_strided_slice %51 {offsets = [0, 0], sizes = [16, 55], strides = [1, 1]} : vector<16x64xbf16> to vector<16x55xbf16>
    %54 = tpu.concatenate %52, %53 in 1 : vector<16x9xbf16>, vector<16x55xbf16> -> vector<16x64xbf16>
    %c0_14 = arith.constant 0 : index
    %c0_15 = arith.constant 0 : index
    %55 = vector.load %arg1[%c0_14, %c0_15] : memref<9x64xbf16, #tpu.memory_space<vmem>>, vector<1x64xbf16>
    %56 = vector.broadcast %55 : vector<1x64xbf16> to vector<16x64xbf16>
    %57 = arith.mulf %54, %56 : vector<16x64xbf16>
    %58 = vector.extract_strided_slice %51 {offsets = [0, 56], sizes = [16, 8], strides = [1, 1]} : vector<16x64xbf16> to vector<16x8xbf16>
    %59 = vector.extract_strided_slice %51 {offsets = [0, 0], sizes = [16, 56], strides = [1, 1]} : vector<16x64xbf16> to vector<16x56xbf16>
    %60 = tpu.concatenate %58, %59 in 1 : vector<16x8xbf16>, vector<16x56xbf16> -> vector<16x64xbf16>
    %c1_16 = arith.constant 1 : index
    %c0_17 = arith.constant 0 : index
    %61 = vector.load %arg1[%c1_16, %c0_17] : memref<9x64xbf16, #tpu.memory_space<vmem>>, vector<1x64xbf16>
    %62 = vector.broadcast %61 : vector<1x64xbf16> to vector<16x64xbf16>
    %63 = arith.mulf %60, %62 : vector<16x64xbf16>
    %64 = vector.extract_strided_slice %51 {offsets = [0, 57], sizes = [16, 7], strides = [1, 1]} : vector<16x64xbf16> to vector<16x7xbf16>
    %65 = vector.extract_strided_slice %51 {offsets = [0, 0], sizes = [16, 57], strides = [1, 1]} : vector<16x64xbf16> to vector<16x57xbf16>
    %66 = tpu.concatenate %64, %65 in 1 : vector<16x7xbf16>, vector<16x57xbf16> -> vector<16x64xbf16>
    %c2_18 = arith.constant 2 : index
    %c0_19 = arith.constant 0 : index
    %67 = vector.load %arg1[%c2_18, %c0_19] : memref<9x64xbf16, #tpu.memory_space<vmem>>, vector<1x64xbf16>
    %68 = vector.broadcast %67 : vector<1x64xbf16> to vector<16x64xbf16>
    %69 = arith.mulf %66, %68 : vector<16x64xbf16>
    %70 = vector.extract_strided_slice %51 {offsets = [0, 63], sizes = [16, 1], strides = [1, 1]} : vector<16x64xbf16> to vector<16x1xbf16>
    %71 = vector.extract_strided_slice %51 {offsets = [0, 0], sizes = [16, 63], strides = [1, 1]} : vector<16x64xbf16> to vector<16x63xbf16>
    %72 = tpu.concatenate %70, %71 in 1 : vector<16x1xbf16>, vector<16x63xbf16> -> vector<16x64xbf16>
    %c3_20 = arith.constant 3 : index
    %c0_21 = arith.constant 0 : index
    %73 = vector.load %arg1[%c3_20, %c0_21] : memref<9x64xbf16, #tpu.memory_space<vmem>>, vector<1x64xbf16>
    %74 = vector.broadcast %73 : vector<1x64xbf16> to vector<16x64xbf16>
    %75 = arith.mulf %72, %74 : vector<16x64xbf16>
    %76 = vector.extract_strided_slice %51 {offsets = [0, 1], sizes = [16, 63], strides = [1, 1]} : vector<16x64xbf16> to vector<16x63xbf16>
    %77 = vector.extract_strided_slice %51 {offsets = [0, 0], sizes = [16, 1], strides = [1, 1]} : vector<16x64xbf16> to vector<16x1xbf16>
    %78 = tpu.concatenate %76, %77 in 1 : vector<16x63xbf16>, vector<16x1xbf16> -> vector<16x64xbf16>
    %c5_22 = arith.constant 5 : index
    %c0_23 = arith.constant 0 : index
    %79 = vector.load %arg1[%c5_22, %c0_23] : memref<9x64xbf16, #tpu.memory_space<vmem>>, vector<1x64xbf16>
    %80 = vector.broadcast %79 : vector<1x64xbf16> to vector<16x64xbf16>
    %81 = arith.mulf %78, %80 : vector<16x64xbf16>
    %82 = vector.extract_strided_slice %51 {offsets = [0, 7], sizes = [16, 57], strides = [1, 1]} : vector<16x64xbf16> to vector<16x57xbf16>
    %83 = vector.extract_strided_slice %51 {offsets = [0, 0], sizes = [16, 7], strides = [1, 1]} : vector<16x64xbf16> to vector<16x7xbf16>
    %84 = tpu.concatenate %82, %83 in 1 : vector<16x57xbf16>, vector<16x7xbf16> -> vector<16x64xbf16>
    %c6_24 = arith.constant 6 : index
    %c0_25 = arith.constant 0 : index
    %85 = vector.load %arg1[%c6_24, %c0_25] : memref<9x64xbf16, #tpu.memory_space<vmem>>, vector<1x64xbf16>
    %86 = vector.broadcast %85 : vector<1x64xbf16> to vector<16x64xbf16>
    %87 = arith.mulf %84, %86 : vector<16x64xbf16>
    %88 = vector.extract_strided_slice %51 {offsets = [0, 8], sizes = [16, 56], strides = [1, 1]} : vector<16x64xbf16> to vector<16x56xbf16>
    %89 = vector.extract_strided_slice %51 {offsets = [0, 0], sizes = [16, 8], strides = [1, 1]} : vector<16x64xbf16> to vector<16x8xbf16>
    %90 = tpu.concatenate %88, %89 in 1 : vector<16x56xbf16>, vector<16x8xbf16> -> vector<16x64xbf16>
    %c7_26 = arith.constant 7 : index
    %c0_27 = arith.constant 0 : index
    %91 = vector.load %arg1[%c7_26, %c0_27] : memref<9x64xbf16, #tpu.memory_space<vmem>>, vector<1x64xbf16>
    %92 = vector.broadcast %91 : vector<1x64xbf16> to vector<16x64xbf16>
    %93 = arith.mulf %90, %92 : vector<16x64xbf16>
    %94 = vector.extract_strided_slice %51 {offsets = [0, 9], sizes = [16, 55], strides = [1, 1]} : vector<16x64xbf16> to vector<16x55xbf16>
    %95 = vector.extract_strided_slice %51 {offsets = [0, 0], sizes = [16, 9], strides = [1, 1]} : vector<16x64xbf16> to vector<16x9xbf16>
    %96 = tpu.concatenate %94, %95 in 1 : vector<16x55xbf16>, vector<16x9xbf16> -> vector<16x64xbf16>
    %c8_28 = arith.constant 8 : index
    %c0_29 = arith.constant 0 : index
    %97 = vector.load %arg1[%c8_28, %c0_29] : memref<9x64xbf16, #tpu.memory_space<vmem>>, vector<1x64xbf16>
    %98 = vector.broadcast %97 : vector<1x64xbf16> to vector<16x64xbf16>
    %99 = arith.mulf %96, %98 : vector<16x64xbf16>
    %100 = tpu.concatenate %7, %13, %19, %25, %1, %31, %37, %43, %49, %57, %63, %69, %75, %51, %81, %87 in 0 : vector<16x64xbf16>, vector<16x64xbf16>, vector<16x64xbf16>, vector<16x64xbf16>, vector<16x64xbf16>, vector<16x64xbf16>, vector<16x64xbf16>, vector<16x64xbf16>, vector<16x64xbf16>, vector<16x64xbf16>, vector<16x64xbf16>, vector<16x64xbf16>, vector<16x64xbf16>, vector<16x64xbf16>, vector<16x64xbf16>, vector<16x64xbf16> -> vector<256x64xbf16>
    %101 = tpu.concatenate %93, %99 in 0 : vector<16x64xbf16>, vector<16x64xbf16> -> vector<32x64xbf16>
    %102 = tpu.concatenate %100, %101 in 0 : vector<256x64xbf16>, vector<32x64xbf16> -> vector<288x64xbf16>
    %c0_30 = arith.constant 0 : index
    %c0_31 = arith.constant 0 : index
    %103 = vector.load %arg4[%c0_30, %c0_31] : memref<8x288xbf16, #tpu.memory_space<vmem>>, vector<8x288xbf16>
    %cst = arith.constant dense<0.000000e+00> : vector<8x64xf32>
    %104 = tpu.matmul %103, %102, %cst {dimension_numbers = #tpu.dot_dimension_numbers<[1], [0], [0], [1], [0, 0, 1, 1], [], []>} : vector<8x288xbf16>, vector<288x64xbf16>, vector<8x64xf32> -> vector<8x64xf32>
    %cst_32 = arith.constant dense<0.000000e+00> : vector<8xf32>
    %105 = vector.multi_reduction <add>, %104, %cst_32 [1] : vector<8x64xf32> to vector<8xf32>
    %106 = vector.shape_cast %105 : vector<8xf32> to vector<8x1xf32>
    %107 = arith.mulf %104, %104 : vector<8x64xf32>
    %cst_33 = arith.constant dense<0.000000e+00> : vector<8xf32>
    %108 = vector.multi_reduction <add>, %107, %cst_33 [1] : vector<8x64xf32> to vector<8xf32>
    %109 = vector.shape_cast %108 : vector<8xf32> to vector<8x1xf32>
    %cst_34 = arith.constant 1.562500e-02 : f32
    %110 = vector.broadcast %cst_34 : f32 to vector<8x1xf32>
    %111 = arith.mulf %106, %110 : vector<8x1xf32>
    %cst_35 = arith.constant 1.562500e-02 : f32
    %112 = vector.broadcast %cst_35 : f32 to vector<8x1xf32>
    %113 = arith.mulf %109, %112 : vector<8x1xf32>
    %114 = arith.mulf %111, %111 : vector<8x1xf32>
    %115 = arith.subf %113, %114 : vector<8x1xf32>
    %cst_36 = arith.constant 0.000000e+00 : f32
    %116 = vector.broadcast %cst_36 : f32 to vector<8x1xf32>
    %117 = arith.maximumf %115, %116 : vector<8x1xf32>
    %cst_37 = arith.constant 9.99999974E-6 : f32
    %118 = vector.broadcast %cst_37 : f32 to vector<8x1xf32>
    %119 = arith.addf %117, %118 : vector<8x1xf32>
    %120 = math.rsqrt %119 : vector<8x1xf32>
    %cst_38 = arith.constant 0.000000e+00 : f32
    %121 = vector.broadcast %cst_38 : f32 to vector<8x1xf32>
    %122 = arith.subf %121, %111 : vector<8x1xf32>
    %123 = arith.mulf %122, %120 : vector<8x1xf32>
    %124 = vector.broadcast %120 : vector<8x1xf32> to vector<8x64xf32>
    %125 = arith.mulf %104, %124 : vector<8x64xf32>
    %126 = vector.broadcast %123 : vector<8x1xf32> to vector<8x64xf32>
    %127 = arith.addf %125, %126 : vector<8x64xf32>
    %cst_39 = arith.constant 0.000000e+00 : f32
    %128 = vector.broadcast %cst_39 : f32 to vector<8x64xf32>
    %129 = arith.maximumf %127, %128 : vector<8x64xf32>
    %130 = arith.truncf %129 : vector<8x64xf32> to vector<8x64xbf16>
    %131 = vector.extract_strided_slice %130 {offsets = [0, 55], sizes = [8, 9], strides = [1, 1]} : vector<8x64xbf16> to vector<8x9xbf16>
    %132 = vector.extract_strided_slice %130 {offsets = [0, 0], sizes = [8, 55], strides = [1, 1]} : vector<8x64xbf16> to vector<8x55xbf16>
    %133 = tpu.concatenate %131, %132 in 1 : vector<8x9xbf16>, vector<8x55xbf16> -> vector<8x64xbf16>
    %c0_40 = arith.constant 0 : index
    %c0_41 = arith.constant 0 : index
    %134 = vector.load %arg1[%c0_40, %c0_41] : memref<9x64xbf16, #tpu.memory_space<vmem>>, vector<1x64xbf16>
    %135 = vector.broadcast %134 : vector<1x64xbf16> to vector<8x64xbf16>
    %136 = arith.mulf %133, %135 : vector<8x64xbf16>
    %137 = vector.extract_strided_slice %130 {offsets = [0, 56], sizes = [8, 8], strides = [1, 1]} : vector<8x64xbf16> to vector<8x8xbf16>
    %138 = vector.extract_strided_slice %130 {offsets = [0, 0], sizes = [8, 56], strides = [1, 1]} : vector<8x64xbf16> to vector<8x56xbf16>
    %139 = tpu.concatenate %137, %138 in 1 : vector<8x8xbf16>, vector<8x56xbf16> -> vector<8x64xbf16>
    %c1_42 = arith.constant 1 : index
    %c0_43 = arith.constant 0 : index
    %140 = vector.load %arg1[%c1_42, %c0_43] : memref<9x64xbf16, #tpu.memory_space<vmem>>, vector<1x64xbf16>
    %141 = vector.broadcast %140 : vector<1x64xbf16> to vector<8x64xbf16>
    %142 = arith.mulf %139, %141 : vector<8x64xbf16>
    %143 = vector.extract_strided_slice %130 {offsets = [0, 57], sizes = [8, 7], strides = [1, 1]} : vector<8x64xbf16> to vector<8x7xbf16>
    %144 = vector.extract_strided_slice %130 {offsets = [0, 0], sizes = [8, 57], strides = [1, 1]} : vector<8x64xbf16> to vector<8x57xbf16>
    %145 = tpu.concatenate %143, %144 in 1 : vector<8x7xbf16>, vector<8x57xbf16> -> vector<8x64xbf16>
    %c2_44 = arith.constant 2 : index
    %c0_45 = arith.constant 0 : index
    %146 = vector.load %arg1[%c2_44, %c0_45] : memref<9x64xbf16, #tpu.memory_space<vmem>>, vector<1x64xbf16>
    %147 = vector.broadcast %146 : vector<1x64xbf16> to vector<8x64xbf16>
    %148 = arith.mulf %145, %147 : vector<8x64xbf16>
    %149 = vector.extract_strided_slice %130 {offsets = [0, 63], sizes = [8, 1], strides = [1, 1]} : vector<8x64xbf16> to vector<8x1xbf16>
    %150 = vector.extract_strided_slice %130 {offsets = [0, 0], sizes = [8, 63], strides = [1, 1]} : vector<8x64xbf16> to vector<8x63xbf16>
    %151 = tpu.concatenate %149, %150 in 1 : vector<8x1xbf16>, vector<8x63xbf16> -> vector<8x64xbf16>
    %c3_46 = arith.constant 3 : index
    %c0_47 = arith.constant 0 : index
    %152 = vector.load %arg1[%c3_46, %c0_47] : memref<9x64xbf16, #tpu.memory_space<vmem>>, vector<1x64xbf16>
    %153 = vector.broadcast %152 : vector<1x64xbf16> to vector<8x64xbf16>
    %154 = arith.mulf %151, %153 : vector<8x64xbf16>
    %155 = vector.extract_strided_slice %130 {offsets = [0, 1], sizes = [8, 63], strides = [1, 1]} : vector<8x64xbf16> to vector<8x63xbf16>
    %156 = vector.extract_strided_slice %130 {offsets = [0, 0], sizes = [8, 1], strides = [1, 1]} : vector<8x64xbf16> to vector<8x1xbf16>
    %157 = tpu.concatenate %155, %156 in 1 : vector<8x63xbf16>, vector<8x1xbf16> -> vector<8x64xbf16>
    %c5_48 = arith.constant 5 : index
    %c0_49 = arith.constant 0 : index
    %158 = vector.load %arg1[%c5_48, %c0_49] : memref<9x64xbf16, #tpu.memory_space<vmem>>, vector<1x64xbf16>
    %159 = vector.broadcast %158 : vector<1x64xbf16> to vector<8x64xbf16>
    %160 = arith.mulf %157, %159 : vector<8x64xbf16>
    %161 = vector.extract_strided_slice %130 {offsets = [0, 7], sizes = [8, 57], strides = [1, 1]} : vector<8x64xbf16> to vector<8x57xbf16>
    %162 = vector.extract_strided_slice %130 {offsets = [0, 0], sizes = [8, 7], strides = [1, 1]} : vector<8x64xbf16> to vector<8x7xbf16>
    %163 = tpu.concatenate %161, %162 in 1 : vector<8x57xbf16>, vector<8x7xbf16> -> vector<8x64xbf16>
    %c6_50 = arith.constant 6 : index
    %c0_51 = arith.constant 0 : index
    %164 = vector.load %arg1[%c6_50, %c0_51] : memref<9x64xbf16, #tpu.memory_space<vmem>>, vector<1x64xbf16>
    %165 = vector.broadcast %164 : vector<1x64xbf16> to vector<8x64xbf16>
    %166 = arith.mulf %163, %165 : vector<8x64xbf16>
    %167 = vector.extract_strided_slice %130 {offsets = [0, 8], sizes = [8, 56], strides = [1, 1]} : vector<8x64xbf16> to vector<8x56xbf16>
    %168 = vector.extract_strided_slice %130 {offsets = [0, 0], sizes = [8, 8], strides = [1, 1]} : vector<8x64xbf16> to vector<8x8xbf16>
    %169 = tpu.concatenate %167, %168 in 1 : vector<8x56xbf16>, vector<8x8xbf16> -> vector<8x64xbf16>
    %c7_52 = arith.constant 7 : index
    %c0_53 = arith.constant 0 : index
    %170 = vector.load %arg1[%c7_52, %c0_53] : memref<9x64xbf16, #tpu.memory_space<vmem>>, vector<1x64xbf16>
    %171 = vector.broadcast %170 : vector<1x64xbf16> to vector<8x64xbf16>
    %172 = arith.mulf %169, %171 : vector<8x64xbf16>
    %173 = vector.extract_strided_slice %130 {offsets = [0, 9], sizes = [8, 55], strides = [1, 1]} : vector<8x64xbf16> to vector<8x55xbf16>
    %174 = vector.extract_strided_slice %130 {offsets = [0, 0], sizes = [8, 9], strides = [1, 1]} : vector<8x64xbf16> to vector<8x9xbf16>
    %175 = tpu.concatenate %173, %174 in 1 : vector<8x55xbf16>, vector<8x9xbf16> -> vector<8x64xbf16>
    %c8_54 = arith.constant 8 : index
    %c0_55 = arith.constant 0 : index
    %176 = vector.load %arg1[%c8_54, %c0_55] : memref<9x64xbf16, #tpu.memory_space<vmem>>, vector<1x64xbf16>
    %177 = vector.broadcast %176 : vector<1x64xbf16> to vector<8x64xbf16>
    %178 = arith.mulf %175, %177 : vector<8x64xbf16>
    %179 = tpu.concatenate %136, %142, %148, %154, %130, %160, %166, %172, %178 in 0 : vector<8x64xbf16>, vector<8x64xbf16>, vector<8x64xbf16>, vector<8x64xbf16>, vector<8x64xbf16>, vector<8x64xbf16>, vector<8x64xbf16>, vector<8x64xbf16>, vector<8x64xbf16> -> vector<72x64xbf16>
    %c0_56 = arith.constant 0 : index
    %c0_57 = arith.constant 0 : index
    %180 = vector.load %arg5[%c0_56, %c0_57] : memref<8x72xbf16, #tpu.memory_space<vmem>>, vector<8x72xbf16>
    %cst_58 = arith.constant dense<0.000000e+00> : vector<8x64xf32>
    %181 = tpu.matmul %180, %179, %cst_58 {dimension_numbers = #tpu.dot_dimension_numbers<[1], [0], [0], [1], [0, 0, 1, 1], [], []>} : vector<8x72xbf16>, vector<72x64xbf16>, vector<8x64xf32> -> vector<8x64xf32>
    %cst_59 = arith.constant dense<0.000000e+00> : vector<8xf32>
    %182 = vector.multi_reduction <add>, %181, %cst_59 [1] : vector<8x64xf32> to vector<8xf32>
    %183 = vector.shape_cast %182 : vector<8xf32> to vector<8x1xf32>
    %184 = arith.mulf %181, %181 : vector<8x64xf32>
    %cst_60 = arith.constant dense<0.000000e+00> : vector<8xf32>
    %185 = vector.multi_reduction <add>, %184, %cst_60 [1] : vector<8x64xf32> to vector<8xf32>
    %186 = vector.shape_cast %185 : vector<8xf32> to vector<8x1xf32>
    %cst_61 = arith.constant 1.562500e-02 : f32
    %187 = vector.broadcast %cst_61 : f32 to vector<8x1xf32>
    %188 = arith.mulf %183, %187 : vector<8x1xf32>
    %cst_62 = arith.constant 1.562500e-02 : f32
    %189 = vector.broadcast %cst_62 : f32 to vector<8x1xf32>
    %190 = arith.mulf %186, %189 : vector<8x1xf32>
    %191 = arith.mulf %188, %188 : vector<8x1xf32>
    %192 = arith.subf %190, %191 : vector<8x1xf32>
    %cst_63 = arith.constant 0.000000e+00 : f32
    %193 = vector.broadcast %cst_63 : f32 to vector<8x1xf32>
    %194 = arith.maximumf %192, %193 : vector<8x1xf32>
    %cst_64 = arith.constant 9.99999974E-6 : f32
    %195 = vector.broadcast %cst_64 : f32 to vector<8x1xf32>
    %196 = arith.addf %194, %195 : vector<8x1xf32>
    %197 = math.rsqrt %196 : vector<8x1xf32>
    %cst_65 = arith.constant 0.000000e+00 : f32
    %198 = vector.broadcast %cst_65 : f32 to vector<8x1xf32>
    %199 = arith.subf %198, %188 : vector<8x1xf32>
    %200 = arith.mulf %199, %197 : vector<8x1xf32>
    %201 = vector.broadcast %197 : vector<8x1xf32> to vector<8x64xf32>
    %202 = arith.mulf %181, %201 : vector<8x64xf32>
    %203 = vector.broadcast %200 : vector<8x1xf32> to vector<8x64xf32>
    %204 = arith.addf %202, %203 : vector<8x64xf32>
    %cst_66 = arith.constant 0.000000e+00 : f32
    %205 = vector.broadcast %cst_66 : f32 to vector<8x64xf32>
    %206 = arith.maximumf %204, %205 : vector<8x64xf32>
    %c0_67 = arith.constant 0 : index
    %c0_68 = arith.constant 0 : index
    %c0_69 = arith.constant 0 : index
    %207 = vector.load %arg6[%c0_67, %c0_68, %c0_69] : memref<1x8x64xf32, #tpu.memory_space<vmem>>, vector<1x8x64xf32>
    %208 = vector.shape_cast %207 : vector<1x8x64xf32> to vector<8x64xf32>
    %209 = vector.shape_cast %206 : vector<8x64xf32> to vector<1x8x64xf32>
    tpu.vector_store %arg6[%c0_67, %c0_68, %c0_69], %209 {strides = array<i32>} : memref<1x8x64xf32, #tpu.memory_space<vmem>>, vector<1x8x64xf32>,
    return
  }
  func.func @transform_0(%arg0: i32) -> (i32, i32) {
    %c0_i32 = arith.constant 0 : i32
    %c0_i32_0 = arith.constant 0 : i32
    %c0_i32_1 = arith.constant 0 : i32
    return %c0_i32, %c0_i32_0 : i32, i32
  }
  func.func @transform_1(%arg0: i32) -> (i32, i32, i32) {
    %c0_i32 = arith.constant 0 : i32
    %c0_i32_0 = arith.constant 0 : i32
    %c0_i32_1 = arith.constant 0 : i32
    return %arg0, %c0_i32, %c0_i32_0 : i32, i32, i32
  }
  func.func @transform_2(%arg0: i32) -> (i32, i32, i32) {
    %c0_i32 = arith.constant 0 : i32
    %c0_i32_0 = arith.constant 0 : i32
    %c0_i32_1 = arith.constant 0 : i32
    return %arg0, %c0_i32, %c0_i32_0 : i32, i32, i32
  }
  func.func @transform_3(%arg0: i32) -> (i32, i32) {
    %c0_i32 = arith.constant 0 : i32
    %c0_i32_0 = arith.constant 0 : i32
    %c0_i32_1 = arith.constant 0 : i32
    return %c0_i32, %c0_i32_0 : i32, i32
  }
  func.func @transform_4(%arg0: i32) -> (i32, i32) {
    %c0_i32 = arith.constant 0 : i32
    %c0_i32_0 = arith.constant 0 : i32
    %c0_i32_1 = arith.constant 0 : i32
    return %c0_i32, %c0_i32_0 : i32, i32
  }
  func.func @transform_5(%arg0: i32) -> (i32, i32, i32) {
    %c0_i32 = arith.constant 0 : i32
    %c0_i32_0 = arith.constant 0 : i32
    %c0_i32_1 = arith.constant 0 : i32
    return %arg0, %c0_i32, %c0_i32_0 : i32, i32, i32
  }
}

module attributes {stable_mosaic.version = 11 : i64} {
  func.func @kernel(%arg0: i32, %arg1: memref<9x256xbf16, #tpu.memory_space<vmem>>, %arg2: memref<1x8x256xf32, #tpu.memory_space<vmem>>, %arg3: memref<1x8x256xf32, #tpu.memory_space<vmem>>, %arg4: memref<8x144xbf16, #tpu.memory_space<vmem>>, %arg5: memref<8x72xbf16, #tpu.memory_space<vmem>>, %arg6: memref<1x8x256xf32, #tpu.memory_space<vmem>>) attributes {dimension_semantics = [#tpu.dimension_semantics<parallel>], iteration_bounds = array<i64: 2>, scalar_prefetch = 0 : i64, scratch_operands = 0 : i64, tpu.core_type = #tpu.core_type<tc>, window_params = [{pipeline_mode = #tpu.pipeline_mode<synchronous>, transform_indices = @transform_0, window_bounds = array<i64: 9, 256>}, {transform_indices = @transform_1, window_bounds = array<i64: 1, 8, 256>}, {transform_indices = @transform_2, window_bounds = array<i64: 1, 8, 256>}, {pipeline_mode = #tpu.pipeline_mode<synchronous>, transform_indices = @transform_3, window_bounds = array<i64: 8, 144>}, {pipeline_mode = #tpu.pipeline_mode<synchronous>, transform_indices = @transform_4, window_bounds = array<i64: 8, 72>}, {transform_indices = @transform_5, window_bounds = array<i64: 1, 8, 256>}]} {
    %c0 = arith.constant 0 : index
    %c0_0 = arith.constant 0 : index
    %c0_1 = arith.constant 0 : index
    %0 = vector.load %arg2[%c0, %c0_0, %c0_1] : memref<1x8x256xf32, #tpu.memory_space<vmem>>, vector<1x8x256xf32>
    %1 = vector.shape_cast %0 : vector<1x8x256xf32> to vector<8x256xf32>
    %2 = arith.truncf %1 : vector<8x256xf32> to vector<8x256xbf16>
    %3 = vector.extract_strided_slice %2 {offsets = [0, 239], sizes = [8, 17], strides = [1, 1]} : vector<8x256xbf16> to vector<8x17xbf16>
    %4 = vector.extract_strided_slice %2 {offsets = [0, 0], sizes = [8, 239], strides = [1, 1]} : vector<8x256xbf16> to vector<8x239xbf16>
    %5 = tpu.concatenate %3, %4 in 1 : vector<8x17xbf16>, vector<8x239xbf16> -> vector<8x256xbf16>
    %c0_2 = arith.constant 0 : index
    %c0_3 = arith.constant 0 : index
    %6 = vector.load %arg1[%c0_2, %c0_3] : memref<9x256xbf16, #tpu.memory_space<vmem>>, vector<1x256xbf16>
    %7 = vector.broadcast %6 : vector<1x256xbf16> to vector<8x256xbf16>
    %8 = arith.mulf %5, %7 : vector<8x256xbf16>
    %9 = vector.extract_strided_slice %2 {offsets = [0, 240], sizes = [8, 16], strides = [1, 1]} : vector<8x256xbf16> to vector<8x16xbf16>
    %10 = vector.extract_strided_slice %2 {offsets = [0, 0], sizes = [8, 240], strides = [1, 1]} : vector<8x256xbf16> to vector<8x240xbf16>
    %11 = tpu.concatenate %9, %10 in 1 : vector<8x16xbf16>, vector<8x240xbf16> -> vector<8x256xbf16>
    %c1 = arith.constant 1 : index
    %c0_4 = arith.constant 0 : index
    %12 = vector.load %arg1[%c1, %c0_4] : memref<9x256xbf16, #tpu.memory_space<vmem>>, vector<1x256xbf16>
    %13 = vector.broadcast %12 : vector<1x256xbf16> to vector<8x256xbf16>
    %14 = arith.mulf %11, %13 : vector<8x256xbf16>
    %15 = vector.extract_strided_slice %2 {offsets = [0, 241], sizes = [8, 15], strides = [1, 1]} : vector<8x256xbf16> to vector<8x15xbf16>
    %16 = vector.extract_strided_slice %2 {offsets = [0, 0], sizes = [8, 241], strides = [1, 1]} : vector<8x256xbf16> to vector<8x241xbf16>
    %17 = tpu.concatenate %15, %16 in 1 : vector<8x15xbf16>, vector<8x241xbf16> -> vector<8x256xbf16>
    %c2 = arith.constant 2 : index
    %c0_5 = arith.constant 0 : index
    %18 = vector.load %arg1[%c2, %c0_5] : memref<9x256xbf16, #tpu.memory_space<vmem>>, vector<1x256xbf16>
    %19 = vector.broadcast %18 : vector<1x256xbf16> to vector<8x256xbf16>
    %20 = arith.mulf %17, %19 : vector<8x256xbf16>
    %21 = vector.extract_strided_slice %2 {offsets = [0, 255], sizes = [8, 1], strides = [1, 1]} : vector<8x256xbf16> to vector<8x1xbf16>
    %22 = vector.extract_strided_slice %2 {offsets = [0, 0], sizes = [8, 255], strides = [1, 1]} : vector<8x256xbf16> to vector<8x255xbf16>
    %23 = tpu.concatenate %21, %22 in 1 : vector<8x1xbf16>, vector<8x255xbf16> -> vector<8x256xbf16>
    %c3 = arith.constant 3 : index
    %c0_6 = arith.constant 0 : index
    %24 = vector.load %arg1[%c3, %c0_6] : memref<9x256xbf16, #tpu.memory_space<vmem>>, vector<1x256xbf16>
    %25 = vector.broadcast %24 : vector<1x256xbf16> to vector<8x256xbf16>
    %26 = arith.mulf %23, %25 : vector<8x256xbf16>
    %27 = vector.extract_strided_slice %2 {offsets = [0, 1], sizes = [8, 255], strides = [1, 1]} : vector<8x256xbf16> to vector<8x255xbf16>
    %28 = vector.extract_strided_slice %2 {offsets = [0, 0], sizes = [8, 1], strides = [1, 1]} : vector<8x256xbf16> to vector<8x1xbf16>
    %29 = tpu.concatenate %27, %28 in 1 : vector<8x255xbf16>, vector<8x1xbf16> -> vector<8x256xbf16>
    %c5 = arith.constant 5 : index
    %c0_7 = arith.constant 0 : index
    %30 = vector.load %arg1[%c5, %c0_7] : memref<9x256xbf16, #tpu.memory_space<vmem>>, vector<1x256xbf16>
    %31 = vector.broadcast %30 : vector<1x256xbf16> to vector<8x256xbf16>
    %32 = arith.mulf %29, %31 : vector<8x256xbf16>
    %33 = vector.extract_strided_slice %2 {offsets = [0, 15], sizes = [8, 241], strides = [1, 1]} : vector<8x256xbf16> to vector<8x241xbf16>
    %34 = vector.extract_strided_slice %2 {offsets = [0, 0], sizes = [8, 15], strides = [1, 1]} : vector<8x256xbf16> to vector<8x15xbf16>
    %35 = tpu.concatenate %33, %34 in 1 : vector<8x241xbf16>, vector<8x15xbf16> -> vector<8x256xbf16>
    %c6 = arith.constant 6 : index
    %c0_8 = arith.constant 0 : index
    %36 = vector.load %arg1[%c6, %c0_8] : memref<9x256xbf16, #tpu.memory_space<vmem>>, vector<1x256xbf16>
    %37 = vector.broadcast %36 : vector<1x256xbf16> to vector<8x256xbf16>
    %38 = arith.mulf %35, %37 : vector<8x256xbf16>
    %39 = vector.extract_strided_slice %2 {offsets = [0, 16], sizes = [8, 240], strides = [1, 1]} : vector<8x256xbf16> to vector<8x240xbf16>
    %40 = vector.extract_strided_slice %2 {offsets = [0, 0], sizes = [8, 16], strides = [1, 1]} : vector<8x256xbf16> to vector<8x16xbf16>
    %41 = tpu.concatenate %39, %40 in 1 : vector<8x240xbf16>, vector<8x16xbf16> -> vector<8x256xbf16>
    %c7 = arith.constant 7 : index
    %c0_9 = arith.constant 0 : index
    %42 = vector.load %arg1[%c7, %c0_9] : memref<9x256xbf16, #tpu.memory_space<vmem>>, vector<1x256xbf16>
    %43 = vector.broadcast %42 : vector<1x256xbf16> to vector<8x256xbf16>
    %44 = arith.mulf %41, %43 : vector<8x256xbf16>
    %45 = vector.extract_strided_slice %2 {offsets = [0, 17], sizes = [8, 239], strides = [1, 1]} : vector<8x256xbf16> to vector<8x239xbf16>
    %46 = vector.extract_strided_slice %2 {offsets = [0, 0], sizes = [8, 17], strides = [1, 1]} : vector<8x256xbf16> to vector<8x17xbf16>
    %47 = tpu.concatenate %45, %46 in 1 : vector<8x239xbf16>, vector<8x17xbf16> -> vector<8x256xbf16>
    %c8 = arith.constant 8 : index
    %c0_10 = arith.constant 0 : index
    %48 = vector.load %arg1[%c8, %c0_10] : memref<9x256xbf16, #tpu.memory_space<vmem>>, vector<1x256xbf16>
    %49 = vector.broadcast %48 : vector<1x256xbf16> to vector<8x256xbf16>
    %50 = arith.mulf %47, %49 : vector<8x256xbf16>
    %c0_11 = arith.constant 0 : index
    %c0_12 = arith.constant 0 : index
    %c0_13 = arith.constant 0 : index
    %51 = vector.load %arg3[%c0_11, %c0_12, %c0_13] : memref<1x8x256xf32, #tpu.memory_space<vmem>>, vector<1x8x256xf32>
    %52 = vector.shape_cast %51 : vector<1x8x256xf32> to vector<8x256xf32>
    %53 = arith.truncf %52 : vector<8x256xf32> to vector<8x256xbf16>
    %54 = vector.extract_strided_slice %53 {offsets = [0, 239], sizes = [8, 17], strides = [1, 1]} : vector<8x256xbf16> to vector<8x17xbf16>
    %55 = vector.extract_strided_slice %53 {offsets = [0, 0], sizes = [8, 239], strides = [1, 1]} : vector<8x256xbf16> to vector<8x239xbf16>
    %56 = tpu.concatenate %54, %55 in 1 : vector<8x17xbf16>, vector<8x239xbf16> -> vector<8x256xbf16>
    %c0_14 = arith.constant 0 : index
    %c0_15 = arith.constant 0 : index
    %57 = vector.load %arg1[%c0_14, %c0_15] : memref<9x256xbf16, #tpu.memory_space<vmem>>, vector<1x256xbf16>
    %58 = vector.broadcast %57 : vector<1x256xbf16> to vector<8x256xbf16>
    %59 = arith.mulf %56, %58 : vector<8x256xbf16>
    %60 = vector.extract_strided_slice %53 {offsets = [0, 240], sizes = [8, 16], strides = [1, 1]} : vector<8x256xbf16> to vector<8x16xbf16>
    %61 = vector.extract_strided_slice %53 {offsets = [0, 0], sizes = [8, 240], strides = [1, 1]} : vector<8x256xbf16> to vector<8x240xbf16>
    %62 = tpu.concatenate %60, %61 in 1 : vector<8x16xbf16>, vector<8x240xbf16> -> vector<8x256xbf16>
    %c1_16 = arith.constant 1 : index
    %c0_17 = arith.constant 0 : index
    %63 = vector.load %arg1[%c1_16, %c0_17] : memref<9x256xbf16, #tpu.memory_space<vmem>>, vector<1x256xbf16>
    %64 = vector.broadcast %63 : vector<1x256xbf16> to vector<8x256xbf16>
    %65 = arith.mulf %62, %64 : vector<8x256xbf16>
    %66 = vector.extract_strided_slice %53 {offsets = [0, 241], sizes = [8, 15], strides = [1, 1]} : vector<8x256xbf16> to vector<8x15xbf16>
    %67 = vector.extract_strided_slice %53 {offsets = [0, 0], sizes = [8, 241], strides = [1, 1]} : vector<8x256xbf16> to vector<8x241xbf16>
    %68 = tpu.concatenate %66, %67 in 1 : vector<8x15xbf16>, vector<8x241xbf16> -> vector<8x256xbf16>
    %c2_18 = arith.constant 2 : index
    %c0_19 = arith.constant 0 : index
    %69 = vector.load %arg1[%c2_18, %c0_19] : memref<9x256xbf16, #tpu.memory_space<vmem>>, vector<1x256xbf16>
    %70 = vector.broadcast %69 : vector<1x256xbf16> to vector<8x256xbf16>
    %71 = arith.mulf %68, %70 : vector<8x256xbf16>
    %72 = vector.extract_strided_slice %53 {offsets = [0, 255], sizes = [8, 1], strides = [1, 1]} : vector<8x256xbf16> to vector<8x1xbf16>
    %73 = vector.extract_strided_slice %53 {offsets = [0, 0], sizes = [8, 255], strides = [1, 1]} : vector<8x256xbf16> to vector<8x255xbf16>
    %74 = tpu.concatenate %72, %73 in 1 : vector<8x1xbf16>, vector<8x255xbf16> -> vector<8x256xbf16>
    %c3_20 = arith.constant 3 : index
    %c0_21 = arith.constant 0 : index
    %75 = vector.load %arg1[%c3_20, %c0_21] : memref<9x256xbf16, #tpu.memory_space<vmem>>, vector<1x256xbf16>
    %76 = vector.broadcast %75 : vector<1x256xbf16> to vector<8x256xbf16>
    %77 = arith.mulf %74, %76 : vector<8x256xbf16>
    %78 = vector.extract_strided_slice %53 {offsets = [0, 1], sizes = [8, 255], strides = [1, 1]} : vector<8x256xbf16> to vector<8x255xbf16>
    %79 = vector.extract_strided_slice %53 {offsets = [0, 0], sizes = [8, 1], strides = [1, 1]} : vector<8x256xbf16> to vector<8x1xbf16>
    %80 = tpu.concatenate %78, %79 in 1 : vector<8x255xbf16>, vector<8x1xbf16> -> vector<8x256xbf16>
    %c5_22 = arith.constant 5 : index
    %c0_23 = arith.constant 0 : index
    %81 = vector.load %arg1[%c5_22, %c0_23] : memref<9x256xbf16, #tpu.memory_space<vmem>>, vector<1x256xbf16>
    %82 = vector.broadcast %81 : vector<1x256xbf16> to vector<8x256xbf16>
    %83 = arith.mulf %80, %82 : vector<8x256xbf16>
    %84 = vector.extract_strided_slice %53 {offsets = [0, 15], sizes = [8, 241], strides = [1, 1]} : vector<8x256xbf16> to vector<8x241xbf16>
    %85 = vector.extract_strided_slice %53 {offsets = [0, 0], sizes = [8, 15], strides = [1, 1]} : vector<8x256xbf16> to vector<8x15xbf16>
    %86 = tpu.concatenate %84, %85 in 1 : vector<8x241xbf16>, vector<8x15xbf16> -> vector<8x256xbf16>
    %c6_24 = arith.constant 6 : index
    %c0_25 = arith.constant 0 : index
    %87 = vector.load %arg1[%c6_24, %c0_25] : memref<9x256xbf16, #tpu.memory_space<vmem>>, vector<1x256xbf16>
    %88 = vector.broadcast %87 : vector<1x256xbf16> to vector<8x256xbf16>
    %89 = arith.mulf %86, %88 : vector<8x256xbf16>
    %90 = vector.extract_strided_slice %53 {offsets = [0, 16], sizes = [8, 240], strides = [1, 1]} : vector<8x256xbf16> to vector<8x240xbf16>
    %91 = vector.extract_strided_slice %53 {offsets = [0, 0], sizes = [8, 16], strides = [1, 1]} : vector<8x256xbf16> to vector<8x16xbf16>
    %92 = tpu.concatenate %90, %91 in 1 : vector<8x240xbf16>, vector<8x16xbf16> -> vector<8x256xbf16>
    %c7_26 = arith.constant 7 : index
    %c0_27 = arith.constant 0 : index
    %93 = vector.load %arg1[%c7_26, %c0_27] : memref<9x256xbf16, #tpu.memory_space<vmem>>, vector<1x256xbf16>
    %94 = vector.broadcast %93 : vector<1x256xbf16> to vector<8x256xbf16>
    %95 = arith.mulf %92, %94 : vector<8x256xbf16>
    %96 = vector.extract_strided_slice %53 {offsets = [0, 17], sizes = [8, 239], strides = [1, 1]} : vector<8x256xbf16> to vector<8x239xbf16>
    %97 = vector.extract_strided_slice %53 {offsets = [0, 0], sizes = [8, 17], strides = [1, 1]} : vector<8x256xbf16> to vector<8x17xbf16>
    %98 = tpu.concatenate %96, %97 in 1 : vector<8x239xbf16>, vector<8x17xbf16> -> vector<8x256xbf16>
    %c8_28 = arith.constant 8 : index
    %c0_29 = arith.constant 0 : index
    %99 = vector.load %arg1[%c8_28, %c0_29] : memref<9x256xbf16, #tpu.memory_space<vmem>>, vector<1x256xbf16>
    %100 = vector.broadcast %99 : vector<1x256xbf16> to vector<8x256xbf16>
    %101 = arith.mulf %98, %100 : vector<8x256xbf16>
    %102 = tpu.concatenate %8, %14, %20, %26, %2, %32, %38, %44, %50, %59, %65, %71, %77, %53, %83, %89 in 0 : vector<8x256xbf16>, vector<8x256xbf16>, vector<8x256xbf16>, vector<8x256xbf16>, vector<8x256xbf16>, vector<8x256xbf16>, vector<8x256xbf16>, vector<8x256xbf16>, vector<8x256xbf16>, vector<8x256xbf16>, vector<8x256xbf16>, vector<8x256xbf16>, vector<8x256xbf16>, vector<8x256xbf16>, vector<8x256xbf16>, vector<8x256xbf16> -> vector<128x256xbf16>
    %103 = tpu.concatenate %95, %101 in 0 : vector<8x256xbf16>, vector<8x256xbf16> -> vector<16x256xbf16>
    %104 = tpu.concatenate %102, %103 in 0 : vector<128x256xbf16>, vector<16x256xbf16> -> vector<144x256xbf16>
    %c0_30 = arith.constant 0 : index
    %c0_31 = arith.constant 0 : index
    %105 = vector.load %arg4[%c0_30, %c0_31] : memref<8x144xbf16, #tpu.memory_space<vmem>>, vector<8x144xbf16>
    %cst = arith.constant dense<0.000000e+00> : vector<8x256xf32>
    %106 = tpu.matmul %105, %104, %cst {dimension_numbers = #tpu.dot_dimension_numbers<[1], [0], [0], [1], [0, 0, 1, 1], [], []>} : vector<8x144xbf16>, vector<144x256xbf16>, vector<8x256xf32> -> vector<8x256xf32>
    %cst_32 = arith.constant dense<0.000000e+00> : vector<8xf32>
    %107 = vector.multi_reduction <add>, %106, %cst_32 [1] : vector<8x256xf32> to vector<8xf32>
    %108 = vector.shape_cast %107 : vector<8xf32> to vector<8x1xf32>
    %109 = arith.mulf %106, %106 : vector<8x256xf32>
    %cst_33 = arith.constant dense<0.000000e+00> : vector<8xf32>
    %110 = vector.multi_reduction <add>, %109, %cst_33 [1] : vector<8x256xf32> to vector<8xf32>
    %111 = vector.shape_cast %110 : vector<8xf32> to vector<8x1xf32>
    %cst_34 = arith.constant 3.906250e-03 : f32
    %112 = vector.broadcast %cst_34 : f32 to vector<8x1xf32>
    %113 = arith.mulf %108, %112 : vector<8x1xf32>
    %cst_35 = arith.constant 3.906250e-03 : f32
    %114 = vector.broadcast %cst_35 : f32 to vector<8x1xf32>
    %115 = arith.mulf %111, %114 : vector<8x1xf32>
    %116 = arith.mulf %113, %113 : vector<8x1xf32>
    %117 = arith.subf %115, %116 : vector<8x1xf32>
    %cst_36 = arith.constant 0.000000e+00 : f32
    %118 = vector.broadcast %cst_36 : f32 to vector<8x1xf32>
    %119 = arith.maximumf %117, %118 : vector<8x1xf32>
    %cst_37 = arith.constant 9.99999974E-6 : f32
    %120 = vector.broadcast %cst_37 : f32 to vector<8x1xf32>
    %121 = arith.addf %119, %120 : vector<8x1xf32>
    %122 = math.rsqrt %121 : vector<8x1xf32>
    %cst_38 = arith.constant 0.000000e+00 : f32
    %123 = vector.broadcast %cst_38 : f32 to vector<8x1xf32>
    %124 = arith.subf %123, %113 : vector<8x1xf32>
    %125 = arith.mulf %124, %122 : vector<8x1xf32>
    %126 = vector.broadcast %122 : vector<8x1xf32> to vector<8x256xf32>
    %127 = arith.mulf %106, %126 : vector<8x256xf32>
    %128 = vector.broadcast %125 : vector<8x1xf32> to vector<8x256xf32>
    %129 = arith.addf %127, %128 : vector<8x256xf32>
    %cst_39 = arith.constant 0.000000e+00 : f32
    %130 = vector.broadcast %cst_39 : f32 to vector<8x256xf32>
    %131 = arith.maximumf %129, %130 : vector<8x256xf32>
    %132 = arith.truncf %131 : vector<8x256xf32> to vector<8x256xbf16>
    %133 = vector.extract_strided_slice %132 {offsets = [0, 239], sizes = [8, 17], strides = [1, 1]} : vector<8x256xbf16> to vector<8x17xbf16>
    %134 = vector.extract_strided_slice %132 {offsets = [0, 0], sizes = [8, 239], strides = [1, 1]} : vector<8x256xbf16> to vector<8x239xbf16>
    %135 = tpu.concatenate %133, %134 in 1 : vector<8x17xbf16>, vector<8x239xbf16> -> vector<8x256xbf16>
    %c0_40 = arith.constant 0 : index
    %c0_41 = arith.constant 0 : index
    %136 = vector.load %arg1[%c0_40, %c0_41] : memref<9x256xbf16, #tpu.memory_space<vmem>>, vector<1x256xbf16>
    %137 = vector.broadcast %136 : vector<1x256xbf16> to vector<8x256xbf16>
    %138 = arith.mulf %135, %137 : vector<8x256xbf16>
    %139 = vector.extract_strided_slice %132 {offsets = [0, 240], sizes = [8, 16], strides = [1, 1]} : vector<8x256xbf16> to vector<8x16xbf16>
    %140 = vector.extract_strided_slice %132 {offsets = [0, 0], sizes = [8, 240], strides = [1, 1]} : vector<8x256xbf16> to vector<8x240xbf16>
    %141 = tpu.concatenate %139, %140 in 1 : vector<8x16xbf16>, vector<8x240xbf16> -> vector<8x256xbf16>
    %c1_42 = arith.constant 1 : index
    %c0_43 = arith.constant 0 : index
    %142 = vector.load %arg1[%c1_42, %c0_43] : memref<9x256xbf16, #tpu.memory_space<vmem>>, vector<1x256xbf16>
    %143 = vector.broadcast %142 : vector<1x256xbf16> to vector<8x256xbf16>
    %144 = arith.mulf %141, %143 : vector<8x256xbf16>
    %145 = vector.extract_strided_slice %132 {offsets = [0, 241], sizes = [8, 15], strides = [1, 1]} : vector<8x256xbf16> to vector<8x15xbf16>
    %146 = vector.extract_strided_slice %132 {offsets = [0, 0], sizes = [8, 241], strides = [1, 1]} : vector<8x256xbf16> to vector<8x241xbf16>
    %147 = tpu.concatenate %145, %146 in 1 : vector<8x15xbf16>, vector<8x241xbf16> -> vector<8x256xbf16>
    %c2_44 = arith.constant 2 : index
    %c0_45 = arith.constant 0 : index
    %148 = vector.load %arg1[%c2_44, %c0_45] : memref<9x256xbf16, #tpu.memory_space<vmem>>, vector<1x256xbf16>
    %149 = vector.broadcast %148 : vector<1x256xbf16> to vector<8x256xbf16>
    %150 = arith.mulf %147, %149 : vector<8x256xbf16>
    %151 = vector.extract_strided_slice %132 {offsets = [0, 255], sizes = [8, 1], strides = [1, 1]} : vector<8x256xbf16> to vector<8x1xbf16>
    %152 = vector.extract_strided_slice %132 {offsets = [0, 0], sizes = [8, 255], strides = [1, 1]} : vector<8x256xbf16> to vector<8x255xbf16>
    %153 = tpu.concatenate %151, %152 in 1 : vector<8x1xbf16>, vector<8x255xbf16> -> vector<8x256xbf16>
    %c3_46 = arith.constant 3 : index
    %c0_47 = arith.constant 0 : index
    %154 = vector.load %arg1[%c3_46, %c0_47] : memref<9x256xbf16, #tpu.memory_space<vmem>>, vector<1x256xbf16>
    %155 = vector.broadcast %154 : vector<1x256xbf16> to vector<8x256xbf16>
    %156 = arith.mulf %153, %155 : vector<8x256xbf16>
    %157 = vector.extract_strided_slice %132 {offsets = [0, 1], sizes = [8, 255], strides = [1, 1]} : vector<8x256xbf16> to vector<8x255xbf16>
    %158 = vector.extract_strided_slice %132 {offsets = [0, 0], sizes = [8, 1], strides = [1, 1]} : vector<8x256xbf16> to vector<8x1xbf16>
    %159 = tpu.concatenate %157, %158 in 1 : vector<8x255xbf16>, vector<8x1xbf16> -> vector<8x256xbf16>
    %c5_48 = arith.constant 5 : index
    %c0_49 = arith.constant 0 : index
    %160 = vector.load %arg1[%c5_48, %c0_49] : memref<9x256xbf16, #tpu.memory_space<vmem>>, vector<1x256xbf16>
    %161 = vector.broadcast %160 : vector<1x256xbf16> to vector<8x256xbf16>
    %162 = arith.mulf %159, %161 : vector<8x256xbf16>
    %163 = vector.extract_strided_slice %132 {offsets = [0, 15], sizes = [8, 241], strides = [1, 1]} : vector<8x256xbf16> to vector<8x241xbf16>
    %164 = vector.extract_strided_slice %132 {offsets = [0, 0], sizes = [8, 15], strides = [1, 1]} : vector<8x256xbf16> to vector<8x15xbf16>
    %165 = tpu.concatenate %163, %164 in 1 : vector<8x241xbf16>, vector<8x15xbf16> -> vector<8x256xbf16>
    %c6_50 = arith.constant 6 : index
    %c0_51 = arith.constant 0 : index
    %166 = vector.load %arg1[%c6_50, %c0_51] : memref<9x256xbf16, #tpu.memory_space<vmem>>, vector<1x256xbf16>
    %167 = vector.broadcast %166 : vector<1x256xbf16> to vector<8x256xbf16>
    %168 = arith.mulf %165, %167 : vector<8x256xbf16>
    %169 = vector.extract_strided_slice %132 {offsets = [0, 16], sizes = [8, 240], strides = [1, 1]} : vector<8x256xbf16> to vector<8x240xbf16>
    %170 = vector.extract_strided_slice %132 {offsets = [0, 0], sizes = [8, 16], strides = [1, 1]} : vector<8x256xbf16> to vector<8x16xbf16>
    %171 = tpu.concatenate %169, %170 in 1 : vector<8x240xbf16>, vector<8x16xbf16> -> vector<8x256xbf16>
    %c7_52 = arith.constant 7 : index
    %c0_53 = arith.constant 0 : index
    %172 = vector.load %arg1[%c7_52, %c0_53] : memref<9x256xbf16, #tpu.memory_space<vmem>>, vector<1x256xbf16>
    %173 = vector.broadcast %172 : vector<1x256xbf16> to vector<8x256xbf16>
    %174 = arith.mulf %171, %173 : vector<8x256xbf16>
    %175 = vector.extract_strided_slice %132 {offsets = [0, 17], sizes = [8, 239], strides = [1, 1]} : vector<8x256xbf16> to vector<8x239xbf16>
    %176 = vector.extract_strided_slice %132 {offsets = [0, 0], sizes = [8, 17], strides = [1, 1]} : vector<8x256xbf16> to vector<8x17xbf16>
    %177 = tpu.concatenate %175, %176 in 1 : vector<8x239xbf16>, vector<8x17xbf16> -> vector<8x256xbf16>
    %c8_54 = arith.constant 8 : index
    %c0_55 = arith.constant 0 : index
    %178 = vector.load %arg1[%c8_54, %c0_55] : memref<9x256xbf16, #tpu.memory_space<vmem>>, vector<1x256xbf16>
    %179 = vector.broadcast %178 : vector<1x256xbf16> to vector<8x256xbf16>
    %180 = arith.mulf %177, %179 : vector<8x256xbf16>
    %181 = tpu.concatenate %138, %144, %150, %156, %132, %162, %168, %174, %180 in 0 : vector<8x256xbf16>, vector<8x256xbf16>, vector<8x256xbf16>, vector<8x256xbf16>, vector<8x256xbf16>, vector<8x256xbf16>, vector<8x256xbf16>, vector<8x256xbf16>, vector<8x256xbf16> -> vector<72x256xbf16>
    %c0_56 = arith.constant 0 : index
    %c0_57 = arith.constant 0 : index
    %182 = vector.load %arg5[%c0_56, %c0_57] : memref<8x72xbf16, #tpu.memory_space<vmem>>, vector<8x72xbf16>
    %cst_58 = arith.constant dense<0.000000e+00> : vector<8x256xf32>
    %183 = tpu.matmul %182, %181, %cst_58 {dimension_numbers = #tpu.dot_dimension_numbers<[1], [0], [0], [1], [0, 0, 1, 1], [], []>} : vector<8x72xbf16>, vector<72x256xbf16>, vector<8x256xf32> -> vector<8x256xf32>
    %cst_59 = arith.constant dense<0.000000e+00> : vector<8xf32>
    %184 = vector.multi_reduction <add>, %183, %cst_59 [1] : vector<8x256xf32> to vector<8xf32>
    %185 = vector.shape_cast %184 : vector<8xf32> to vector<8x1xf32>
    %186 = arith.mulf %183, %183 : vector<8x256xf32>
    %cst_60 = arith.constant dense<0.000000e+00> : vector<8xf32>
    %187 = vector.multi_reduction <add>, %186, %cst_60 [1] : vector<8x256xf32> to vector<8xf32>
    %188 = vector.shape_cast %187 : vector<8xf32> to vector<8x1xf32>
    %cst_61 = arith.constant 3.906250e-03 : f32
    %189 = vector.broadcast %cst_61 : f32 to vector<8x1xf32>
    %190 = arith.mulf %185, %189 : vector<8x1xf32>
    %cst_62 = arith.constant 3.906250e-03 : f32
    %191 = vector.broadcast %cst_62 : f32 to vector<8x1xf32>
    %192 = arith.mulf %188, %191 : vector<8x1xf32>
    %193 = arith.mulf %190, %190 : vector<8x1xf32>
    %194 = arith.subf %192, %193 : vector<8x1xf32>
    %cst_63 = arith.constant 0.000000e+00 : f32
    %195 = vector.broadcast %cst_63 : f32 to vector<8x1xf32>
    %196 = arith.maximumf %194, %195 : vector<8x1xf32>
    %cst_64 = arith.constant 9.99999974E-6 : f32
    %197 = vector.broadcast %cst_64 : f32 to vector<8x1xf32>
    %198 = arith.addf %196, %197 : vector<8x1xf32>
    %199 = math.rsqrt %198 : vector<8x1xf32>
    %cst_65 = arith.constant 0.000000e+00 : f32
    %200 = vector.broadcast %cst_65 : f32 to vector<8x1xf32>
    %201 = arith.subf %200, %190 : vector<8x1xf32>
    %202 = arith.mulf %201, %199 : vector<8x1xf32>
    %203 = vector.broadcast %199 : vector<8x1xf32> to vector<8x256xf32>
    %204 = arith.mulf %183, %203 : vector<8x256xf32>
    %205 = vector.broadcast %202 : vector<8x1xf32> to vector<8x256xf32>
    %206 = arith.addf %204, %205 : vector<8x256xf32>
    %cst_66 = arith.constant 0.000000e+00 : f32
    %207 = vector.broadcast %cst_66 : f32 to vector<8x256xf32>
    %208 = arith.maximumf %206, %207 : vector<8x256xf32>
    %c0_67 = arith.constant 0 : index
    %c0_68 = arith.constant 0 : index
    %c0_69 = arith.constant 0 : index
    %209 = vector.load %arg6[%c0_67, %c0_68, %c0_69] : memref<1x8x256xf32, #tpu.memory_space<vmem>>, vector<1x8x256xf32>
    %210 = vector.shape_cast %209 : vector<1x8x256xf32> to vector<8x256xf32>
    %211 = vector.shape_cast %208 : vector<8x256xf32> to vector<1x8x256xf32>
    tpu.vector_store %arg6[%c0_67, %c0_68, %c0_69], %211 {strides = array<i32>} : memref<1x8x256xf32, #tpu.memory_space<vmem>>, vector<1x8x256xf32>,
    return
  }
  func.func @transform_0(%arg0: i32) -> (i32, i32) {
    %c0_i32 = arith.constant 0 : i32
    %c0_i32_0 = arith.constant 0 : i32
    %c0_i32_1 = arith.constant 0 : i32
    return %c0_i32, %c0_i32_0 : i32, i32
  }
  func.func @transform_1(%arg0: i32) -> (i32, i32, i32) {
    %c0_i32 = arith.constant 0 : i32
    %c0_i32_0 = arith.constant 0 : i32
    %c0_i32_1 = arith.constant 0 : i32
    return %arg0, %c0_i32, %c0_i32_0 : i32, i32, i32
  }
  func.func @transform_2(%arg0: i32) -> (i32, i32, i32) {
    %c0_i32 = arith.constant 0 : i32
    %c0_i32_0 = arith.constant 0 : i32
    %c0_i32_1 = arith.constant 0 : i32
    return %arg0, %c0_i32, %c0_i32_0 : i32, i32, i32
  }
  func.func @transform_3(%arg0: i32) -> (i32, i32) {
    %c0_i32 = arith.constant 0 : i32
    %c0_i32_0 = arith.constant 0 : i32
    %c0_i32_1 = arith.constant 0 : i32
    return %c0_i32, %c0_i32_0 : i32, i32
  }
  func.func @transform_4(%arg0: i32) -> (i32, i32) {
    %c0_i32 = arith.constant 0 : i32
    %c0_i32_0 = arith.constant 0 : i32
    %c0_i32_1 = arith.constant 0 : i32
    return %c0_i32, %c0_i32_0 : i32, i32
  }
  func.func @transform_5(%arg0: i32) -> (i32, i32, i32) {
    %c0_i32 = arith.constant 0 : i32
    %c0_i32_0 = arith.constant 0 : i32
    %c0_i32_1 = arith.constant 0 : i32
    return %arg0, %c0_i32, %c0_i32_0 : i32, i32, i32
  }
}

module attributes {stable_mosaic.version = 11 : i64} {
  func.func @_c1x1_chain_kernel(%arg0: i32, %arg1: i32, %arg2: memref<1x8x256xf32, #tpu.memory_space<vmem>>, %arg3: memref<4x8xbf16, #tpu.memory_space<vmem>>, %arg4: memref<4x1xf32, #tpu.memory_space<vmem>>, %arg5: memref<2x4xbf16, #tpu.memory_space<vmem>>, %arg6: memref<2x1xf32, #tpu.memory_space<vmem>>, %arg7: memref<2x2xbf16, #tpu.memory_space<vmem>>, %arg8: memref<2x1xf32, #tpu.memory_space<vmem>>, %arg9: memref<1x2x256xf32, #tpu.memory_space<vmem>>) attributes {dimension_semantics = [#tpu.dimension_semantics<parallel>, #tpu.dimension_semantics<parallel>], iteration_bounds = array<i64: 2, 1>, scalar_prefetch = 0 : i64, scratch_operands = 0 : i64, tpu.core_type = #tpu.core_type<tc>, window_params = [{transform_indices = @transform_0, window_bounds = array<i64: 1, 8, 256>}, {pipeline_mode = #tpu.pipeline_mode<synchronous>, transform_indices = @transform_1, window_bounds = array<i64: 4, 8>}, {pipeline_mode = #tpu.pipeline_mode<synchronous>, transform_indices = @transform_2, window_bounds = array<i64: 4, 1>}, {pipeline_mode = #tpu.pipeline_mode<synchronous>, transform_indices = @transform_3, window_bounds = array<i64: 2, 4>}, {pipeline_mode = #tpu.pipeline_mode<synchronous>, transform_indices = @transform_4, window_bounds = array<i64: 2, 1>}, {pipeline_mode = #tpu.pipeline_mode<synchronous>, transform_indices = @transform_5, window_bounds = array<i64: 2, 2>}, {pipeline_mode = #tpu.pipeline_mode<synchronous>, transform_indices = @transform_6, window_bounds = array<i64: 2, 1>}, {transform_indices = @transform_7, window_bounds = array<i64: 1, 2, 256>}]} {
    %c0 = arith.constant 0 : index
    %c0_0 = arith.constant 0 : index
    %c0_1 = arith.constant 0 : index
    %0 = vector.load %arg2[%c0, %c0_0, %c0_1] : memref<1x8x256xf32, #tpu.memory_space<vmem>>, vector<1x8x256xf32>
    %1 = vector.shape_cast %0 : vector<1x8x256xf32> to vector<8x256xf32>
    %2 = arith.truncf %1 : vector<8x256xf32> to vector<8x256xbf16>
    %c0_2 = arith.constant 0 : index
    %c0_3 = arith.constant 0 : index
    %3 = vector.load %arg3[%c0_2, %c0_3] : memref<4x8xbf16, #tpu.memory_space<vmem>>, vector<4x8xbf16>
    %cst = arith.constant dense<0.000000e+00> : vector<4x256xf32>
    %4 = tpu.matmul %3, %2, %cst {dimension_numbers = #tpu.dot_dimension_numbers<[1], [0], [0], [1], [0, 0, 1, 1], [], []>} : vector<4x8xbf16>, vector<8x256xbf16>, vector<4x256xf32> -> vector<4x256xf32>
    %c0_4 = arith.constant 0 : index
    %c0_5 = arith.constant 0 : index
    %5 = vector.load %arg4[%c0_4, %c0_5] : memref<4x1xf32, #tpu.memory_space<vmem>>, vector<4x1xf32>
    %6 = vector.broadcast %5 : vector<4x1xf32> to vector<4x256xf32>
    %7 = arith.addf %4, %6 : vector<4x256xf32>
    %c0_6 = arith.constant 0 : index
    %c0_7 = arith.constant 0 : index
    %8 = vector.load %arg5[%c0_6, %c0_7] : memref<2x4xbf16, #tpu.memory_space<vmem>>, vector<2x4xbf16>
    %9 = arith.truncf %7 : vector<4x256xf32> to vector<4x256xbf16>
    %cst_8 = arith.constant dense<0.000000e+00> : vector<2x256xf32>
    %10 = tpu.matmul %8, %9, %cst_8 {dimension_numbers = #tpu.dot_dimension_numbers<[1], [0], [0], [1], [0, 0, 1, 1], [], []>} : vector<2x4xbf16>, vector<4x256xbf16>, vector<2x256xf32> -> vector<2x256xf32>
    %c0_9 = arith.constant 0 : index
    %c0_10 = arith.constant 0 : index
    %11 = vector.load %arg6[%c0_9, %c0_10] : memref<2x1xf32, #tpu.memory_space<vmem>>, vector<2x1xf32>
    %12 = vector.broadcast %11 : vector<2x1xf32> to vector<2x256xf32>
    %13 = arith.addf %10, %12 : vector<2x256xf32>
    %c0_11 = arith.constant 0 : index
    %c0_12 = arith.constant 0 : index
    %14 = vector.load %arg7[%c0_11, %c0_12] : memref<2x2xbf16, #tpu.memory_space<vmem>>, vector<2x2xbf16>
    %15 = arith.truncf %13 : vector<2x256xf32> to vector<2x256xbf16>
    %cst_13 = arith.constant dense<0.000000e+00> : vector<2x256xf32>
    %16 = tpu.matmul %14, %15, %cst_13 {dimension_numbers = #tpu.dot_dimension_numbers<[1], [0], [0], [1], [0, 0, 1, 1], [], []>} : vector<2x2xbf16>, vector<2x256xbf16>, vector<2x256xf32> -> vector<2x256xf32>
    %c0_14 = arith.constant 0 : index
    %c0_15 = arith.constant 0 : index
    %17 = vector.load %arg8[%c0_14, %c0_15] : memref<2x1xf32, #tpu.memory_space<vmem>>, vector<2x1xf32>
    %18 = vector.broadcast %17 : vector<2x1xf32> to vector<2x256xf32>
    %19 = arith.addf %16, %18 : vector<2x256xf32>
    %c0_16 = arith.constant 0 : index
    %c0_17 = arith.constant 0 : index
    %c0_18 = arith.constant 0 : index
    %20 = vector.load %arg9[%c0_16, %c0_17, %c0_18] : memref<1x2x256xf32, #tpu.memory_space<vmem>>, vector<1x2x256xf32>
    %21 = vector.shape_cast %20 : vector<1x2x256xf32> to vector<2x256xf32>
    %22 = vector.shape_cast %19 : vector<2x256xf32> to vector<1x2x256xf32>
    tpu.vector_store %arg9[%c0_16, %c0_17, %c0_18], %22 {strides = array<i32>} : memref<1x2x256xf32, #tpu.memory_space<vmem>>, vector<1x2x256xf32>,
    return
  }
  func.func @transform_0(%arg0: i32, %arg1: i32) -> (i32, i32, i32) {
    %c0_i32 = arith.constant 0 : i32
    %c0_i32_0 = arith.constant 0 : i32
    return %arg0, %c0_i32, %arg1 : i32, i32, i32
  }
  func.func @transform_1(%arg0: i32, %arg1: i32) -> (i32, i32) {
    %c0_i32 = arith.constant 0 : i32
    %c0_i32_0 = arith.constant 0 : i32
    %c0_i32_1 = arith.constant 0 : i32
    return %c0_i32, %c0_i32_0 : i32, i32
  }
  func.func @transform_2(%arg0: i32, %arg1: i32) -> (i32, i32) {
    %c0_i32 = arith.constant 0 : i32
    %c0_i32_0 = arith.constant 0 : i32
    %c0_i32_1 = arith.constant 0 : i32
    return %c0_i32, %c0_i32_0 : i32, i32
  }
  func.func @transform_3(%arg0: i32, %arg1: i32) -> (i32, i32) {
    %c0_i32 = arith.constant 0 : i32
    %c0_i32_0 = arith.constant 0 : i32
    %c0_i32_1 = arith.constant 0 : i32
    return %c0_i32, %c0_i32_0 : i32, i32
  }
  func.func @transform_4(%arg0: i32, %arg1: i32) -> (i32, i32) {
    %c0_i32 = arith.constant 0 : i32
    %c0_i32_0 = arith.constant 0 : i32
    %c0_i32_1 = arith.constant 0 : i32
    return %c0_i32, %c0_i32_0 : i32, i32
  }
  func.func @transform_5(%arg0: i32, %arg1: i32) -> (i32, i32) {
    %c0_i32 = arith.constant 0 : i32
    %c0_i32_0 = arith.constant 0 : i32
    %c0_i32_1 = arith.constant 0 : i32
    return %c0_i32, %c0_i32_0 : i32, i32
  }
  func.func @transform_6(%arg0: i32, %arg1: i32) -> (i32, i32) {
    %c0_i32 = arith.constant 0 : i32
    %c0_i32_0 = arith.constant 0 : i32
    %c0_i32_1 = arith.constant 0 : i32
    return %c0_i32, %c0_i32_0 : i32, i32
  }
  func.func @transform_7(%arg0: i32, %arg1: i32) -> (i32, i32, i32) {
    %c0_i32 = arith.constant 0 : i32
    %c0_i32_0 = arith.constant 0 : i32
    return %arg0, %c0_i32, %arg1 : i32, i32, i32
  }
}

</mosaic_0001>

<llo_original>
// kernel: unet_forward.8
$region0: #{unet_forward.8}
  #allocation0 [shape = 'u32[]', space=smem, size = 0x4, offset = 0x4, fixed_abs, tag = 'smem constant byte address 0x4 - core index']
  #allocation1 [shape = 'u32[144,128]{1,0:T(1,128)}', space=vmem, size = 0x12000, scoped, tag = 'internal scratch']
  %s0 = inlined_call_operand.vmem [shape: bf16[9,256], index: 0, kind: input, shape index: {}]
  %s1 = inlined_call_operand.vmem [shape: f32[2,2,256], index: 1, kind: input, shape index: {}]
  %s2 = inlined_call_operand.vmem [shape: bf16[8,18], index: 2, kind: input, shape index: {}]
  %s3 = inlined_call_operand.vmem [shape: bf16[8,72], index: 3, kind: input, shape index: {}]
  %s4 = inlined_call_operand.vmem [shape: f32[2,8,256], index: 4, kind: output, shape index: {}]
  %s5 = sld [smem:[#allocation0]]
  $region49: #{unet_forward.8} parent=0
    _
  %s7 = ssub.s32 1, %s5
  %s8 = scalar_select 0, %s7, %s5
  loop: start=0, step=1, limit=4
  $region2: #{unet_forward.8} parent=0 // loop_pre_header
    _
  $region3: #{unet_forward.8} parent=0 // loop_header
    %s10 = sphi 0, %s14
    %p11 = scmp.ge.s32.totalorder %s10, 4
    %s18 = sphi 0, %s18
    %s20 = sphi 0, %s18
    %s21 = sphi 0, %s20
    %s35 = sphi 0, %s21
    %s41 = sphi 0, %s43
    %s44 = sphi 0, %s41
    %s45 = sphi 0, %s44
    %s61 = sphi 0, %s45
    %s65 = sphi 0, %s65
    %s67 = sphi 0, %s65
    %s68 = sphi 0, %s67
    %s82 = sphi 0, %s68
    %s86 = sphi 0, %s86
    %s88 = sphi 0, %s86
    %s89 = sphi 0, %s88
    %s103 = sphi 0, %s89
    %s109 = sphi 0, %s111
    %s112 = sphi 0, %s109
    %s113 = sphi 0, %s112
    %s129 = sphi 0, %s113
  $region4: #{unet_forward.8} parent=0 // loop_header_branch
    %13 = sbr.rel (%p11) target = $region8
  $region5: #{unet_forward.8} parent=0 // loop_body
    %s15 = ssub.s32 %s10, 1
    %s16 = ssub.s32 %s10, 2
    %s17 = sadd.s32 %s10, 1
    %s19 = sadd.s32 %s18, 1
    %p22 = scmp.eq.s32.totalorder %s10, 1
    %p23 = scmp.ne.s32.totalorder %s18, %s20
    %p24 = scmp.eq.s32.totalorder %s10, 0
    %p25 = por %p23, %p24
    %p26 = scmp.ne.s32.totalorder %s18, %s20
    %p27 = scmp.eq.s32.totalorder %s15, 1
    %p28 = por %p26, %p27
    %p29 = scmp.ne.s32.totalorder %s20, %s21
    %p30 = scmp.eq.s32.totalorder %s15, 0
    %p31 = por %p29, %p30
    %p32 = scmp.ne.s32.totalorder %s20, %s21
    %p33 = scmp.eq.s32.totalorder %s16, 1
    %p34 = por %p32, %p33
    %p36 = scmp.ne.s32.totalorder %s21, %s35
    %p37 = scmp.eq.s32.totalorder %s16, 0
    %p38 = por %p36, %p37
    %s39 = ssub.s32 %s10, %s17
    %p40 = scmp.eq.s32.totalorder %s39, 0
    %s42 = sadd.s32 %s41, 1
    %s43 = scalar_select %p40, %s41, %s42
    %p46 = pneg %p40
    %p47 = scmp.eq.s32.totalorder %s10, 1
    %p48 = por %p46, %p47
    %p49 = scmp.ne.s32.totalorder %s41, %s44
    %p50 = scmp.eq.s32.totalorder %s10, 0
    %p51 = por %p49, %p50
    %p52 = scmp.ne.s32.totalorder %s41, %s44
    %p53 = scmp.eq.s32.totalorder %s15, 1
    %p54 = por %p52, %p53
    %p55 = scmp.ne.s32.totalorder %s44, %s45
    %p56 = scmp.eq.s32.totalorder %s15, 0
    %p57 = por %p55, %p56
    %p58 = scmp.ne.s32.totalorder %s44, %s45
    %p59 = scmp.eq.s32.totalorder %s16, 1
    %p60 = por %p58, %p59
    %p62 = scmp.ne.s32.totalorder %s45, %s61
    %p63 = scmp.eq.s32.totalorder %s16, 0
    %p64 = por %p62, %p63
    %s66 = sadd.s32 %s65, 1
    %p69 = scmp.eq.s32.totalorder %s10, 1
    %p70 = scmp.ne.s32.totalorder %s65, %s67
    %p71 = scmp.eq.s32.totalorder %s10, 0
    %p72 = por %p70, %p71
    %p73 = scmp.ne.s32.totalorder %s65, %s67
    %p74 = scmp.eq.s32.totalorder %s15, 1
    %p75 = por %p73, %p74
    %p76 = scmp.ne.s32.totalorder %s67, %s68
    %p77 = scmp.eq.s32.totalorder %s15, 0
    %p78 = por %p76, %p77
    %p79 = scmp.ne.s32.totalorder %s67, %s68
    %p80 = scmp.eq.s32.totalorder %s16, 1
    %p81 = por %p79, %p80
    %p83 = scmp.ne.s32.totalorder %s68, %s82
    %p84 = scmp.eq.s32.totalorder %s16, 0
    %p85 = por %p83, %p84
    %s87 = sadd.s32 %s86, 1
    %p90 = scmp.eq.s32.totalorder %s10, 1
    %p91 = scmp.ne.s32.totalorder %s86, %s88
    %p92 = scmp.eq.s32.totalorder %s10, 0
    %p93 = por %p91, %p92
    %p94 = scmp.ne.s32.totalorder %s86, %s88
    %p95 = scmp.eq.s32.totalorder %s15, 1
    %p96 = por %p94, %p95
    %p97 = scmp.ne.s32.totalorder %s88, %s89
    %p98 = scmp.eq.s32.totalorder %s15, 0
    %p99 = por %p97, %p98
    %p100 = scmp.ne.s32.totalorder %s88, %s89
    %p101 = scmp.eq.s32.totalorder %s16, 1
    %p102 = por %p100, %p101
    %p104 = scmp.ne.s32.totalorder %s89, %s103
    %p105 = scmp.eq.s32.totalorder %s16, 0
    %p106 = por %p104, %p105
    %s107 = ssub.s32 %s10, %s17
    %p108 = scmp.eq.s32.totalorder %s107, 0
    %s110 = sadd.s32 %s109, 1
    %s111 = scalar_select %p108, %s109, %s110
    %p114 = pneg %p108
    %p115 = scmp.eq.s32.totalorder %s10, 1
    %p116 = por %p114, %p115
    %p117 = scmp.ne.s32.totalorder %s109, %s112
    %p118 = scmp.eq.s32.totalorder %s10, 0
    %p119 = por %p117, %p118
    %p120 = scmp.ne.s32.totalorder %s109, %s112
    %p121 = scmp.eq.s32.totalorder %s15, 1
    %p122 = por %p120, %p121
    %p123 = scmp.ne.s32.totalorder %s112, %s113
    %p124 = scmp.eq.s32.totalorder %s15, 0
    %p125 = por %p123, %p124
    %p126 = scmp.ne.s32.totalorder %s112, %s113
    %p127 = scmp.eq.s32.totalorder %s16, 1
    %p128 = por %p126, %p127
    %p130 = scmp.ne.s32.totalorder %s113, %s129
    %p131 = scmp.eq.s32.totalorder %s16, 0
    %p132 = por %p130, %p131
    %p133 = scmp.le.s32.totalorder 1, %s10
    %p134 = scmp.lt.s32.totalorder %s10, 3
    %p135 = pnand %p133, %p134
    %p136 = pneg %p135
    // Predicated region
    $region9: #{unet_forward.8} parent=5 // pred_check
      _
    $region10: #{unet_forward.8} parent=5 // pred_check_branch
      %138 = sbr.rel (%p135) target = $region12
    $region11: #{unet_forward.8} parent=5 // pred_region
      %s139 = ssub.s32 %s10, 1
      // Predicated region
      $region13: #{unet_forward.8} parent=11 // pred_check
        %p140 = pneg %p31
      $region14: #{unet_forward.8} parent=11 // pred_check_branch
        %142 = sbr.rel (%p140) target = $region16
      $region15: #{unet_forward.8} parent=11 // pred_region
        _
      $region16: #{unet_forward.8} parent=11 // pred_fallthru
        _
      // Predicated region
      $region17: #{unet_forward.8} parent=11 // pred_check
        %p143 = pneg %p78
      $region18: #{unet_forward.8} parent=11 // pred_check_branch
        %145 = sbr.rel (%p143) target = $region20
      $region19: #{unet_forward.8} parent=11 // pred_region
        _
      $region20: #{unet_forward.8} parent=11 // pred_fallthru
        _
      // Predicated region
      $region21: #{unet_forward.8} parent=11 // pred_check
        %p146 = pneg %p99
      $region22: #{unet_forward.8} parent=11 // pred_check_branch
        %148 = sbr.rel (%p146) target = $region24
      $region23: #{unet_forward.8} parent=11 // pred_region
        _
      $region24: #{unet_forward.8} parent=11 // pred_fallthru
        _
    $region12: #{unet_forward.8} parent=5 // pred_fallthru
      _
    %p149 = scmp.lt.s32.totalorder %s10, 2
    // Predicated region
    $region25: #{unet_forward.8} parent=5 // pred_check
      %p150 = pneg %p149
    $region26: #{unet_forward.8} parent=5 // pred_check_branch
      %152 = sbr.rel (%p150) target = $region28
    $region27: #{unet_forward.8} parent=5 // pred_region
      // Predicated region
      $region29: #{unet_forward.8} parent=27 // pred_check
        %p153 = pneg %p51
      $region30: #{unet_forward.8} parent=27 // pred_check_branch
        %155 = sbr.rel (%p153) target = $region32
      $region31: #{unet_forward.8} parent=27 // pred_region
        %p156 = scmp.lt.s32.totalorder %s10, 1
        %s157 = scalar_select %p156, %s10, 1
        %s158 = smul.addr %s157, 2
        %s159 = smul.addr %s158, 2
        %s160 = scalar_lea.vmem %s1, %s159
      $region32: #{unet_forward.8} parent=27 // pred_fallthru
        _
    $region28: #{unet_forward.8} parent=5 // pred_fallthru
      _
    %p161 = scmp.le.s32.totalorder 1, %s10
    %p162 = scmp.lt.s32.totalorder %s10, 3
    %p163 = pnand %p161, %p162
    %p164 = pneg %p163
    // Predicated region
    $region33: #{unet_forward.8} parent=5 // pred_check
      _
    $region34: #{unet_forward.8} parent=5 // pred_check_branch
      %166 = sbr.rel (%p163) target = $region36
    $region35: #{unet_forward.8} parent=5 // pred_region
      %s167 = ssub.s32 %s10, 1
      %p168 = pneg %p31
      %p169 = pneg %p28
      %p170 = scmp.lt.s32.totalorder %s15, 1
      %s171 = scalar_select %p170, %s15, 1
      %s172 = smul.addr %s171, 2
      %s173 = smul.addr %s172, 2
      %s174 = scalar_lea.vmem %s1, %s173
      %p175 = pneg %p57
      %p176 = pneg %p54
      %p177 = pneg %p78
      %p178 = pneg %p75
      %p179 = pneg %p99
      %p180 = pneg %p96
      %p181 = pneg %p125
      %p182 = pneg %p122
      %p183 = scmp.lt.s32.totalorder %s15, 1
      %s184 = scalar_select %p183, %s15, 1
      %s185 = smul.addr %s184, 2
      %s186 = smul.addr %s185, 8
      %s187 = scalar_lea.vmem %s4, %s186
      %p188 = scmp.lt.s32.totalorder %s15, 1
      %s189 = scalar_select %p188, %s15, 1
      %s190 = smul.addr %s189, 2
      %s191 = smul.addr %s190, 2
      %s192 = scalar_lea.vmem %s1, %s191
      %p193 = scmp.lt.s32.totalorder %s15, 1
      %s194 = scalar_select %p193, %s15, 1
      %s195 = smul.addr %s194, 2
      %s196 = smul.addr %s195, 8
      %s197 = scalar_lea.vmem %s4, %s196
      %v199 = vld [vmem:[%s192] sm:$0xf]
      %v202 = vunpack.c.l.s4 1983009808
      %v203 = vunpack.c.0.s8 %v202
      %v204 = vlaneseq
      %v205 = vshrl.u32 %v204, 7
      %v206 = vsub.s32 %v203, %v205
      %v207 = vrot.slane %v199, %v206
      %v208 = vcombine.high %v207, %v207
      %v211 = vpack.c.bf16 %v207, %v207
      %v212 = vpack.c.bf16 %v208, %v208
      %214 = vrot.lane.b32.xlu0 %v212, 17
      %v215 = vpop.permute.xlu0 %214
      %217 = vrot.lane.b32.xlu0 %v211, 17
      %v218 = vpop.permute.xlu0 %217
      %vm219 = vcmask 138240
      %v220 = vsel %vm219, %v218, %v215
      %vm222 = vcmask 138240
      %v225 = vsel %vm222, %v215, %v218
      %v227 = vld [vmem:[%s0] sm:$0x11]
      %v229 = vunpack.c.l.b16 %v227
      %v230 = vunpack.c.h.b16 %v227
      %v231 = vpack.c.b16 %v229, %v229
      %v232 = vpack.c.b16 %v230, %v230
      %v234 = vpack.i.b16 %v231, %v231
      %v236 = vlaneseq
      %v237 = vshrl.u32 %v236, 7
      %v238 = vsub.s32 0, %v237
      %v239 = vrot.slane %v234, %v238
      %v241 = vpack.i.b16 %v232, %v232
      %v243 = vlaneseq
      %v244 = vshrl.u32 %v243, 7
      %v245 = vsub.s32 0, %v244
      %v246 = vrot.slane %v241, %v245
      %v247 = vmul.bf16 %v225, %v239
      %v248 = vmul.bf16 %v220, %v246
      %249 = vrot.lane.b32.xlu0 %v212, 16
      %v250 = vpop.permute.xlu0 %249
      %251 = vrot.lane.b32.xlu0 %v211, 16
      %v252 = vpop.permute.xlu0 %251
      %vm253 = vcmask 130048
      %v254 = vsel %vm253, %v252, %v250
      %vm256 = vcmask 130048
      %v259 = vsel %vm256, %v250, %v252
      %v261 = vshrl.u32 %v231, 16
      %v262 = vpack.i.b16 %v261, %v261
      %v264 = vlaneseq
      %v265 = vshrl.u32 %v264, 7
      %v266 = vsub.s32 0, %v265
      %v267 = vrot.slane %v262, %v266
      %v268 = vshrl.u32 %v232, 16
      %v269 = vpack.i.b16 %v268, %v268
      %v271 = vlaneseq
      %v272 = vshrl.u32 %v271, 7
      %v273 = vsub.s32 0, %v272
      %v274 = vrot.slane %v269, %v273
      %v275 = vmul.bf16 %v259, %v267
      %v276 = vmul.bf16 %v254, %v274
      %277 = vrot.lane.b32.xlu0 %v212, 15
      %v278 = vpop.permute.xlu0 %277
      %279 = vrot.lane.b32.xlu0 %v211, 15
      %v280 = vpop.permute.xlu0 %279
      %vm281 = vcmask 121856
      %v282 = vsel %vm281, %v280, %v278
      %vm284 = vcmask 121856
      %v287 = vsel %vm284, %v278, %v280
      %v289 = vld [vmem:[%s0] sm:$0x22]
      %v291 = vunpack.c.l.b16 %v289
      %v292 = vunpack.c.h.b16 %v289
      %v293 = vpack.c.b16 %v291, %v291
      %v294 = vpack.c.b16 %v292, %v292
      %v296 = vpack.i.b16 %v293, %v293
      %v298 = vlaneseq
      %v299 = vshrl.u32 %v298, 7
      %v300 = vsub.s32 1, %v299
      %v301 = vrot.slane %v296, %v300
      %v303 = vpack.i.b16 %v294, %v294
      %v305 = vlaneseq
      %v306 = vshrl.u32 %v305, 7
      %v307 = vsub.s32 1, %v306
      %v308 = vrot.slane %v303, %v307
      %v309 = vmul.bf16 %v287, %v301
      %v310 = vmul.bf16 %v282, %v308
      %311 = vrot.lane.b32.xlu0 %v212, 1
      %v312 = vpop.permute.xlu0 %311
      %313 = vrot.lane.b32.xlu0 %v211, 1
      %v314 = vpop.permute.xlu0 %313
      %vm315 = vcmask 7168
      %v316 = vsel %vm315, %v314, %v312
      %vm318 = vcmask 7168
      %v321 = vsel %vm318, %v312, %v314
      %v323 = vshrl.u32 %v293, 16
      %v324 = vpack.i.b16 %v323, %v323
      %v326 = vlaneseq
      %v327 = vshrl.u32 %v326, 7
      %v328 = vsub.s32 1, %v327
      %v329 = vrot.slane %v324, %v328
      %v330 = vshrl.u32 %v294, 16
      %v331 = vpack.i.b16 %v330, %v330
      %v333 = vlaneseq
      %v334 = vshrl.u32 %v333, 7
      %v335 = vsub.s32 1, %v334
      %v336 = vrot.slane %v331, %v335
      %v337 = vmul.bf16 %v321, %v329
      %v338 = vmul.bf16 %v316, %v336
      %339 = vrot.lane.b32.xlu0 %v211, 127
      %v340 = vpop.permute.xlu0 %339
      %341 = vrot.lane.b32.xlu0 %v212, 127
      %v342 = vpop.permute.xlu0 %341
      %vm343 = vcmask 1039360
      %v344 = vsel %vm343, %v340, %v342
      %vm346 = vcmask 1039360
      %v349 = vsel %vm346, %v342, %v340
      %v351 = vld [vmem:[%s0] sm:$0x44]
      %v353 = vunpack.c.l.b16 %v351
      %v354 = vunpack.c.h.b16 %v351
      %v355 = vpack.c.b16 %v353, %v353
      %v356 = vpack.c.b16 %v354, %v354
      %v358 = vshrl.u32 %v355, 16
      %v359 = vpack.i.b16 %v358, %v358
      %v361 = vlaneseq
      %v362 = vshrl.u32 %v361, 7
      %v363 = vsub.s32 2, %v362
      %v364 = vrot.slane %v359, %v363
      %v366 = vshrl.u32 %v356, 16
      %v367 = vpack.i.b16 %v366, %v366
      %v369 = vlaneseq
      %v370 = vshrl.u32 %v369, 7
      %v371 = vsub.s32 2, %v370
      %v372 = vrot.slane %v367, %v371
      %v373 = vmul.bf16 %v344, %v364
      %v374 = vmul.bf16 %v349, %v372
      %375 = vrot.lane.b32.xlu0 %v211, 113
      %v376 = vpop.permute.xlu0 %375
      %377 = vrot.lane.b32.xlu0 %v212, 113
      %v378 = vpop.permute.xlu0 %377
      %vm379 = vcmask 924672
      %v380 = vsel %vm379, %v376, %v378
      %vm382 = vcmask 924672
      %v385 = vsel %vm382, %v378, %v376
      %v387 = vld [vmem:[%s0] sm:$0x88]
      %v389 = vunpack.c.l.b16 %v387
      %v390 = vunpack.c.h.b16 %v387
      %v391 = vpack.c.b16 %v389, %v389
      %v392 = vpack.c.b16 %v390, %v390
      %v394 = vpack.i.b16 %v391, %v391
      %v396 = vlaneseq
      %v397 = vshrl.u32 %v396, 7
      %v398 = vsub.s32 3, %v397
      %v399 = vrot.slane %v394, %v398
      %v401 = vpack.i.b16 %v392, %v392
      %v403 = vlaneseq
      %v404 = vshrl.u32 %v403, 7
      %v405 = vsub.s32 3, %v404
      %v406 = vrot.slane %v401, %v405
      %v407 = vmul.bf16 %v380, %v399
      %v408 = vmul.bf16 %v385, %v406
      %409 = vrot.lane.b32.xlu0 %v211, 112
      %v410 = vpop.permute.xlu0 %409
      %411 = vrot.lane.b32.xlu0 %v212, 112
      %v412 = vpop.permute.xlu0 %411
      %vm413 = vcmask 916480
      %v414 = vsel %vm413, %v410, %v412
      %vm416 = vcmask 916480
      %v419 = vsel %vm416, %v412, %v410
      %v421 = vshrl.u32 %v391, 16
      %v422 = vpack.i.b16 %v421, %v421
      %v424 = vlaneseq
      %v425 = vshrl.u32 %v424, 7
      %v426 = vsub.s32 3, %v425
      %v427 = vrot.slane %v422, %v426
      %v428 = vshrl.u32 %v392, 16
      %v429 = vpack.i.b16 %v428, %v428
      %v431 = vlaneseq
      %v432 = vshrl.u32 %v431, 7
      %v433 = vsub.s32 3, %v432
      %v434 = vrot.slane %v429, %v433
      %v435 = vmul.bf16 %v414, %v427
      %v436 = vmul.bf16 %v419, %v434
      %437 = vrot.lane.b32.xlu0 %v211, 111
      %v438 = vpop.permute.xlu0 %437
      %439 = vrot.lane.b32.xlu0 %v212, 111
      %v440 = vpop.permute.xlu0 %439
      %vm441 = vcmask 908288
      %v442 = vsel %vm441, %v438, %v440
      %vm444 = vcmask 908288
      %v447 = vsel %vm444, %v440, %v438
      %v449 = vld [vmem:[%s0 + $0x8] sm:$0x11]
      %v451 = vunpack.c.l.b16 %v449
      %v452 = vunpack.c.h.b16 %v449
      %v453 = vpack.c.b16 %v451, %v451
      %v454 = vpack.c.b16 %v452, %v452
      %v456 = vpack.i.b16 %v453, %v453
      %v458 = vlaneseq
      %v459 = vshrl.u32 %v458, 7
      %v460 = vsub.s32 0, %v459
      %v461 = vrot.slane %v456, %v460
      %v463 = vpack.i.b16 %v454, %v454
      %v465 = vlaneseq
      %v466 = vshrl.u32 %v465, 7
      %v467 = vsub.s32 0, %v466
      %v468 = vrot.slane %v463, %v467
      %v469 = vmul.bf16 %v442, %v461
      %v470 = vmul.bf16 %v447, %v468
      %v473 = vrot.slane %v275, 7
      %v474 = vrot.slane %v276, 7
      %v477 = vrot.slane %v309, 6
      %v478 = vrot.slane %v310, 6
      %v481 = vrot.slane %v337, 5
      %v482 = vrot.slane %v338, 5
      %v483 = vrot.slane %v211, 4
      %v484 = vrot.slane %v212, 4
      %v487 = vrot.slane %v373, 3
      %v488 = vrot.slane %v374, 3
      %v491 = vrot.slane %v407, 2
      %v492 = vrot.slane %v408, 2
      %v495 = vrot.slane %v435, 1
      %v496 = vrot.slane %v436, 1
      %vm497 = vcmask 1040384
      %v500 = vsel %vm497, %v247, %v473
      %v503 = vsel %vm497, %v248, %v474
      %vm504 = vcmask 1041408
      %v506 = vsel %vm504, %v500, %v477
      %v508 = vsel %vm504, %v503, %v478
      %vm509 = vcmask 1042432
      %v511 = vsel %vm509, %v506, %v481
      %v513 = vsel %vm509, %v508, %v482
      %vm514 = vcmask 1043456
      %v516 = vsel %vm514, %v511, %v483
      %v518 = vsel %vm514, %v513, %v484
      %vm519 = vcmask 1044480
      %v521 = vsel %vm519, %v516, %v487
      %v523 = vsel %vm519, %v518, %v488
      %vm524 = vcmask 1045504
      %v526 = vsel %vm524, %v521, %v491
      %v528 = vsel %vm524, %v523, %v492
      %vm529 = vcmask 1046528
      %v531 = vsel %vm529, %v526, %v495
      %v534 = vsel %vm529, %v528, %v496
      %v536 = vld [vmem:[%s2] sm:$0xf]
      %vm537 = vcmask 146432
      %v539 = vsel %vm537, %v536, 0
      %v542 = vsel %vm497, %v469, 0
      %v545 = vsel %vm497, %v470, 0
      %547 = vmatprep.subr.bf16.mxu0 %v534
      %548 = vmatpush1.bf16.msra.mxu0 %v531
      %549 = vmatprep.subr.bf16.mxu0 %v545
      %550 = vmatpush1.bf16.msra.mxu0 %v542
      %551 = vmatprep.subr.bf16.mxu0 0
      %552 = vmatpush1.bf16.msra.mxu0 0
      %553 = vmatprep.subr.bf16.mxu0 0
      %554 = vmatpush1.bf16.msra.mxu0 0
      %555 = vmatprep.subr.bf16.mxu0 0
      %556 = vmatpush1.bf16.msra.mxu0 0
      %557 = vmatprep.subr.bf16.mxu0 0
      %558 = vmatpush1.bf16.msra.mxu0 0
      %559 = vmatprep.subr.bf16.mxu0 0
      %560 = vmatpush1.bf16.msra.mxu0 0
      %561 = vmatprep.subr.bf16.mxu0 0
      %562 = vmatpush1.bf16.msra.mxu0 0
      %563 = vmatprep.subr.bf16.mxu0 0
      %564 = vmatpush1.bf16.msra.mxu0 0
      %565 = vmatprep.subr.bf16.mxu0 0
      %566 = vmatpush1.bf16.msra.mxu0 0
      %567 = vmatprep.subr.bf16.mxu0 0
      %568 = vmatpush1.bf16.msra.mxu0 0
      %569 = vmatprep.subr.bf16.mxu0 0
      %570 = vmatpush1.bf16.msra.mxu0 0
      %571 = vmatprep.subr.bf16.mxu0 0
      %572 = vmatpush1.bf16.msra.mxu0 0
      %573 = vmatprep.subr.bf16.mxu0 0
      %574 = vmatpush1.bf16.msra.mxu0 0
      %575 = vmatprep.subr.bf16.mxu0 0
      %576 = vmatpush1.bf16.msra.mxu0 0
      %577 = vmatprep.subr.bf16.mxu0 0
      %578 = vmatpush1.bf16.msra.mxu0 0
      %579 = vmatprep.mubr.bf16.mxu0 0
      %580 = vmatmul.mubr.bf16.gmra.mrb[0].mxu0 %v539
      %v581 = vpop.f32.mrb[0].mxu0
      %v582 = vadd.f32 0.0, %v581
      %v583 = vpop.f32.mrb[0].mxu0
      %v584 = vadd.f32 0.0, %v583
      %v585 = vpop.f32.mrb[0].mxu0
      %v586 = vpop.f32.mrb[0].mxu0
      %587 = vdwg.mxu0
      %v588 = vadd.f32 %v582, %v584
      %589 = vadd.xlane.f32.xlu0 %v588
      %v590 = vpop.xlane.xlu0 %589
      %v591 = vmul.f32 %v582, %v582
      %v592 = vmul.f32 %v584, %v584
      %v593 = vadd.f32 %v591, %v592
      %594 = vadd.xlane.f32.xlu0 %v593
      %v595 = vpop.xlane.xlu0 %594
      %v596 = vmul.f32 %v590, 0.00390625
      %v597 = vmul.f32 %v595, 0.00390625
      %v598 = vmul.f32 %v596, %v596
      %v599 = vsub.f32 %v597, %v598
      %v600 = vmax.f32 %v599, 0.0
      %v601 = vadd.f32 %v600, 1e-05
      %v602 = vrsqrt.pop %v601
      %v603 = vsub.f32 0.0, %v596
      %v604 = vmul.f32 %v603, %v602
      %v605 = vmul.f32 %v582, %v602
      %v606 = vmul.f32 %v584, %v602
      %v607 = vadd.f32 %v605, %v604
      %v608 = vadd.f32 %v606, %v604
      %v609 = vmax.f32 %v607, 0.0
      %v610 = vmax.f32 %v608, 0.0
      %v611 = vpack.c.bf16 %v609, %v609
      %v612 = vpack.c.bf16 %v610, %v610
      %614 = vrot.lane.b32.xlu0 %v612, 17
      %v615 = vpop.permute.xlu0 %614
      %617 = vrot.lane.b32.xlu0 %v611, 17
      %v618 = vpop.permute.xlu0 %617
      %v619 = vsel %vm219, %v618, %v615
      %v623 = vsel %vm222, %v615, %v618
      %v625 = vmul.bf16 %v623, %v239
      %v626 = vmul.bf16 %v619, %v246
      %627 = vrot.lane.b32.xlu0 %v612, 16
      %v628 = vpop.permute.xlu0 %627
      %629 = vrot.lane.b32.xlu0 %v611, 16
      %v630 = vpop.permute.xlu0 %629
      %v631 = vsel %vm253, %v630, %v628
      %v635 = vsel %vm256, %v628, %v630
      %v637 = vmul.bf16 %v635, %v267
      %v638 = vmul.bf16 %v631, %v274
      %639 = vrot.lane.b32.xlu0 %v612, 15
      %v640 = vpop.permute.xlu0 %639
      %641 = vrot.lane.b32.xlu0 %v611, 15
      %v642 = vpop.permute.xlu0 %641
      %v643 = vsel %vm281, %v642, %v640
      %v647 = vsel %vm284, %v640, %v642
      %v649 = vmul.bf16 %v647, %v301
      %v650 = vmul.bf16 %v643, %v308
      %651 = vrot.lane.b32.xlu0 %v612, 1
      %v652 = vpop.permute.xlu0 %651
      %653 = vrot.lane.b32.xlu0 %v611, 1
      %v654 = vpop.permute.xlu0 %653
      %v655 = vsel %vm315, %v654, %v652
      %v659 = vsel %vm318, %v652, %v654
      %v661 = vmul.bf16 %v659, %v329
      %v662 = vmul.bf16 %v655, %v336
      %663 = vrot.lane.b32.xlu0 %v611, 127
      %v664 = vpop.permute.xlu0 %663
      %665 = vrot.lane.b32.xlu0 %v612, 127
      %v666 = vpop.permute.xlu0 %665
      %v667 = vsel %vm343, %v664, %v666
      %v671 = vsel %vm346, %v666, %v664
      %v673 = vmul.bf16 %v667, %v364
      %v674 = vmul.bf16 %v671, %v372
      %675 = vrot.lane.b32.xlu0 %v611, 113
      %v676 = vpop.permute.xlu0 %675
      %677 = vrot.lane.b32.xlu0 %v612, 113
      %v678 = vpop.permute.xlu0 %677
      %v679 = vsel %vm379, %v676, %v678
      %v683 = vsel %vm382, %v678, %v676
      %v685 = vmul.bf16 %v679, %v399
      %v686 = vmul.bf16 %v683, %v406
      %687 = vrot.lane.b32.xlu0 %v611, 112
      %v688 = vpop.permute.xlu0 %687
      %689 = vrot.lane.b32.xlu0 %v612, 112
      %v690 = vpop.permute.xlu0 %689
      %v691 = vsel %vm413, %v688, %v690
      %v695 = vsel %vm416, %v690, %v688
      %v697 = vmul.bf16 %v691, %v427
      %v698 = vmul.bf16 %v695, %v434
      %699 = vrot.lane.b32.xlu0 %v611, 111
      %v700 = vpop.permute.xlu0 %699
      %701 = vrot.lane.b32.xlu0 %v612, 111
      %v702 = vpop.permute.xlu0 %701
      %v703 = vsel %vm441, %v700, %v702
      %v707 = vsel %vm444, %v702, %v700
      %v709 = vmul.bf16 %v703, %v461
      %v710 = vmul.bf16 %v707, %v468
      %v713 = vrot.slane %v637, 4
      %v714 = vrot.slane %v638, 4
      %v717 = vrot.slane %v661, 4
      %v718 = vrot.slane %v662, 4
      %v721 = vrot.slane %v673, 4
      %v722 = vrot.slane %v674, 4
      %v725 = vrot.slane %v697, 4
      %v726 = vrot.slane %v698, 4
      %v729 = vsel %vm514, %v625, %v713
      %v733 = vsel %vm514, %v626, %v714
      %v737 = vsel %vm514, %v649, %v717
      %v741 = vsel %vm514, %v650, %v718
      %v745 = vsel %vm514, %v611, %v721
      %v749 = vsel %vm514, %v612, %v722
      %v753 = vsel %vm514, %v685, %v725
      %v757 = vsel %vm514, %v686, %v726
      %v759 = vld [vmem:[%s3] sm:$0xf]
      %vm760 = vcmask 588800
      %v762 = vsel %vm760, %v759, 0
      %v765 = vsel %vm514, %v709, 0
      %v768 = vsel %vm514, %v710, 0
      %770 = vmatprep.subr.bf16.mxu0 %v733
      %771 = vmatpush1.bf16.msra.mxu0 %v729
      %772 = vmatprep.subr.bf16.mxu0 %v741
      %773 = vmatpush1.bf16.msra.mxu0 %v737
      %774 = vmatprep.subr.bf16.mxu0 %v749
      %775 = vmatpush1.bf16.msra.mxu0 %v745
      %776 = vmatprep.subr.bf16.mxu0 %v757
      %777 = vmatpush1.bf16.msra.mxu0 %v753
      %778 = vmatprep.subr.bf16.mxu0 %v768
      %779 = vmatpush1.bf16.msra.mxu0 %v765
      %780 = vmatprep.subr.bf16.mxu0 0
      %781 = vmatpush1.bf16.msra.mxu0 0
      %782 = vmatprep.subr.bf16.mxu0 0
      %783 = vmatpush1.bf16.msra.mxu0 0
      %784 = vmatprep.subr.bf16.mxu0 0
      %785 = vmatpush1.bf16.msra.mxu0 0
      %786 = vmatprep.subr.bf16.mxu0 0
      %787 = vmatpush1.bf16.msra.mxu0 0
      %788 = vmatprep.subr.bf16.mxu0 0
      %789 = vmatpush1.bf16.msra.mxu0 0
      %790 = vmatprep.subr.bf16.mxu0 0
      %791 = vmatpush1.bf16.msra.mxu0 0
      %792 = vmatprep.subr.bf16.mxu0 0
      %793 = vmatpush1.bf16.msra.mxu0 0
      %794 = vmatprep.subr.bf16.mxu0 0
      %795 = vmatpush1.bf16.msra.mxu0 0
      %796 = vmatprep.subr.bf16.mxu0 0
      %797 = vmatpush1.bf16.msra.mxu0 0
      %798 = vmatprep.subr.bf16.mxu0 0
      %799 = vmatpush1.bf16.msra.mxu0 0
      %800 = vmatprep.subr.bf16.mxu0 0
      %801 = vmatpush1.bf16.msra.mxu0 0
      %802 = vmatprep.mubr.bf16.mxu0 0
      %803 = vmatmul.mubr.bf16.gmra.mrb[0].mxu0 %v762
      %v804 = vpop.f32.mrb[0].mxu0
      %v805 = vadd.f32 0.0, %v804
      %v806 = vpop.f32.mrb[0].mxu0
      %v807 = vadd.f32 0.0, %v806
      %v808 = vpop.f32.mrb[0].mxu0
      %v809 = vpop.f32.mrb[0].mxu0
      %810 = vdwg.mxu0
      %v811 = vadd.f32 %v805, %v807
      %812 = vadd.xlane.f32.xlu0 %v811
      %v813 = vpop.xlane.xlu0 %812
      %v814 = vmul.f32 %v805, %v805
      %v815 = vmul.f32 %v807, %v807
      %v816 = vadd.f32 %v814, %v815
      %817 = vadd.xlane.f32.xlu0 %v816
      %v818 = vpop.xlane.xlu0 %817
      %v819 = vmul.f32 %v813, 0.00390625
      %v820 = vmul.f32 %v818, 0.00390625
      %v821 = vmul.f32 %v819, %v819
      %v822 = vsub.f32 %v820, %v821
      %v823 = vmax.f32 %v822, 0.0
      %v824 = vadd.f32 %v823, 1e-05
      %v825 = vrsqrt.pop %v824
      %v826 = vsub.f32 0.0, %v819
      %v827 = vmul.f32 %v826, %v825
      %v828 = vmul.f32 %v805, %v825
      %v829 = vmul.f32 %v807, %v825
      %v830 = vadd.f32 %v828, %v827
      %v831 = vadd.f32 %v829, %v827
      %v832 = vmax.f32 %v830, 0.0
      %v833 = vmax.f32 %v831, 0.0
      %834 = vst [vmem:[%s197] sm:$0xff] %v832
      %835 = vst [vmem:[%s197 + $0x8] sm:$0xff] %v833
      %p836 = scmp.lt.s32.totalorder %s15, 1
      %s837 = scalar_select %p836, %s15, 1
      %s838 = smul.addr %s837, 2
      %s839 = smul.addr %s838, 8
      %s840 = scalar_lea.vmem %s4, %s839
      // Predicated region
      $region37: #{unet_forward.8} parent=35 // pred_check
        %p841 = pneg %p122
      $region38: #{unet_forward.8} parent=35 // pred_check_branch
        %843 = sbr.rel (%p841) target = $region40
      $region39: #{unet_forward.8} parent=35 // pred_region
        _
      $region40: #{unet_forward.8} parent=35 // pred_fallthru
        _
    $region36: #{unet_forward.8} parent=5 // pred_fallthru
      _
    %p844 = scmp.le.s32.totalorder 2, %s10
    // Predicated region
    $region41: #{unet_forward.8} parent=5 // pred_check
      %p845 = pneg %p844
    $region42: #{unet_forward.8} parent=5 // pred_check_branch
      %847 = sbr.rel (%p845) target = $region44
    $region43: #{unet_forward.8} parent=5 // pred_region
      %s848 = ssub.s32 %s10, 2
      // Predicated region
      $region45: #{unet_forward.8} parent=43 // pred_check
        %p849 = pneg %p128
      $region46: #{unet_forward.8} parent=43 // pred_check_branch
        %851 = sbr.rel (%p849) target = $region48
      $region47: #{unet_forward.8} parent=43 // pred_region
        %p852 = scmp.lt.s32.totalorder %s16, 1
        %s853 = scalar_select %p852, %s16, 1
        %s854 = smul.addr %s853, 2
        %s855 = smul.addr %s854, 8
        %s856 = scalar_lea.vmem %s4, %s855
      $region48: #{unet_forward.8} parent=43 // pred_fallthru
        _
    $region44: #{unet_forward.8} parent=5 // pred_fallthru
      _
  $region6: #{unet_forward.8} parent=0 // loop_footer
    %s14 = sadd.s32 1, %s10
  $region7: #{unet_forward.8} parent=0 // loop_footer_branch
    %9 = sbr.rel target = $region3
  $region8: #{unet_forward.8} parent=0 // loop_exit
    _

// kernel: unet_forward.9
$region0: #{unet_forward.9}
  #allocation0 [shape = 'u32[]', space=smem, size = 0x4, offset = 0x4, fixed_abs, tag = 'smem constant byte address 0x4 - core index']
  #allocation1 [shape = 'u32[144,128]{1,0:T(1,128)}', space=vmem, size = 0x12000, scoped, tag = 'internal scratch']
  %s0 = inlined_call_operand.vmem [shape: bf16[9,64], index: 0, kind: input, shape index: {}]
  %s1 = inlined_call_operand.vmem [shape: f32[2,8,64], index: 1, kind: input, shape index: {}]
  %s2 = inlined_call_operand.vmem [shape: bf16[16,72], index: 2, kind: input, shape index: {}]
  %s3 = inlined_call_operand.vmem [shape: bf16[16,144], index: 3, kind: input, shape index: {}]
  %s4 = inlined_call_operand.vmem [shape: bf16[2,16,64], index: 4, kind: output, shape index: {}]
  %s5 = sld [smem:[#allocation0]]
  $region49: #{unet_forward.9} parent=0
    _
  %s7 = ssub.s32 1, %s5
  %s8 = scalar_select 0, %s7, %s5
  loop: start=0, step=1, limit=4
  $region2: #{unet_forward.9} parent=0 // loop_pre_header
    _
  $region3: #{unet_forward.9} parent=0 // loop_header
    %s10 = sphi 0, %s14
    %p11 = scmp.ge.s32.totalorder %s10, 4
    %s18 = sphi 0, %s18
    %s20 = sphi 0, %s18
    %s21 = sphi 0, %s20
    %s35 = sphi 0, %s21
    %s41 = sphi 0, %s43
    %s44 = sphi 0, %s41
    %s45 = sphi 0, %s44
    %s61 = sphi 0, %s45
    %s65 = sphi 0, %s65
    %s67 = sphi 0, %s65
    %s68 = sphi 0, %s67
    %s82 = sphi 0, %s68
    %s86 = sphi 0, %s86
    %s88 = sphi 0, %s86
    %s89 = sphi 0, %s88
    %s103 = sphi 0, %s89
    %s109 = sphi 0, %s111
    %s112 = sphi 0, %s109
    %s113 = sphi 0, %s112
    %s129 = sphi 0, %s113
  $region4: #{unet_forward.9} parent=0 // loop_header_branch
    %13 = sbr.rel (%p11) target = $region8
  $region5: #{unet_forward.9} parent=0 // loop_body
    %s15 = ssub.s32 %s10, 1
    %s16 = ssub.s32 %s10, 2
    %s17 = sadd.s32 %s10, 1
    %s19 = sadd.s32 %s18, 1
    %p22 = scmp.eq.s32.totalorder %s10, 1
    %p23 = scmp.ne.s32.totalorder %s18, %s20
    %p24 = scmp.eq.s32.totalorder %s10, 0
    %p25 = por %p23, %p24
    %p26 = scmp.ne.s32.totalorder %s18, %s20
    %p27 = scmp.eq.s32.totalorder %s15, 1
    %p28 = por %p26, %p27
    %p29 = scmp.ne.s32.totalorder %s20, %s21
    %p30 = scmp.eq.s32.totalorder %s15, 0
    %p31 = por %p29, %p30
    %p32 = scmp.ne.s32.totalorder %s20, %s21
    %p33 = scmp.eq.s32.totalorder %s16, 1
    %p34 = por %p32, %p33
    %p36 = scmp.ne.s32.totalorder %s21, %s35
    %p37 = scmp.eq.s32.totalorder %s16, 0
    %p38 = por %p36, %p37
    %s39 = ssub.s32 %s10, %s17
    %p40 = scmp.eq.s32.totalorder %s39, 0
    %s42 = sadd.s32 %s41, 1
    %s43 = scalar_select %p40, %s41, %s42
    %p46 = pneg %p40
    %p47 = scmp.eq.s32.totalorder %s10, 1
    %p48 = por %p46, %p47
    %p49 = scmp.ne.s32.totalorder %s41, %s44
    %p50 = scmp.eq.s32.totalorder %s10, 0
    %p51 = por %p49, %p50
    %p52 = scmp.ne.s32.totalorder %s41, %s44
    %p53 = scmp.eq.s32.totalorder %s15, 1
    %p54 = por %p52, %p53
    %p55 = scmp.ne.s32.totalorder %s44, %s45
    %p56 = scmp.eq.s32.totalorder %s15, 0
    %p57 = por %p55, %p56
    %p58 = scmp.ne.s32.totalorder %s44, %s45
    %p59 = scmp.eq.s32.totalorder %s16, 1
    %p60 = por %p58, %p59
    %p62 = scmp.ne.s32.totalorder %s45, %s61
    %p63 = scmp.eq.s32.totalorder %s16, 0
    %p64 = por %p62, %p63
    %s66 = sadd.s32 %s65, 1
    %p69 = scmp.eq.s32.totalorder %s10, 1
    %p70 = scmp.ne.s32.totalorder %s65, %s67
    %p71 = scmp.eq.s32.totalorder %s10, 0
    %p72 = por %p70, %p71
    %p73 = scmp.ne.s32.totalorder %s65, %s67
    %p74 = scmp.eq.s32.totalorder %s15, 1
    %p75 = por %p73, %p74
    %p76 = scmp.ne.s32.totalorder %s67, %s68
    %p77 = scmp.eq.s32.totalorder %s15, 0
    %p78 = por %p76, %p77
    %p79 = scmp.ne.s32.totalorder %s67, %s68
    %p80 = scmp.eq.s32.totalorder %s16, 1
    %p81 = por %p79, %p80
    %p83 = scmp.ne.s32.totalorder %s68, %s82
    %p84 = scmp.eq.s32.totalorder %s16, 0
    %p85 = por %p83, %p84
    %s87 = sadd.s32 %s86, 1
    %p90 = scmp.eq.s32.totalorder %s10, 1
    %p91 = scmp.ne.s32.totalorder %s86, %s88
    %p92 = scmp.eq.s32.totalorder %s10, 0
    %p93 = por %p91, %p92
    %p94 = scmp.ne.s32.totalorder %s86, %s88
    %p95 = scmp.eq.s32.totalorder %s15, 1
    %p96 = por %p94, %p95
    %p97 = scmp.ne.s32.totalorder %s88, %s89
    %p98 = scmp.eq.s32.totalorder %s15, 0
    %p99 = por %p97, %p98
    %p100 = scmp.ne.s32.totalorder %s88, %s89
    %p101 = scmp.eq.s32.totalorder %s16, 1
    %p102 = por %p100, %p101
    %p104 = scmp.ne.s32.totalorder %s89, %s103
    %p105 = scmp.eq.s32.totalorder %s16, 0
    %p106 = por %p104, %p105
    %s107 = ssub.s32 %s10, %s17
    %p108 = scmp.eq.s32.totalorder %s107, 0
    %s110 = sadd.s32 %s109, 1
    %s111 = scalar_select %p108, %s109, %s110
    %p114 = pneg %p108
    %p115 = scmp.eq.s32.totalorder %s10, 1
    %p116 = por %p114, %p115
    %p117 = scmp.ne.s32.totalorder %s109, %s112
    %p118 = scmp.eq.s32.totalorder %s10, 0
    %p119 = por %p117, %p118
    %p120 = scmp.ne.s32.totalorder %s109, %s112
    %p121 = scmp.eq.s32.totalorder %s15, 1
    %p122 = por %p120, %p121
    %p123 = scmp.ne.s32.totalorder %s112, %s113
    %p124 = scmp.eq.s32.totalorder %s15, 0
    %p125 = por %p123, %p124
    %p126 = scmp.ne.s32.totalorder %s112, %s113
    %p127 = scmp.eq.s32.totalorder %s16, 1
    %p128 = por %p126, %p127
    %p130 = scmp.ne.s32.totalorder %s113, %s129
    %p131 = scmp.eq.s32.totalorder %s16, 0
    %p132 = por %p130, %p131
    %p133 = scmp.le.s32.totalorder 1, %s10
    %p134 = scmp.lt.s32.totalorder %s10, 3
    %p135 = pnand %p133, %p134
    %p136 = pneg %p135
    // Predicated region
    $region9: #{unet_forward.9} parent=5 // pred_check
      _
    $region10: #{unet_forward.9} parent=5 // pred_check_branch
      %138 = sbr.rel (%p135) target = $region12
    $region11: #{unet_forward.9} parent=5 // pred_region
      %s139 = ssub.s32 %s10, 1
      // Predicated region
      $region13: #{unet_forward.9} parent=11 // pred_check
        %p140 = pneg %p31
      $region14: #{unet_forward.9} parent=11 // pred_check_branch
        %142 = sbr.rel (%p140) target = $region16
      $region15: #{unet_forward.9} parent=11 // pred_region
        _
      $region16: #{unet_forward.9} parent=11 // pred_fallthru
        _
      // Predicated region
      $region17: #{unet_forward.9} parent=11 // pred_check
        %p143 = pneg %p78
      $region18: #{unet_forward.9} parent=11 // pred_check_branch
        %145 = sbr.rel (%p143) target = $region20
      $region19: #{unet_forward.9} parent=11 // pred_region
        _
      $region20: #{unet_forward.9} parent=11 // pred_fallthru
        _
      // Predicated region
      $region21: #{unet_forward.9} parent=11 // pred_check
        %p146 = pneg %p99
      $region22: #{unet_forward.9} parent=11 // pred_check_branch
        %148 = sbr.rel (%p146) target = $region24
      $region23: #{unet_forward.9} parent=11 // pred_region
        _
      $region24: #{unet_forward.9} parent=11 // pred_fallthru
        _
    $region12: #{unet_forward.9} parent=5 // pred_fallthru
      _
    %p149 = scmp.lt.s32.totalorder %s10, 2
    // Predicated region
    $region25: #{unet_forward.9} parent=5 // pred_check
      %p150 = pneg %p149
    $region26: #{unet_forward.9} parent=5 // pred_check_branch
      %152 = sbr.rel (%p150) target = $region28
    $region27: #{unet_forward.9} parent=5 // pred_region
      // Predicated region
      $region29: #{unet_forward.9} parent=27 // pred_check
        %p153 = pneg %p51
      $region30: #{unet_forward.9} parent=27 // pred_check_branch
        %155 = sbr.rel (%p153) target = $region32
      $region31: #{unet_forward.9} parent=27 // pred_region
        %p156 = scmp.lt.s32.totalorder %s10, 1
        %s157 = scalar_select %p156, %s10, 1
        %s158 = smul.addr %s157, 8
        %s159 = scalar_lea.vmem %s1, %s158
      $region32: #{unet_forward.9} parent=27 // pred_fallthru
        _
    $region28: #{unet_forward.9} parent=5 // pred_fallthru
      _
    %p160 = scmp.le.s32.totalorder 1, %s10
    %p161 = scmp.lt.s32.totalorder %s10, 3
    %p162 = pnand %p160, %p161
    %p163 = pneg %p162
    // Predicated region
    $region33: #{unet_forward.9} parent=5 // pred_check
      _
    $region34: #{unet_forward.9} parent=5 // pred_check_branch
      %165 = sbr.rel (%p162) target = $region36
    $region35: #{unet_forward.9} parent=5 // pred_region
      %s166 = ssub.s32 %s10, 1
      %p167 = pneg %p31
      %p168 = pneg %p28
      %p169 = scmp.lt.s32.totalorder %s15, 1
      %s170 = scalar_select %p169, %s15, 1
      %s171 = smul.addr %s170, 8
      %s172 = scalar_lea.vmem %s1, %s171
      %p173 = pneg %p57
      %p174 = pneg %p54
      %p175 = pneg %p78
      %p176 = pneg %p75
      %p177 = pneg %p99
      %p178 = pneg %p96
      %p179 = pneg %p125
      %p180 = pneg %p122
      %p181 = scmp.lt.s32.totalorder %s15, 1
      %s182 = scalar_select %p181, %s15, 1
      %s183 = smul.addr %s182, 2
      %s184 = smul.addr %s183, 4
      %s185 = scalar_lea.vmem %s4, %s184
      %p186 = scmp.lt.s32.totalorder %s15, 1
      %s187 = scalar_select %p186, %s15, 1
      %s188 = smul.addr %s187, 8
      %s189 = scalar_lea.vmem %s1, %s188
      %p190 = scmp.lt.s32.totalorder %s15, 1
      %s191 = scalar_select %p190, %s15, 1
      %s192 = smul.addr %s191, 2
      %s193 = smul.addr %s192, 4
      %s194 = scalar_lea.vmem %s4, %s193
      %v196 = vld [vmem:[%s189] sm:$0xff]
      %v197 = vpack.c.bf16 %v196, %v196
      %199 = vrot.lane.b32.xlu0 %v197, 73
      %v200 = vpop.permute.xlu0 %199
      %201 = vrot.lane.b32.xlu0 %v197, 9
      %v202 = vpop.permute.xlu0 %201
      %vm203 = vcmask 72704
      %v206 = vsel %vm203, %v200, %v202
      %v208 = vld [vmem:[%s0] sm:$0x1]
      %v210 = vpack.i.b16 %v208, %v208
      %v212 = vlaneseq
      %v213 = vshrl.u32 %v212, 7
      %v214 = vsub.s32 0, %v213
      %v215 = vrot.slane %v210, %v214
      %v216 = vmul.bf16 %v206, %v215
      %217 = vrot.lane.b32.xlu0 %v197, 72
      %v218 = vpop.permute.xlu0 %217
      %219 = vrot.lane.b32.xlu0 %v197, 8
      %v220 = vpop.permute.xlu0 %219
      %vm221 = vcmask 64512
      %v224 = vsel %vm221, %v218, %v220
      %v226 = vshrl.u32 %v208, 16
      %v227 = vpack.i.b16 %v226, %v226
      %v229 = vlaneseq
      %v230 = vshrl.u32 %v229, 7
      %v231 = vsub.s32 0, %v230
      %v232 = vrot.slane %v227, %v231
      %v233 = vmul.bf16 %v224, %v232
      %234 = vrot.lane.b32.xlu0 %v197, 71
      %v235 = vpop.permute.xlu0 %234
      %236 = vrot.lane.b32.xlu0 %v197, 7
      %v237 = vpop.permute.xlu0 %236
      %vm238 = vcmask 56320
      %v241 = vsel %vm238, %v235, %v237
      %v243 = vld [vmem:[%s0] sm:$0x2]
      %v245 = vpack.i.b16 %v243, %v243
      %v247 = vlaneseq
      %v248 = vshrl.u32 %v247, 7
      %v249 = vsub.s32 1, %v248
      %v250 = vrot.slane %v245, %v249
      %v251 = vmul.bf16 %v241, %v250
      %252 = vrot.lane.b32.xlu0 %v197, 65
      %v253 = vpop.permute.xlu0 %252
      %254 = vrot.lane.b32.xlu0 %v197, 1
      %v255 = vpop.permute.xlu0 %254
      %vm256 = vcmask 7168
      %v259 = vsel %vm256, %v253, %v255
      %v261 = vshrl.u32 %v243, 16
      %v262 = vpack.i.b16 %v261, %v261
      %v264 = vlaneseq
      %v265 = vshrl.u32 %v264, 7
      %v266 = vsub.s32 1, %v265
      %v267 = vrot.slane %v262, %v266
      %v268 = vmul.bf16 %v259, %v267
      %269 = vrot.lane.b32.xlu0 %v197, 127
      %v270 = vpop.permute.xlu0 %269
      %271 = vrot.lane.b32.xlu0 %v197, 63
      %v272 = vpop.permute.xlu0 %271
      %vm273 = vcmask 515072
      %v276 = vsel %vm273, %v270, %v272
      %v278 = vld [vmem:[%s0] sm:$0x4]
      %v280 = vshrl.u32 %v278, 16
      %v281 = vpack.i.b16 %v280, %v280
      %v283 = vlaneseq
      %v284 = vshrl.u32 %v283, 7
      %v285 = vsub.s32 2, %v284
      %v286 = vrot.slane %v281, %v285
      %v287 = vmul.bf16 %v276, %v286
      %288 = vrot.lane.b32.xlu0 %v197, 121
      %v289 = vpop.permute.xlu0 %288
      %290 = vrot.lane.b32.xlu0 %v197, 57
      %v291 = vpop.permute.xlu0 %290
      %vm292 = vcmask 465920
      %v295 = vsel %vm292, %v289, %v291
      %v297 = vld [vmem:[%s0] sm:$0x8]
      %v299 = vpack.i.b16 %v297, %v297
      %v301 = vlaneseq
      %v302 = vshrl.u32 %v301, 7
      %v303 = vsub.s32 3, %v302
      %v304 = vrot.slane %v299, %v303
      %v305 = vmul.bf16 %v295, %v304
      %306 = vrot.lane.b32.xlu0 %v197, 120
      %v307 = vpop.permute.xlu0 %306
      %308 = vrot.lane.b32.xlu0 %v197, 56
      %v309 = vpop.permute.xlu0 %308
      %vm310 = vcmask 457728
      %v313 = vsel %vm310, %v307, %v309
      %v315 = vshrl.u32 %v297, 16
      %v316 = vpack.i.b16 %v315, %v315
      %v318 = vlaneseq
      %v319 = vshrl.u32 %v318, 7
      %v320 = vsub.s32 3, %v319
      %v321 = vrot.slane %v316, %v320
      %v322 = vmul.bf16 %v313, %v321
      %323 = vrot.lane.b32.xlu0 %v197, 119
      %v324 = vpop.permute.xlu0 %323
      %325 = vrot.lane.b32.xlu0 %v197, 55
      %v326 = vpop.permute.xlu0 %325
      %vm327 = vcmask 449536
      %v330 = vsel %vm327, %v324, %v326
      %v332 = vld [vmem:[%s0 + $0x4] sm:$0x1]
      %v334 = vpack.i.b16 %v332, %v332
      %v336 = vlaneseq
      %v337 = vshrl.u32 %v336, 7
      %v338 = vsub.s32 0, %v337
      %v339 = vrot.slane %v334, %v338
      %v340 = vmul.bf16 %v330, %v339
      %v342 = vrot.slane %v233, 4
      %v344 = vrot.slane %v268, 4
      %v346 = vrot.slane %v287, 4
      %v348 = vrot.slane %v322, 4
      %vm349 = vcmask 1043456
      %v352 = vsel %vm349, %v216, %v342
      %v356 = vsel %vm349, %v251, %v344
      %v360 = vsel %vm349, %v197, %v346
      %v364 = vsel %vm349, %v305, %v348
      %v366 = vld [vmem:[%s2] sm:$0xf]
      %v367 = vld [vmem:[%s2 + $0x4] sm:$0xf]
      %v370 = vunpack.c.l.b16 %v366
      %v371 = vunpack.c.l.b16 %v367
      %v372 = vpack.c.b16 %v371, %v370
      %vm373 = vcmask 588800
      %v375 = vsel %vm373, %v372, 0
      %v378 = vsel %vm349, %v340, 0
      %380 = vmatprep.subr.bf16.mxu0 0
      %381 = vmatpush1.bf16.msra.mxu0 %v352
      %382 = vmatprep.subr.bf16.mxu0 0
      %383 = vmatpush1.bf16.msra.mxu0 %v356
      %384 = vmatprep.subr.bf16.mxu0 0
      %385 = vmatpush1.bf16.msra.mxu0 %v360
      %386 = vmatprep.subr.bf16.mxu0 0
      %387 = vmatpush1.bf16.msra.mxu0 %v364
      %388 = vmatprep.subr.bf16.mxu0 0
      %389 = vmatpush1.bf16.msra.mxu0 %v378
      %390 = vmatprep.subr.bf16.mxu0 0
      %391 = vmatpush1.bf16.msra.mxu0 0
      %392 = vmatprep.subr.bf16.mxu0 0
      %393 = vmatpush1.bf16.msra.mxu0 0
      %394 = vmatprep.subr.bf16.mxu0 0
      %395 = vmatpush1.bf16.msra.mxu0 0
      %396 = vmatprep.subr.bf16.mxu0 0
      %397 = vmatpush1.bf16.msra.mxu0 0
      %398 = vmatprep.subr.bf16.mxu0 0
      %399 = vmatpush1.bf16.msra.mxu0 0
      %400 = vmatprep.subr.bf16.mxu0 0
      %401 = vmatpush1.bf16.msra.mxu0 0
      %402 = vmatprep.subr.bf16.mxu0 0
      %403 = vmatpush1.bf16.msra.mxu0 0
      %404 = vmatprep.subr.bf16.mxu0 0
      %405 = vmatpush1.bf16.msra.mxu0 0
      %406 = vmatprep.subr.bf16.mxu0 0
      %407 = vmatpush1.bf16.msra.mxu0 0
      %408 = vmatprep.subr.bf16.mxu0 0
      %409 = vmatpush1.bf16.msra.mxu0 0
      %410 = vmatprep.subr.bf16.mxu0 0
      %411 = vmatpush1.bf16.msra.mxu0 0
      %412 = vmatprep.mubr.bf16.mxu0 0
      %413 = vmatmul.mubr.bf16.gmra.mrb[0].mxu0 %v375
      %v414 = vpop.f32.mrb[0].mxu0
      %v415 = vadd.f32 0.0, %v414
      %v416 = vpop.f32.mrb[0].mxu0
      %v417 = vpop.f32.mrb[0].mxu0
      %v418 = vadd.f32 0.0, %v417
      %v419 = vpop.f32.mrb[0].mxu0
      %420 = vdwg.mxu0
      %vm421 = vcmask 523264
      %v422 = vsel %vm421, %v415, 0.0
      %423 = vadd.xlane.f32.xlu0 %v422
      %v424 = vpop.xlane.xlu0 %423
      %v425 = vsel %vm421, %v418, 0.0
      %426 = vadd.xlane.f32.xlu0 %v425
      %v427 = vpop.xlane.xlu0 %426
      %v428 = vmul.f32 %v415, %v415
      %v429 = vmul.f32 %v418, %v418
      %v430 = vsel %vm421, %v428, 0.0
      %431 = vadd.xlane.f32.xlu0 %v430
      %v432 = vpop.xlane.xlu0 %431
      %v433 = vsel %vm421, %v429, 0.0
      %434 = vadd.xlane.f32.xlu0 %v433
      %v435 = vpop.xlane.xlu0 %434
      %v436 = vmul.f32 %v424, 0.015625
      %v437 = vmul.f32 %v427, 0.015625
      %v438 = vmul.f32 %v432, 0.015625
      %v439 = vmul.f32 %v435, 0.015625
      %v440 = vmul.f32 %v436, %v436
      %v441 = vmul.f32 %v437, %v437
      %v442 = vsub.f32 %v438, %v440
      %v443 = vsub.f32 %v439, %v441
      %v444 = vmax.f32 %v442, 0.0
      %v445 = vmax.f32 %v443, 0.0
      %v446 = vadd.f32 %v444, 1e-05
      %v447 = vadd.f32 %v445, 1e-05
      %v448 = vrsqrt.pop %v446
      %v449 = vrsqrt.pop %v447
      %v450 = vsub.f32 0.0, %v436
      %v451 = vsub.f32 0.0, %v437
      %v452 = vmul.f32 %v450, %v448
      %v453 = vmul.f32 %v451, %v449
      %v454 = vmul.f32 %v415, %v448
      %v455 = vmul.f32 %v418, %v449
      %v456 = vadd.f32 %v454, %v452
      %v457 = vadd.f32 %v455, %v453
      %v458 = vmax.f32 %v456, 0.0
      %v459 = vmax.f32 %v457, 0.0
      %v460 = vpack.c.bf16 %v459, %v458
      %462 = vrot.lane.b32.xlu0 %v460, 73
      %v463 = vpop.permute.xlu0 %462
      %464 = vrot.lane.b32.xlu0 %v460, 9
      %v465 = vpop.permute.xlu0 %464
      %v468 = vsel %vm203, %v463, %v465
      %v470 = vmul.bf16 %v468, %v215
      %471 = vrot.lane.b32.xlu0 %v460, 72
      %v472 = vpop.permute.xlu0 %471
      %473 = vrot.lane.b32.xlu0 %v460, 8
      %v474 = vpop.permute.xlu0 %473
      %v477 = vsel %vm221, %v472, %v474
      %v479 = vmul.bf16 %v477, %v232
      %480 = vrot.lane.b32.xlu0 %v460, 71
      %v481 = vpop.permute.xlu0 %480
      %482 = vrot.lane.b32.xlu0 %v460, 7
      %v483 = vpop.permute.xlu0 %482
      %v486 = vsel %vm238, %v481, %v483
      %v488 = vmul.bf16 %v486, %v250
      %489 = vrot.lane.b32.xlu0 %v460, 65
      %v490 = vpop.permute.xlu0 %489
      %491 = vrot.lane.b32.xlu0 %v460, 1
      %v492 = vpop.permute.xlu0 %491
      %v495 = vsel %vm256, %v490, %v492
      %v497 = vmul.bf16 %v495, %v267
      %498 = vrot.lane.b32.xlu0 %v460, 127
      %v499 = vpop.permute.xlu0 %498
      %500 = vrot.lane.b32.xlu0 %v460, 63
      %v501 = vpop.permute.xlu0 %500
      %v504 = vsel %vm273, %v499, %v501
      %v506 = vmul.bf16 %v504, %v286
      %507 = vrot.lane.b32.xlu0 %v460, 121
      %v508 = vpop.permute.xlu0 %507
      %509 = vrot.lane.b32.xlu0 %v460, 57
      %v510 = vpop.permute.xlu0 %509
      %v513 = vsel %vm292, %v508, %v510
      %v515 = vmul.bf16 %v513, %v304
      %516 = vrot.lane.b32.xlu0 %v460, 120
      %v517 = vpop.permute.xlu0 %516
      %518 = vrot.lane.b32.xlu0 %v460, 56
      %v519 = vpop.permute.xlu0 %518
      %v522 = vsel %vm310, %v517, %v519
      %v524 = vmul.bf16 %v522, %v321
      %525 = vrot.lane.b32.xlu0 %v460, 119
      %v526 = vpop.permute.xlu0 %525
      %527 = vrot.lane.b32.xlu0 %v460, 55
      %v528 = vpop.permute.xlu0 %527
      %v531 = vsel %vm327, %v526, %v528
      %v533 = vmul.bf16 %v531, %v339
      %v534 = vld [vmem:[%s3] sm:$0xff]
      %v535 = vld [vmem:[%s3 + $0x8] sm:$0xff]
      %v538 = vunpack.c.l.b16 %v534
      %v539 = vunpack.c.h.b16 %v534
      %v540 = vunpack.c.l.b16 %v535
      %v541 = vunpack.c.h.b16 %v535
      %v542 = vpack.c.b16 %v540, %v538
      %v543 = vpack.c.b16 %v541, %v539
      %vm545 = vcmask 130048
      %v547 = vsel %vm545, %v543, 0
      %549 = vmatprep.subr.bf16.mxu0 0
      %550 = vmatpush1.bf16.msra.mxu0 %v470
      %551 = vmatprep.subr.bf16.mxu0 0
      %552 = vmatpush1.bf16.msra.mxu0 %v479
      %553 = vmatprep.subr.bf16.mxu0 0
      %554 = vmatpush1.bf16.msra.mxu0 %v488
      %555 = vmatprep.subr.bf16.mxu0 0
      %556 = vmatpush1.bf16.msra.mxu0 %v497
      %557 = vmatprep.subr.bf16.mxu0 0
      %558 = vmatpush1.bf16.msra.mxu0 %v460
      %559 = vmatprep.subr.bf16.mxu0 0
      %560 = vmatpush1.bf16.msra.mxu0 %v506
      %561 = vmatprep.subr.bf16.mxu0 0
      %562 = vmatpush1.bf16.msra.mxu0 %v515
      %563 = vmatprep.subr.bf16.mxu0 0
      %564 = vmatpush1.bf16.msra.mxu0 %v524
      %565 = vmatprep.subr.bf16.mxu0 0
      %566 = vmatpush1.bf16.msra.mxu0 %v533
      %567 = vmatprep.subr.bf16.mxu0 0
      %568 = vmatpush1.bf16.msra.mxu0 0
      %569 = vmatprep.subr.bf16.mxu0 0
      %570 = vmatpush1.bf16.msra.mxu0 0
      %571 = vmatprep.subr.bf16.mxu0 0
      %572 = vmatpush1.bf16.msra.mxu0 0
      %573 = vmatprep.subr.bf16.mxu0 0
      %574 = vmatpush1.bf16.msra.mxu0 0
      %575 = vmatprep.subr.bf16.mxu0 0
      %576 = vmatpush1.bf16.msra.mxu0 0
      %577 = vmatprep.subr.bf16.mxu0 0
      %578 = vmatpush1.bf16.msra.mxu0 0
      %579 = vmatprep.subr.bf16.mxu0 0
      %580 = vmatpush1.bf16.msra.mxu0 0
      %581 = vmatprep.mubr.bf16.mxu0 %v547
      %582 = vmatmul.mubr.bf16.gmra.mrb[0].mxu0 %v542
      %v583 = vpop.f32.mrb[0].mxu0
      %v584 = vadd.f32 0.0, %v583
      %v585 = vpop.f32.mrb[0].mxu0
      %v586 = vpop.f32.mrb[0].mxu0
      %v587 = vadd.f32 0.0, %v586
      %v588 = vpop.f32.mrb[0].mxu0
      %589 = vdwg.mxu0
      %v590 = vsel %vm421, %v584, 0.0
      %591 = vadd.xlane.f32.xlu0 %v590
      %v592 = vpop.xlane.xlu0 %591
      %v593 = vsel %vm421, %v587, 0.0
      %594 = vadd.xlane.f32.xlu0 %v593
      %v595 = vpop.xlane.xlu0 %594
      %v596 = vmul.f32 %v584, %v584
      %v597 = vmul.f32 %v587, %v587
      %v598 = vsel %vm421, %v596, 0.0
      %599 = vadd.xlane.f32.xlu0 %v598
      %v600 = vpop.xlane.xlu0 %599
      %v601 = vsel %vm421, %v597, 0.0
      %602 = vadd.xlane.f32.xlu0 %v601
      %v603 = vpop.xlane.xlu0 %602
      %v604 = vmul.f32 %v592, 0.015625
      %v605 = vmul.f32 %v595, 0.015625
      %v606 = vmul.f32 %v600, 0.015625
      %v607 = vmul.f32 %v603, 0.015625
      %v608 = vmul.f32 %v604, %v604
      %v609 = vmul.f32 %v605, %v605
      %v610 = vsub.f32 %v606, %v608
      %v611 = vsub.f32 %v607, %v609
      %v612 = vmax.f32 %v610, 0.0
      %v613 = vmax.f32 %v611, 0.0
      %v614 = vadd.f32 %v612, 1e-05
      %v615 = vadd.f32 %v613, 1e-05
      %v616 = vrsqrt.pop %v614
      %v617 = vrsqrt.pop %v615
      %v618 = vsub.f32 0.0, %v604
      %v619 = vsub.f32 0.0, %v605
      %v620 = vmul.f32 %v618, %v616
      %v621 = vmul.f32 %v619, %v617
      %v622 = vmul.f32 %v584, %v616
      %v623 = vmul.f32 %v587, %v617
      %v624 = vadd.f32 %v622, %v620
      %v625 = vadd.f32 %v623, %v621
      %v626 = vmax.f32 %v624, 0.0
      %v627 = vmax.f32 %v625, 0.0
      %v628 = vpack.c.bf16 %v627, %v626
      %v630 = vunpack.c.l.b16 %v628
      %v631 = vunpack.c.h.b16 %v628
      %v632 = vpack.c.b16 %v630, %v630
      %v633 = vpack.c.b16 %v631, %v631
      %vm636 = vcmask 519168
      %637 = vst.msk [vmem:[%s194] sm:$0xf] %vm636, %v632
      %638 = vst.msk [vmem:[%s194 + $0x4] sm:$0xf] %vm636, %v633
      %p639 = scmp.lt.s32.totalorder %s15, 1
      %s640 = scalar_select %p639, %s15, 1
      %s641 = smul.addr %s640, 2
      %s642 = smul.addr %s641, 4
      %s643 = scalar_lea.vmem %s4, %s642
      // Predicated region
      $region37: #{unet_forward.9} parent=35 // pred_check
        %p644 = pneg %p122
      $region38: #{unet_forward.9} parent=35 // pred_check_branch
        %646 = sbr.rel (%p644) target = $region40
      $region39: #{unet_forward.9} parent=35 // pred_region
        _
      $region40: #{unet_forward.9} parent=35 // pred_fallthru
        _
    $region36: #{unet_forward.9} parent=5 // pred_fallthru
      _
    %p647 = scmp.le.s32.totalorder 2, %s10
    // Predicated region
    $region41: #{unet_forward.9} parent=5 // pred_check
      %p648 = pneg %p647
    $region42: #{unet_forward.9} parent=5 // pred_check_branch
      %650 = sbr.rel (%p648) target = $region44
    $region43: #{unet_forward.9} parent=5 // pred_region
      %s651 = ssub.s32 %s10, 2
      // Predicated region
      $region45: #{unet_forward.9} parent=43 // pred_check
        %p652 = pneg %p128
      $region46: #{unet_forward.9} parent=43 // pred_check_branch
        %654 = sbr.rel (%p652) target = $region48
      $region47: #{unet_forward.9} parent=43 // pred_region
        %p655 = scmp.lt.s32.totalorder %s16, 1
        %s656 = scalar_select %p655, %s16, 1
        %s657 = smul.addr %s656, 2
        %s658 = smul.addr %s657, 4
        %s659 = scalar_lea.vmem %s4, %s658
      $region48: #{unet_forward.9} parent=43 // pred_fallthru
        _
    $region44: #{unet_forward.9} parent=5 // pred_fallthru
      _
  $region6: #{unet_forward.9} parent=0 // loop_footer
    %s14 = sadd.s32 1, %s10
  $region7: #{unet_forward.9} parent=0 // loop_footer_branch
    %9 = sbr.rel target = $region3
  $region8: #{unet_forward.9} parent=0 // loop_exit
    _

// kernel: unet_forward.10
$region0: #{unet_forward.10}
  #allocation0 [shape = 'u32[]', space=smem, size = 0x4, offset = 0x4, fixed_abs, tag = 'smem constant byte address 0x4 - core index']
  #allocation1 [shape = 'u32[144,128]{1,0:T(1,128)}', space=vmem, size = 0x12000, scoped, tag = 'internal scratch']
  %s0 = inlined_call_operand.vmem [shape: bf16[9,16], index: 0, kind: input, shape index: {}]
  %s1 = inlined_call_operand.vmem [shape: bf16[2,16,16], index: 1, kind: input, shape index: {}]
  %s2 = inlined_call_operand.vmem [shape: bf16[32,144], index: 2, kind: input, shape index: {}]
  %s3 = inlined_call_operand.vmem [shape: bf16[32,288], index: 3, kind: input, shape index: {}]
  %s4 = inlined_call_operand.vmem [shape: bf16[2,32,16], index: 4, kind: output, shape index: {}]
  %s5 = sld [smem:[#allocation0]]
  $region49: #{unet_forward.10} parent=0
    _
  %s7 = ssub.s32 1, %s5
  %s8 = scalar_select 0, %s7, %s5
  loop: start=0, step=1, limit=4
  $region2: #{unet_forward.10} parent=0 // loop_pre_header
    _
  $region3: #{unet_forward.10} parent=0 // loop_header
    %s10 = sphi 0, %s14
    %p11 = scmp.ge.s32.totalorder %s10, 4
    %s18 = sphi 0, %s18
    %s20 = sphi 0, %s18
    %s21 = sphi 0, %s20
    %s35 = sphi 0, %s21
    %s41 = sphi 0, %s43
    %s44 = sphi 0, %s41
    %s45 = sphi 0, %s44
    %s61 = sphi 0, %s45
    %s65 = sphi 0, %s65
    %s67 = sphi 0, %s65
    %s68 = sphi 0, %s67
    %s82 = sphi 0, %s68
    %s86 = sphi 0, %s86
    %s88 = sphi 0, %s86
    %s89 = sphi 0, %s88
    %s103 = sphi 0, %s89
    %s109 = sphi 0, %s111
    %s112 = sphi 0, %s109
    %s113 = sphi 0, %s112
    %s129 = sphi 0, %s113
  $region4: #{unet_forward.10} parent=0 // loop_header_branch
    %13 = sbr.rel (%p11) target = $region8
  $region5: #{unet_forward.10} parent=0 // loop_body
    %s15 = ssub.s32 %s10, 1
    %s16 = ssub.s32 %s10, 2
    %s17 = sadd.s32 %s10, 1
    %s19 = sadd.s32 %s18, 1
    %p22 = scmp.eq.s32.totalorder %s10, 1
    %p23 = scmp.ne.s32.totalorder %s18, %s20
    %p24 = scmp.eq.s32.totalorder %s10, 0
    %p25 = por %p23, %p24
    %p26 = scmp.ne.s32.totalorder %s18, %s20
    %p27 = scmp.eq.s32.totalorder %s15, 1
    %p28 = por %p26, %p27
    %p29 = scmp.ne.s32.totalorder %s20, %s21
    %p30 = scmp.eq.s32.totalorder %s15, 0
    %p31 = por %p29, %p30
    %p32 = scmp.ne.s32.totalorder %s20, %s21
    %p33 = scmp.eq.s32.totalorder %s16, 1
    %p34 = por %p32, %p33
    %p36 = scmp.ne.s32.totalorder %s21, %s35
    %p37 = scmp.eq.s32.totalorder %s16, 0
    %p38 = por %p36, %p37
    %s39 = ssub.s32 %s10, %s17
    %p40 = scmp.eq.s32.totalorder %s39, 0
    %s42 = sadd.s32 %s41, 1
    %s43 = scalar_select %p40, %s41, %s42
    %p46 = pneg %p40
    %p47 = scmp.eq.s32.totalorder %s10, 1
    %p48 = por %p46, %p47
    %p49 = scmp.ne.s32.totalorder %s41, %s44
    %p50 = scmp.eq.s32.totalorder %s10, 0
    %p51 = por %p49, %p50
    %p52 = scmp.ne.s32.totalorder %s41, %s44
    %p53 = scmp.eq.s32.totalorder %s15, 1
    %p54 = por %p52, %p53
    %p55 = scmp.ne.s32.totalorder %s44, %s45
    %p56 = scmp.eq.s32.totalorder %s15, 0
    %p57 = por %p55, %p56
    %p58 = scmp.ne.s32.totalorder %s44, %s45
    %p59 = scmp.eq.s32.totalorder %s16, 1
    %p60 = por %p58, %p59
    %p62 = scmp.ne.s32.totalorder %s45, %s61
    %p63 = scmp.eq.s32.totalorder %s16, 0
    %p64 = por %p62, %p63
    %s66 = sadd.s32 %s65, 1
    %p69 = scmp.eq.s32.totalorder %s10, 1
    %p70 = scmp.ne.s32.totalorder %s65, %s67
    %p71 = scmp.eq.s32.totalorder %s10, 0
    %p72 = por %p70, %p71
    %p73 = scmp.ne.s32.totalorder %s65, %s67
    %p74 = scmp.eq.s32.totalorder %s15, 1
    %p75 = por %p73, %p74
    %p76 = scmp.ne.s32.totalorder %s67, %s68
    %p77 = scmp.eq.s32.totalorder %s15, 0
    %p78 = por %p76, %p77
    %p79 = scmp.ne.s32.totalorder %s67, %s68
    %p80 = scmp.eq.s32.totalorder %s16, 1
    %p81 = por %p79, %p80
    %p83 = scmp.ne.s32.totalorder %s68, %s82
    %p84 = scmp.eq.s32.totalorder %s16, 0
    %p85 = por %p83, %p84
    %s87 = sadd.s32 %s86, 1
    %p90 = scmp.eq.s32.totalorder %s10, 1
    %p91 = scmp.ne.s32.totalorder %s86, %s88
    %p92 = scmp.eq.s32.totalorder %s10, 0
    %p93 = por %p91, %p92
    %p94 = scmp.ne.s32.totalorder %s86, %s88
    %p95 = scmp.eq.s32.totalorder %s15, 1
    %p96 = por %p94, %p95
    %p97 = scmp.ne.s32.totalorder %s88, %s89
    %p98 = scmp.eq.s32.totalorder %s15, 0
    %p99 = por %p97, %p98
    %p100 = scmp.ne.s32.totalorder %s88, %s89
    %p101 = scmp.eq.s32.totalorder %s16, 1
    %p102 = por %p100, %p101
    %p104 = scmp.ne.s32.totalorder %s89, %s103
    %p105 = scmp.eq.s32.totalorder %s16, 0
    %p106 = por %p104, %p105
    %s107 = ssub.s32 %s10, %s17
    %p108 = scmp.eq.s32.totalorder %s107, 0
    %s110 = sadd.s32 %s109, 1
    %s111 = scalar_select %p108, %s109, %s110
    %p114 = pneg %p108
    %p115 = scmp.eq.s32.totalorder %s10, 1
    %p116 = por %p114, %p115
    %p117 = scmp.ne.s32.totalorder %s109, %s112
    %p118 = scmp.eq.s32.totalorder %s10, 0
    %p119 = por %p117, %p118
    %p120 = scmp.ne.s32.totalorder %s109, %s112
    %p121 = scmp.eq.s32.totalorder %s15, 1
    %p122 = por %p120, %p121
    %p123 = scmp.ne.s32.totalorder %s112, %s113
    %p124 = scmp.eq.s32.totalorder %s15, 0
    %p125 = por %p123, %p124
    %p126 = scmp.ne.s32.totalorder %s112, %s113
    %p127 = scmp.eq.s32.totalorder %s16, 1
    %p128 = por %p126, %p127
    %p130 = scmp.ne.s32.totalorder %s113, %s129
    %p131 = scmp.eq.s32.totalorder %s16, 0
    %p132 = por %p130, %p131
    %p133 = scmp.le.s32.totalorder 1, %s10
    %p134 = scmp.lt.s32.totalorder %s10, 3
    %p135 = pnand %p133, %p134
    %p136 = pneg %p135
    // Predicated region
    $region9: #{unet_forward.10} parent=5 // pred_check
      _
    $region10: #{unet_forward.10} parent=5 // pred_check_branch
      %138 = sbr.rel (%p135) target = $region12
    $region11: #{unet_forward.10} parent=5 // pred_region
      %s139 = ssub.s32 %s10, 1
      // Predicated region
      $region13: #{unet_forward.10} parent=11 // pred_check
        %p140 = pneg %p31
      $region14: #{unet_forward.10} parent=11 // pred_check_branch
        %142 = sbr.rel (%p140) target = $region16
      $region15: #{unet_forward.10} parent=11 // pred_region
        _
      $region16: #{unet_forward.10} parent=11 // pred_fallthru
        _
      // Predicated region
      $region17: #{unet_forward.10} parent=11 // pred_check
        %p143 = pneg %p78
      $region18: #{unet_forward.10} parent=11 // pred_check_branch
        %145 = sbr.rel (%p143) target = $region20
      $region19: #{unet_forward.10} parent=11 // pred_region
        _
      $region20: #{unet_forward.10} parent=11 // pred_fallthru
        _
      // Predicated region
      $region21: #{unet_forward.10} parent=11 // pred_check
        %p146 = pneg %p99
      $region22: #{unet_forward.10} parent=11 // pred_check_branch
        %148 = sbr.rel (%p146) target = $region24
      $region23: #{unet_forward.10} parent=11 // pred_region
        _
      $region24: #{unet_forward.10} parent=11 // pred_fallthru
        _
    $region12: #{unet_forward.10} parent=5 // pred_fallthru
      _
    %p149 = scmp.lt.s32.totalorder %s10, 2
    // Predicated region
    $region25: #{unet_forward.10} parent=5 // pred_check
      %p150 = pneg %p149
    $region26: #{unet_forward.10} parent=5 // pred_check_branch
      %152 = sbr.rel (%p150) target = $region28
    $region27: #{unet_forward.10} parent=5 // pred_region
      // Predicated region
      $region29: #{unet_forward.10} parent=27 // pred_check
        %p153 = pneg %p51
      $region30: #{unet_forward.10} parent=27 // pred_check_branch
        %155 = sbr.rel (%p153) target = $region32
      $region31: #{unet_forward.10} parent=27 // pred_region
        %p156 = scmp.lt.s32.totalorder %s10, 1
        %s157 = scalar_select %p156, %s10, 1
        %s158 = smul.addr %s157, 2
        %s159 = smul.addr %s158, 4
        %s160 = scalar_lea.vmem %s1, %s159
      $region32: #{unet_forward.10} parent=27 // pred_fallthru
        _
    $region28: #{unet_forward.10} parent=5 // pred_fallthru
      _
    %p161 = scmp.le.s32.totalorder 1, %s10
    %p162 = scmp.lt.s32.totalorder %s10, 3
    %p163 = pnand %p161, %p162
    %p164 = pneg %p163
    // Predicated region
    $region33: #{unet_forward.10} parent=5 // pred_check
      _
    $region34: #{unet_forward.10} parent=5 // pred_check_branch
      %166 = sbr.rel (%p163) target = $region36
    $region35: #{unet_forward.10} parent=5 // pred_region
      %s167 = ssub.s32 %s10, 1
      %p168 = pneg %p31
      %p169 = pneg %p28
      %p170 = scmp.lt.s32.totalorder %s15, 1
      %s171 = scalar_select %p170, %s15, 1
      %s172 = smul.addr %s171, 2
      %s173 = smul.addr %s172, 4
      %s174 = scalar_lea.vmem %s1, %s173
      %p175 = pneg %p57
      %p176 = pneg %p54
      %p177 = pneg %p78
      %p178 = pneg %p75
      %p179 = pneg %p99
      %p180 = pneg %p96
      %p181 = pneg %p125
      %p182 = pneg %p122
      %p183 = scmp.lt.s32.totalorder %s15, 1
      %s184 = scalar_select %p183, %s15, 1
      %s185 = smul.addr %s184, 4
      %s186 = smul.addr %s185, 4
      %s187 = scalar_lea.vmem %s4, %s186
      %p188 = scmp.lt.s32.totalorder %s15, 1
      %s189 = scalar_select %p188, %s15, 1
      %s190 = smul.addr %s189, 2
      %s191 = smul.addr %s190, 4
      %s192 = scalar_lea.vmem %s1, %s191
      %p193 = scmp.lt.s32.totalorder %s15, 1
      %s194 = scalar_select %p193, %s15, 1
      %s195 = smul.addr %s194, 4
      %s196 = smul.addr %s195, 4
      %s197 = scalar_lea.vmem %s4, %s196
      %v199 = vld [vmem:[%s192] sm:$0xf]
      %v200 = vld [vmem:[%s192 + $0x4] sm:$0xf]
      %v203 = vunpack.c.l.b16 %v199
      %v204 = vunpack.c.l.b16 %v200
      %v205 = vpack.c.b16 %v204, %v203
      %206 = vrot.lane.b32.xlu0 %v205, 117
      %v207 = vpop.permute.xlu0 %206
      %208 = vrot.lane.b32.xlu0 %v205, 5
      %v209 = vpop.permute.xlu0 %208
      %vm210 = vcmask 39936
      %v213 = vsel %vm210, %v207, %v209
      %v215 = vld [vmem:[%s0] sm:$0x1]
      %v217 = vpack.i.b16 %v215, %v215
      %v219 = vlaneseq
      %v220 = vshrl.u32 %v219, 7
      %v221 = vsub.s32 0, %v220
      %v222 = vrot.slane %v217, %v221
      %v223 = vmul.bf16 %v213, %v222
      %224 = vrot.lane.b32.xlu0 %v205, 116
      %v225 = vpop.permute.xlu0 %224
      %226 = vrot.lane.b32.xlu0 %v205, 4
      %v227 = vpop.permute.xlu0 %226
      %vm228 = vcmask 31744
      %v231 = vsel %vm228, %v225, %v227
      %v233 = vshrl.u32 %v215, 16
      %v234 = vpack.i.b16 %v233, %v233
      %v236 = vlaneseq
      %v237 = vshrl.u32 %v236, 7
      %v238 = vsub.s32 0, %v237
      %v239 = vrot.slane %v234, %v238
      %v240 = vmul.bf16 %v231, %v239
      %241 = vrot.lane.b32.xlu0 %v205, 115
      %v242 = vpop.permute.xlu0 %241
      %243 = vrot.lane.b32.xlu0 %v205, 3
      %v244 = vpop.permute.xlu0 %243
      %vm245 = vcmask 23552
      %v248 = vsel %vm245, %v242, %v244
      %v250 = vld [vmem:[%s0] sm:$0x2]
      %v252 = vpack.i.b16 %v250, %v250
      %v254 = vlaneseq
      %v255 = vshrl.u32 %v254, 7
      %v256 = vsub.s32 1, %v255
      %v257 = vrot.slane %v252, %v256
      %v258 = vmul.bf16 %v248, %v257
      %259 = vrot.lane.b32.xlu0 %v205, 113
      %v260 = vpop.permute.xlu0 %259
      %261 = vrot.lane.b32.xlu0 %v205, 1
      %v262 = vpop.permute.xlu0 %261
      %vm263 = vcmask 7168
      %v266 = vsel %vm263, %v260, %v262
      %v268 = vshrl.u32 %v250, 16
      %v269 = vpack.i.b16 %v268, %v268
      %v271 = vlaneseq
      %v272 = vshrl.u32 %v271, 7
      %v273 = vsub.s32 1, %v272
      %v274 = vrot.slane %v269, %v273
      %v275 = vmul.bf16 %v266, %v274
      %276 = vrot.lane.b32.xlu0 %v205, 127
      %v277 = vpop.permute.xlu0 %276
      %278 = vrot.lane.b32.xlu0 %v205, 15
      %v279 = vpop.permute.xlu0 %278
      %vm280 = vcmask 121856
      %v283 = vsel %vm280, %v277, %v279
      %v285 = vld [vmem:[%s0] sm:$0x4]
      %v287 = vshrl.u32 %v285, 16
      %v288 = vpack.i.b16 %v287, %v287
      %v290 = vlaneseq
      %v291 = vshrl.u32 %v290, 7
      %v292 = vsub.s32 2, %v291
      %v293 = vrot.slane %v288, %v292
      %v294 = vmul.bf16 %v283, %v293
      %295 = vrot.lane.b32.xlu0 %v205, 125
      %v296 = vpop.permute.xlu0 %295
      %297 = vrot.lane.b32.xlu0 %v205, 13
      %v298 = vpop.permute.xlu0 %297
      %vm299 = vcmask 105472
      %v302 = vsel %vm299, %v296, %v298
      %v304 = vld [vmem:[%s0] sm:$0x8]
      %v306 = vpack.i.b16 %v304, %v304
      %v308 = vlaneseq
      %v309 = vshrl.u32 %v308, 7
      %v310 = vsub.s32 3, %v309
      %v311 = vrot.slane %v306, %v310
      %v312 = vmul.bf16 %v302, %v311
      %313 = vrot.lane.b32.xlu0 %v205, 124
      %v314 = vpop.permute.xlu0 %313
      %315 = vrot.lane.b32.xlu0 %v205, 12
      %v316 = vpop.permute.xlu0 %315
      %vm317 = vcmask 97280
      %v320 = vsel %vm317, %v314, %v316
      %v322 = vshrl.u32 %v304, 16
      %v323 = vpack.i.b16 %v322, %v322
      %v325 = vlaneseq
      %v326 = vshrl.u32 %v325, 7
      %v327 = vsub.s32 3, %v326
      %v328 = vrot.slane %v323, %v327
      %v329 = vmul.bf16 %v320, %v328
      %330 = vrot.lane.b32.xlu0 %v205, 123
      %v331 = vpop.permute.xlu0 %330
      %332 = vrot.lane.b32.xlu0 %v205, 11
      %v333 = vpop.permute.xlu0 %332
      %vm334 = vcmask 89088
      %v337 = vsel %vm334, %v331, %v333
      %v339 = vld [vmem:[%s0 + $0x4] sm:$0x1]
      %v341 = vpack.i.b16 %v339, %v339
      %v343 = vlaneseq
      %v344 = vshrl.u32 %v343, 7
      %v345 = vsub.s32 0, %v344
      %v346 = vrot.slane %v341, %v345
      %v347 = vmul.bf16 %v337, %v346
      %v349 = vld [vmem:[%s2] sm:$0xff]
      %v350 = vld [vmem:[%s2 + $0x8] sm:$0xff]
      %v351 = vld [vmem:[%s2 + $0x10] sm:$0xff]
      %v352 = vld [vmem:[%s2 + $0x18] sm:$0xff]
      %v357 = vunpack.c.l.b16 %v349
      %v358 = vunpack.c.h.b16 %v349
      %v359 = vunpack.c.l.b16 %v350
      %v360 = vunpack.c.h.b16 %v350
      %v361 = vunpack.c.l.b16 %v351
      %v362 = vunpack.c.h.b16 %v351
      %v363 = vunpack.c.l.b16 %v352
      %v364 = vunpack.c.h.b16 %v352
      %v365 = vpack.c.b16 %v359, %v357
      %v366 = vpack.c.b16 %v360, %v358
      %v367 = vpack.c.b16 %v363, %v361
      %v368 = vpack.c.b16 %v364, %v362
      %vm371 = vcmask 130048
      %v373 = vsel %vm371, %v366, 0
      %v376 = vsel %vm371, %v368, 0
      %378 = vmatprep.subr.bf16.mxu0 0
      %379 = vmatpush1.bf16.msra.mxu0 %v223
      %380 = vmatprep.subr.bf16.mxu0 0
      %381 = vmatpush1.bf16.msra.mxu0 %v240
      %382 = vmatprep.subr.bf16.mxu0 0
      %383 = vmatpush1.bf16.msra.mxu0 %v258
      %384 = vmatprep.subr.bf16.mxu0 0
      %385 = vmatpush1.bf16.msra.mxu0 %v275
      %386 = vmatprep.subr.bf16.mxu0 0
      %387 = vmatpush1.bf16.msra.mxu0 %v205
      %388 = vmatprep.subr.bf16.mxu0 0
      %389 = vmatpush1.bf16.msra.mxu0 %v294
      %390 = vmatprep.subr.bf16.mxu0 0
      %391 = vmatpush1.bf16.msra.mxu0 %v312
      %392 = vmatprep.subr.bf16.mxu0 0
      %393 = vmatpush1.bf16.msra.mxu0 %v329
      %394 = vmatprep.subr.bf16.mxu0 0
      %395 = vmatpush1.bf16.msra.mxu0 %v347
      %396 = vmatprep.subr.bf16.mxu0 0
      %397 = vmatpush1.bf16.msra.mxu0 0
      %398 = vmatprep.subr.bf16.mxu0 0
      %399 = vmatpush1.bf16.msra.mxu0 0
      %400 = vmatprep.subr.bf16.mxu0 0
      %401 = vmatpush1.bf16.msra.mxu0 0
      %402 = vmatprep.subr.bf16.mxu0 0
      %403 = vmatpush1.bf16.msra.mxu0 0
      %404 = vmatprep.subr.bf16.mxu0 0
      %405 = vmatpush1.bf16.msra.mxu0 0
      %406 = vmatprep.subr.bf16.mxu0 0
      %407 = vmatpush1.bf16.msra.mxu0 0
      %408 = vmatprep.subr.bf16.mxu0 0
      %409 = vmatpush1.bf16.msra.mxu0 0
      %410 = vmatprep.mubr.bf16.mxu0 %v373
      %411 = vmatmul.mubr.bf16.gmra.mrb[0].mxu0 %v365
      %v412 = vpop.f32.mrb[0].mxu0
      %v413 = vadd.f32 0.0, %v412
      %v414 = vpop.f32.mrb[0].mxu0
      %v415 = vpop.f32.mrb[0].mxu0
      %v416 = vadd.f32 0.0, %v415
      %v417 = vpop.f32.mrb[0].mxu0
      %418 = vmatprep.mubr.bf16.mxu0 %v376
      %419 = vmatmul.mubr.bf16.gmra.mrb[0].mxu0 %v367
      %v420 = vpop.f32.mrb[0].mxu0
      %v421 = vadd.f32 0.0, %v420
      %v422 = vpop.f32.mrb[0].mxu0
      %v423 = vpop.f32.mrb[0].mxu0
      %v424 = vadd.f32 0.0, %v423
      %v425 = vpop.f32.mrb[0].mxu0
      %426 = vdwg.mxu0
      %v427 = vsel %vm371, %v413, 0.0
      %428 = vadd.xlane.f32.xlu0 %v427
      %v429 = vpop.xlane.xlu0 %428
      %v430 = vsel %vm371, %v416, 0.0
      %431 = vadd.xlane.f32.xlu0 %v430
      %v432 = vpop.xlane.xlu0 %431
      %v433 = vsel %vm371, %v421, 0.0
      %434 = vadd.xlane.f32.xlu0 %v433
      %v435 = vpop.xlane.xlu0 %434
      %v436 = vsel %vm371, %v424, 0.0
      %437 = vadd.xlane.f32.xlu0 %v436
      %v438 = vpop.xlane.xlu0 %437
      %v439 = vmul.f32 %v413, %v413
      %v440 = vmul.f32 %v416, %v416
      %v441 = vmul.f32 %v421, %v421
      %v442 = vmul.f32 %v424, %v424
      %v443 = vsel %vm371, %v439, 0.0
      %444 = vadd.xlane.f32.xlu0 %v443
      %v445 = vpop.xlane.xlu0 %444
      %v446 = vsel %vm371, %v440, 0.0
      %447 = vadd.xlane.f32.xlu0 %v446
      %v448 = vpop.xlane.xlu0 %447
      %v449 = vsel %vm371, %v441, 0.0
      %450 = vadd.xlane.f32.xlu0 %v449
      %v451 = vpop.xlane.xlu0 %450
      %v452 = vsel %vm371, %v442, 0.0
      %453 = vadd.xlane.f32.xlu0 %v452
      %v454 = vpop.xlane.xlu0 %453
      %v455 = vmul.f32 %v429, 0.0625
      %v456 = vmul.f32 %v432, 0.0625
      %v457 = vmul.f32 %v435, 0.0625
      %v458 = vmul.f32 %v438, 0.0625
      %v459 = vmul.f32 %v445, 0.0625
      %v460 = vmul.f32 %v448, 0.0625
      %v461 = vmul.f32 %v451, 0.0625
      %v462 = vmul.f32 %v454, 0.0625
      %v463 = vmul.f32 %v455, %v455
      %v464 = vmul.f32 %v456, %v456
      %v465 = vmul.f32 %v457, %v457
      %v466 = vmul.f32 %v458, %v458
      %v467 = vsub.f32 %v459, %v463
      %v468 = vsub.f32 %v460, %v464
      %v469 = vsub.f32 %v461, %v465
      %v470 = vsub.f32 %v462, %v466
      %v471 = vmax.f32 %v467, 0.0
      %v472 = vmax.f32 %v468, 0.0
      %v473 = vmax.f32 %v469, 0.0
      %v474 = vmax.f32 %v470, 0.0
      %v475 = vadd.f32 %v471, 1e-05
      %v476 = vadd.f32 %v472, 1e-05
      %v477 = vadd.f32 %v473, 1e-05
      %v478 = vadd.f32 %v474, 1e-05
      %v479 = vrsqrt.pop %v475
      %v480 = vrsqrt.pop %v476
      %v481 = vrsqrt.pop %v477
      %v482 = vrsqrt.pop %v478
      %v483 = vsub.f32 0.0, %v455
      %v484 = vsub.f32 0.0, %v456
      %v485 = vsub.f32 0.0, %v457
      %v486 = vsub.f32 0.0, %v458
      %v487 = vmul.f32 %v483, %v479
      %v488 = vmul.f32 %v484, %v480
      %v489 = vmul.f32 %v485, %v481
      %v490 = vmul.f32 %v486, %v482
      %v491 = vmul.f32 %v413, %v479
      %v492 = vmul.f32 %v416, %v480
      %v493 = vmul.f32 %v421, %v481
      %v494 = vmul.f32 %v424, %v482
      %v495 = vadd.f32 %v491, %v487
      %v496 = vadd.f32 %v492, %v488
      %v497 = vadd.f32 %v493, %v489
      %v498 = vadd.f32 %v494, %v490
      %v499 = vmax.f32 %v495, 0.0
      %v500 = vmax.f32 %v496, 0.0
      %v501 = vmax.f32 %v497, 0.0
      %v502 = vmax.f32 %v498, 0.0
      %v503 = vpack.c.bf16 %v500, %v499
      %v504 = vpack.c.bf16 %v502, %v501
      %507 = vrot.lane.b32.xlu0 %v503, 117
      %v508 = vpop.permute.xlu0 %507
      %509 = vrot.lane.b32.xlu0 %v504, 117
      %v510 = vpop.permute.xlu0 %509
      %511 = vrot.lane.b32.xlu0 %v503, 5
      %v512 = vpop.permute.xlu0 %511
      %513 = vrot.lane.b32.xlu0 %v504, 5
      %v514 = vpop.permute.xlu0 %513
      %v517 = vsel %vm210, %v508, %v512
      %v521 = vsel %vm210, %v510, %v514
      %v523 = vmul.bf16 %v517, %v222
      %v524 = vmul.bf16 %v521, %v222
      %525 = vrot.lane.b32.xlu0 %v503, 116
      %v526 = vpop.permute.xlu0 %525
      %527 = vrot.lane.b32.xlu0 %v504, 116
      %v528 = vpop.permute.xlu0 %527
      %529 = vrot.lane.b32.xlu0 %v503, 4
      %v530 = vpop.permute.xlu0 %529
      %531 = vrot.lane.b32.xlu0 %v504, 4
      %v532 = vpop.permute.xlu0 %531
      %v535 = vsel %vm228, %v526, %v530
      %v539 = vsel %vm228, %v528, %v532
      %v541 = vmul.bf16 %v535, %v239
      %v542 = vmul.bf16 %v539, %v239
      %543 = vrot.lane.b32.xlu0 %v503, 115
      %v544 = vpop.permute.xlu0 %543
      %545 = vrot.lane.b32.xlu0 %v504, 115
      %v546 = vpop.permute.xlu0 %545
      %547 = vrot.lane.b32.xlu0 %v503, 3
      %v548 = vpop.permute.xlu0 %547
      %549 = vrot.lane.b32.xlu0 %v504, 3
      %v550 = vpop.permute.xlu0 %549
      %v553 = vsel %vm245, %v544, %v548
      %v557 = vsel %vm245, %v546, %v550
      %v559 = vmul.bf16 %v553, %v257
      %v560 = vmul.bf16 %v557, %v257
      %561 = vrot.lane.b32.xlu0 %v503, 113
      %v562 = vpop.permute.xlu0 %561
      %563 = vrot.lane.b32.xlu0 %v504, 113
      %v564 = vpop.permute.xlu0 %563
      %565 = vrot.lane.b32.xlu0 %v503, 1
      %v566 = vpop.permute.xlu0 %565
      %567 = vrot.lane.b32.xlu0 %v504, 1
      %v568 = vpop.permute.xlu0 %567
      %v571 = vsel %vm263, %v562, %v566
      %v575 = vsel %vm263, %v564, %v568
      %v577 = vmul.bf16 %v571, %v274
      %v578 = vmul.bf16 %v575, %v274
      %579 = vrot.lane.b32.xlu0 %v503, 127
      %v580 = vpop.permute.xlu0 %579
      %581 = vrot.lane.b32.xlu0 %v504, 127
      %v582 = vpop.permute.xlu0 %581
      %583 = vrot.lane.b32.xlu0 %v503, 15
      %v584 = vpop.permute.xlu0 %583
      %585 = vrot.lane.b32.xlu0 %v504, 15
      %v586 = vpop.permute.xlu0 %585
      %v589 = vsel %vm280, %v580, %v584
      %v593 = vsel %vm280, %v582, %v586
      %v595 = vmul.bf16 %v589, %v293
      %v596 = vmul.bf16 %v593, %v293
      %597 = vrot.lane.b32.xlu0 %v503, 125
      %v598 = vpop.permute.xlu0 %597
      %599 = vrot.lane.b32.xlu0 %v504, 125
      %v600 = vpop.permute.xlu0 %599
      %601 = vrot.lane.b32.xlu0 %v503, 13
      %v602 = vpop.permute.xlu0 %601
      %603 = vrot.lane.b32.xlu0 %v504, 13
      %v604 = vpop.permute.xlu0 %603
      %v607 = vsel %vm299, %v598, %v602
      %v611 = vsel %vm299, %v600, %v604
      %v613 = vmul.bf16 %v607, %v311
      %v614 = vmul.bf16 %v611, %v311
      %615 = vrot.lane.b32.xlu0 %v503, 124
      %v616 = vpop.permute.xlu0 %615
      %617 = vrot.lane.b32.xlu0 %v504, 124
      %v618 = vpop.permute.xlu0 %617
      %619 = vrot.lane.b32.xlu0 %v503, 12
      %v620 = vpop.permute.xlu0 %619
      %621 = vrot.lane.b32.xlu0 %v504, 12
      %v622 = vpop.permute.xlu0 %621
      %v625 = vsel %vm317, %v616, %v620
      %v629 = vsel %vm317, %v618, %v622
      %v631 = vmul.bf16 %v625, %v328
      %v632 = vmul.bf16 %v629, %v328
      %633 = vrot.lane.b32.xlu0 %v503, 123
      %v634 = vpop.permute.xlu0 %633
      %635 = vrot.lane.b32.xlu0 %v504, 123
      %v636 = vpop.permute.xlu0 %635
      %637 = vrot.lane.b32.xlu0 %v503, 11
      %v638 = vpop.permute.xlu0 %637
      %639 = vrot.lane.b32.xlu0 %v504, 11
      %v640 = vpop.permute.xlu0 %639
      %v643 = vsel %vm334, %v634, %v638
      %v647 = vsel %vm334, %v636, %v640
      %v649 = vmul.bf16 %v643, %v346
      %v650 = vmul.bf16 %v647, %v346
      %v651 = vld [vmem:[%s3] sm:$0xff]
      %v652 = vld [vmem:[%s3 + $0x8] sm:$0xf]
      %v653 = vld [vmem:[%s3 + $0xc] sm:$0xff]
      %v654 = vld [vmem:[%s3 + $0x14] sm:$0xf]
      %v655 = vld [vmem:[%s3 + $0x18] sm:$0xff]
      %v656 = vld [vmem:[%s3 + $0x20] sm:$0xf]
      %v657 = vld [vmem:[%s3 + $0x24] sm:$0xff]
      %v658 = vld [vmem:[%s3 + $0x2c] sm:$0xf]
      %v667 = vunpack.c.l.b16 %v651
      %v668 = vunpack.c.h.b16 %v651
      %v669 = vunpack.c.l.b16 %v652
      %v670 = vunpack.c.l.b16 %v653
      %v671 = vunpack.c.h.b16 %v653
      %v672 = vunpack.c.l.b16 %v654
      %v673 = vunpack.c.l.b16 %v655
      %v674 = vunpack.c.h.b16 %v655
      %v675 = vunpack.c.l.b16 %v656
      %v676 = vunpack.c.l.b16 %v657
      %v677 = vunpack.c.h.b16 %v657
      %v678 = vunpack.c.l.b16 %v658
      %v679 = vpack.c.b16 %v670, %v667
      %v680 = vpack.c.b16 %v671, %v668
      %v681 = vpack.c.b16 %v672, %v669
      %v682 = vpack.c.b16 %v676, %v673
      %v683 = vpack.c.b16 %v677, %v674
      %v684 = vpack.c.b16 %v678, %v675
      %vm689 = vcmask 261120
      %v691 = vsel %vm689, %v681, 0
      %v694 = vsel %vm689, %v684, 0
      %696 = vmatprep.subr.bf16.mxu0 0
      %697 = vmatpush1.bf16.msra.mxu0 %v523
      %698 = vmatprep.subr.bf16.mxu0 0
      %699 = vmatpush1.bf16.msra.mxu0 %v524
      %700 = vmatprep.subr.bf16.mxu0 0
      %701 = vmatpush1.bf16.msra.mxu0 %v541
      %702 = vmatprep.subr.bf16.mxu0 0
      %703 = vmatpush1.bf16.msra.mxu0 %v542
      %704 = vmatprep.subr.bf16.mxu0 0
      %705 = vmatpush1.bf16.msra.mxu0 %v559
      %706 = vmatprep.subr.bf16.mxu0 0
      %707 = vmatpush1.bf16.msra.mxu0 %v560
      %708 = vmatprep.subr.bf16.mxu0 0
      %709 = vmatpush1.bf16.msra.mxu0 %v577
      %710 = vmatprep.subr.bf16.mxu0 0
      %711 = vmatpush1.bf16.msra.mxu0 %v578
      %712 = vmatprep.subr.bf16.mxu0 0
      %713 = vmatpush1.bf16.msra.mxu0 %v503
      %714 = vmatprep.subr.bf16.mxu0 0
      %715 = vmatpush1.bf16.msra.mxu0 %v504
      %716 = vmatprep.subr.bf16.mxu0 0
      %717 = vmatpush1.bf16.msra.mxu0 %v595
      %718 = vmatprep.subr.bf16.mxu0 0
      %719 = vmatpush1.bf16.msra.mxu0 %v596
      %720 = vmatprep.subr.bf16.mxu0 0
      %721 = vmatpush1.bf16.msra.mxu0 %v613
      %722 = vmatprep.subr.bf16.mxu0 0
      %723 = vmatpush1.bf16.msra.mxu0 %v614
      %724 = vmatprep.subr.bf16.mxu0 0
      %725 = vmatpush1.bf16.msra.mxu0 %v631
      %726 = vmatprep.subr.bf16.mxu0 0
      %727 = vmatpush1.bf16.msra.mxu0 %v632
      %728 = vmatprep.mubr.bf16.mxu0 %v680
      %729 = vmatmul.mubr.bf16.gmra.mrb[0].mxu0 %v679
      %v730 = vpop.f32.mrb[0].mxu0
      %v731 = vadd.f32 0.0, %v730
      %v732 = vpop.f32.mrb[0].mxu0
      %v733 = vpop.f32.mrb[0].mxu0
      %v734 = vadd.f32 0.0, %v733
      %v735 = vpop.f32.mrb[0].mxu0
      %736 = vmatprep.mubr.bf16.mxu0 %v683
      %737 = vmatmul.mubr.bf16.gmra.mrb[0].mxu0 %v682
      %v738 = vpop.f32.mrb[0].mxu0
      %v739 = vadd.f32 0.0, %v738
      %v740 = vpop.f32.mrb[0].mxu0
      %v741 = vpop.f32.mrb[0].mxu0
      %v742 = vadd.f32 0.0, %v741
      %v743 = vpop.f32.mrb[0].mxu0
      %744 = vdwg.mxu0
      %745 = vmatprep.subr.bf16.mxu0 0
      %746 = vmatpush1.bf16.msra.mxu0 %v649
      %747 = vmatprep.subr.bf16.mxu0 0
      %748 = vmatpush1.bf16.msra.mxu0 %v650
      %749 = vmatprep.subr.bf16.mxu0 0
      %750 = vmatpush1.bf16.msra.mxu0 0
      %751 = vmatprep.subr.bf16.mxu0 0
      %752 = vmatpush1.bf16.msra.mxu0 0
      %753 = vmatprep.subr.bf16.mxu0 0
      %754 = vmatpush1.bf16.msra.mxu0 0
      %755 = vmatprep.subr.bf16.mxu0 0
      %756 = vmatpush1.bf16.msra.mxu0 0
      %757 = vmatprep.subr.bf16.mxu0 0
      %758 = vmatpush1.bf16.msra.mxu0 0
      %759 = vmatprep.subr.bf16.mxu0 0
      %760 = vmatpush1.bf16.msra.mxu0 0
      %761 = vmatprep.subr.bf16.mxu0 0
      %762 = vmatpush1.bf16.msra.mxu0 0
      %763 = vmatprep.subr.bf16.mxu0 0
      %764 = vmatpush1.bf16.msra.mxu0 0
      %765 = vmatprep.subr.bf16.mxu0 0
      %766 = vmatpush1.bf16.msra.mxu0 0
      %767 = vmatprep.subr.bf16.mxu0 0
      %768 = vmatpush1.bf16.msra.mxu0 0
      %769 = vmatprep.subr.bf16.mxu0 0
      %770 = vmatpush1.bf16.msra.mxu0 0
      %771 = vmatprep.subr.bf16.mxu0 0
      %772 = vmatpush1.bf16.msra.mxu0 0
      %773 = vmatprep.subr.bf16.mxu0 0
      %774 = vmatpush1.bf16.msra.mxu0 0
      %775 = vmatprep.subr.bf16.mxu0 0
      %776 = vmatpush1.bf16.msra.mxu0 0
      %777 = vmatprep.mubr.bf16.mxu0 0
      %778 = vmatmul.mubr.bf16.gmra.mrb[0].mxu0 %v691
      %v779 = vpop.f32.mrb[0].mxu0
      %v780 = vadd.f32 %v731, %v779
      %v781 = vpop.f32.mrb[0].mxu0
      %v782 = vpop.f32.mrb[0].mxu0
      %v783 = vadd.f32 %v734, %v782
      %v784 = vpop.f32.mrb[0].mxu0
      %785 = vmatprep.mubr.bf16.mxu0 0
      %786 = vmatmul.mubr.bf16.gmra.mrb[0].mxu0 %v694
      %v787 = vpop.f32.mrb[0].mxu0
      %v788 = vadd.f32 %v739, %v787
      %v789 = vpop.f32.mrb[0].mxu0
      %v790 = vpop.f32.mrb[0].mxu0
      %v791 = vadd.f32 %v742, %v790
      %v792 = vpop.f32.mrb[0].mxu0
      %793 = vdwg.mxu0
      %v794 = vsel %vm371, %v780, 0.0
      %795 = vadd.xlane.f32.xlu0 %v794
      %v796 = vpop.xlane.xlu0 %795
      %v797 = vsel %vm371, %v783, 0.0
      %798 = vadd.xlane.f32.xlu0 %v797
      %v799 = vpop.xlane.xlu0 %798
      %v800 = vsel %vm371, %v788, 0.0
      %801 = vadd.xlane.f32.xlu0 %v800
      %v802 = vpop.xlane.xlu0 %801
      %v803 = vsel %vm371, %v791, 0.0
      %804 = vadd.xlane.f32.xlu0 %v803
      %v805 = vpop.xlane.xlu0 %804
      %v806 = vmul.f32 %v780, %v780
      %v807 = vmul.f32 %v783, %v783
      %v808 = vmul.f32 %v788, %v788
      %v809 = vmul.f32 %v791, %v791
      %v810 = vsel %vm371, %v806, 0.0
      %811 = vadd.xlane.f32.xlu0 %v810
      %v812 = vpop.xlane.xlu0 %811
      %v813 = vsel %vm371, %v807, 0.0
      %814 = vadd.xlane.f32.xlu0 %v813
      %v815 = vpop.xlane.xlu0 %814
      %v816 = vsel %vm371, %v808, 0.0
      %817 = vadd.xlane.f32.xlu0 %v816
      %v818 = vpop.xlane.xlu0 %817
      %v819 = vsel %vm371, %v809, 0.0
      %820 = vadd.xlane.f32.xlu0 %v819
      %v821 = vpop.xlane.xlu0 %820
      %v822 = vmul.f32 %v796, 0.0625
      %v823 = vmul.f32 %v799, 0.0625
      %v824 = vmul.f32 %v802, 0.0625
      %v825 = vmul.f32 %v805, 0.0625
      %v826 = vmul.f32 %v812, 0.0625
      %v827 = vmul.f32 %v815, 0.0625
      %v828 = vmul.f32 %v818, 0.0625
      %v829 = vmul.f32 %v821, 0.0625
      %v830 = vmul.f32 %v822, %v822
      %v831 = vmul.f32 %v823, %v823
      %v832 = vmul.f32 %v824, %v824
      %v833 = vmul.f32 %v825, %v825
      %v834 = vsub.f32 %v826, %v830
      %v835 = vsub.f32 %v827, %v831
      %v836 = vsub.f32 %v828, %v832
      %v837 = vsub.f32 %v829, %v833
      %v838 = vmax.f32 %v834, 0.0
      %v839 = vmax.f32 %v835, 0.0
      %v840 = vmax.f32 %v836, 0.0
      %v841 = vmax.f32 %v837, 0.0
      %v842 = vadd.f32 %v838, 1e-05
      %v843 = vadd.f32 %v839, 1e-05
      %v844 = vadd.f32 %v840, 1e-05
      %v845 = vadd.f32 %v841, 1e-05
      %v846 = vrsqrt.pop %v842
      %v847 = vrsqrt.pop %v843
      %v848 = vrsqrt.pop %v844
      %v849 = vrsqrt.pop %v845
      %v850 = vsub.f32 0.0, %v822
      %v851 = vsub.f32 0.0, %v823
      %v852 = vsub.f32 0.0, %v824
      %v853 = vsub.f32 0.0, %v825
      %v854 = vmul.f32 %v850, %v846
      %v855 = vmul.f32 %v851, %v847
      %v856 = vmul.f32 %v852, %v848
      %v857 = vmul.f32 %v853, %v849
      %v858 = vmul.f32 %v780, %v846
      %v859 = vmul.f32 %v783, %v847
      %v860 = vmul.f32 %v788, %v848
      %v861 = vmul.f32 %v791, %v849
      %v862 = vadd.f32 %v858, %v854
      %v863 = vadd.f32 %v859, %v855
      %v864 = vadd.f32 %v860, %v856
      %v865 = vadd.f32 %v861, %v857
      %v866 = vmax.f32 %v862, 0.0
      %v867 = vmax.f32 %v863, 0.0
      %v868 = vmax.f32 %v864, 0.0
      %v869 = vmax.f32 %v865, 0.0
      %v870 = vpack.c.bf16 %v867, %v866
      %v871 = vpack.c.bf16 %v869, %v868
      %v874 = vunpack.c.l.b16 %v870
      %v875 = vunpack.c.h.b16 %v870
      %v876 = vunpack.c.l.b16 %v871
      %v877 = vunpack.c.h.b16 %v871
      %v878 = vpack.c.b16 %v874, %v874
      %v879 = vpack.c.b16 %v875, %v875
      %v880 = vpack.c.b16 %v876, %v876
      %v881 = vpack.c.b16 %v877, %v877
      %vm886 = vcmask 125952
      %887 = vst.msk [vmem:[%s197] sm:$0xf] %vm886, %v878
      %888 = vst.msk [vmem:[%s197 + $0x4] sm:$0xf] %vm886, %v879
      %889 = vst.msk [vmem:[%s197 + $0x8] sm:$0xf] %vm886, %v880
      %890 = vst.msk [vmem:[%s197 + $0xc] sm:$0xf] %vm886, %v881
      %p891 = scmp.lt.s32.totalorder %s15, 1
      %s892 = scalar_select %p891, %s15, 1
      %s893 = smul.addr %s892, 4
      %s894 = smul.addr %s893, 4
      %s895 = scalar_lea.vmem %s4, %s894
      // Predicated region
      $region37: #{unet_forward.10} parent=35 // pred_check
        %p896 = pneg %p122
      $region38: #{unet_forward.10} parent=35 // pred_check_branch
        %898 = sbr.rel (%p896) target = $region40
      $region39: #{unet_forward.10} parent=35 // pred_region
        _
      $region40: #{unet_forward.10} parent=35 // pred_fallthru
        _
    $region36: #{unet_forward.10} parent=5 // pred_fallthru
      _
    %p899 = scmp.le.s32.totalorder 2, %s10
    // Predicated region
    $region41: #{unet_forward.10} parent=5 // pred_check
      %p900 = pneg %p899
    $region42: #{unet_forward.10} parent=5 // pred_check_branch
      %902 = sbr.rel (%p900) target = $region44
    $region43: #{unet_forward.10} parent=5 // pred_region
      %s903 = ssub.s32 %s10, 2
      // Predicated region
      $region45: #{unet_forward.10} parent=43 // pred_check
        %p904 = pneg %p128
      $region46: #{unet_forward.10} parent=43 // pred_check_branch
        %906 = sbr.rel (%p904) target = $region48
      $region47: #{unet_forward.10} parent=43 // pred_region
        %p907 = scmp.lt.s32.totalorder %s16, 1
        %s908 = scalar_select %p907, %s16, 1
        %s909 = smul.addr %s908, 4
        %s910 = smul.addr %s909, 4
        %s911 = scalar_lea.vmem %s4, %s910
      $region48: #{unet_forward.10} parent=43 // pred_fallthru
        _
    $region44: #{unet_forward.10} parent=5 // pred_fallthru
      _
  $region6: #{unet_forward.10} parent=0 // loop_footer
    %s14 = sadd.s32 1, %s10
  $region7: #{unet_forward.10} parent=0 // loop_footer_branch
    %9 = sbr.rel target = $region3
  $region8: #{unet_forward.10} parent=0 // loop_exit
    _

// kernel: unet_forward.11
$region0: #{unet_forward.11}
  #allocation0 [shape = 'u32[]', space=smem, size = 0x4, offset = 0x4, fixed_abs, tag = 'smem constant byte address 0x4 - core index']
  #allocation1 [shape = 'u32[144,128]{1,0:T(1,128)}', space=vmem, size = 0x12000, scoped, tag = 'internal scratch']
  %s0 = inlined_call_operand.vmem [shape: bf16[9,4], index: 0, kind: input, shape index: {}]
  %s1 = inlined_call_operand.vmem [shape: bf16[2,32,4], index: 1, kind: input, shape index: {}]
  %s2 = inlined_call_operand.vmem [shape: bf16[32,288], index: 2, kind: input, shape index: {}]
  %s3 = inlined_call_operand.vmem [shape: bf16[32,288], index: 3, kind: input, shape index: {}]
  %s4 = inlined_call_operand.vmem [shape: bf16[2,32,4], index: 4, kind: output, shape index: {}]
  %s5 = sld [smem:[#allocation0]]
  $region49: #{unet_forward.11} parent=0
    _
  %s7 = ssub.s32 1, %s5
  %s8 = scalar_select 0, %s7, %s5
  loop: start=0, step=1, limit=4
  $region2: #{unet_forward.11} parent=0 // loop_pre_header
    _
  $region3: #{unet_forward.11} parent=0 // loop_header
    %s10 = sphi 0, %s14
    %p11 = scmp.ge.s32.totalorder %s10, 4
    %s18 = sphi 0, %s18
    %s20 = sphi 0, %s18
    %s21 = sphi 0, %s20
    %s35 = sphi 0, %s21
    %s41 = sphi 0, %s43
    %s44 = sphi 0, %s41
    %s45 = sphi 0, %s44
    %s61 = sphi 0, %s45
    %s65 = sphi 0, %s65
    %s67 = sphi 0, %s65
    %s68 = sphi 0, %s67
    %s82 = sphi 0, %s68
    %s86 = sphi 0, %s86
    %s88 = sphi 0, %s86
    %s89 = sphi 0, %s88
    %s103 = sphi 0, %s89
    %s109 = sphi 0, %s111
    %s112 = sphi 0, %s109
    %s113 = sphi 0, %s112
    %s129 = sphi 0, %s113
  $region4: #{unet_forward.11} parent=0 // loop_header_branch
    %13 = sbr.rel (%p11) target = $region8
  $region5: #{unet_forward.11} parent=0 // loop_body
    %s15 = ssub.s32 %s10, 1
    %s16 = ssub.s32 %s10, 2
    %s17 = sadd.s32 %s10, 1
    %s19 = sadd.s32 %s18, 1
    %p22 = scmp.eq.s32.totalorder %s10, 1
    %p23 = scmp.ne.s32.totalorder %s18, %s20
    %p24 = scmp.eq.s32.totalorder %s10, 0
    %p25 = por %p23, %p24
    %p26 = scmp.ne.s32.totalorder %s18, %s20
    %p27 = scmp.eq.s32.totalorder %s15, 1
    %p28 = por %p26, %p27
    %p29 = scmp.ne.s32.totalorder %s20, %s21
    %p30 = scmp.eq.s32.totalorder %s15, 0
    %p31 = por %p29, %p30
    %p32 = scmp.ne.s32.totalorder %s20, %s21
    %p33 = scmp.eq.s32.totalorder %s16, 1
    %p34 = por %p32, %p33
    %p36 = scmp.ne.s32.totalorder %s21, %s35
    %p37 = scmp.eq.s32.totalorder %s16, 0
    %p38 = por %p36, %p37
    %s39 = ssub.s32 %s10, %s17
    %p40 = scmp.eq.s32.totalorder %s39, 0
    %s42 = sadd.s32 %s41, 1
    %s43 = scalar_select %p40, %s41, %s42
    %p46 = pneg %p40
    %p47 = scmp.eq.s32.totalorder %s10, 1
    %p48 = por %p46, %p47
    %p49 = scmp.ne.s32.totalorder %s41, %s44
    %p50 = scmp.eq.s32.totalorder %s10, 0
    %p51 = por %p49, %p50
    %p52 = scmp.ne.s32.totalorder %s41, %s44
    %p53 = scmp.eq.s32.totalorder %s15, 1
    %p54 = por %p52, %p53
    %p55 = scmp.ne.s32.totalorder %s44, %s45
    %p56 = scmp.eq.s32.totalorder %s15, 0
    %p57 = por %p55, %p56
    %p58 = scmp.ne.s32.totalorder %s44, %s45
    %p59 = scmp.eq.s32.totalorder %s16, 1
    %p60 = por %p58, %p59
    %p62 = scmp.ne.s32.totalorder %s45, %s61
    %p63 = scmp.eq.s32.totalorder %s16, 0
    %p64 = por %p62, %p63
    %s66 = sadd.s32 %s65, 1
    %p69 = scmp.eq.s32.totalorder %s10, 1
    %p70 = scmp.ne.s32.totalorder %s65, %s67
    %p71 = scmp.eq.s32.totalorder %s10, 0
    %p72 = por %p70, %p71
    %p73 = scmp.ne.s32.totalorder %s65, %s67
    %p74 = scmp.eq.s32.totalorder %s15, 1
    %p75 = por %p73, %p74
    %p76 = scmp.ne.s32.totalorder %s67, %s68
    %p77 = scmp.eq.s32.totalorder %s15, 0
    %p78 = por %p76, %p77
    %p79 = scmp.ne.s32.totalorder %s67, %s68
    %p80 = scmp.eq.s32.totalorder %s16, 1
    %p81 = por %p79, %p80
    %p83 = scmp.ne.s32.totalorder %s68, %s82
    %p84 = scmp.eq.s32.totalorder %s16, 0
    %p85 = por %p83, %p84
    %s87 = sadd.s32 %s86, 1
    %p90 = scmp.eq.s32.totalorder %s10, 1
    %p91 = scmp.ne.s32.totalorder %s86, %s88
    %p92 = scmp.eq.s32.totalorder %s10, 0
    %p93 = por %p91, %p92
    %p94 = scmp.ne.s32.totalorder %s86, %s88
    %p95 = scmp.eq.s32.totalorder %s15, 1
    %p96 = por %p94, %p95
    %p97 = scmp.ne.s32.totalorder %s88, %s89
    %p98 = scmp.eq.s32.totalorder %s15, 0
    %p99 = por %p97, %p98
    %p100 = scmp.ne.s32.totalorder %s88, %s89
    %p101 = scmp.eq.s32.totalorder %s16, 1
    %p102 = por %p100, %p101
    %p104 = scmp.ne.s32.totalorder %s89, %s103
    %p105 = scmp.eq.s32.totalorder %s16, 0
    %p106 = por %p104, %p105
    %s107 = ssub.s32 %s10, %s17
    %p108 = scmp.eq.s32.totalorder %s107, 0
    %s110 = sadd.s32 %s109, 1
    %s111 = scalar_select %p108, %s109, %s110
    %p114 = pneg %p108
    %p115 = scmp.eq.s32.totalorder %s10, 1
    %p116 = por %p114, %p115
    %p117 = scmp.ne.s32.totalorder %s109, %s112
    %p118 = scmp.eq.s32.totalorder %s10, 0
    %p119 = por %p117, %p118
    %p120 = scmp.ne.s32.totalorder %s109, %s112
    %p121 = scmp.eq.s32.totalorder %s15, 1
    %p122 = por %p120, %p121
    %p123 = scmp.ne.s32.totalorder %s112, %s113
    %p124 = scmp.eq.s32.totalorder %s15, 0
    %p125 = por %p123, %p124
    %p126 = scmp.ne.s32.totalorder %s112, %s113
    %p127 = scmp.eq.s32.totalorder %s16, 1
    %p128 = por %p126, %p127
    %p130 = scmp.ne.s32.totalorder %s113, %s129
    %p131 = scmp.eq.s32.totalorder %s16, 0
    %p132 = por %p130, %p131
    %p133 = scmp.le.s32.totalorder 1, %s10
    %p134 = scmp.lt.s32.totalorder %s10, 3
    %p135 = pnand %p133, %p134
    %p136 = pneg %p135
    // Predicated region
    $region9: #{unet_forward.11} parent=5 // pred_check
      _
    $region10: #{unet_forward.11} parent=5 // pred_check_branch
      %138 = sbr.rel (%p135) target = $region12
    $region11: #{unet_forward.11} parent=5 // pred_region
      %s139 = ssub.s32 %s10, 1
      // Predicated region
      $region13: #{unet_forward.11} parent=11 // pred_check
        %p140 = pneg %p31
      $region14: #{unet_forward.11} parent=11 // pred_check_branch
        %142 = sbr.rel (%p140) target = $region16
      $region15: #{unet_forward.11} parent=11 // pred_region
        _
      $region16: #{unet_forward.11} parent=11 // pred_fallthru
        _
      // Predicated region
      $region17: #{unet_forward.11} parent=11 // pred_check
        %p143 = pneg %p78
      $region18: #{unet_forward.11} parent=11 // pred_check_branch
        %145 = sbr.rel (%p143) target = $region20
      $region19: #{unet_forward.11} parent=11 // pred_region
        _
      $region20: #{unet_forward.11} parent=11 // pred_fallthru
        _
      // Predicated region
      $region21: #{unet_forward.11} parent=11 // pred_check
        %p146 = pneg %p99
      $region22: #{unet_forward.11} parent=11 // pred_check_branch
        %148 = sbr.rel (%p146) target = $region24
      $region23: #{unet_forward.11} parent=11 // pred_region
        _
      $region24: #{unet_forward.11} parent=11 // pred_fallthru
        _
    $region12: #{unet_forward.11} parent=5 // pred_fallthru
      _
    %p149 = scmp.lt.s32.totalorder %s10, 2
    // Predicated region
    $region25: #{unet_forward.11} parent=5 // pred_check
      %p150 = pneg %p149
    $region26: #{unet_forward.11} parent=5 // pred_check_branch
      %152 = sbr.rel (%p150) target = $region28
    $region27: #{unet_forward.11} parent=5 // pred_region
      // Predicated region
      $region29: #{unet_forward.11} parent=27 // pred_check
        %p153 = pneg %p51
      $region30: #{unet_forward.11} parent=27 // pred_check_branch
        %155 = sbr.rel (%p153) target = $region32
      $region31: #{unet_forward.11} parent=27 // pred_region
        %p156 = scmp.lt.s32.totalorder %s10, 1
        %s157 = scalar_select %p156, %s10, 1
        %s158 = smul.addr %s157, 4
        %s159 = smul.addr %s158, 4
        %s160 = scalar_lea.vmem %s1, %s159
      $region32: #{unet_forward.11} parent=27 // pred_fallthru
        _
    $region28: #{unet_forward.11} parent=5 // pred_fallthru
      _
    %p161 = scmp.le.s32.totalorder 1, %s10
    %p162 = scmp.lt.s32.totalorder %s10, 3
    %p163 = pnand %p161, %p162
    %p164 = pneg %p163
    // Predicated region
    $region33: #{unet_forward.11} parent=5 // pred_check
      _
    $region34: #{unet_forward.11} parent=5 // pred_check_branch
      %166 = sbr.rel (%p163) target = $region36
    $region35: #{unet_forward.11} parent=5 // pred_region
      %s167 = ssub.s32 %s10, 1
      %p168 = pneg %p31
      %p169 = pneg %p28
      %p170 = scmp.lt.s32.totalorder %s15, 1
      %s171 = scalar_select %p170, %s15, 1
      %s172 = smul.addr %s171, 4
      %s173 = smul.addr %s172, 4
      %s174 = scalar_lea.vmem %s1, %s173
      %p175 = pneg %p57
      %p176 = pneg %p54
      %p177 = pneg %p78
      %p178 = pneg %p75
      %p179 = pneg %p99
      %p180 = pneg %p96
      %p181 = pneg %p125
      %p182 = pneg %p122
      %p183 = scmp.lt.s32.totalorder %s15, 1
      %s184 = scalar_select %p183, %s15, 1
      %s185 = smul.addr %s184, 4
      %s186 = smul.addr %s185, 4
      %s187 = scalar_lea.vmem %s4, %s186
      %p188 = scmp.lt.s32.totalorder %s15, 1
      %s189 = scalar_select %p188, %s15, 1
      %s190 = smul.addr %s189, 4
      %s191 = smul.addr %s190, 4
      %s192 = scalar_lea.vmem %s1, %s191
      %p193 = scmp.lt.s32.totalorder %s15, 1
      %s194 = scalar_select %p193, %s15, 1
      %s195 = smul.addr %s194, 4
      %s196 = smul.addr %s195, 4
      %s197 = scalar_lea.vmem %s4, %s196
      %v199 = vld [vmem:[%s192] sm:$0xf]
      %v200 = vld [vmem:[%s192 + $0x4] sm:$0xf]
      %v201 = vld [vmem:[%s192 + $0x8] sm:$0xf]
      %v202 = vld [vmem:[%s192 + $0xc] sm:$0xf]
      %v207 = vunpack.c.l.b16 %v199
      %v208 = vunpack.c.l.b16 %v200
      %v209 = vunpack.c.l.b16 %v201
      %v210 = vunpack.c.l.b16 %v202
      %v211 = vpack.c.b16 %v208, %v207
      %v212 = vpack.c.b16 %v210, %v209
      %213 = vrot.lane.b32.xlu0 %v211, 127
      %v214 = vpop.permute.xlu0 %213
      %215 = vrot.lane.b32.xlu0 %v212, 127
      %v216 = vpop.permute.xlu0 %215
      %217 = vrot.lane.b32.xlu0 %v211, 3
      %v218 = vpop.permute.xlu0 %217
      %219 = vrot.lane.b32.xlu0 %v212, 3
      %v220 = vpop.permute.xlu0 %219
      %vm221 = vcmask 23552
      %v224 = vsel %vm221, %v214, %v218
      %v228 = vsel %vm221, %v216, %v220
      %v230 = vld [vmem:[%s0] sm:$0x1]
      %v232 = vpack.i.b16 %v230, %v230
      %v234 = vlaneseq
      %v235 = vshrl.u32 %v234, 7
      %v236 = vsub.s32 0, %v235
      %v237 = vrot.slane %v232, %v236
      %v238 = vmul.bf16 %v224, %v237
      %v239 = vmul.bf16 %v228, %v237
      %240 = vrot.lane.b32.xlu0 %v211, 126
      %v241 = vpop.permute.xlu0 %240
      %242 = vrot.lane.b32.xlu0 %v212, 126
      %v243 = vpop.permute.xlu0 %242
      %244 = vrot.lane.b32.xlu0 %v211, 2
      %v245 = vpop.permute.xlu0 %244
      %246 = vrot.lane.b32.xlu0 %v212, 2
      %v247 = vpop.permute.xlu0 %246
      %vm248 = vcmask 15360
      %v251 = vsel %vm248, %v241, %v245
      %v255 = vsel %vm248, %v243, %v247
      %v257 = vshrl.u32 %v230, 16
      %v258 = vpack.i.b16 %v257, %v257
      %v260 = vlaneseq
      %v261 = vshrl.u32 %v260, 7
      %v262 = vsub.s32 0, %v261
      %v263 = vrot.slane %v258, %v262
      %v264 = vmul.bf16 %v251, %v263
      %v265 = vmul.bf16 %v255, %v263
      %266 = vrot.lane.b32.xlu0 %v211, 125
      %v267 = vpop.permute.xlu0 %266
      %268 = vrot.lane.b32.xlu0 %v212, 125
      %v269 = vpop.permute.xlu0 %268
      %270 = vrot.lane.b32.xlu0 %v211, 1
      %v271 = vpop.permute.xlu0 %270
      %272 = vrot.lane.b32.xlu0 %v212, 1
      %v273 = vpop.permute.xlu0 %272
      %vm274 = vcmask 7168
      %v277 = vsel %vm274, %v267, %v271
      %v281 = vsel %vm274, %v269, %v273
      %v283 = vld [vmem:[%s0] sm:$0x2]
      %v285 = vpack.i.b16 %v283, %v283
      %v287 = vlaneseq
      %v288 = vshrl.u32 %v287, 7
      %v289 = vsub.s32 1, %v288
      %v290 = vrot.slane %v285, %v289
      %v291 = vmul.bf16 %v277, %v290
      %v292 = vmul.bf16 %v281, %v290
      %v293 = vshrl.u32 %v283, 16
      %v294 = vpack.i.b16 %v293, %v293
      %v296 = vlaneseq
      %v297 = vshrl.u32 %v296, 7
      %v298 = vsub.s32 1, %v297
      %v299 = vrot.slane %v294, %v298
      %v300 = vmul.bf16 %v277, %v299
      %v301 = vmul.bf16 %v281, %v299
      %v302 = vld [vmem:[%s0] sm:$0x4]
      %v304 = vshrl.u32 %v302, 16
      %v305 = vpack.i.b16 %v304, %v304
      %v307 = vlaneseq
      %v308 = vshrl.u32 %v307, 7
      %v309 = vsub.s32 2, %v308
      %v310 = vrot.slane %v305, %v309
      %v311 = vmul.bf16 %v224, %v310
      %v312 = vmul.bf16 %v228, %v310
      %v313 = vld [vmem:[%s0] sm:$0x8]
      %v315 = vpack.i.b16 %v313, %v313
      %v317 = vlaneseq
      %v318 = vshrl.u32 %v317, 7
      %v319 = vsub.s32 3, %v318
      %v320 = vrot.slane %v315, %v319
      %v321 = vmul.bf16 %v224, %v320
      %v322 = vmul.bf16 %v228, %v320
      %v323 = vshrl.u32 %v313, 16
      %v324 = vpack.i.b16 %v323, %v323
      %v326 = vlaneseq
      %v327 = vshrl.u32 %v326, 7
      %v328 = vsub.s32 3, %v327
      %v329 = vrot.slane %v324, %v328
      %v330 = vmul.bf16 %v251, %v329
      %v331 = vmul.bf16 %v255, %v329
      %v332 = vld [vmem:[%s0 + $0x4] sm:$0x1]
      %v334 = vpack.i.b16 %v332, %v332
      %v336 = vlaneseq
      %v337 = vshrl.u32 %v336, 7
      %v338 = vsub.s32 0, %v337
      %v339 = vrot.slane %v334, %v338
      %v340 = vmul.bf16 %v277, %v339
      %v341 = vmul.bf16 %v281, %v339
      %v344 = vld [vmem:[%s2] sm:$0xff]
      %v345 = vld [vmem:[%s2 + $0x8] sm:$0xf]
      %v346 = vld [vmem:[%s2 + $0xc] sm:$0xff]
      %v347 = vld [vmem:[%s2 + $0x14] sm:$0xf]
      %v348 = vld [vmem:[%s2 + $0x18] sm:$0xff]
      %v349 = vld [vmem:[%s2 + $0x20] sm:$0xf]
      %v350 = vld [vmem:[%s2 + $0x24] sm:$0xff]
      %v351 = vld [vmem:[%s2 + $0x2c] sm:$0xf]
      %v360 = vunpack.c.l.b16 %v344
      %v361 = vunpack.c.h.b16 %v344
      %v362 = vunpack.c.l.b16 %v345
      %v363 = vunpack.c.l.b16 %v346
      %v364 = vunpack.c.h.b16 %v346
      %v365 = vunpack.c.l.b16 %v347
      %v366 = vunpack.c.l.b16 %v348
      %v367 = vunpack.c.h.b16 %v348
      %v368 = vunpack.c.l.b16 %v349
      %v369 = vunpack.c.l.b16 %v350
      %v370 = vunpack.c.h.b16 %v350
      %v371 = vunpack.c.l.b16 %v351
      %v372 = vpack.c.b16 %v363, %v360
      %v373 = vpack.c.b16 %v364, %v361
      %v374 = vpack.c.b16 %v365, %v362
      %v375 = vpack.c.b16 %v369, %v366
      %v376 = vpack.c.b16 %v370, %v367
      %v377 = vpack.c.b16 %v371, %v368
      %vm382 = vcmask 261120
      %v384 = vsel %vm382, %v374, 0
      %v387 = vsel %vm382, %v377, 0
      %389 = vmatprep.subr.bf16.mxu0 0
      %390 = vmatpush1.bf16.msra.mxu0 %v238
      %391 = vmatprep.subr.bf16.mxu0 0
      %392 = vmatpush1.bf16.msra.mxu0 %v239
      %393 = vmatprep.subr.bf16.mxu0 0
      %394 = vmatpush1.bf16.msra.mxu0 %v264
      %395 = vmatprep.subr.bf16.mxu0 0
      %396 = vmatpush1.bf16.msra.mxu0 %v265
      %397 = vmatprep.subr.bf16.mxu0 0
      %398 = vmatpush1.bf16.msra.mxu0 %v291
      %399 = vmatprep.subr.bf16.mxu0 0
      %400 = vmatpush1.bf16.msra.mxu0 %v292
      %401 = vmatprep.subr.bf16.mxu0 0
      %402 = vmatpush1.bf16.msra.mxu0 %v300
      %403 = vmatprep.subr.bf16.mxu0 0
      %404 = vmatpush1.bf16.msra.mxu0 %v301
      %405 = vmatprep.subr.bf16.mxu0 0
      %406 = vmatpush1.bf16.msra.mxu0 %v211
      %407 = vmatprep.subr.bf16.mxu0 0
      %408 = vmatpush1.bf16.msra.mxu0 %v212
      %409 = vmatprep.subr.bf16.mxu0 0
      %410 = vmatpush1.bf16.msra.mxu0 %v311
      %411 = vmatprep.subr.bf16.mxu0 0
      %412 = vmatpush1.bf16.msra.mxu0 %v312
      %413 = vmatprep.subr.bf16.mxu0 0
      %414 = vmatpush1.bf16.msra.mxu0 %v321
      %415 = vmatprep.subr.bf16.mxu0 0
      %416 = vmatpush1.bf16.msra.mxu0 %v322
      %417 = vmatprep.subr.bf16.mxu0 0
      %418 = vmatpush1.bf16.msra.mxu0 %v330
      %419 = vmatprep.subr.bf16.mxu0 0
      %420 = vmatpush1.bf16.msra.mxu0 %v331
      %421 = vmatprep.mubr.bf16.mxu0 %v373
      %422 = vmatmul.mubr.bf16.gmra.mrb[0].mxu0 %v372
      %v423 = vpop.f32.mrb[0].mxu0
      %v424 = vadd.f32 0.0, %v423
      %v425 = vpop.f32.mrb[0].mxu0
      %v426 = vpop.f32.mrb[0].mxu0
      %v427 = vadd.f32 0.0, %v426
      %v428 = vpop.f32.mrb[0].mxu0
      %429 = vmatprep.mubr.bf16.mxu0 %v376
      %430 = vmatmul.mubr.bf16.gmra.mrb[0].mxu0 %v375
      %v431 = vpop.f32.mrb[0].mxu0
      %v432 = vadd.f32 0.0, %v431
      %v433 = vpop.f32.mrb[0].mxu0
      %v434 = vpop.f32.mrb[0].mxu0
      %v435 = vadd.f32 0.0, %v434
      %v436 = vpop.f32.mrb[0].mxu0
      %437 = vdwg.mxu0
      %438 = vmatprep.subr.bf16.mxu0 0
      %439 = vmatpush1.bf16.msra.mxu0 %v340
      %440 = vmatprep.subr.bf16.mxu0 0
      %441 = vmatpush1.bf16.msra.mxu0 %v341
      %442 = vmatprep.subr.bf16.mxu0 0
      %443 = vmatpush1.bf16.msra.mxu0 0
      %444 = vmatprep.subr.bf16.mxu0 0
      %445 = vmatpush1.bf16.msra.mxu0 0
      %446 = vmatprep.subr.bf16.mxu0 0
      %447 = vmatpush1.bf16.msra.mxu0 0
      %448 = vmatprep.subr.bf16.mxu0 0
      %449 = vmatpush1.bf16.msra.mxu0 0
      %450 = vmatprep.subr.bf16.mxu0 0
      %451 = vmatpush1.bf16.msra.mxu0 0
      %452 = vmatprep.subr.bf16.mxu0 0
      %453 = vmatpush1.bf16.msra.mxu0 0
      %454 = vmatprep.subr.bf16.mxu0 0
      %455 = vmatpush1.bf16.msra.mxu0 0
      %456 = vmatprep.subr.bf16.mxu0 0
      %457 = vmatpush1.bf16.msra.mxu0 0
      %458 = vmatprep.subr.bf16.mxu0 0
      %459 = vmatpush1.bf16.msra.mxu0 0
      %460 = vmatprep.subr.bf16.mxu0 0
      %461 = vmatpush1.bf16.msra.mxu0 0
      %462 = vmatprep.subr.bf16.mxu0 0
      %463 = vmatpush1.bf16.msra.mxu0 0
      %464 = vmatprep.subr.bf16.mxu0 0
      %465 = vmatpush1.bf16.msra.mxu0 0
      %466 = vmatprep.subr.bf16.mxu0 0
      %467 = vmatpush1.bf16.msra.mxu0 0
      %468 = vmatprep.subr.bf16.mxu0 0
      %469 = vmatpush1.bf16.msra.mxu0 0
      %470 = vmatprep.mubr.bf16.mxu0 0
      %471 = vmatmul.mubr.bf16.gmra.mrb[0].mxu0 %v384
      %v472 = vpop.f32.mrb[0].mxu0
      %v473 = vadd.f32 %v424, %v472
      %v474 = vpop.f32.mrb[0].mxu0
      %v475 = vpop.f32.mrb[0].mxu0
      %v476 = vadd.f32 %v427, %v475
      %v477 = vpop.f32.mrb[0].mxu0
      %478 = vmatprep.mubr.bf16.mxu0 0
      %479 = vmatmul.mubr.bf16.gmra.mrb[0].mxu0 %v387
      %v480 = vpop.f32.mrb[0].mxu0
      %v481 = vadd.f32 %v432, %v480
      %v482 = vpop.f32.mrb[0].mxu0
      %v483 = vpop.f32.mrb[0].mxu0
      %v484 = vadd.f32 %v435, %v483
      %v485 = vpop.f32.mrb[0].mxu0
      %486 = vdwg.mxu0
      %vm487 = vcmask 31744
      %v488 = vsel %vm487, %v473, 0.0
      %489 = vadd.xlane.f32.xlu0 %v488
      %v490 = vpop.xlane.xlu0 %489
      %v491 = vsel %vm487, %v476, 0.0
      %492 = vadd.xlane.f32.xlu0 %v491
      %v493 = vpop.xlane.xlu0 %492
      %v494 = vsel %vm487, %v481, 0.0
      %495 = vadd.xlane.f32.xlu0 %v494
      %v496 = vpop.xlane.xlu0 %495
      %v497 = vsel %vm487, %v484, 0.0
      %498 = vadd.xlane.f32.xlu0 %v497
      %v499 = vpop.xlane.xlu0 %498
      %v500 = vmul.f32 %v473, %v473
      %v501 = vmul.f32 %v476, %v476
      %v502 = vmul.f32 %v481, %v481
      %v503 = vmul.f32 %v484, %v484
      %v504 = vsel %vm487, %v500, 0.0
      %505 = vadd.xlane.f32.xlu0 %v504
      %v506 = vpop.xlane.xlu0 %505
      %v507 = vsel %vm487, %v501, 0.0
      %508 = vadd.xlane.f32.xlu0 %v507
      %v509 = vpop.xlane.xlu0 %508
      %v510 = vsel %vm487, %v502, 0.0
      %511 = vadd.xlane.f32.xlu0 %v510
      %v512 = vpop.xlane.xlu0 %511
      %v513 = vsel %vm487, %v503, 0.0
      %514 = vadd.xlane.f32.xlu0 %v513
      %v515 = vpop.xlane.xlu0 %514
      %v516 = vmul.f32 %v490, 0.25
      %v517 = vmul.f32 %v493, 0.25
      %v518 = vmul.f32 %v496, 0.25
      %v519 = vmul.f32 %v499, 0.25
      %v520 = vmul.f32 %v506, 0.25
      %v521 = vmul.f32 %v509, 0.25
      %v522 = vmul.f32 %v512, 0.25
      %v523 = vmul.f32 %v515, 0.25
      %v524 = vmul.f32 %v516, %v516
      %v525 = vmul.f32 %v517, %v517
      %v526 = vmul.f32 %v518, %v518
      %v527 = vmul.f32 %v519, %v519
      %v528 = vsub.f32 %v520, %v524
      %v529 = vsub.f32 %v521, %v525
      %v530 = vsub.f32 %v522, %v526
      %v531 = vsub.f32 %v523, %v527
      %v532 = vmax.f32 %v528, 0.0
      %v533 = vmax.f32 %v529, 0.0
      %v534 = vmax.f32 %v530, 0.0
      %v535 = vmax.f32 %v531, 0.0
      %v536 = vadd.f32 %v532, 1e-05
      %v537 = vadd.f32 %v533, 1e-05
      %v538 = vadd.f32 %v534, 1e-05
      %v539 = vadd.f32 %v535, 1e-05
      %v540 = vrsqrt.pop %v536
      %v541 = vrsqrt.pop %v537
      %v542 = vrsqrt.pop %v538
      %v543 = vrsqrt.pop %v539
      %v544 = vsub.f32 0.0, %v516
      %v545 = vsub.f32 0.0, %v517
      %v546 = vsub.f32 0.0, %v518
      %v547 = vsub.f32 0.0, %v519
      %v548 = vmul.f32 %v544, %v540
      %v549 = vmul.f32 %v545, %v541
      %v550 = vmul.f32 %v546, %v542
      %v551 = vmul.f32 %v547, %v543
      %v552 = vmul.f32 %v473, %v540
      %v553 = vmul.f32 %v476, %v541
      %v554 = vmul.f32 %v481, %v542
      %v555 = vmul.f32 %v484, %v543
      %v556 = vadd.f32 %v552, %v548
      %v557 = vadd.f32 %v553, %v549
      %v558 = vadd.f32 %v554, %v550
      %v559 = vadd.f32 %v555, %v551
      %v560 = vmax.f32 %v556, 0.0
      %v561 = vmax.f32 %v557, 0.0
      %v562 = vmax.f32 %v558, 0.0
      %v563 = vmax.f32 %v559, 0.0
      %v564 = vpack.c.bf16 %v561, %v560
      %v565 = vpack.c.bf16 %v563, %v562
      %568 = vrot.lane.b32.xlu0 %v564, 127
      %v569 = vpop.permute.xlu0 %568
      %570 = vrot.lane.b32.xlu0 %v565, 127
      %v571 = vpop.permute.xlu0 %570
      %572 = vrot.lane.b32.xlu0 %v564, 3
      %v573 = vpop.permute.xlu0 %572
      %574 = vrot.lane.b32.xlu0 %v565, 3
      %v575 = vpop.permute.xlu0 %574
      %v578 = vsel %vm221, %v569, %v573
      %v582 = vsel %vm221, %v571, %v575
      %v584 = vmul.bf16 %v578, %v237
      %v585 = vmul.bf16 %v582, %v237
      %586 = vrot.lane.b32.xlu0 %v564, 126
      %v587 = vpop.permute.xlu0 %586
      %588 = vrot.lane.b32.xlu0 %v565, 126
      %v589 = vpop.permute.xlu0 %588
      %590 = vrot.lane.b32.xlu0 %v564, 2
      %v591 = vpop.permute.xlu0 %590
      %592 = vrot.lane.b32.xlu0 %v565, 2
      %v593 = vpop.permute.xlu0 %592
      %v596 = vsel %vm248, %v587, %v591
      %v600 = vsel %vm248, %v589, %v593
      %v602 = vmul.bf16 %v596, %v263
      %v603 = vmul.bf16 %v600, %v263
      %604 = vrot.lane.b32.xlu0 %v564, 125
      %v605 = vpop.permute.xlu0 %604
      %606 = vrot.lane.b32.xlu0 %v565, 125
      %v607 = vpop.permute.xlu0 %606
      %608 = vrot.lane.b32.xlu0 %v564, 1
      %v609 = vpop.permute.xlu0 %608
      %610 = vrot.lane.b32.xlu0 %v565, 1
      %v611 = vpop.permute.xlu0 %610
      %v614 = vsel %vm274, %v605, %v609
      %v618 = vsel %vm274, %v607, %v611
      %v620 = vmul.bf16 %v614, %v290
      %v621 = vmul.bf16 %v618, %v290
      %v622 = vmul.bf16 %v614, %v299
      %v623 = vmul.bf16 %v618, %v299
      %v624 = vmul.bf16 %v578, %v310
      %v625 = vmul.bf16 %v582, %v310
      %v626 = vmul.bf16 %v578, %v320
      %v627 = vmul.bf16 %v582, %v320
      %v628 = vmul.bf16 %v596, %v329
      %v629 = vmul.bf16 %v600, %v329
      %v630 = vmul.bf16 %v614, %v339
      %v631 = vmul.bf16 %v618, %v339
      %v632 = vld [vmem:[%s3] sm:$0xff]
      %v633 = vld [vmem:[%s3 + $0x8] sm:$0xf]
      %v634 = vld [vmem:[%s3 + $0xc] sm:$0xff]
      %v635 = vld [vmem:[%s3 + $0x14] sm:$0xf]
      %v636 = vld [vmem:[%s3 + $0x18] sm:$0xff]
      %v637 = vld [vmem:[%s3 + $0x20] sm:$0xf]
      %v638 = vld [vmem:[%s3 + $0x24] sm:$0xff]
      %v639 = vld [vmem:[%s3 + $0x2c] sm:$0xf]
      %v648 = vunpack.c.l.b16 %v632
      %v649 = vunpack.c.h.b16 %v632
      %v650 = vunpack.c.l.b16 %v633
      %v651 = vunpack.c.l.b16 %v634
      %v652 = vunpack.c.h.b16 %v634
      %v653 = vunpack.c.l.b16 %v635
      %v654 = vunpack.c.l.b16 %v636
      %v655 = vunpack.c.h.b16 %v636
      %v656 = vunpack.c.l.b16 %v637
      %v657 = vunpack.c.l.b16 %v638
      %v658 = vunpack.c.h.b16 %v638
      %v659 = vunpack.c.l.b16 %v639
      %v660 = vpack.c.b16 %v651, %v648
      %v661 = vpack.c.b16 %v652, %v649
      %v662 = vpack.c.b16 %v653, %v650
      %v663 = vpack.c.b16 %v657, %v654
      %v664 = vpack.c.b16 %v658, %v655
      %v665 = vpack.c.b16 %v659, %v656
      %v671 = vsel %vm382, %v662, 0
      %v674 = vsel %vm382, %v665, 0
      %676 = vmatprep.subr.bf16.mxu0 0
      %677 = vmatpush1.bf16.msra.mxu0 %v584
      %678 = vmatprep.subr.bf16.mxu0 0
      %679 = vmatpush1.bf16.msra.mxu0 %v585
      %680 = vmatprep.subr.bf16.mxu0 0
      %681 = vmatpush1.bf16.msra.mxu0 %v602
      %682 = vmatprep.subr.bf16.mxu0 0
      %683 = vmatpush1.bf16.msra.mxu0 %v603
      %684 = vmatprep.subr.bf16.mxu0 0
      %685 = vmatpush1.bf16.msra.mxu0 %v620
      %686 = vmatprep.subr.bf16.mxu0 0
      %687 = vmatpush1.bf16.msra.mxu0 %v621
      %688 = vmatprep.subr.bf16.mxu0 0
      %689 = vmatpush1.bf16.msra.mxu0 %v622
      %690 = vmatprep.subr.bf16.mxu0 0
      %691 = vmatpush1.bf16.msra.mxu0 %v623
      %692 = vmatprep.subr.bf16.mxu0 0
      %693 = vmatpush1.bf16.msra.mxu0 %v564
      %694 = vmatprep.subr.bf16.mxu0 0
      %695 = vmatpush1.bf16.msra.mxu0 %v565
      %696 = vmatprep.subr.bf16.mxu0 0
      %697 = vmatpush1.bf16.msra.mxu0 %v624
      %698 = vmatprep.subr.bf16.mxu0 0
      %699 = vmatpush1.bf16.msra.mxu0 %v625
      %700 = vmatprep.subr.bf16.mxu0 0
      %701 = vmatpush1.bf16.msra.mxu0 %v626
      %702 = vmatprep.subr.bf16.mxu0 0
      %703 = vmatpush1.bf16.msra.mxu0 %v627
      %704 = vmatprep.subr.bf16.mxu0 0
      %705 = vmatpush1.bf16.msra.mxu0 %v628
      %706 = vmatprep.subr.bf16.mxu0 0
      %707 = vmatpush1.bf16.msra.mxu0 %v629
      %708 = vmatprep.mubr.bf16.mxu0 %v661
      %709 = vmatmul.mubr.bf16.gmra.mrb[0].mxu0 %v660
      %v710 = vpop.f32.mrb[0].mxu0
      %v711 = vadd.f32 0.0, %v710
      %v712 = vpop.f32.mrb[0].mxu0
      %v713 = vpop.f32.mrb[0].mxu0
      %v714 = vadd.f32 0.0, %v713
      %v715 = vpop.f32.mrb[0].mxu0
      %716 = vmatprep.mubr.bf16.mxu0 %v664
      %717 = vmatmul.mubr.bf16.gmra.mrb[0].mxu0 %v663
      %v718 = vpop.f32.mrb[0].mxu0
      %v719 = vadd.f32 0.0, %v718
      %v720 = vpop.f32.mrb[0].mxu0
      %v721 = vpop.f32.mrb[0].mxu0
      %v722 = vadd.f32 0.0, %v721
      %v723 = vpop.f32.mrb[0].mxu0
      %724 = vdwg.mxu0
      %725 = vmatprep.subr.bf16.mxu0 0
      %726 = vmatpush1.bf16.msra.mxu0 %v630
      %727 = vmatprep.subr.bf16.mxu0 0
      %728 = vmatpush1.bf16.msra.mxu0 %v631
      %729 = vmatprep.subr.bf16.mxu0 0
      %730 = vmatpush1.bf16.msra.mxu0 0
      %731 = vmatprep.subr.bf16.mxu0 0
      %732 = vmatpush1.bf16.msra.mxu0 0
      %733 = vmatprep.subr.bf16.mxu0 0
      %734 = vmatpush1.bf16.msra.mxu0 0
      %735 = vmatprep.subr.bf16.mxu0 0
      %736 = vmatpush1.bf16.msra.mxu0 0
      %737 = vmatprep.subr.bf16.mxu0 0
      %738 = vmatpush1.bf16.msra.mxu0 0
      %739 = vmatprep.subr.bf16.mxu0 0
      %740 = vmatpush1.bf16.msra.mxu0 0
      %741 = vmatprep.subr.bf16.mxu0 0
      %742 = vmatpush1.bf16.msra.mxu0 0
      %743 = vmatprep.subr.bf16.mxu0 0
      %744 = vmatpush1.bf16.msra.mxu0 0
      %745 = vmatprep.subr.bf16.mxu0 0
      %746 = vmatpush1.bf16.msra.mxu0 0
      %747 = vmatprep.subr.bf16.mxu0 0
      %748 = vmatpush1.bf16.msra.mxu0 0
      %749 = vmatprep.subr.bf16.mxu0 0
      %750 = vmatpush1.bf16.msra.mxu0 0
      %751 = vmatprep.subr.bf16.mxu0 0
      %752 = vmatpush1.bf16.msra.mxu0 0
      %753 = vmatprep.subr.bf16.mxu0 0
      %754 = vmatpush1.bf16.msra.mxu0 0
      %755 = vmatprep.subr.bf16.mxu0 0
      %756 = vmatpush1.bf16.msra.mxu0 0
      %757 = vmatprep.mubr.bf16.mxu0 0
      %758 = vmatmul.mubr.bf16.gmra.mrb[0].mxu0 %v671
      %v759 = vpop.f32.mrb[0].mxu0
      %v760 = vadd.f32 %v711, %v759
      %v761 = vpop.f32.mrb[0].mxu0
      %v762 = vpop.f32.mrb[0].mxu0
      %v763 = vadd.f32 %v714, %v762
      %v764 = vpop.f32.mrb[0].mxu0
      %765 = vmatprep.mubr.bf16.mxu0 0
      %766 = vmatmul.mubr.bf16.gmra.mrb[0].mxu0 %v674
      %v767 = vpop.f32.mrb[0].mxu0
      %v768 = vadd.f32 %v719, %v767
      %v769 = vpop.f32.mrb[0].mxu0
      %v770 = vpop.f32.mrb[0].mxu0
      %v771 = vadd.f32 %v722, %v770
      %v772 = vpop.f32.mrb[0].mxu0
      %773 = vdwg.mxu0
      %v774 = vsel %vm487, %v760, 0.0
      %775 = vadd.xlane.f32.xlu0 %v774
      %v776 = vpop.xlane.xlu0 %775
      %v777 = vsel %vm487, %v763, 0.0
      %778 = vadd.xlane.f32.xlu0 %v777
      %v779 = vpop.xlane.xlu0 %778
      %v780 = vsel %vm487, %v768, 0.0
      %781 = vadd.xlane.f32.xlu0 %v780
      %v782 = vpop.xlane.xlu0 %781
      %v783 = vsel %vm487, %v771, 0.0
      %784 = vadd.xlane.f32.xlu0 %v783
      %v785 = vpop.xlane.xlu0 %784
      %v786 = vmul.f32 %v760, %v760
      %v787 = vmul.f32 %v763, %v763
      %v788 = vmul.f32 %v768, %v768
      %v789 = vmul.f32 %v771, %v771
      %v790 = vsel %vm487, %v786, 0.0
      %791 = vadd.xlane.f32.xlu0 %v790
      %v792 = vpop.xlane.xlu0 %791
      %v793 = vsel %vm487, %v787, 0.0
      %794 = vadd.xlane.f32.xlu0 %v793
      %v795 = vpop.xlane.xlu0 %794
      %v796 = vsel %vm487, %v788, 0.0
      %797 = vadd.xlane.f32.xlu0 %v796
      %v798 = vpop.xlane.xlu0 %797
      %v799 = vsel %vm487, %v789, 0.0
      %800 = vadd.xlane.f32.xlu0 %v799
      %v801 = vpop.xlane.xlu0 %800
      %v802 = vmul.f32 %v776, 0.25
      %v803 = vmul.f32 %v779, 0.25
      %v804 = vmul.f32 %v782, 0.25
      %v805 = vmul.f32 %v785, 0.25
      %v806 = vmul.f32 %v792, 0.25
      %v807 = vmul.f32 %v795, 0.25
      %v808 = vmul.f32 %v798, 0.25
      %v809 = vmul.f32 %v801, 0.25
      %v810 = vmul.f32 %v802, %v802
      %v811 = vmul.f32 %v803, %v803
      %v812 = vmul.f32 %v804, %v804
      %v813 = vmul.f32 %v805, %v805
      %v814 = vsub.f32 %v806, %v810
      %v815 = vsub.f32 %v807, %v811
      %v816 = vsub.f32 %v808, %v812
      %v817 = vsub.f32 %v809, %v813
      %v818 = vmax.f32 %v814, 0.0
      %v819 = vmax.f32 %v815, 0.0
      %v820 = vmax.f32 %v816, 0.0
      %v821 = vmax.f32 %v817, 0.0
      %v822 = vadd.f32 %v818, 1e-05
      %v823 = vadd.f32 %v819, 1e-05
      %v824 = vadd.f32 %v820, 1e-05
      %v825 = vadd.f32 %v821, 1e-05
      %v826 = vrsqrt.pop %v822
      %v827 = vrsqrt.pop %v823
      %v828 = vrsqrt.pop %v824
      %v829 = vrsqrt.pop %v825
      %v830 = vsub.f32 0.0, %v802
      %v831 = vsub.f32 0.0, %v803
      %v832 = vsub.f32 0.0, %v804
      %v833 = vsub.f32 0.0, %v805
      %v834 = vmul.f32 %v830, %v826
      %v835 = vmul.f32 %v831, %v827
      %v836 = vmul.f32 %v832, %v828
      %v837 = vmul.f32 %v833, %v829
      %v838 = vmul.f32 %v760, %v826
      %v839 = vmul.f32 %v763, %v827
      %v840 = vmul.f32 %v768, %v828
      %v841 = vmul.f32 %v771, %v829
      %v842 = vadd.f32 %v838, %v834
      %v843 = vadd.f32 %v839, %v835
      %v844 = vadd.f32 %v840, %v836
      %v845 = vadd.f32 %v841, %v837
      %v846 = vmax.f32 %v842, 0.0
      %v847 = vmax.f32 %v843, 0.0
      %v848 = vmax.f32 %v844, 0.0
      %v849 = vmax.f32 %v845, 0.0
      %v850 = vpack.c.bf16 %v847, %v846
      %v851 = vpack.c.bf16 %v849, %v848
      %v854 = vunpack.c.l.b16 %v850
      %v855 = vunpack.c.h.b16 %v850
      %v856 = vunpack.c.l.b16 %v851
      %v857 = vunpack.c.h.b16 %v851
      %v858 = vpack.c.b16 %v854, %v854
      %v859 = vpack.c.b16 %v855, %v855
      %v860 = vpack.c.b16 %v856, %v856
      %v861 = vpack.c.b16 %v857, %v857
      %vm866 = vcmask 27648
      %867 = vst.msk [vmem:[%s197] sm:$0xf] %vm866, %v858
      %868 = vst.msk [vmem:[%s197 + $0x4] sm:$0xf] %vm866, %v859
      %869 = vst.msk [vmem:[%s197 + $0x8] sm:$0xf] %vm866, %v860
      %870 = vst.msk [vmem:[%s197 + $0xc] sm:$0xf] %vm866, %v861
      %p871 = scmp.lt.s32.totalorder %s15, 1
      %s872 = scalar_select %p871, %s15, 1
      %s873 = smul.addr %s872, 4
      %s874 = smul.addr %s873, 4
      %s875 = scalar_lea.vmem %s4, %s874
      // Predicated region
      $region37: #{unet_forward.11} parent=35 // pred_check
        %p876 = pneg %p122
      $region38: #{unet_forward.11} parent=35 // pred_check_branch
        %878 = sbr.rel (%p876) target = $region40
      $region39: #{unet_forward.11} parent=35 // pred_region
        _
      $region40: #{unet_forward.11} parent=35 // pred_fallthru
        _
    $region36: #{unet_forward.11} parent=5 // pred_fallthru
      _
    %p879 = scmp.le.s32.totalorder 2, %s10
    // Predicated region
    $region41: #{unet_forward.11} parent=5 // pred_check
      %p880 = pneg %p879
    $region42: #{unet_forward.11} parent=5 // pred_check_branch
      %882 = sbr.rel (%p880) target = $region44
    $region43: #{unet_forward.11} parent=5 // pred_region
      %s883 = ssub.s32 %s10, 2
      // Predicated region
      $region45: #{unet_forward.11} parent=43 // pred_check
        %p884 = pneg %p128
      $region46: #{unet_forward.11} parent=43 // pred_check_branch
        %886 = sbr.rel (%p884) target = $region48
      $region47: #{unet_forward.11} parent=43 // pred_region
        %p887 = scmp.lt.s32.totalorder %s16, 1
        %s888 = scalar_select %p887, %s16, 1
        %s889 = smul.addr %s888, 4
        %s890 = smul.addr %s889, 4
        %s891 = scalar_lea.vmem %s4, %s890
      $region48: #{unet_forward.11} parent=43 // pred_fallthru
        _
    $region44: #{unet_forward.11} parent=5 // pred_fallthru
      _
  $region6: #{unet_forward.11} parent=0 // loop_footer
    %s14 = sadd.s32 1, %s10
  $region7: #{unet_forward.11} parent=0 // loop_footer_branch
    %9 = sbr.rel target = $region3
  $region8: #{unet_forward.11} parent=0 // loop_exit
    _

// kernel: unet_forward.12
$region0: #{unet_forward.12}
  #allocation0 [shape = 'u32[]', space=smem, size = 0x4, offset = 0x4, fixed_abs, tag = 'smem constant byte address 0x4 - core index']
  #allocation1 [shape = 'u32[144,128]{1,0:T(1,128)}', space=vmem, size = 0x12000, scoped, tag = 'internal scratch']
  %s0 = inlined_call_operand.vmem [shape: bf16[9,16], index: 0, kind: input, shape index: {}]
  %s1 = inlined_call_operand.vmem [shape: bf16[2,32,16], index: 1, kind: input, shape index: {}]
  %s2 = inlined_call_operand.vmem [shape: bf16[2,32,16], index: 2, kind: input, shape index: {}]
  %s3 = inlined_call_operand.vmem [shape: bf16[16,576], index: 3, kind: input, shape index: {}]
  %s4 = inlined_call_operand.vmem [shape: bf16[16,144], index: 4, kind: input, shape index: {}]
  %s5 = inlined_call_operand.vmem [shape: bf16[2,16,16], index: 5, kind: output, shape index: {}]
  %s6 = sld [smem:[#allocation0]]
  $region53: #{unet_forward.12} parent=0
    _
  %s8 = ssub.s32 1, %s6
  %s9 = scalar_select 0, %s8, %s6
  loop: start=0, step=1, limit=4
  $region2: #{unet_forward.12} parent=0 // loop_pre_header
    _
  $region3: #{unet_forward.12} parent=0 // loop_header
    %s11 = sphi 0, %s15
    %p12 = scmp.ge.s32.totalorder %s11, 4
    %s19 = sphi 0, %s19
    %s21 = sphi 0, %s19
    %s22 = sphi 0, %s21
    %s36 = sphi 0, %s22
    %s42 = sphi 0, %s44
    %s45 = sphi 0, %s42
    %s46 = sphi 0, %s45
    %s62 = sphi 0, %s46
    %s68 = sphi 0, %s70
    %s71 = sphi 0, %s68
    %s72 = sphi 0, %s71
    %s88 = sphi 0, %s72
    %s92 = sphi 0, %s92
    %s94 = sphi 0, %s92
    %s95 = sphi 0, %s94
    %s109 = sphi 0, %s95
    %s113 = sphi 0, %s113
    %s115 = sphi 0, %s113
    %s116 = sphi 0, %s115
    %s130 = sphi 0, %s116
    %s136 = sphi 0, %s138
    %s139 = sphi 0, %s136
    %s140 = sphi 0, %s139
    %s156 = sphi 0, %s140
  $region4: #{unet_forward.12} parent=0 // loop_header_branch
    %14 = sbr.rel (%p12) target = $region8
  $region5: #{unet_forward.12} parent=0 // loop_body
    %s16 = ssub.s32 %s11, 1
    %s17 = ssub.s32 %s11, 2
    %s18 = sadd.s32 %s11, 1
    %s20 = sadd.s32 %s19, 1
    %p23 = scmp.eq.s32.totalorder %s11, 1
    %p24 = scmp.ne.s32.totalorder %s19, %s21
    %p25 = scmp.eq.s32.totalorder %s11, 0
    %p26 = por %p24, %p25
    %p27 = scmp.ne.s32.totalorder %s19, %s21
    %p28 = scmp.eq.s32.totalorder %s16, 1
    %p29 = por %p27, %p28
    %p30 = scmp.ne.s32.totalorder %s21, %s22
    %p31 = scmp.eq.s32.totalorder %s16, 0
    %p32 = por %p30, %p31
    %p33 = scmp.ne.s32.totalorder %s21, %s22
    %p34 = scmp.eq.s32.totalorder %s17, 1
    %p35 = por %p33, %p34
    %p37 = scmp.ne.s32.totalorder %s22, %s36
    %p38 = scmp.eq.s32.totalorder %s17, 0
    %p39 = por %p37, %p38
    %s40 = ssub.s32 %s11, %s18
    %p41 = scmp.eq.s32.totalorder %s40, 0
    %s43 = sadd.s32 %s42, 1
    %s44 = scalar_select %p41, %s42, %s43
    %p47 = pneg %p41
    %p48 = scmp.eq.s32.totalorder %s11, 1
    %p49 = por %p47, %p48
    %p50 = scmp.ne.s32.totalorder %s42, %s45
    %p51 = scmp.eq.s32.totalorder %s11, 0
    %p52 = por %p50, %p51
    %p53 = scmp.ne.s32.totalorder %s42, %s45
    %p54 = scmp.eq.s32.totalorder %s16, 1
    %p55 = por %p53, %p54
    %p56 = scmp.ne.s32.totalorder %s45, %s46
    %p57 = scmp.eq.s32.totalorder %s16, 0
    %p58 = por %p56, %p57
    %p59 = scmp.ne.s32.totalorder %s45, %s46
    %p60 = scmp.eq.s32.totalorder %s17, 1
    %p61 = por %p59, %p60
    %p63 = scmp.ne.s32.totalorder %s46, %s62
    %p64 = scmp.eq.s32.totalorder %s17, 0
    %p65 = por %p63, %p64
    %s66 = ssub.s32 %s11, %s18
    %p67 = scmp.eq.s32.totalorder %s66, 0
    %s69 = sadd.s32 %s68, 1
    %s70 = scalar_select %p67, %s68, %s69
    %p73 = pneg %p67
    %p74 = scmp.eq.s32.totalorder %s11, 1
    %p75 = por %p73, %p74
    %p76 = scmp.ne.s32.totalorder %s68, %s71
    %p77 = scmp.eq.s32.totalorder %s11, 0
    %p78 = por %p76, %p77
    %p79 = scmp.ne.s32.totalorder %s68, %s71
    %p80 = scmp.eq.s32.totalorder %s16, 1
    %p81 = por %p79, %p80
    %p82 = scmp.ne.s32.totalorder %s71, %s72
    %p83 = scmp.eq.s32.totalorder %s16, 0
    %p84 = por %p82, %p83
    %p85 = scmp.ne.s32.totalorder %s71, %s72
    %p86 = scmp.eq.s32.totalorder %s17, 1
    %p87 = por %p85, %p86
    %p89 = scmp.ne.s32.totalorder %s72, %s88
    %p90 = scmp.eq.s32.totalorder %s17, 0
    %p91 = por %p89, %p90
    %s93 = sadd.s32 %s92, 1
    %p96 = scmp.eq.s32.totalorder %s11, 1
    %p97 = scmp.ne.s32.totalorder %s92, %s94
    %p98 = scmp.eq.s32.totalorder %s11, 0
    %p99 = por %p97, %p98
    %p100 = scmp.ne.s32.totalorder %s92, %s94
    %p101 = scmp.eq.s32.totalorder %s16, 1
    %p102 = por %p100, %p101
    %p103 = scmp.ne.s32.totalorder %s94, %s95
    %p104 = scmp.eq.s32.totalorder %s16, 0
    %p105 = por %p103, %p104
    %p106 = scmp.ne.s32.totalorder %s94, %s95
    %p107 = scmp.eq.s32.totalorder %s17, 1
    %p108 = por %p106, %p107
    %p110 = scmp.ne.s32.totalorder %s95, %s109
    %p111 = scmp.eq.s32.totalorder %s17, 0
    %p112 = por %p110, %p111
    %s114 = sadd.s32 %s113, 1
    %p117 = scmp.eq.s32.totalorder %s11, 1
    %p118 = scmp.ne.s32.totalorder %s113, %s115
    %p119 = scmp.eq.s32.totalorder %s11, 0
    %p120 = por %p118, %p119
    %p121 = scmp.ne.s32.totalorder %s113, %s115
    %p122 = scmp.eq.s32.totalorder %s16, 1
    %p123 = por %p121, %p122
    %p124 = scmp.ne.s32.totalorder %s115, %s116
    %p125 = scmp.eq.s32.totalorder %s16, 0
    %p126 = por %p124, %p125
    %p127 = scmp.ne.s32.totalorder %s115, %s116
    %p128 = scmp.eq.s32.totalorder %s17, 1
    %p129 = por %p127, %p128
    %p131 = scmp.ne.s32.totalorder %s116, %s130
    %p132 = scmp.eq.s32.totalorder %s17, 0
    %p133 = por %p131, %p132
    %s134 = ssub.s32 %s11, %s18
    %p135 = scmp.eq.s32.totalorder %s134, 0
    %s137 = sadd.s32 %s136, 1
    %s138 = scalar_select %p135, %s136, %s137
    %p141 = pneg %p135
    %p142 = scmp.eq.s32.totalorder %s11, 1
    %p143 = por %p141, %p142
    %p144 = scmp.ne.s32.totalorder %s136, %s139
    %p145 = scmp.eq.s32.totalorder %s11, 0
    %p146 = por %p144, %p145
    %p147 = scmp.ne.s32.totalorder %s136, %s139
    %p148 = scmp.eq.s32.totalorder %s16, 1
    %p149 = por %p147, %p148
    %p150 = scmp.ne.s32.totalorder %s139, %s140
    %p151 = scmp.eq.s32.totalorder %s16, 0
    %p152 = por %p150, %p151
    %p153 = scmp.ne.s32.totalorder %s139, %s140
    %p154 = scmp.eq.s32.totalorder %s17, 1
    %p155 = por %p153, %p154
    %p157 = scmp.ne.s32.totalorder %s140, %s156
    %p158 = scmp.eq.s32.totalorder %s17, 0
    %p159 = por %p157, %p158
    %p160 = scmp.le.s32.totalorder 1, %s11
    %p161 = scmp.lt.s32.totalorder %s11, 3
    %p162 = pnand %p160, %p161
    %p163 = pneg %p162
    // Predicated region
    $region9: #{unet_forward.12} parent=5 // pred_check
      _
    $region10: #{unet_forward.12} parent=5 // pred_check_branch
      %165 = sbr.rel (%p162) target = $region12
    $region11: #{unet_forward.12} parent=5 // pred_region
      %s166 = ssub.s32 %s11, 1
      // Predicated region
      $region13: #{unet_forward.12} parent=11 // pred_check
        %p167 = pneg %p32
      $region14: #{unet_forward.12} parent=11 // pred_check_branch
        %169 = sbr.rel (%p167) target = $region16
      $region15: #{unet_forward.12} parent=11 // pred_region
        _
      $region16: #{unet_forward.12} parent=11 // pred_fallthru
        _
      // Predicated region
      $region17: #{unet_forward.12} parent=11 // pred_check
        %p170 = pneg %p105
      $region18: #{unet_forward.12} parent=11 // pred_check_branch
        %172 = sbr.rel (%p170) target = $region20
      $region19: #{unet_forward.12} parent=11 // pred_region
        _
      $region20: #{unet_forward.12} parent=11 // pred_fallthru
        _
      // Predicated region
      $region21: #{unet_forward.12} parent=11 // pred_check
        %p173 = pneg %p126
      $region22: #{unet_forward.12} parent=11 // pred_check_branch
        %175 = sbr.rel (%p173) target = $region24
      $region23: #{unet_forward.12} parent=11 // pred_region
        _
      $region24: #{unet_forward.12} parent=11 // pred_fallthru
        _
    $region12: #{unet_forward.12} parent=5 // pred_fallthru
      _
    %p176 = scmp.lt.s32.totalorder %s11, 2
    // Predicated region
    $region25: #{unet_forward.12} parent=5 // pred_check
      %p177 = pneg %p176
    $region26: #{unet_forward.12} parent=5 // pred_check_branch
      %179 = sbr.rel (%p177) target = $region28
    $region27: #{unet_forward.12} parent=5 // pred_region
      // Predicated region
      $region29: #{unet_forward.12} parent=27 // pred_check
        %p180 = pneg %p52
      $region30: #{unet_forward.12} parent=27 // pred_check_branch
        %182 = sbr.rel (%p180) target = $region32
      $region31: #{unet_forward.12} parent=27 // pred_region
        %p183 = scmp.lt.s32.totalorder %s11, 1
        %s184 = scalar_select %p183, %s11, 1
        %s185 = smul.addr %s184, 4
        %s186 = smul.addr %s185, 4
        %s187 = scalar_lea.vmem %s1, %s186
      $region32: #{unet_forward.12} parent=27 // pred_fallthru
        _
      // Predicated region
      $region33: #{unet_forward.12} parent=27 // pred_check
        %p188 = pneg %p78
      $region34: #{unet_forward.12} parent=27 // pred_check_branch
        %190 = sbr.rel (%p188) target = $region36
      $region35: #{unet_forward.12} parent=27 // pred_region
        %p191 = scmp.lt.s32.totalorder %s11, 1
        %s192 = scalar_select %p191, %s11, 1
        %s193 = smul.addr %s192, 4
        %s194 = smul.addr %s193, 4
        %s195 = scalar_lea.vmem %s2, %s194
      $region36: #{unet_forward.12} parent=27 // pred_fallthru
        _
    $region28: #{unet_forward.12} parent=5 // pred_fallthru
      _
    %p196 = scmp.le.s32.totalorder 1, %s11
    %p197 = scmp.lt.s32.totalorder %s11, 3
    %p198 = pnand %p196, %p197
    %p199 = pneg %p198
    // Predicated region
    $region37: #{unet_forward.12} parent=5 // pred_check
      _
    $region38: #{unet_forward.12} parent=5 // pred_check_branch
      %201 = sbr.rel (%p198) target = $region40
    $region39: #{unet_forward.12} parent=5 // pred_region
      %s202 = ssub.s32 %s11, 1
      %p203 = pneg %p32
      %p204 = pneg %p29
      %p205 = scmp.lt.s32.totalorder %s16, 1
      %s206 = scalar_select %p205, %s16, 1
      %s207 = smul.addr %s206, 4
      %s208 = smul.addr %s207, 4
      %s209 = scalar_lea.vmem %s1, %s208
      %p210 = pneg %p58
      %p211 = pneg %p55
      %p212 = scmp.lt.s32.totalorder %s16, 1
      %s213 = scalar_select %p212, %s16, 1
      %s214 = smul.addr %s213, 4
      %s215 = smul.addr %s214, 4
      %s216 = scalar_lea.vmem %s2, %s215
      %p217 = pneg %p84
      %p218 = pneg %p81
      %p219 = pneg %p105
      %p220 = pneg %p102
      %p221 = pneg %p126
      %p222 = pneg %p123
      %p223 = pneg %p152
      %p224 = pneg %p149
      %p225 = scmp.lt.s32.totalorder %s16, 1
      %s226 = scalar_select %p225, %s16, 1
      %s227 = smul.addr %s226, 2
      %s228 = smul.addr %s227, 4
      %s229 = scalar_lea.vmem %s5, %s228
      %p230 = scmp.lt.s32.totalorder %s16, 1
      %s231 = scalar_select %p230, %s16, 1
      %s232 = smul.addr %s231, 4
      %s233 = smul.addr %s232, 4
      %s234 = scalar_lea.vmem %s1, %s233
      %p235 = scmp.lt.s32.totalorder %s16, 1
      %s236 = scalar_select %p235, %s16, 1
      %s237 = smul.addr %s236, 4
      %s238 = smul.addr %s237, 4
      %s239 = scalar_lea.vmem %s2, %s238
      %p240 = scmp.lt.s32.totalorder %s16, 1
      %s241 = scalar_select %p240, %s16, 1
      %s242 = smul.addr %s241, 2
      %s243 = smul.addr %s242, 4
      %s244 = scalar_lea.vmem %s5, %s243
      %v246 = vld [vmem:[%s234] sm:$0xf]
      %v247 = vld [vmem:[%s234 + $0x4] sm:$0xf]
      %v248 = vld [vmem:[%s234 + $0x8] sm:$0xf]
      %v249 = vld [vmem:[%s234 + $0xc] sm:$0xf]
      %v254 = vunpack.c.l.b16 %v246
      %v255 = vunpack.c.l.b16 %v247
      %v256 = vunpack.c.l.b16 %v248
      %v257 = vunpack.c.l.b16 %v249
      %v258 = vpack.c.b16 %v255, %v254
      %v259 = vpack.c.b16 %v257, %v256
      %260 = vrot.lane.b32.xlu0 %v258, 117
      %v261 = vpop.permute.xlu0 %260
      %262 = vrot.lane.b32.xlu0 %v259, 117
      %v263 = vpop.permute.xlu0 %262
      %264 = vrot.lane.b32.xlu0 %v258, 5
      %v265 = vpop.permute.xlu0 %264
      %266 = vrot.lane.b32.xlu0 %v259, 5
      %v267 = vpop.permute.xlu0 %266
      %vm268 = vcmask 39936
      %v271 = vsel %vm268, %v261, %v265
      %v275 = vsel %vm268, %v263, %v267
      %v277 = vld [vmem:[%s0] sm:$0x1]
      %v279 = vpack.i.b16 %v277, %v277
      %v281 = vlaneseq
      %v282 = vshrl.u32 %v281, 7
      %v283 = vsub.s32 0, %v282
      %v284 = vrot.slane %v279, %v283
      %v285 = vmul.bf16 %v271, %v284
      %v286 = vmul.bf16 %v275, %v284
      %287 = vrot.lane.b32.xlu0 %v258, 116
      %v288 = vpop.permute.xlu0 %287
      %289 = vrot.lane.b32.xlu0 %v259, 116
      %v290 = vpop.permute.xlu0 %289
      %291 = vrot.lane.b32.xlu0 %v258, 4
      %v292 = vpop.permute.xlu0 %291
      %293 = vrot.lane.b32.xlu0 %v259, 4
      %v294 = vpop.permute.xlu0 %293
      %vm295 = vcmask 31744
      %v298 = vsel %vm295, %v288, %v292
      %v302 = vsel %vm295, %v290, %v294
      %v304 = vshrl.u32 %v277, 16
      %v305 = vpack.i.b16 %v304, %v304
      %v307 = vlaneseq
      %v308 = vshrl.u32 %v307, 7
      %v309 = vsub.s32 0, %v308
      %v310 = vrot.slane %v305, %v309
      %v311 = vmul.bf16 %v298, %v310
      %v312 = vmul.bf16 %v302, %v310
      %313 = vrot.lane.b32.xlu0 %v258, 115
      %v314 = vpop.permute.xlu0 %313
      %315 = vrot.lane.b32.xlu0 %v259, 115
      %v316 = vpop.permute.xlu0 %315
      %317 = vrot.lane.b32.xlu0 %v258, 3
      %v318 = vpop.permute.xlu0 %317
      %319 = vrot.lane.b32.xlu0 %v259, 3
      %v320 = vpop.permute.xlu0 %319
      %vm321 = vcmask 23552
      %v324 = vsel %vm321, %v314, %v318
      %v328 = vsel %vm321, %v316, %v320
      %v330 = vld [vmem:[%s0] sm:$0x2]
      %v332 = vpack.i.b16 %v330, %v330
      %v334 = vlaneseq
      %v335 = vshrl.u32 %v334, 7
      %v336 = vsub.s32 1, %v335
      %v337 = vrot.slane %v332, %v336
      %v338 = vmul.bf16 %v324, %v337
      %v339 = vmul.bf16 %v328, %v337
      %340 = vrot.lane.b32.xlu0 %v258, 113
      %v341 = vpop.permute.xlu0 %340
      %342 = vrot.lane.b32.xlu0 %v259, 113
      %v343 = vpop.permute.xlu0 %342
      %344 = vrot.lane.b32.xlu0 %v258, 1
      %v345 = vpop.permute.xlu0 %344
      %346 = vrot.lane.b32.xlu0 %v259, 1
      %v347 = vpop.permute.xlu0 %346
      %vm348 = vcmask 7168
      %v351 = vsel %vm348, %v341, %v345
      %v355 = vsel %vm348, %v343, %v347
      %v357 = vshrl.u32 %v330, 16
      %v358 = vpack.i.b16 %v357, %v357
      %v360 = vlaneseq
      %v361 = vshrl.u32 %v360, 7
      %v362 = vsub.s32 1, %v361
      %v363 = vrot.slane %v358, %v362
      %v364 = vmul.bf16 %v351, %v363
      %v365 = vmul.bf16 %v355, %v363
      %366 = vrot.lane.b32.xlu0 %v258, 127
      %v367 = vpop.permute.xlu0 %366
      %368 = vrot.lane.b32.xlu0 %v259, 127
      %v369 = vpop.permute.xlu0 %368
      %370 = vrot.lane.b32.xlu0 %v258, 15
      %v371 = vpop.permute.xlu0 %370
      %372 = vrot.lane.b32.xlu0 %v259, 15
      %v373 = vpop.permute.xlu0 %372
      %vm374 = vcmask 121856
      %v377 = vsel %vm374, %v367, %v371
      %v381 = vsel %vm374, %v369, %v373
      %v383 = vld [vmem:[%s0] sm:$0x4]
      %v385 = vshrl.u32 %v383, 16
      %v386 = vpack.i.b16 %v385, %v385
      %v388 = vlaneseq
      %v389 = vshrl.u32 %v388, 7
      %v390 = vsub.s32 2, %v389
      %v391 = vrot.slane %v386, %v390
      %v392 = vmul.bf16 %v377, %v391
      %v393 = vmul.bf16 %v381, %v391
      %394 = vrot.lane.b32.xlu0 %v258, 125
      %v395 = vpop.permute.xlu0 %394
      %396 = vrot.lane.b32.xlu0 %v259, 125
      %v397 = vpop.permute.xlu0 %396
      %398 = vrot.lane.b32.xlu0 %v258, 13
      %v399 = vpop.permute.xlu0 %398
      %400 = vrot.lane.b32.xlu0 %v259, 13
      %v401 = vpop.permute.xlu0 %400
      %vm402 = vcmask 105472
      %v405 = vsel %vm402, %v395, %v399
      %v409 = vsel %vm402, %v397, %v401
      %v411 = vld [vmem:[%s0] sm:$0x8]
      %v413 = vpack.i.b16 %v411, %v411
      %v415 = vlaneseq
      %v416 = vshrl.u32 %v415, 7
      %v417 = vsub.s32 3, %v416
      %v418 = vrot.slane %v413, %v417
      %v419 = vmul.bf16 %v405, %v418
      %v420 = vmul.bf16 %v409, %v418
      %421 = vrot.lane.b32.xlu0 %v258, 124
      %v422 = vpop.permute.xlu0 %421
      %423 = vrot.lane.b32.xlu0 %v259, 124
      %v424 = vpop.permute.xlu0 %423
      %425 = vrot.lane.b32.xlu0 %v258, 12
      %v426 = vpop.permute.xlu0 %425
      %427 = vrot.lane.b32.xlu0 %v259, 12
      %v428 = vpop.permute.xlu0 %427
      %vm429 = vcmask 97280
      %v432 = vsel %vm429, %v422, %v426
      %v436 = vsel %vm429, %v424, %v428
      %v438 = vshrl.u32 %v411, 16
      %v439 = vpack.i.b16 %v438, %v438
      %v441 = vlaneseq
      %v442 = vshrl.u32 %v441, 7
      %v443 = vsub.s32 3, %v442
      %v444 = vrot.slane %v439, %v443
      %v445 = vmul.bf16 %v432, %v444
      %v446 = vmul.bf16 %v436, %v444
      %447 = vrot.lane.b32.xlu0 %v258, 123
      %v448 = vpop.permute.xlu0 %447
      %449 = vrot.lane.b32.xlu0 %v259, 123
      %v450 = vpop.permute.xlu0 %449
      %451 = vrot.lane.b32.xlu0 %v258, 11
      %v452 = vpop.permute.xlu0 %451
      %453 = vrot.lane.b32.xlu0 %v259, 11
      %v454 = vpop.permute.xlu0 %453
      %vm455 = vcmask 89088
      %v458 = vsel %vm455, %v448, %v452
      %v462 = vsel %vm455, %v450, %v454
      %v464 = vld [vmem:[%s0 + $0x4] sm:$0x1]
      %v466 = vpack.i.b16 %v464, %v464
      %v468 = vlaneseq
      %v469 = vshrl.u32 %v468, 7
      %v470 = vsub.s32 0, %v469
      %v471 = vrot.slane %v466, %v470
      %v472 = vmul.bf16 %v458, %v471
      %v473 = vmul.bf16 %v462, %v471
      %v474 = vld [vmem:[%s239] sm:$0xf]
      %v475 = vld [vmem:[%s239 + $0x4] sm:$0xf]
      %v476 = vld [vmem:[%s239 + $0x8] sm:$0xf]
      %v477 = vld [vmem:[%s239 + $0xc] sm:$0xf]
      %v482 = vunpack.c.l.b16 %v474
      %v483 = vunpack.c.l.b16 %v475
      %v484 = vunpack.c.l.b16 %v476
      %v485 = vunpack.c.l.b16 %v477
      %v486 = vpack.c.b16 %v483, %v482
      %v487 = vpack.c.b16 %v485, %v484
      %488 = vrot.lane.b32.xlu0 %v486, 117
      %v489 = vpop.permute.xlu0 %488
      %490 = vrot.lane.b32.xlu0 %v487, 117
      %v491 = vpop.permute.xlu0 %490
      %492 = vrot.lane.b32.xlu0 %v486, 5
      %v493 = vpop.permute.xlu0 %492
      %494 = vrot.lane.b32.xlu0 %v487, 5
      %v495 = vpop.permute.xlu0 %494
      %v498 = vsel %vm268, %v489, %v493
      %v502 = vsel %vm268, %v491, %v495
      %v504 = vmul.bf16 %v498, %v284
      %v505 = vmul.bf16 %v502, %v284
      %506 = vrot.lane.b32.xlu0 %v486, 116
      %v507 = vpop.permute.xlu0 %506
      %508 = vrot.lane.b32.xlu0 %v487, 116
      %v509 = vpop.permute.xlu0 %508
      %510 = vrot.lane.b32.xlu0 %v486, 4
      %v511 = vpop.permute.xlu0 %510
      %512 = vrot.lane.b32.xlu0 %v487, 4
      %v513 = vpop.permute.xlu0 %512
      %v516 = vsel %vm295, %v507, %v511
      %v520 = vsel %vm295, %v509, %v513
      %v522 = vmul.bf16 %v516, %v310
      %v523 = vmul.bf16 %v520, %v310
      %524 = vrot.lane.b32.xlu0 %v486, 115
      %v525 = vpop.permute.xlu0 %524
      %526 = vrot.lane.b32.xlu0 %v487, 115
      %v527 = vpop.permute.xlu0 %526
      %528 = vrot.lane.b32.xlu0 %v486, 3
      %v529 = vpop.permute.xlu0 %528
      %530 = vrot.lane.b32.xlu0 %v487, 3
      %v531 = vpop.permute.xlu0 %530
      %v534 = vsel %vm321, %v525, %v529
      %v538 = vsel %vm321, %v527, %v531
      %v540 = vmul.bf16 %v534, %v337
      %v541 = vmul.bf16 %v538, %v337
      %542 = vrot.lane.b32.xlu0 %v486, 113
      %v543 = vpop.permute.xlu0 %542
      %544 = vrot.lane.b32.xlu0 %v487, 113
      %v545 = vpop.permute.xlu0 %544
      %546 = vrot.lane.b32.xlu0 %v486, 1
      %v547 = vpop.permute.xlu0 %546
      %548 = vrot.lane.b32.xlu0 %v487, 1
      %v549 = vpop.permute.xlu0 %548
      %v552 = vsel %vm348, %v543, %v547
      %v556 = vsel %vm348, %v545, %v549
      %v558 = vmul.bf16 %v552, %v363
      %v559 = vmul.bf16 %v556, %v363
      %560 = vrot.lane.b32.xlu0 %v486, 127
      %v561 = vpop.permute.xlu0 %560
      %562 = vrot.lane.b32.xlu0 %v487, 127
      %v563 = vpop.permute.xlu0 %562
      %564 = vrot.lane.b32.xlu0 %v486, 15
      %v565 = vpop.permute.xlu0 %564
      %566 = vrot.lane.b32.xlu0 %v487, 15
      %v567 = vpop.permute.xlu0 %566
      %v570 = vsel %vm374, %v561, %v565
      %v574 = vsel %vm374, %v563, %v567
      %v576 = vmul.bf16 %v570, %v391
      %v577 = vmul.bf16 %v574, %v391
      %578 = vrot.lane.b32.xlu0 %v486, 125
      %v579 = vpop.permute.xlu0 %578
      %580 = vrot.lane.b32.xlu0 %v487, 125
      %v581 = vpop.permute.xlu0 %580
      %582 = vrot.lane.b32.xlu0 %v486, 13
      %v583 = vpop.permute.xlu0 %582
      %584 = vrot.lane.b32.xlu0 %v487, 13
      %v585 = vpop.permute.xlu0 %584
      %v588 = vsel %vm402, %v579, %v583
      %v592 = vsel %vm402, %v581, %v585
      %v594 = vmul.bf16 %v588, %v418
      %v595 = vmul.bf16 %v592, %v418
      %596 = vrot.lane.b32.xlu0 %v486, 124
      %v597 = vpop.permute.xlu0 %596
      %598 = vrot.lane.b32.xlu0 %v487, 124
      %v599 = vpop.permute.xlu0 %598
      %600 = vrot.lane.b32.xlu0 %v486, 12
      %v601 = vpop.permute.xlu0 %600
      %602 = vrot.lane.b32.xlu0 %v487, 12
      %v603 = vpop.permute.xlu0 %602
      %v606 = vsel %vm429, %v597, %v601
      %v610 = vsel %vm429, %v599, %v603
      %v612 = vmul.bf16 %v606, %v444
      %v613 = vmul.bf16 %v610, %v444
      %614 = vrot.lane.b32.xlu0 %v486, 123
      %v615 = vpop.permute.xlu0 %614
      %616 = vrot.lane.b32.xlu0 %v487, 123
      %v617 = vpop.permute.xlu0 %616
      %618 = vrot.lane.b32.xlu0 %v486, 11
      %v619 = vpop.permute.xlu0 %618
      %620 = vrot.lane.b32.xlu0 %v487, 11
      %v621 = vpop.permute.xlu0 %620
      %v624 = vsel %vm455, %v615, %v619
      %v628 = vsel %vm455, %v617, %v621
      %v630 = vmul.bf16 %v624, %v471
      %v631 = vmul.bf16 %v628, %v471
      %v636 = vld [vmem:[%s3] sm:$0xff]
      %v637 = vld [vmem:[%s3 + $0x8] sm:$0xff]
      %v638 = vld [vmem:[%s3 + $0x10] sm:$0xf]
      %v639 = vld [vmem:[%s3 + $0x14] sm:$0xff]
      %v640 = vld [vmem:[%s3 + $0x1c] sm:$0xff]
      %v641 = vld [vmem:[%s3 + $0x24] sm:$0xf]
      %v648 = vunpack.c.l.b16 %v636
      %v649 = vunpack.c.h.b16 %v636
      %v650 = vunpack.c.l.b16 %v637
      %v651 = vunpack.c.h.b16 %v637
      %v652 = vunpack.c.l.b16 %v638
      %v653 = vunpack.c.l.b16 %v639
      %v654 = vunpack.c.h.b16 %v639
      %v655 = vunpack.c.l.b16 %v640
      %v656 = vunpack.c.h.b16 %v640
      %v657 = vunpack.c.l.b16 %v641
      %v658 = vpack.c.b16 %v653, %v648
      %v659 = vpack.c.b16 %v654, %v649
      %v660 = vpack.c.b16 %v655, %v650
      %v661 = vpack.c.b16 %v656, %v651
      %v662 = vpack.c.b16 %v657, %v652
      %vm667 = vcmask 523264
      %v669 = vsel %vm667, %v662, 0
      %671 = vmatprep.subr.bf16.mxu0 0
      %672 = vmatpush1.bf16.msra.mxu0 %v285
      %673 = vmatprep.subr.bf16.mxu0 0
      %674 = vmatpush1.bf16.msra.mxu0 %v286
      %675 = vmatprep.subr.bf16.mxu0 0
      %676 = vmatpush1.bf16.msra.mxu0 %v311
      %677 = vmatprep.subr.bf16.mxu0 0
      %678 = vmatpush1.bf16.msra.mxu0 %v312
      %679 = vmatprep.subr.bf16.mxu0 0
      %680 = vmatpush1.bf16.msra.mxu0 %v338
      %681 = vmatprep.subr.bf16.mxu0 0
      %682 = vmatpush1.bf16.msra.mxu0 %v339
      %683 = vmatprep.subr.bf16.mxu0 0
      %684 = vmatpush1.bf16.msra.mxu0 %v364
      %685 = vmatprep.subr.bf16.mxu0 0
      %686 = vmatpush1.bf16.msra.mxu0 %v365
      %687 = vmatprep.subr.bf16.mxu0 0
      %688 = vmatpush1.bf16.msra.mxu0 %v258
      %689 = vmatprep.subr.bf16.mxu0 0
      %690 = vmatpush1.bf16.msra.mxu0 %v259
      %691 = vmatprep.subr.bf16.mxu0 0
      %692 = vmatpush1.bf16.msra.mxu0 %v392
      %693 = vmatprep.subr.bf16.mxu0 0
      %694 = vmatpush1.bf16.msra.mxu0 %v393
      %695 = vmatprep.subr.bf16.mxu0 0
      %696 = vmatpush1.bf16.msra.mxu0 %v419
      %697 = vmatprep.subr.bf16.mxu0 0
      %698 = vmatpush1.bf16.msra.mxu0 %v420
      %699 = vmatprep.subr.bf16.mxu0 0
      %700 = vmatpush1.bf16.msra.mxu0 %v445
      %701 = vmatprep.subr.bf16.mxu0 0
      %702 = vmatpush1.bf16.msra.mxu0 %v446
      %703 = vmatprep.mubr.bf16.mxu0 %v659
      %704 = vmatmul.mubr.bf16.gmra.mrb[0].mxu0 %v658
      %v705 = vpop.f32.mrb[0].mxu0
      %v706 = vadd.f32 0.0, %v705
      %v707 = vpop.f32.mrb[0].mxu0
      %v708 = vpop.f32.mrb[0].mxu0
      %v709 = vadd.f32 0.0, %v708
      %v710 = vpop.f32.mrb[0].mxu0
      %711 = vdwg.mxu0
      %712 = vmatprep.subr.bf16.mxu0 0
      %713 = vmatpush1.bf16.msra.mxu0 %v472
      %714 = vmatprep.subr.bf16.mxu0 0
      %715 = vmatpush1.bf16.msra.mxu0 %v473
      %716 = vmatprep.subr.bf16.mxu0 0
      %717 = vmatpush1.bf16.msra.mxu0 %v504
      %718 = vmatprep.subr.bf16.mxu0 0
      %719 = vmatpush1.bf16.msra.mxu0 %v505
      %720 = vmatprep.subr.bf16.mxu0 0
      %721 = vmatpush1.bf16.msra.mxu0 %v522
      %722 = vmatprep.subr.bf16.mxu0 0
      %723 = vmatpush1.bf16.msra.mxu0 %v523
      %724 = vmatprep.subr.bf16.mxu0 0
      %725 = vmatpush1.bf16.msra.mxu0 %v540
      %726 = vmatprep.subr.bf16.mxu0 0
      %727 = vmatpush1.bf16.msra.mxu0 %v541
      %728 = vmatprep.subr.bf16.mxu0 0
      %729 = vmatpush1.bf16.msra.mxu0 %v558
      %730 = vmatprep.subr.bf16.mxu0 0
      %731 = vmatpush1.bf16.msra.mxu0 %v559
      %732 = vmatprep.subr.bf16.mxu0 0
      %733 = vmatpush1.bf16.msra.mxu0 %v486
      %734 = vmatprep.subr.bf16.mxu0 0
      %735 = vmatpush1.bf16.msra.mxu0 %v487
      %736 = vmatprep.subr.bf16.mxu0 0
      %737 = vmatpush1.bf16.msra.mxu0 %v576
      %738 = vmatprep.subr.bf16.mxu0 0
      %739 = vmatpush1.bf16.msra.mxu0 %v577
      %740 = vmatprep.subr.bf16.mxu0 0
      %741 = vmatpush1.bf16.msra.mxu0 %v594
      %742 = vmatprep.subr.bf16.mxu0 0
      %743 = vmatpush1.bf16.msra.mxu0 %v595
      %744 = vmatprep.mubr.bf16.mxu0 %v661
      %745 = vmatmul.mubr.bf16.gmra.mrb[0].mxu0 %v660
      %v746 = vpop.f32.mrb[0].mxu0
      %v747 = vadd.f32 %v706, %v746
      %v748 = vpop.f32.mrb[0].mxu0
      %v749 = vpop.f32.mrb[0].mxu0
      %v750 = vadd.f32 %v709, %v749
      %v751 = vpop.f32.mrb[0].mxu0
      %752 = vdwg.mxu0
      %753 = vmatprep.subr.bf16.mxu0 0
      %754 = vmatpush1.bf16.msra.mxu0 %v612
      %755 = vmatprep.subr.bf16.mxu0 0
      %756 = vmatpush1.bf16.msra.mxu0 %v613
      %757 = vmatprep.subr.bf16.mxu0 0
      %758 = vmatpush1.bf16.msra.mxu0 %v630
      %759 = vmatprep.subr.bf16.mxu0 0
      %760 = vmatpush1.bf16.msra.mxu0 %v631
      %761 = vmatprep.subr.bf16.mxu0 0
      %762 = vmatpush1.bf16.msra.mxu0 0
      %763 = vmatprep.subr.bf16.mxu0 0
      %764 = vmatpush1.bf16.msra.mxu0 0
      %765 = vmatprep.subr.bf16.mxu0 0
      %766 = vmatpush1.bf16.msra.mxu0 0
      %767 = vmatprep.subr.bf16.mxu0 0
      %768 = vmatpush1.bf16.msra.mxu0 0
      %769 = vmatprep.subr.bf16.mxu0 0
      %770 = vmatpush1.bf16.msra.mxu0 0
      %771 = vmatprep.subr.bf16.mxu0 0
      %772 = vmatpush1.bf16.msra.mxu0 0
      %773 = vmatprep.subr.bf16.mxu0 0
      %774 = vmatpush1.bf16.msra.mxu0 0
      %775 = vmatprep.subr.bf16.mxu0 0
      %776 = vmatpush1.bf16.msra.mxu0 0
      %777 = vmatprep.subr.bf16.mxu0 0
      %778 = vmatpush1.bf16.msra.mxu0 0
      %779 = vmatprep.subr.bf16.mxu0 0
      %780 = vmatpush1.bf16.msra.mxu0 0
      %781 = vmatprep.subr.bf16.mxu0 0
      %782 = vmatpush1.bf16.msra.mxu0 0
      %783 = vmatprep.subr.bf16.mxu0 0
      %784 = vmatpush1.bf16.msra.mxu0 0
      %785 = vmatprep.mubr.bf16.mxu0 0
      %786 = vmatmul.mubr.bf16.gmra.mrb[0].mxu0 %v669
      %v787 = vpop.f32.mrb[0].mxu0
      %v788 = vadd.f32 %v747, %v787
      %v789 = vpop.f32.mrb[0].mxu0
      %v790 = vpop.f32.mrb[0].mxu0
      %v791 = vadd.f32 %v750, %v790
      %v792 = vpop.f32.mrb[0].mxu0
      %793 = vdwg.mxu0
      %vm794 = vcmask 130048
      %v795 = vsel %vm794, %v788, 0.0
      %796 = vadd.xlane.f32.xlu0 %v795
      %v797 = vpop.xlane.xlu0 %796
      %v798 = vsel %vm794, %v791, 0.0
      %799 = vadd.xlane.f32.xlu0 %v798
      %v800 = vpop.xlane.xlu0 %799
      %v801 = vmul.f32 %v788, %v788
      %v802 = vmul.f32 %v791, %v791
      %v803 = vsel %vm794, %v801, 0.0
      %804 = vadd.xlane.f32.xlu0 %v803
      %v805 = vpop.xlane.xlu0 %804
      %v806 = vsel %vm794, %v802, 0.0
      %807 = vadd.xlane.f32.xlu0 %v806
      %v808 = vpop.xlane.xlu0 %807
      %v809 = vmul.f32 %v797, 0.0625
      %v810 = vmul.f32 %v800, 0.0625
      %v811 = vmul.f32 %v805, 0.0625
      %v812 = vmul.f32 %v808, 0.0625
      %v813 = vmul.f32 %v809, %v809
      %v814 = vmul.f32 %v810, %v810
      %v815 = vsub.f32 %v811, %v813
      %v816 = vsub.f32 %v812, %v814
      %v817 = vmax.f32 %v815, 0.0
      %v818 = vmax.f32 %v816, 0.0
      %v819 = vadd.f32 %v817, 1e-05
      %v820 = vadd.f32 %v818, 1e-05
      %v821 = vrsqrt.pop %v819
      %v822 = vrsqrt.pop %v820
      %v823 = vsub.f32 0.0, %v809
      %v824 = vsub.f32 0.0, %v810
      %v825 = vmul.f32 %v823, %v821
      %v826 = vmul.f32 %v824, %v822
      %v827 = vmul.f32 %v788, %v821
      %v828 = vmul.f32 %v791, %v822
      %v829 = vadd.f32 %v827, %v825
      %v830 = vadd.f32 %v828, %v826
      %v831 = vmax.f32 %v829, 0.0
      %v832 = vmax.f32 %v830, 0.0
      %v833 = vpack.c.bf16 %v832, %v831
      %835 = vrot.lane.b32.xlu0 %v833, 117
      %v836 = vpop.permute.xlu0 %835
      %837 = vrot.lane.b32.xlu0 %v833, 5
      %v838 = vpop.permute.xlu0 %837
      %v841 = vsel %vm268, %v836, %v838
      %v843 = vmul.bf16 %v841, %v284
      %844 = vrot.lane.b32.xlu0 %v833, 116
      %v845 = vpop.permute.xlu0 %844
      %846 = vrot.lane.b32.xlu0 %v833, 4
      %v847 = vpop.permute.xlu0 %846
      %v850 = vsel %vm295, %v845, %v847
      %v852 = vmul.bf16 %v850, %v310
      %853 = vrot.lane.b32.xlu0 %v833, 115
      %v854 = vpop.permute.xlu0 %853
      %855 = vrot.lane.b32.xlu0 %v833, 3
      %v856 = vpop.permute.xlu0 %855
      %v859 = vsel %vm321, %v854, %v856
      %v861 = vmul.bf16 %v859, %v337
      %862 = vrot.lane.b32.xlu0 %v833, 113
      %v863 = vpop.permute.xlu0 %862
      %864 = vrot.lane.b32.xlu0 %v833, 1
      %v865 = vpop.permute.xlu0 %864
      %v868 = vsel %vm348, %v863, %v865
      %v870 = vmul.bf16 %v868, %v363
      %871 = vrot.lane.b32.xlu0 %v833, 127
      %v872 = vpop.permute.xlu0 %871
      %873 = vrot.lane.b32.xlu0 %v833, 15
      %v874 = vpop.permute.xlu0 %873
      %v877 = vsel %vm374, %v872, %v874
      %v879 = vmul.bf16 %v877, %v391
      %880 = vrot.lane.b32.xlu0 %v833, 125
      %v881 = vpop.permute.xlu0 %880
      %882 = vrot.lane.b32.xlu0 %v833, 13
      %v883 = vpop.permute.xlu0 %882
      %v886 = vsel %vm402, %v881, %v883
      %v888 = vmul.bf16 %v886, %v418
      %889 = vrot.lane.b32.xlu0 %v833, 124
      %v890 = vpop.permute.xlu0 %889
      %891 = vrot.lane.b32.xlu0 %v833, 12
      %v892 = vpop.permute.xlu0 %891
      %v895 = vsel %vm429, %v890, %v892
      %v897 = vmul.bf16 %v895, %v444
      %898 = vrot.lane.b32.xlu0 %v833, 123
      %v899 = vpop.permute.xlu0 %898
      %900 = vrot.lane.b32.xlu0 %v833, 11
      %v901 = vpop.permute.xlu0 %900
      %v904 = vsel %vm455, %v899, %v901
      %v906 = vmul.bf16 %v904, %v471
      %v907 = vld [vmem:[%s4] sm:$0xff]
      %v908 = vld [vmem:[%s4 + $0x8] sm:$0xff]
      %v911 = vunpack.c.l.b16 %v907
      %v912 = vunpack.c.h.b16 %v907
      %v913 = vunpack.c.l.b16 %v908
      %v914 = vunpack.c.h.b16 %v908
      %v915 = vpack.c.b16 %v913, %v911
      %v916 = vpack.c.b16 %v914, %v912
      %v919 = vsel %vm794, %v916, 0
      %921 = vmatprep.subr.bf16.mxu0 0
      %922 = vmatpush1.bf16.msra.mxu0 %v843
      %923 = vmatprep.subr.bf16.mxu0 0
      %924 = vmatpush1.bf16.msra.mxu0 %v852
      %925 = vmatprep.subr.bf16.mxu0 0
      %926 = vmatpush1.bf16.msra.mxu0 %v861
      %927 = vmatprep.subr.bf16.mxu0 0
      %928 = vmatpush1.bf16.msra.mxu0 %v870
      %929 = vmatprep.subr.bf16.mxu0 0
      %930 = vmatpush1.bf16.msra.mxu0 %v833
      %931 = vmatprep.subr.bf16.mxu0 0
      %932 = vmatpush1.bf16.msra.mxu0 %v879
      %933 = vmatprep.subr.bf16.mxu0 0
      %934 = vmatpush1.bf16.msra.mxu0 %v888
      %935 = vmatprep.subr.bf16.mxu0 0
      %936 = vmatpush1.bf16.msra.mxu0 %v897
      %937 = vmatprep.subr.bf16.mxu0 0
      %938 = vmatpush1.bf16.msra.mxu0 %v906
      %939 = vmatprep.subr.bf16.mxu0 0
      %940 = vmatpush1.bf16.msra.mxu0 0
      %941 = vmatprep.subr.bf16.mxu0 0
      %942 = vmatpush1.bf16.msra.mxu0 0
      %943 = vmatprep.subr.bf16.mxu0 0
      %944 = vmatpush1.bf16.msra.mxu0 0
      %945 = vmatprep.subr.bf16.mxu0 0
      %946 = vmatpush1.bf16.msra.mxu0 0
      %947 = vmatprep.subr.bf16.mxu0 0
      %948 = vmatpush1.bf16.msra.mxu0 0
      %949 = vmatprep.subr.bf16.mxu0 0
      %950 = vmatpush1.bf16.msra.mxu0 0
      %951 = vmatprep.subr.bf16.mxu0 0
      %952 = vmatpush1.bf16.msra.mxu0 0
      %953 = vmatprep.mubr.bf16.mxu0 %v919
      %954 = vmatmul.mubr.bf16.gmra.mrb[0].mxu0 %v915
      %v955 = vpop.f32.mrb[0].mxu0
      %v956 = vadd.f32 0.0, %v955
      %v957 = vpop.f32.mrb[0].mxu0
      %v958 = vpop.f32.mrb[0].mxu0
      %v959 = vadd.f32 0.0, %v958
      %v960 = vpop.f32.mrb[0].mxu0
      %961 = vdwg.mxu0
      %v962 = vsel %vm794, %v956, 0.0
      %963 = vadd.xlane.f32.xlu0 %v962
      %v964 = vpop.xlane.xlu0 %963
      %v965 = vsel %vm794, %v959, 0.0
      %966 = vadd.xlane.f32.xlu0 %v965
      %v967 = vpop.xlane.xlu0 %966
      %v968 = vmul.f32 %v956, %v956
      %v969 = vmul.f32 %v959, %v959
      %v970 = vsel %vm794, %v968, 0.0
      %971 = vadd.xlane.f32.xlu0 %v970
      %v972 = vpop.xlane.xlu0 %971
      %v973 = vsel %vm794, %v969, 0.0
      %974 = vadd.xlane.f32.xlu0 %v973
      %v975 = vpop.xlane.xlu0 %974
      %v976 = vmul.f32 %v964, 0.0625
      %v977 = vmul.f32 %v967, 0.0625
      %v978 = vmul.f32 %v972, 0.0625
      %v979 = vmul.f32 %v975, 0.0625
      %v980 = vmul.f32 %v976, %v976
      %v981 = vmul.f32 %v977, %v977
      %v982 = vsub.f32 %v978, %v980
      %v983 = vsub.f32 %v979, %v981
      %v984 = vmax.f32 %v982, 0.0
      %v985 = vmax.f32 %v983, 0.0
      %v986 = vadd.f32 %v984, 1e-05
      %v987 = vadd.f32 %v985, 1e-05
      %v988 = vrsqrt.pop %v986
      %v989 = vrsqrt.pop %v987
      %v990 = vsub.f32 0.0, %v976
      %v991 = vsub.f32 0.0, %v977
      %v992 = vmul.f32 %v990, %v988
      %v993 = vmul.f32 %v991, %v989
      %v994 = vmul.f32 %v956, %v988
      %v995 = vmul.f32 %v959, %v989
      %v996 = vadd.f32 %v994, %v992
      %v997 = vadd.f32 %v995, %v993
      %v998 = vmax.f32 %v996, 0.0
      %v999 = vmax.f32 %v997, 0.0
      %v1000 = vpack.c.bf16 %v999, %v998
      %v1002 = vunpack.c.l.b16 %v1000
      %v1003 = vunpack.c.h.b16 %v1000
      %v1004 = vpack.c.b16 %v1002, %v1002
      %v1005 = vpack.c.b16 %v1003, %v1003
      %vm1008 = vcmask 125952
      %1009 = vst.msk [vmem:[%s244] sm:$0xf] %vm1008, %v1004
      %1010 = vst.msk [vmem:[%s244 + $0x4] sm:$0xf] %vm1008, %v1005
      %p1011 = scmp.lt.s32.totalorder %s16, 1
      %s1012 = scalar_select %p1011, %s16, 1
      %s1013 = smul.addr %s1012, 2
      %s1014 = smul.addr %s1013, 4
      %s1015 = scalar_lea.vmem %s5, %s1014
      // Predicated region
      $region41: #{unet_forward.12} parent=39 // pred_check
        %p1016 = pneg %p149
      $region42: #{unet_forward.12} parent=39 // pred_check_branch
        %1018 = sbr.rel (%p1016) target = $region44
      $region43: #{unet_forward.12} parent=39 // pred_region
        _
      $region44: #{unet_forward.12} parent=39 // pred_fallthru
        _
    $region40: #{unet_forward.12} parent=5 // pred_fallthru
      _
    %p1019 = scmp.le.s32.totalorder 2, %s11
    // Predicated region
    $region45: #{unet_forward.12} parent=5 // pred_check
      %p1020 = pneg %p1019
    $region46: #{unet_forward.12} parent=5 // pred_check_branch
      %1022 = sbr.rel (%p1020) target = $region48
    $region47: #{unet_forward.12} parent=5 // pred_region
      %s1023 = ssub.s32 %s11, 2
      // Predicated region
      $region49: #{unet_forward.12} parent=47 // pred_check
        %p1024 = pneg %p155
      $region50: #{unet_forward.12} parent=47 // pred_check_branch
        %1026 = sbr.rel (%p1024) target = $region52
      $region51: #{unet_forward.12} parent=47 // pred_region
        %p1027 = scmp.lt.s32.totalorder %s17, 1
        %s1028 = scalar_select %p1027, %s17, 1
        %s1029 = smul.addr %s1028, 2
        %s1030 = smul.addr %s1029, 4
        %s1031 = scalar_lea.vmem %s5, %s1030
      $region52: #{unet_forward.12} parent=47 // pred_fallthru
        _
    $region48: #{unet_forward.12} parent=5 // pred_fallthru
      _
  $region6: #{unet_forward.12} parent=0 // loop_footer
    %s15 = sadd.s32 1, %s11
  $region7: #{unet_forward.12} parent=0 // loop_footer_branch
    %10 = sbr.rel target = $region3
  $region8: #{unet_forward.12} parent=0 // loop_exit
    _

// kernel: unet_forward.13
$region0: #{unet_forward.13}
  #allocation0 [shape = 'u32[]', space=smem, size = 0x4, offset = 0x4, fixed_abs, tag = 'smem constant byte address 0x4 - core index']
  #allocation1 [shape = 'u32[144,128]{1,0:T(1,128)}', space=vmem, size = 0x12000, scoped, tag = 'internal scratch']
  %s0 = inlined_call_operand.vmem [shape: bf16[9,64], index: 0, kind: input, shape index: {}]
  %s1 = inlined_call_operand.vmem [shape: bf16[2,16,64], index: 1, kind: input, shape index: {}]
  %s2 = inlined_call_operand.vmem [shape: bf16[2,16,64], index: 2, kind: input, shape index: {}]
  %s3 = inlined_call_operand.vmem [shape: bf16[8,288], index: 3, kind: input, shape index: {}]
  %s4 = inlined_call_operand.vmem [shape: bf16[8,72], index: 4, kind: input, shape index: {}]
  %s5 = inlined_call_operand.vmem [shape: f32[2,8,64], index: 5, kind: output, shape index: {}]
  %s6 = sld [smem:[#allocation0]]
  $region53: #{unet_forward.13} parent=0
    _
  %s8 = ssub.s32 1, %s6
  %s9 = scalar_select 0, %s8, %s6
  loop: start=0, step=1, limit=4
  $region2: #{unet_forward.13} parent=0 // loop_pre_header
    _
  $region3: #{unet_forward.13} parent=0 // loop_header
    %s11 = sphi 0, %s15
    %p12 = scmp.ge.s32.totalorder %s11, 4
    %s19 = sphi 0, %s19
    %s21 = sphi 0, %s19
    %s22 = sphi 0, %s21
    %s36 = sphi 0, %s22
    %s42 = sphi 0, %s44
    %s45 = sphi 0, %s42
    %s46 = sphi 0, %s45
    %s62 = sphi 0, %s46
    %s68 = sphi 0, %s70
    %s71 = sphi 0, %s68
    %s72 = sphi 0, %s71
    %s88 = sphi 0, %s72
    %s92 = sphi 0, %s92
    %s94 = sphi 0, %s92
    %s95 = sphi 0, %s94
    %s109 = sphi 0, %s95
    %s113 = sphi 0, %s113
    %s115 = sphi 0, %s113
    %s116 = sphi 0, %s115
    %s130 = sphi 0, %s116
    %s136 = sphi 0, %s138
    %s139 = sphi 0, %s136
    %s140 = sphi 0, %s139
    %s156 = sphi 0, %s140
  $region4: #{unet_forward.13} parent=0 // loop_header_branch
    %14 = sbr.rel (%p12) target = $region8
  $region5: #{unet_forward.13} parent=0 // loop_body
    %s16 = ssub.s32 %s11, 1
    %s17 = ssub.s32 %s11, 2
    %s18 = sadd.s32 %s11, 1
    %s20 = sadd.s32 %s19, 1
    %p23 = scmp.eq.s32.totalorder %s11, 1
    %p24 = scmp.ne.s32.totalorder %s19, %s21
    %p25 = scmp.eq.s32.totalorder %s11, 0
    %p26 = por %p24, %p25
    %p27 = scmp.ne.s32.totalorder %s19, %s21
    %p28 = scmp.eq.s32.totalorder %s16, 1
    %p29 = por %p27, %p28
    %p30 = scmp.ne.s32.totalorder %s21, %s22
    %p31 = scmp.eq.s32.totalorder %s16, 0
    %p32 = por %p30, %p31
    %p33 = scmp.ne.s32.totalorder %s21, %s22
    %p34 = scmp.eq.s32.totalorder %s17, 1
    %p35 = por %p33, %p34
    %p37 = scmp.ne.s32.totalorder %s22, %s36
    %p38 = scmp.eq.s32.totalorder %s17, 0
    %p39 = por %p37, %p38
    %s40 = ssub.s32 %s11, %s18
    %p41 = scmp.eq.s32.totalorder %s40, 0
    %s43 = sadd.s32 %s42, 1
    %s44 = scalar_select %p41, %s42, %s43
    %p47 = pneg %p41
    %p48 = scmp.eq.s32.totalorder %s11, 1
    %p49 = por %p47, %p48
    %p50 = scmp.ne.s32.totalorder %s42, %s45
    %p51 = scmp.eq.s32.totalorder %s11, 0
    %p52 = por %p50, %p51
    %p53 = scmp.ne.s32.totalorder %s42, %s45
    %p54 = scmp.eq.s32.totalorder %s16, 1
    %p55 = por %p53, %p54
    %p56 = scmp.ne.s32.totalorder %s45, %s46
    %p57 = scmp.eq.s32.totalorder %s16, 0
    %p58 = por %p56, %p57
    %p59 = scmp.ne.s32.totalorder %s45, %s46
    %p60 = scmp.eq.s32.totalorder %s17, 1
    %p61 = por %p59, %p60
    %p63 = scmp.ne.s32.totalorder %s46, %s62
    %p64 = scmp.eq.s32.totalorder %s17, 0
    %p65 = por %p63, %p64
    %s66 = ssub.s32 %s11, %s18
    %p67 = scmp.eq.s32.totalorder %s66, 0
    %s69 = sadd.s32 %s68, 1
    %s70 = scalar_select %p67, %s68, %s69
    %p73 = pneg %p67
    %p74 = scmp.eq.s32.totalorder %s11, 1
    %p75 = por %p73, %p74
    %p76 = scmp.ne.s32.totalorder %s68, %s71
    %p77 = scmp.eq.s32.totalorder %s11, 0
    %p78 = por %p76, %p77
    %p79 = scmp.ne.s32.totalorder %s68, %s71
    %p80 = scmp.eq.s32.totalorder %s16, 1
    %p81 = por %p79, %p80
    %p82 = scmp.ne.s32.totalorder %s71, %s72
    %p83 = scmp.eq.s32.totalorder %s16, 0
    %p84 = por %p82, %p83
    %p85 = scmp.ne.s32.totalorder %s71, %s72
    %p86 = scmp.eq.s32.totalorder %s17, 1
    %p87 = por %p85, %p86
    %p89 = scmp.ne.s32.totalorder %s72, %s88
    %p90 = scmp.eq.s32.totalorder %s17, 0
    %p91 = por %p89, %p90
    %s93 = sadd.s32 %s92, 1
    %p96 = scmp.eq.s32.totalorder %s11, 1
    %p97 = scmp.ne.s32.totalorder %s92, %s94
    %p98 = scmp.eq.s32.totalorder %s11, 0
    %p99 = por %p97, %p98
    %p100 = scmp.ne.s32.totalorder %s92, %s94
    %p101 = scmp.eq.s32.totalorder %s16, 1
    %p102 = por %p100, %p101
    %p103 = scmp.ne.s32.totalorder %s94, %s95
    %p104 = scmp.eq.s32.totalorder %s16, 0
    %p105 = por %p103, %p104
    %p106 = scmp.ne.s32.totalorder %s94, %s95
    %p107 = scmp.eq.s32.totalorder %s17, 1
    %p108 = por %p106, %p107
    %p110 = scmp.ne.s32.totalorder %s95, %s109
    %p111 = scmp.eq.s32.totalorder %s17, 0
    %p112 = por %p110, %p111
    %s114 = sadd.s32 %s113, 1
    %p117 = scmp.eq.s32.totalorder %s11, 1
    %p118 = scmp.ne.s32.totalorder %s113, %s115
    %p119 = scmp.eq.s32.totalorder %s11, 0
    %p120 = por %p118, %p119
    %p121 = scmp.ne.s32.totalorder %s113, %s115
    %p122 = scmp.eq.s32.totalorder %s16, 1
    %p123 = por %p121, %p122
    %p124 = scmp.ne.s32.totalorder %s115, %s116
    %p125 = scmp.eq.s32.totalorder %s16, 0
    %p126 = por %p124, %p125
    %p127 = scmp.ne.s32.totalorder %s115, %s116
    %p128 = scmp.eq.s32.totalorder %s17, 1
    %p129 = por %p127, %p128
    %p131 = scmp.ne.s32.totalorder %s116, %s130
    %p132 = scmp.eq.s32.totalorder %s17, 0
    %p133 = por %p131, %p132
    %s134 = ssub.s32 %s11, %s18
    %p135 = scmp.eq.s32.totalorder %s134, 0
    %s137 = sadd.s32 %s136, 1
    %s138 = scalar_select %p135, %s136, %s137
    %p141 = pneg %p135
    %p142 = scmp.eq.s32.totalorder %s11, 1
    %p143 = por %p141, %p142
    %p144 = scmp.ne.s32.totalorder %s136, %s139
    %p145 = scmp.eq.s32.totalorder %s11, 0
    %p146 = por %p144, %p145
    %p147 = scmp.ne.s32.totalorder %s136, %s139
    %p148 = scmp.eq.s32.totalorder %s16, 1
    %p149 = por %p147, %p148
    %p150 = scmp.ne.s32.totalorder %s139, %s140
    %p151 = scmp.eq.s32.totalorder %s16, 0
    %p152 = por %p150, %p151
    %p153 = scmp.ne.s32.totalorder %s139, %s140
    %p154 = scmp.eq.s32.totalorder %s17, 1
    %p155 = por %p153, %p154
    %p157 = scmp.ne.s32.totalorder %s140, %s156
    %p158 = scmp.eq.s32.totalorder %s17, 0
    %p159 = por %p157, %p158
    %p160 = scmp.le.s32.totalorder 1, %s11
    %p161 = scmp.lt.s32.totalorder %s11, 3
    %p162 = pnand %p160, %p161
    %p163 = pneg %p162
    // Predicated region
    $region9: #{unet_forward.13} parent=5 // pred_check
      _
    $region10: #{unet_forward.13} parent=5 // pred_check_branch
      %165 = sbr.rel (%p162) target = $region12
    $region11: #{unet_forward.13} parent=5 // pred_region
      %s166 = ssub.s32 %s11, 1
      // Predicated region
      $region13: #{unet_forward.13} parent=11 // pred_check
        %p167 = pneg %p32
      $region14: #{unet_forward.13} parent=11 // pred_check_branch
        %169 = sbr.rel (%p167) target = $region16
      $region15: #{unet_forward.13} parent=11 // pred_region
        _
      $region16: #{unet_forward.13} parent=11 // pred_fallthru
        _
      // Predicated region
      $region17: #{unet_forward.13} parent=11 // pred_check
        %p170 = pneg %p105
      $region18: #{unet_forward.13} parent=11 // pred_check_branch
        %172 = sbr.rel (%p170) target = $region20
      $region19: #{unet_forward.13} parent=11 // pred_region
        _
      $region20: #{unet_forward.13} parent=11 // pred_fallthru
        _
      // Predicated region
      $region21: #{unet_forward.13} parent=11 // pred_check
        %p173 = pneg %p126
      $region22: #{unet_forward.13} parent=11 // pred_check_branch
        %175 = sbr.rel (%p173) target = $region24
      $region23: #{unet_forward.13} parent=11 // pred_region
        _
      $region24: #{unet_forward.13} parent=11 // pred_fallthru
        _
    $region12: #{unet_forward.13} parent=5 // pred_fallthru
      _
    %p176 = scmp.lt.s32.totalorder %s11, 2
    // Predicated region
    $region25: #{unet_forward.13} parent=5 // pred_check
      %p177 = pneg %p176
    $region26: #{unet_forward.13} parent=5 // pred_check_branch
      %179 = sbr.rel (%p177) target = $region28
    $region27: #{unet_forward.13} parent=5 // pred_region
      // Predicated region
      $region29: #{unet_forward.13} parent=27 // pred_check
        %p180 = pneg %p52
      $region30: #{unet_forward.13} parent=27 // pred_check_branch
        %182 = sbr.rel (%p180) target = $region32
      $region31: #{unet_forward.13} parent=27 // pred_region
        %p183 = scmp.lt.s32.totalorder %s11, 1
        %s184 = scalar_select %p183, %s11, 1
        %s185 = smul.addr %s184, 2
        %s186 = smul.addr %s185, 4
        %s187 = scalar_lea.vmem %s1, %s186
      $region32: #{unet_forward.13} parent=27 // pred_fallthru
        _
      // Predicated region
      $region33: #{unet_forward.13} parent=27 // pred_check
        %p188 = pneg %p78
      $region34: #{unet_forward.13} parent=27 // pred_check_branch
        %190 = sbr.rel (%p188) target = $region36
      $region35: #{unet_forward.13} parent=27 // pred_region
        %p191 = scmp.lt.s32.totalorder %s11, 1
        %s192 = scalar_select %p191, %s11, 1
        %s193 = smul.addr %s192, 2
        %s194 = smul.addr %s193, 4
        %s195 = scalar_lea.vmem %s2, %s194
      $region36: #{unet_forward.13} parent=27 // pred_fallthru
        _
    $region28: #{unet_forward.13} parent=5 // pred_fallthru
      _
    %p196 = scmp.le.s32.totalorder 1, %s11
    %p197 = scmp.lt.s32.totalorder %s11, 3
    %p198 = pnand %p196, %p197
    %p199 = pneg %p198
    // Predicated region
    $region37: #{unet_forward.13} parent=5 // pred_check
      _
    $region38: #{unet_forward.13} parent=5 // pred_check_branch
      %201 = sbr.rel (%p198) target = $region40
    $region39: #{unet_forward.13} parent=5 // pred_region
      %s202 = ssub.s32 %s11, 1
      %p203 = pneg %p32
      %p204 = pneg %p29
      %p205 = scmp.lt.s32.totalorder %s16, 1
      %s206 = scalar_select %p205, %s16, 1
      %s207 = smul.addr %s206, 2
      %s208 = smul.addr %s207, 4
      %s209 = scalar_lea.vmem %s1, %s208
      %p210 = pneg %p58
      %p211 = pneg %p55
      %p212 = scmp.lt.s32.totalorder %s16, 1
      %s213 = scalar_select %p212, %s16, 1
      %s214 = smul.addr %s213, 2
      %s215 = smul.addr %s214, 4
      %s216 = scalar_lea.vmem %s2, %s215
      %p217 = pneg %p84
      %p218 = pneg %p81
      %p219 = pneg %p105
      %p220 = pneg %p102
      %p221 = pneg %p126
      %p222 = pneg %p123
      %p223 = pneg %p152
      %p224 = pneg %p149
      %p225 = scmp.lt.s32.totalorder %s16, 1
      %s226 = scalar_select %p225, %s16, 1
      %s227 = smul.addr %s226, 8
      %s228 = scalar_lea.vmem %s5, %s227
      %p229 = scmp.lt.s32.totalorder %s16, 1
      %s230 = scalar_select %p229, %s16, 1
      %s231 = smul.addr %s230, 2
      %s232 = smul.addr %s231, 4
      %s233 = scalar_lea.vmem %s1, %s232
      %p234 = scmp.lt.s32.totalorder %s16, 1
      %s235 = scalar_select %p234, %s16, 1
      %s236 = smul.addr %s235, 2
      %s237 = smul.addr %s236, 4
      %s238 = scalar_lea.vmem %s2, %s237
      %p239 = scmp.lt.s32.totalorder %s16, 1
      %s240 = scalar_select %p239, %s16, 1
      %s241 = smul.addr %s240, 8
      %s242 = scalar_lea.vmem %s5, %s241
      %v244 = vld [vmem:[%s233] sm:$0xf]
      %v245 = vld [vmem:[%s233 + $0x4] sm:$0xf]
      %v248 = vunpack.c.l.b16 %v244
      %v249 = vunpack.c.l.b16 %v245
      %v250 = vpack.c.b16 %v249, %v248
      %251 = vrot.lane.b32.xlu0 %v250, 73
      %v252 = vpop.permute.xlu0 %251
      %253 = vrot.lane.b32.xlu0 %v250, 9
      %v254 = vpop.permute.xlu0 %253
      %vm255 = vcmask 72704
      %v258 = vsel %vm255, %v252, %v254
      %v260 = vld [vmem:[%s0] sm:$0x1]
      %v262 = vpack.i.b16 %v260, %v260
      %v264 = vlaneseq
      %v265 = vshrl.u32 %v264, 7
      %v266 = vsub.s32 0, %v265
      %v267 = vrot.slane %v262, %v266
      %v268 = vmul.bf16 %v258, %v267
      %269 = vrot.lane.b32.xlu0 %v250, 72
      %v270 = vpop.permute.xlu0 %269
      %271 = vrot.lane.b32.xlu0 %v250, 8
      %v272 = vpop.permute.xlu0 %271
      %vm273 = vcmask 64512
      %v276 = vsel %vm273, %v270, %v272
      %v278 = vshrl.u32 %v260, 16
      %v279 = vpack.i.b16 %v278, %v278
      %v281 = vlaneseq
      %v282 = vshrl.u32 %v281, 7
      %v283 = vsub.s32 0, %v282
      %v284 = vrot.slane %v279, %v283
      %v285 = vmul.bf16 %v276, %v284
      %286 = vrot.lane.b32.xlu0 %v250, 71
      %v287 = vpop.permute.xlu0 %286
      %288 = vrot.lane.b32.xlu0 %v250, 7
      %v289 = vpop.permute.xlu0 %288
      %vm290 = vcmask 56320
      %v293 = vsel %vm290, %v287, %v289
      %v295 = vld [vmem:[%s0] sm:$0x2]
      %v297 = vpack.i.b16 %v295, %v295
      %v299 = vlaneseq
      %v300 = vshrl.u32 %v299, 7
      %v301 = vsub.s32 1, %v300
      %v302 = vrot.slane %v297, %v301
      %v303 = vmul.bf16 %v293, %v302
      %304 = vrot.lane.b32.xlu0 %v250, 65
      %v305 = vpop.permute.xlu0 %304
      %306 = vrot.lane.b32.xlu0 %v250, 1
      %v307 = vpop.permute.xlu0 %306
      %vm308 = vcmask 7168
      %v311 = vsel %vm308, %v305, %v307
      %v313 = vshrl.u32 %v295, 16
      %v314 = vpack.i.b16 %v313, %v313
      %v316 = vlaneseq
      %v317 = vshrl.u32 %v316, 7
      %v318 = vsub.s32 1, %v317
      %v319 = vrot.slane %v314, %v318
      %v320 = vmul.bf16 %v311, %v319
      %321 = vrot.lane.b32.xlu0 %v250, 127
      %v322 = vpop.permute.xlu0 %321
      %323 = vrot.lane.b32.xlu0 %v250, 63
      %v324 = vpop.permute.xlu0 %323
      %vm325 = vcmask 515072
      %v328 = vsel %vm325, %v322, %v324
      %v330 = vld [vmem:[%s0] sm:$0x4]
      %v332 = vshrl.u32 %v330, 16
      %v333 = vpack.i.b16 %v332, %v332
      %v335 = vlaneseq
      %v336 = vshrl.u32 %v335, 7
      %v337 = vsub.s32 2, %v336
      %v338 = vrot.slane %v333, %v337
      %v339 = vmul.bf16 %v328, %v338
      %340 = vrot.lane.b32.xlu0 %v250, 121
      %v341 = vpop.permute.xlu0 %340
      %342 = vrot.lane.b32.xlu0 %v250, 57
      %v343 = vpop.permute.xlu0 %342
      %vm344 = vcmask 465920
      %v347 = vsel %vm344, %v341, %v343
      %v349 = vld [vmem:[%s0] sm:$0x8]
      %v351 = vpack.i.b16 %v349, %v349
      %v353 = vlaneseq
      %v354 = vshrl.u32 %v353, 7
      %v355 = vsub.s32 3, %v354
      %v356 = vrot.slane %v351, %v355
      %v357 = vmul.bf16 %v347, %v356
      %358 = vrot.lane.b32.xlu0 %v250, 120
      %v359 = vpop.permute.xlu0 %358
      %360 = vrot.lane.b32.xlu0 %v250, 56
      %v361 = vpop.permute.xlu0 %360
      %vm362 = vcmask 457728
      %v365 = vsel %vm362, %v359, %v361
      %v367 = vshrl.u32 %v349, 16
      %v368 = vpack.i.b16 %v367, %v367
      %v370 = vlaneseq
      %v371 = vshrl.u32 %v370, 7
      %v372 = vsub.s32 3, %v371
      %v373 = vrot.slane %v368, %v372
      %v374 = vmul.bf16 %v365, %v373
      %375 = vrot.lane.b32.xlu0 %v250, 119
      %v376 = vpop.permute.xlu0 %375
      %377 = vrot.lane.b32.xlu0 %v250, 55
      %v378 = vpop.permute.xlu0 %377
      %vm379 = vcmask 449536
      %v382 = vsel %vm379, %v376, %v378
      %v384 = vld [vmem:[%s0 + $0x4] sm:$0x1]
      %v386 = vpack.i.b16 %v384, %v384
      %v388 = vlaneseq
      %v389 = vshrl.u32 %v388, 7
      %v390 = vsub.s32 0, %v389
      %v391 = vrot.slane %v386, %v390
      %v392 = vmul.bf16 %v382, %v391
      %v393 = vld [vmem:[%s238] sm:$0xf]
      %v394 = vld [vmem:[%s238 + $0x4] sm:$0xf]
      %v397 = vunpack.c.l.b16 %v393
      %v398 = vunpack.c.l.b16 %v394
      %v399 = vpack.c.b16 %v398, %v397
      %400 = vrot.lane.b32.xlu0 %v399, 73
      %v401 = vpop.permute.xlu0 %400
      %402 = vrot.lane.b32.xlu0 %v399, 9
      %v403 = vpop.permute.xlu0 %402
      %v406 = vsel %vm255, %v401, %v403
      %v408 = vmul.bf16 %v406, %v267
      %409 = vrot.lane.b32.xlu0 %v399, 72
      %v410 = vpop.permute.xlu0 %409
      %411 = vrot.lane.b32.xlu0 %v399, 8
      %v412 = vpop.permute.xlu0 %411
      %v415 = vsel %vm273, %v410, %v412
      %v417 = vmul.bf16 %v415, %v284
      %418 = vrot.lane.b32.xlu0 %v399, 71
      %v419 = vpop.permute.xlu0 %418
      %420 = vrot.lane.b32.xlu0 %v399, 7
      %v421 = vpop.permute.xlu0 %420
      %v424 = vsel %vm290, %v419, %v421
      %v426 = vmul.bf16 %v424, %v302
      %427 = vrot.lane.b32.xlu0 %v399, 65
      %v428 = vpop.permute.xlu0 %427
      %429 = vrot.lane.b32.xlu0 %v399, 1
      %v430 = vpop.permute.xlu0 %429
      %v433 = vsel %vm308, %v428, %v430
      %v435 = vmul.bf16 %v433, %v319
      %436 = vrot.lane.b32.xlu0 %v399, 127
      %v437 = vpop.permute.xlu0 %436
      %438 = vrot.lane.b32.xlu0 %v399, 63
      %v439 = vpop.permute.xlu0 %438
      %v442 = vsel %vm325, %v437, %v439
      %v444 = vmul.bf16 %v442, %v338
      %445 = vrot.lane.b32.xlu0 %v399, 121
      %v446 = vpop.permute.xlu0 %445
      %447 = vrot.lane.b32.xlu0 %v399, 57
      %v448 = vpop.permute.xlu0 %447
      %v451 = vsel %vm344, %v446, %v448
      %v453 = vmul.bf16 %v451, %v356
      %454 = vrot.lane.b32.xlu0 %v399, 120
      %v455 = vpop.permute.xlu0 %454
      %456 = vrot.lane.b32.xlu0 %v399, 56
      %v457 = vpop.permute.xlu0 %456
      %v460 = vsel %vm362, %v455, %v457
      %v462 = vmul.bf16 %v460, %v373
      %463 = vrot.lane.b32.xlu0 %v399, 119
      %v464 = vpop.permute.xlu0 %463
      %465 = vrot.lane.b32.xlu0 %v399, 55
      %v466 = vpop.permute.xlu0 %465
      %v469 = vsel %vm379, %v464, %v466
      %v471 = vmul.bf16 %v469, %v391
      %v474 = vld [vmem:[%s3] sm:$0xff]
      %v475 = vld [vmem:[%s3 + $0x8] sm:$0xf]
      %v478 = vunpack.c.l.b16 %v474
      %v479 = vunpack.c.h.b16 %v474
      %v480 = vunpack.c.l.b16 %v475
      %v481 = vpack.c.b16 %v478, %v478
      %v482 = vpack.c.b16 %v479, %v479
      %v483 = vpack.c.b16 %v480, %v480
      %vm486 = vcmask 261120
      %v488 = vsel %vm486, %v483, 0
      %490 = vmatprep.subr.bf16.mxu0 0
      %491 = vmatpush1.bf16.msra.mxu0 %v268
      %492 = vmatprep.subr.bf16.mxu0 0
      %493 = vmatpush1.bf16.msra.mxu0 %v285
      %494 = vmatprep.subr.bf16.mxu0 0
      %495 = vmatpush1.bf16.msra.mxu0 %v303
      %496 = vmatprep.subr.bf16.mxu0 0
      %497 = vmatpush1.bf16.msra.mxu0 %v320
      %498 = vmatprep.subr.bf16.mxu0 0
      %499 = vmatpush1.bf16.msra.mxu0 %v250
      %500 = vmatprep.subr.bf16.mxu0 0
      %501 = vmatpush1.bf16.msra.mxu0 %v339
      %502 = vmatprep.subr.bf16.mxu0 0
      %503 = vmatpush1.bf16.msra.mxu0 %v357
      %504 = vmatprep.subr.bf16.mxu0 0
      %505 = vmatpush1.bf16.msra.mxu0 %v374
      %506 = vmatprep.subr.bf16.mxu0 0
      %507 = vmatpush1.bf16.msra.mxu0 %v392
      %508 = vmatprep.subr.bf16.mxu0 0
      %509 = vmatpush1.bf16.msra.mxu0 %v408
      %510 = vmatprep.subr.bf16.mxu0 0
      %511 = vmatpush1.bf16.msra.mxu0 %v417
      %512 = vmatprep.subr.bf16.mxu0 0
      %513 = vmatpush1.bf16.msra.mxu0 %v426
      %514 = vmatprep.subr.bf16.mxu0 0
      %515 = vmatpush1.bf16.msra.mxu0 %v435
      %516 = vmatprep.subr.bf16.mxu0 0
      %517 = vmatpush1.bf16.msra.mxu0 %v399
      %518 = vmatprep.subr.bf16.mxu0 0
      %519 = vmatpush1.bf16.msra.mxu0 %v444
      %520 = vmatprep.subr.bf16.mxu0 0
      %521 = vmatpush1.bf16.msra.mxu0 %v453
      %522 = vmatprep.mubr.bf16.mxu0 %v482
      %523 = vmatmul.mubr.bf16.gmra.mrb[0].mxu0 %v481
      %v524 = vpop.f32.mrb[0].mxu0
      %v525 = vadd.f32 0.0, %v524
      %v526 = vpop.f32.mrb[0].mxu0
      %v527 = vpop.f32.mrb[0].mxu0
      %v528 = vpop.f32.mrb[0].mxu0
      %529 = vdwg.mxu0
      %530 = vmatprep.subr.bf16.mxu0 0
      %531 = vmatpush1.bf16.msra.mxu0 %v462
      %532 = vmatprep.subr.bf16.mxu0 0
      %533 = vmatpush1.bf16.msra.mxu0 %v471
      %534 = vmatprep.subr.bf16.mxu0 0
      %535 = vmatpush1.bf16.msra.mxu0 0
      %536 = vmatprep.subr.bf16.mxu0 0
      %537 = vmatpush1.bf16.msra.mxu0 0
      %538 = vmatprep.subr.bf16.mxu0 0
      %539 = vmatpush1.bf16.msra.mxu0 0
      %540 = vmatprep.subr.bf16.mxu0 0
      %541 = vmatpush1.bf16.msra.mxu0 0
      %542 = vmatprep.subr.bf16.mxu0 0
      %543 = vmatpush1.bf16.msra.mxu0 0
      %544 = vmatprep.subr.bf16.mxu0 0
      %545 = vmatpush1.bf16.msra.mxu0 0
      %546 = vmatprep.subr.bf16.mxu0 0
      %547 = vmatpush1.bf16.msra.mxu0 0
      %548 = vmatprep.subr.bf16.mxu0 0
      %549 = vmatpush1.bf16.msra.mxu0 0
      %550 = vmatprep.subr.bf16.mxu0 0
      %551 = vmatpush1.bf16.msra.mxu0 0
      %552 = vmatprep.subr.bf16.mxu0 0
      %553 = vmatpush1.bf16.msra.mxu0 0
      %554 = vmatprep.subr.bf16.mxu0 0
      %555 = vmatpush1.bf16.msra.mxu0 0
      %556 = vmatprep.subr.bf16.mxu0 0
      %557 = vmatpush1.bf16.msra.mxu0 0
      %558 = vmatprep.subr.bf16.mxu0 0
      %559 = vmatpush1.bf16.msra.mxu0 0
      %560 = vmatprep.subr.bf16.mxu0 0
      %561 = vmatpush1.bf16.msra.mxu0 0
      %562 = vmatprep.mubr.bf16.mxu0 0
      %563 = vmatmul.mubr.bf16.gmra.mrb[0].mxu0 %v488
      %v564 = vpop.f32.mrb[0].mxu0
      %v565 = vadd.f32 %v525, %v564
      %v566 = vpop.f32.mrb[0].mxu0
      %v567 = vpop.f32.mrb[0].mxu0
      %v568 = vpop.f32.mrb[0].mxu0
      %569 = vdwg.mxu0
      %vm570 = vcmask 523264
      %v571 = vsel %vm570, %v565, 0.0
      %572 = vadd.xlane.f32.xlu0 %v571
      %v573 = vpop.xlane.xlu0 %572
      %v574 = vmul.f32 %v565, %v565
      %v575 = vsel %vm570, %v574, 0.0
      %576 = vadd.xlane.f32.xlu0 %v575
      %v577 = vpop.xlane.xlu0 %576
      %v578 = vmul.f32 %v573, 0.015625
      %v579 = vmul.f32 %v577, 0.015625
      %v580 = vmul.f32 %v578, %v578
      %v581 = vsub.f32 %v579, %v580
      %v582 = vmax.f32 %v581, 0.0
      %v583 = vadd.f32 %v582, 1e-05
      %v584 = vrsqrt.pop %v583
      %v585 = vsub.f32 0.0, %v578
      %v586 = vmul.f32 %v585, %v584
      %v587 = vmul.f32 %v565, %v584
      %v588 = vadd.f32 %v587, %v586
      %v589 = vmax.f32 %v588, 0.0
      %v590 = vpack.c.bf16 %v589, %v589
      %592 = vrot.lane.b32.xlu0 %v590, 73
      %v593 = vpop.permute.xlu0 %592
      %594 = vrot.lane.b32.xlu0 %v590, 9
      %v595 = vpop.permute.xlu0 %594
      %v598 = vsel %vm255, %v593, %v595
      %v600 = vmul.bf16 %v598, %v267
      %601 = vrot.lane.b32.xlu0 %v590, 72
      %v602 = vpop.permute.xlu0 %601
      %603 = vrot.lane.b32.xlu0 %v590, 8
      %v604 = vpop.permute.xlu0 %603
      %v607 = vsel %vm273, %v602, %v604
      %v609 = vmul.bf16 %v607, %v284
      %610 = vrot.lane.b32.xlu0 %v590, 71
      %v611 = vpop.permute.xlu0 %610
      %612 = vrot.lane.b32.xlu0 %v590, 7
      %v613 = vpop.permute.xlu0 %612
      %v616 = vsel %vm290, %v611, %v613
      %v618 = vmul.bf16 %v616, %v302
      %619 = vrot.lane.b32.xlu0 %v590, 65
      %v620 = vpop.permute.xlu0 %619
      %621 = vrot.lane.b32.xlu0 %v590, 1
      %v622 = vpop.permute.xlu0 %621
      %v625 = vsel %vm308, %v620, %v622
      %v627 = vmul.bf16 %v625, %v319
      %628 = vrot.lane.b32.xlu0 %v590, 127
      %v629 = vpop.permute.xlu0 %628
      %630 = vrot.lane.b32.xlu0 %v590, 63
      %v631 = vpop.permute.xlu0 %630
      %v634 = vsel %vm325, %v629, %v631
      %v636 = vmul.bf16 %v634, %v338
      %637 = vrot.lane.b32.xlu0 %v590, 121
      %v638 = vpop.permute.xlu0 %637
      %639 = vrot.lane.b32.xlu0 %v590, 57
      %v640 = vpop.permute.xlu0 %639
      %v643 = vsel %vm344, %v638, %v640
      %v645 = vmul.bf16 %v643, %v356
      %646 = vrot.lane.b32.xlu0 %v590, 120
      %v647 = vpop.permute.xlu0 %646
      %648 = vrot.lane.b32.xlu0 %v590, 56
      %v649 = vpop.permute.xlu0 %648
      %v652 = vsel %vm362, %v647, %v649
      %v654 = vmul.bf16 %v652, %v373
      %655 = vrot.lane.b32.xlu0 %v590, 119
      %v656 = vpop.permute.xlu0 %655
      %657 = vrot.lane.b32.xlu0 %v590, 55
      %v658 = vpop.permute.xlu0 %657
      %v661 = vsel %vm379, %v656, %v658
      %v663 = vmul.bf16 %v661, %v391
      %v665 = vrot.slane %v609, 4
      %v667 = vrot.slane %v627, 4
      %v669 = vrot.slane %v636, 4
      %v671 = vrot.slane %v654, 4
      %vm672 = vcmask 1043456
      %v675 = vsel %vm672, %v600, %v665
      %v679 = vsel %vm672, %v618, %v667
      %v683 = vsel %vm672, %v590, %v669
      %v687 = vsel %vm672, %v645, %v671
      %v689 = vld [vmem:[%s4] sm:$0xf]
      %vm690 = vcmask 588800
      %v692 = vsel %vm690, %v689, 0
      %v695 = vsel %vm672, %v663, 0
      %697 = vmatprep.subr.bf16.mxu0 0
      %698 = vmatpush1.bf16.msra.mxu0 %v675
      %699 = vmatprep.subr.bf16.mxu0 0
      %700 = vmatpush1.bf16.msra.mxu0 %v679
      %701 = vmatprep.subr.bf16.mxu0 0
      %702 = vmatpush1.bf16.msra.mxu0 %v683
      %703 = vmatprep.subr.bf16.mxu0 0
      %704 = vmatpush1.bf16.msra.mxu0 %v687
      %705 = vmatprep.subr.bf16.mxu0 0
      %706 = vmatpush1.bf16.msra.mxu0 %v695
      %707 = vmatprep.subr.bf16.mxu0 0
      %708 = vmatpush1.bf16.msra.mxu0 0
      %709 = vmatprep.subr.bf16.mxu0 0
      %710 = vmatpush1.bf16.msra.mxu0 0
      %711 = vmatprep.subr.bf16.mxu0 0
      %712 = vmatpush1.bf16.msra.mxu0 0
      %713 = vmatprep.subr.bf16.mxu0 0
      %714 = vmatpush1.bf16.msra.mxu0 0
      %715 = vmatprep.subr.bf16.mxu0 0
      %716 = vmatpush1.bf16.msra.mxu0 0
      %717 = vmatprep.subr.bf16.mxu0 0
      %718 = vmatpush1.bf16.msra.mxu0 0
      %719 = vmatprep.subr.bf16.mxu0 0
      %720 = vmatpush1.bf16.msra.mxu0 0
      %721 = vmatprep.subr.bf16.mxu0 0
      %722 = vmatpush1.bf16.msra.mxu0 0
      %723 = vmatprep.subr.bf16.mxu0 0
      %724 = vmatpush1.bf16.msra.mxu0 0
      %725 = vmatprep.subr.bf16.mxu0 0
      %726 = vmatpush1.bf16.msra.mxu0 0
      %727 = vmatprep.subr.bf16.mxu0 0
      %728 = vmatpush1.bf16.msra.mxu0 0
      %729 = vmatprep.mubr.bf16.mxu0 0
      %730 = vmatmul.mubr.bf16.gmra.mrb[0].mxu0 %v692
      %v731 = vpop.f32.mrb[0].mxu0
      %v732 = vadd.f32 0.0, %v731
      %v733 = vpop.f32.mrb[0].mxu0
      %v734 = vpop.f32.mrb[0].mxu0
      %v735 = vpop.f32.mrb[0].mxu0
      %736 = vdwg.mxu0
      %v737 = vsel %vm570, %v732, 0.0
      %738 = vadd.xlane.f32.xlu0 %v737
      %v739 = vpop.xlane.xlu0 %738
      %v740 = vmul.f32 %v732, %v732
      %v741 = vsel %vm570, %v740, 0.0
      %742 = vadd.xlane.f32.xlu0 %v741
      %v743 = vpop.xlane.xlu0 %742
      %v744 = vmul.f32 %v739, 0.015625
      %v745 = vmul.f32 %v743, 0.015625
      %v746 = vmul.f32 %v744, %v744
      %v747 = vsub.f32 %v745, %v746
      %v748 = vmax.f32 %v747, 0.0
      %v749 = vadd.f32 %v748, 1e-05
      %v750 = vrsqrt.pop %v749
      %v751 = vsub.f32 0.0, %v744
      %v752 = vmul.f32 %v751, %v750
      %v753 = vmul.f32 %v732, %v750
      %v754 = vadd.f32 %v753, %v752
      %v755 = vmax.f32 %v754, 0.0
      %756 = vst.msk [vmem:[%s242] sm:$0xff] %vm570, %v755
      %p757 = scmp.lt.s32.totalorder %s16, 1
      %s758 = scalar_select %p757, %s16, 1
      %s759 = smul.addr %s758, 8
      %s760 = scalar_lea.vmem %s5, %s759
      // Predicated region
      $region41: #{unet_forward.13} parent=39 // pred_check
        %p761 = pneg %p149
      $region42: #{unet_forward.13} parent=39 // pred_check_branch
        %763 = sbr.rel (%p761) target = $region44
      $region43: #{unet_forward.13} parent=39 // pred_region
        _
      $region44: #{unet_forward.13} parent=39 // pred_fallthru
        _
    $region40: #{unet_forward.13} parent=5 // pred_fallthru
      _
    %p764 = scmp.le.s32.totalorder 2, %s11
    // Predicated region
    $region45: #{unet_forward.13} parent=5 // pred_check
      %p765 = pneg %p764
    $region46: #{unet_forward.13} parent=5 // pred_check_branch
      %767 = sbr.rel (%p765) target = $region48
    $region47: #{unet_forward.13} parent=5 // pred_region
      %s768 = ssub.s32 %s11, 2
      // Predicated region
      $region49: #{unet_forward.13} parent=47 // pred_check
        %p769 = pneg %p155
      $region50: #{unet_forward.13} parent=47 // pred_check_branch
        %771 = sbr.rel (%p769) target = $region52
      $region51: #{unet_forward.13} parent=47 // pred_region
        %p772 = scmp.lt.s32.totalorder %s17, 1
        %s773 = scalar_select %p772, %s17, 1
        %s774 = smul.addr %s773, 8
        %s775 = scalar_lea.vmem %s5, %s774
      $region52: #{unet_forward.13} parent=47 // pred_fallthru
        _
    $region48: #{unet_forward.13} parent=5 // pred_fallthru
      _
  $region6: #{unet_forward.13} parent=0 // loop_footer
    %s15 = sadd.s32 1, %s11
  $region7: #{unet_forward.13} parent=0 // loop_footer_branch
    %10 = sbr.rel target = $region3
  $region8: #{unet_forward.13} parent=0 // loop_exit
    _

// kernel: unet_forward.15
$region0: #{unet_forward.15}
  #allocation0 [shape = 'u32[]', space=smem, size = 0x4, offset = 0x4, fixed_abs, tag = 'smem constant byte address 0x4 - core index']
  #allocation1 [shape = 'u32[144,128]{1,0:T(1,128)}', space=vmem, size = 0x12000, scoped, tag = 'internal scratch']
  %s0 = inlined_call_operand.vmem [shape: f32[2,8,256], index: 0, kind: input, shape index: {}]
  %s1 = inlined_call_operand.vmem [shape: bf16[4,8], index: 1, kind: input, shape index: {}]
  %s2 = inlined_call_operand.vmem [shape: f32[4,1], index: 2, kind: input, shape index: {}]
  %s3 = inlined_call_operand.vmem [shape: bf16[2,4], index: 3, kind: input, shape index: {}]
  %s4 = inlined_call_operand.vmem [shape: f32[2,1], index: 4, kind: input, shape index: {}]
  %s5 = inlined_call_operand.vmem [shape: bf16[2,2], index: 5, kind: input, shape index: {}]
  %s6 = inlined_call_operand.vmem [shape: f32[2,1], index: 6, kind: input, shape index: {}]
  %s7 = inlined_call_operand.vmem [shape: f32[2,2,256], index: 7, kind: output, shape index: {}]
  %s8 = sld [smem:[#allocation0]]
  $region61: #{unet_forward.15} parent=0
    _
  %s10 = ssub.s32 1, %s8
  %s11 = scalar_select 0, %s10, %s8
  loop: start=0, step=1, limit=4
  $region2: #{unet_forward.15} parent=0 // loop_pre_header
    _
  $region3: #{unet_forward.15} parent=0 // loop_header
    %s13 = sphi 0, %s17
    %p14 = scmp.ge.s32.totalorder %s13, 4
    %s20 = sphi 0, %s32
    %s21 = sphi 0, %s28
    %s22 = sphi 0, %s20
    %s23 = sphi 0, %s21
    %s24 = sphi 0, %s22
    %s25 = sphi 0, %s23
    %s37 = sphi 0, %s39
    %s40 = sphi 0, %s37
    %s41 = sphi 0, %s40
    %s57 = sphi 0, %s41
    %s61 = sphi 0, %s61
    %s63 = sphi 0, %s61
    %s64 = sphi 0, %s63
    %s78 = sphi 0, %s64
    %s82 = sphi 0, %s82
    %s84 = sphi 0, %s82
    %s85 = sphi 0, %s84
    %s99 = sphi 0, %s85
    %s103 = sphi 0, %s103
    %s105 = sphi 0, %s103
    %s106 = sphi 0, %s105
    %s120 = sphi 0, %s106
    %s124 = sphi 0, %s124
    %s126 = sphi 0, %s124
    %s127 = sphi 0, %s126
    %s141 = sphi 0, %s127
    %s145 = sphi 0, %s145
    %s147 = sphi 0, %s145
    %s148 = sphi 0, %s147
    %s162 = sphi 0, %s148
    %s166 = sphi 0, %s166
    %s168 = sphi 0, %s166
    %s169 = sphi 0, %s168
    %s183 = sphi 0, %s169
    %s191 = sphi 0, %s193
    %s194 = sphi 0, %s191
    %s195 = sphi 0, %s194
    %s211 = sphi 0, %s195
  $region4: #{unet_forward.15} parent=0 // loop_header_branch
    %16 = sbr.rel (%p14) target = $region8
  $region5: #{unet_forward.15} parent=0 // loop_body
    %s18 = ssub.s32 %s13, 1
    %s19 = ssub.s32 %s13, 2
    %s26 = sadd.s32 1, %s21
    %p27 = scmp.ge.s32.totalorder %s26, 1
    %s28 = scalar_select %p27, 0, %s26
    %s29 = sadd.s32 1, %s20
    %s30 = scalar_select %p27, %s29, %s20
    %p31 = scmp.ge.s32.totalorder %s30, 2
    %s32 = scalar_select %p31, 0, %s30
    %s33 = ssub.s32 %s20, %s32
    %s34 = ssub.s32 %s21, %s28
    %s35 = sor.u32 %s33, %s34
    %p36 = scmp.eq.s32.totalorder %s35, 0
    %s38 = sadd.s32 %s37, 1
    %s39 = scalar_select %p36, %s37, %s38
    %p42 = pneg %p36
    %p43 = scmp.eq.s32.totalorder %s13, 1
    %p44 = por %p42, %p43
    %p45 = scmp.ne.s32.totalorder %s37, %s40
    %p46 = scmp.eq.s32.totalorder %s13, 0
    %p47 = por %p45, %p46
    %p48 = scmp.ne.s32.totalorder %s37, %s40
    %p49 = scmp.eq.s32.totalorder %s18, 1
    %p50 = por %p48, %p49
    %p51 = scmp.ne.s32.totalorder %s40, %s41
    %p52 = scmp.eq.s32.totalorder %s18, 0
    %p53 = por %p51, %p52
    %p54 = scmp.ne.s32.totalorder %s40, %s41
    %p55 = scmp.eq.s32.totalorder %s19, 1
    %p56 = por %p54, %p55
    %p58 = scmp.ne.s32.totalorder %s41, %s57
    %p59 = scmp.eq.s32.totalorder %s19, 0
    %p60 = por %p58, %p59
    %s62 = sadd.s32 %s61, 1
    %p65 = scmp.eq.s32.totalorder %s13, 1
    %p66 = scmp.ne.s32.totalorder %s61, %s63
    %p67 = scmp.eq.s32.totalorder %s13, 0
    %p68 = por %p66, %p67
    %p69 = scmp.ne.s32.totalorder %s61, %s63
    %p70 = scmp.eq.s32.totalorder %s18, 1
    %p71 = por %p69, %p70
    %p72 = scmp.ne.s32.totalorder %s63, %s64
    %p73 = scmp.eq.s32.totalorder %s18, 0
    %p74 = por %p72, %p73
    %p75 = scmp.ne.s32.totalorder %s63, %s64
    %p76 = scmp.eq.s32.totalorder %s19, 1
    %p77 = por %p75, %p76
    %p79 = scmp.ne.s32.totalorder %s64, %s78
    %p80 = scmp.eq.s32.totalorder %s19, 0
    %p81 = por %p79, %p80
    %s83 = sadd.s32 %s82, 1
    %p86 = scmp.eq.s32.totalorder %s13, 1
    %p87 = scmp.ne.s32.totalorder %s82, %s84
    %p88 = scmp.eq.s32.totalorder %s13, 0
    %p89 = por %p87, %p88
    %p90 = scmp.ne.s32.totalorder %s82, %s84
    %p91 = scmp.eq.s32.totalorder %s18, 1
    %p92 = por %p90, %p91
    %p93 = scmp.ne.s32.totalorder %s84, %s85
    %p94 = scmp.eq.s32.totalorder %s18, 0
    %p95 = por %p93, %p94
    %p96 = scmp.ne.s32.totalorder %s84, %s85
    %p97 = scmp.eq.s32.totalorder %s19, 1
    %p98 = por %p96, %p97
    %p100 = scmp.ne.s32.totalorder %s85, %s99
    %p101 = scmp.eq.s32.totalorder %s19, 0
    %p102 = por %p100, %p101
    %s104 = sadd.s32 %s103, 1
    %p107 = scmp.eq.s32.totalorder %s13, 1
    %p108 = scmp.ne.s32.totalorder %s103, %s105
    %p109 = scmp.eq.s32.totalorder %s13, 0
    %p110 = por %p108, %p109
    %p111 = scmp.ne.s32.totalorder %s103, %s105
    %p112 = scmp.eq.s32.totalorder %s18, 1
    %p113 = por %p111, %p112
    %p114 = scmp.ne.s32.totalorder %s105, %s106
    %p115 = scmp.eq.s32.totalorder %s18, 0
    %p116 = por %p114, %p115
    %p117 = scmp.ne.s32.totalorder %s105, %s106
    %p118 = scmp.eq.s32.totalorder %s19, 1
    %p119 = por %p117, %p118
    %p121 = scmp.ne.s32.totalorder %s106, %s120
    %p122 = scmp.eq.s32.totalorder %s19, 0
    %p123 = por %p121, %p122
    %s125 = sadd.s32 %s124, 1
    %p128 = scmp.eq.s32.totalorder %s13, 1
    %p129 = scmp.ne.s32.totalorder %s124, %s126
    %p130 = scmp.eq.s32.totalorder %s13, 0
    %p131 = por %p129, %p130
    %p132 = scmp.ne.s32.totalorder %s124, %s126
    %p133 = scmp.eq.s32.totalorder %s18, 1
    %p134 = por %p132, %p133
    %p135 = scmp.ne.s32.totalorder %s126, %s127
    %p136 = scmp.eq.s32.totalorder %s18, 0
    %p137 = por %p135, %p136
    %p138 = scmp.ne.s32.totalorder %s126, %s127
    %p139 = scmp.eq.s32.totalorder %s19, 1
    %p140 = por %p138, %p139
    %p142 = scmp.ne.s32.totalorder %s127, %s141
    %p143 = scmp.eq.s32.totalorder %s19, 0
    %p144 = por %p142, %p143
    %s146 = sadd.s32 %s145, 1
    %p149 = scmp.eq.s32.totalorder %s13, 1
    %p150 = scmp.ne.s32.totalorder %s145, %s147
    %p151 = scmp.eq.s32.totalorder %s13, 0
    %p152 = por %p150, %p151
    %p153 = scmp.ne.s32.totalorder %s145, %s147
    %p154 = scmp.eq.s32.totalorder %s18, 1
    %p155 = por %p153, %p154
    %p156 = scmp.ne.s32.totalorder %s147, %s148
    %p157 = scmp.eq.s32.totalorder %s18, 0
    %p158 = por %p156, %p157
    %p159 = scmp.ne.s32.totalorder %s147, %s148
    %p160 = scmp.eq.s32.totalorder %s19, 1
    %p161 = por %p159, %p160
    %p163 = scmp.ne.s32.totalorder %s148, %s162
    %p164 = scmp.eq.s32.totalorder %s19, 0
    %p165 = por %p163, %p164
    %s167 = sadd.s32 %s166, 1
    %p170 = scmp.eq.s32.totalorder %s13, 1
    %p171 = scmp.ne.s32.totalorder %s166, %s168
    %p172 = scmp.eq.s32.totalorder %s13, 0
    %p173 = por %p171, %p172
    %p174 = scmp.ne.s32.totalorder %s166, %s168
    %p175 = scmp.eq.s32.totalorder %s18, 1
    %p176 = por %p174, %p175
    %p177 = scmp.ne.s32.totalorder %s168, %s169
    %p178 = scmp.eq.s32.totalorder %s18, 0
    %p179 = por %p177, %p178
    %p180 = scmp.ne.s32.totalorder %s168, %s169
    %p181 = scmp.eq.s32.totalorder %s19, 1
    %p182 = por %p180, %p181
    %p184 = scmp.ne.s32.totalorder %s169, %s183
    %p185 = scmp.eq.s32.totalorder %s19, 0
    %p186 = por %p184, %p185
    %s187 = ssub.s32 %s20, %s32
    %s188 = ssub.s32 %s21, %s28
    %s189 = sor.u32 %s187, %s188
    %p190 = scmp.eq.s32.totalorder %s189, 0
    %s192 = sadd.s32 %s191, 1
    %s193 = scalar_select %p190, %s191, %s192
    %p196 = pneg %p190
    %p197 = scmp.eq.s32.totalorder %s13, 1
    %p198 = por %p196, %p197
    %p199 = scmp.ne.s32.totalorder %s191, %s194
    %p200 = scmp.eq.s32.totalorder %s13, 0
    %p201 = por %p199, %p200
    %p202 = scmp.ne.s32.totalorder %s191, %s194
    %p203 = scmp.eq.s32.totalorder %s18, 1
    %p204 = por %p202, %p203
    %p205 = scmp.ne.s32.totalorder %s194, %s195
    %p206 = scmp.eq.s32.totalorder %s18, 0
    %p207 = por %p205, %p206
    %p208 = scmp.ne.s32.totalorder %s194, %s195
    %p209 = scmp.eq.s32.totalorder %s19, 1
    %p210 = por %p208, %p209
    %p212 = scmp.ne.s32.totalorder %s195, %s211
    %p213 = scmp.eq.s32.totalorder %s19, 0
    %p214 = por %p212, %p213
    %p215 = scmp.le.s32.totalorder 1, %s13
    %p216 = scmp.lt.s32.totalorder %s13, 3
    %p217 = pnand %p215, %p216
    %p218 = pneg %p217
    // Predicated region
    $region9: #{unet_forward.15} parent=5 // pred_check
      _
    $region10: #{unet_forward.15} parent=5 // pred_check_branch
      %220 = sbr.rel (%p217) target = $region12
    $region11: #{unet_forward.15} parent=5 // pred_region
      %s221 = ssub.s32 %s13, 1
      // Predicated region
      $region13: #{unet_forward.15} parent=11 // pred_check
        %p222 = pneg %p74
      $region14: #{unet_forward.15} parent=11 // pred_check_branch
        %224 = sbr.rel (%p222) target = $region16
      $region15: #{unet_forward.15} parent=11 // pred_region
        _
      $region16: #{unet_forward.15} parent=11 // pred_fallthru
        _
      // Predicated region
      $region17: #{unet_forward.15} parent=11 // pred_check
        %p225 = pneg %p95
      $region18: #{unet_forward.15} parent=11 // pred_check_branch
        %227 = sbr.rel (%p225) target = $region20
      $region19: #{unet_forward.15} parent=11 // pred_region
        _
      $region20: #{unet_forward.15} parent=11 // pred_fallthru
        _
      // Predicated region
      $region21: #{unet_forward.15} parent=11 // pred_check
        %p228 = pneg %p116
      $region22: #{unet_forward.15} parent=11 // pred_check_branch
        %230 = sbr.rel (%p228) target = $region24
      $region23: #{unet_forward.15} parent=11 // pred_region
        _
      $region24: #{unet_forward.15} parent=11 // pred_fallthru
        _
      // Predicated region
      $region25: #{unet_forward.15} parent=11 // pred_check
        %p231 = pneg %p137
      $region26: #{unet_forward.15} parent=11 // pred_check_branch
        %233 = sbr.rel (%p231) target = $region28
      $region27: #{unet_forward.15} parent=11 // pred_region
        _
      $region28: #{unet_forward.15} parent=11 // pred_fallthru
        _
      // Predicated region
      $region29: #{unet_forward.15} parent=11 // pred_check
        %p234 = pneg %p158
      $region30: #{unet_forward.15} parent=11 // pred_check_branch
        %236 = sbr.rel (%p234) target = $region32
      $region31: #{unet_forward.15} parent=11 // pred_region
        _
      $region32: #{unet_forward.15} parent=11 // pred_fallthru
        _
      // Predicated region
      $region33: #{unet_forward.15} parent=11 // pred_check
        %p237 = pneg %p179
      $region34: #{unet_forward.15} parent=11 // pred_check_branch
        %239 = sbr.rel (%p237) target = $region36
      $region35: #{unet_forward.15} parent=11 // pred_region
        _
      $region36: #{unet_forward.15} parent=11 // pred_fallthru
        _
    $region12: #{unet_forward.15} parent=5 // pred_fallthru
      _
    %p240 = scmp.lt.s32.totalorder %s13, 2
    // Predicated region
    $region37: #{unet_forward.15} parent=5 // pred_check
      %p241 = pneg %p240
    $region38: #{unet_forward.15} parent=5 // pred_check_branch
      %243 = sbr.rel (%p241) target = $region40
    $region39: #{unet_forward.15} parent=5 // pred_region
      // Predicated region
      $region41: #{unet_forward.15} parent=39 // pred_check
        %p244 = pneg %p47
      $region42: #{unet_forward.15} parent=39 // pred_check_branch
        %246 = sbr.rel (%p244) target = $region44
      $region43: #{unet_forward.15} parent=39 // pred_region
        %s247 = smul.u32 2, %s21
        %p248 = scmp.lt.s32.totalorder %s20, 1
        %s249 = scalar_select %p248, %s20, 1
        %p250 = scmp.lt.s32.totalorder %s247, 1
        %s251 = scalar_select %p250, %s247, 1
        %s252 = smul.addr %s249, 2
        %s253 = sadd.s32 %s251, %s252
        %s254 = smul.addr %s253, 8
        %s255 = scalar_lea.vmem %s0, %s254
        %s256 = smul.u32 2, %s21
      $region44: #{unet_forward.15} parent=39 // pred_fallthru
        _
    $region40: #{unet_forward.15} parent=5 // pred_fallthru
      _
    %p257 = scmp.le.s32.totalorder 1, %s13
    %p258 = scmp.lt.s32.totalorder %s13, 3
    %p259 = pnand %p257, %p258
    %p260 = pneg %p259
    // Predicated region
    $region45: #{unet_forward.15} parent=5 // pred_check
      _
    $region46: #{unet_forward.15} parent=5 // pred_check_branch
      %262 = sbr.rel (%p259) target = $region48
    $region47: #{unet_forward.15} parent=5 // pred_region
      %s263 = ssub.s32 %s13, 1
      %s264 = smul.u32 2, %s23
      %p265 = scmp.lt.s32.totalorder %s22, 1
      %s266 = scalar_select %p265, %s22, 1
      %p267 = scmp.lt.s32.totalorder %s264, 1
      %s268 = scalar_select %p267, %s264, 1
      %s269 = smul.addr %s266, 2
      %s270 = sadd.s32 %s268, %s269
      %s271 = smul.addr %s270, 8
      %s272 = scalar_lea.vmem %s0, %s271
      %p273 = pneg %p53
      %p274 = pneg %p50
      %p275 = pneg %p74
      %p276 = pneg %p71
      %p277 = pneg %p95
      %p278 = pneg %p92
      %p279 = pneg %p116
      %p280 = pneg %p113
      %p281 = pneg %p137
      %p282 = pneg %p134
      %p283 = pneg %p158
      %p284 = pneg %p155
      %p285 = pneg %p179
      %p286 = pneg %p176
      %p287 = pneg %p207
      %p288 = pneg %p204
      %s289 = smul.u32 2, %s23
      %p290 = scmp.lt.s32.totalorder %s22, 1
      %s291 = scalar_select %p290, %s22, 1
      %p292 = scmp.lt.s32.totalorder %s289, 1
      %s293 = scalar_select %p292, %s289, 1
      %s294 = smul.addr %s291, 2
      %s295 = sadd.s32 %s293, %s294
      %s296 = smul.addr %s295, 2
      %s297 = scalar_lea.vmem %s7, %s296
      %s298 = smul.u32 2, %s23
      %p299 = scmp.lt.s32.totalorder %s22, 1
      %s300 = scalar_select %p299, %s22, 1
      %p301 = scmp.lt.s32.totalorder %s298, 1
      %s302 = scalar_select %p301, %s298, 1
      %s303 = smul.addr %s300, 2
      %s304 = sadd.s32 %s302, %s303
      %s305 = smul.addr %s304, 8
      %s306 = scalar_lea.vmem %s0, %s305
      %s307 = smul.u32 2, %s23
      %s308 = smul.u32 2, %s23
      %p309 = scmp.lt.s32.totalorder %s22, 1
      %s310 = scalar_select %p309, %s22, 1
      %p311 = scmp.lt.s32.totalorder %s308, 1
      %s312 = scalar_select %p311, %s308, 1
      %s313 = smul.addr %s310, 2
      %s314 = sadd.s32 %s312, %s313
      %s315 = smul.addr %s314, 2
      %s316 = scalar_lea.vmem %s7, %s315
      %s317 = smul.u32 2, %s23
      %v319 = vld [vmem:[%s306] sm:$0xff]
      %v320 = vld [vmem:[%s306 + $0x8] sm:$0xff]
      %v321 = vpack.c.bf16 %v319, %v319
      %v322 = vpack.c.bf16 %v320, %v320
      %v323 = vld [vmem:[%s1] sm:$0x3]
      %v324 = vld [vmem:[%s2] sm:$0xf]
      %326 = vset.pattern.permute.xlu0 0
      %327 = vperm.xlu0 %326, %v324
      %v328 = vpop.permute.xlu0 %327
      %vm330 = vcmask 64512
      %v332 = vsel %vm330, %v323, 0
      %vm334 = vcmask 1043456
      %v336 = vsel %vm334, %v321, 0
      %v339 = vsel %vm334, %v322, 0
      %341 = vmatprep.subr.bf16.mxu0 %v339
      %342 = vmatpush1.bf16.msra.mxu0 %v336
      %343 = vmatprep.subr.bf16.mxu0 0
      %344 = vmatpush1.bf16.msra.mxu0 0
      %345 = vmatprep.subr.bf16.mxu0 0
      %346 = vmatpush1.bf16.msra.mxu0 0
      %347 = vmatprep.subr.bf16.mxu0 0
      %348 = vmatpush1.bf16.msra.mxu0 0
      %349 = vmatprep.subr.bf16.mxu0 0
      %350 = vmatpush1.bf16.msra.mxu0 0
      %351 = vmatprep.subr.bf16.mxu0 0
      %352 = vmatpush1.bf16.msra.mxu0 0
      %353 = vmatprep.subr.bf16.mxu0 0
      %354 = vmatpush1.bf16.msra.mxu0 0
      %355 = vmatprep.subr.bf16.mxu0 0
      %356 = vmatpush1.bf16.msra.mxu0 0
      %357 = vmatprep.subr.bf16.mxu0 0
      %358 = vmatpush1.bf16.msra.mxu0 0
      %359 = vmatprep.subr.bf16.mxu0 0
      %360 = vmatpush1.bf16.msra.mxu0 0
      %361 = vmatprep.subr.bf16.mxu0 0
      %362 = vmatpush1.bf16.msra.mxu0 0
      %363 = vmatprep.subr.bf16.mxu0 0
      %364 = vmatpush1.bf16.msra.mxu0 0
      %365 = vmatprep.subr.bf16.mxu0 0
      %366 = vmatpush1.bf16.msra.mxu0 0
      %367 = vmatprep.subr.bf16.mxu0 0
      %368 = vmatpush1.bf16.msra.mxu0 0
      %369 = vmatprep.subr.bf16.mxu0 0
      %370 = vmatpush1.bf16.msra.mxu0 0
      %371 = vmatprep.subr.bf16.mxu0 0
      %372 = vmatpush1.bf16.msra.mxu0 0
      %373 = vmatprep.mubr.bf16.mxu0 0
      %374 = vmatmul.mubr.bf16.gmra.mrb[0].mxu0 %v332
      %v375 = vpop.f32.mrb[0].mxu0
      %v376 = vadd.f32 %v328, %v375
      %v377 = vpop.f32.mrb[0].mxu0
      %v378 = vadd.f32 %v328, %v377
      %v379 = vpop.f32.mrb[0].mxu0
      %v380 = vpop.f32.mrb[0].mxu0
      %381 = vdwg.mxu0
      %v382 = vld [vmem:[%s3] sm:$0x1]
      %v383 = vpack.c.bf16 %v376, %v376
      %v384 = vpack.c.bf16 %v378, %v378
      %v385 = vld [vmem:[%s4] sm:$0x3]
      %387 = vset.pattern.permute.xlu0 0
      %388 = vperm.xlu0 %387, %v385
      %v389 = vpop.permute.xlu0 %388
      %vm391 = vcmask 31744
      %v393 = vsel %vm391, %v382, 0
      %vm395 = vcmask 1041408
      %v397 = vsel %vm395, %v383, 0
      %v400 = vsel %vm395, %v384, 0
      %402 = vmatprep.subr.bf16.mxu0 %v400
      %403 = vmatpush1.bf16.msra.mxu0 %v397
      %404 = vmatprep.subr.bf16.mxu0 0
      %405 = vmatpush1.bf16.msra.mxu0 0
      %406 = vmatprep.subr.bf16.mxu0 0
      %407 = vmatpush1.bf16.msra.mxu0 0
      %408 = vmatprep.subr.bf16.mxu0 0
      %409 = vmatpush1.bf16.msra.mxu0 0
      %410 = vmatprep.subr.bf16.mxu0 0
      %411 = vmatpush1.bf16.msra.mxu0 0
      %412 = vmatprep.subr.bf16.mxu0 0
      %413 = vmatpush1.bf16.msra.mxu0 0
      %414 = vmatprep.subr.bf16.mxu0 0
      %415 = vmatpush1.bf16.msra.mxu0 0
      %416 = vmatprep.subr.bf16.mxu0 0
      %417 = vmatpush1.bf16.msra.mxu0 0
      %418 = vmatprep.subr.bf16.mxu0 0
      %419 = vmatpush1.bf16.msra.mxu0 0
      %420 = vmatprep.subr.bf16.mxu0 0
      %421 = vmatpush1.bf16.msra.mxu0 0
      %422 = vmatprep.subr.bf16.mxu0 0
      %423 = vmatpush1.bf16.msra.mxu0 0
      %424 = vmatprep.subr.bf16.mxu0 0
      %425 = vmatpush1.bf16.msra.mxu0 0
      %426 = vmatprep.subr.bf16.mxu0 0
      %427 = vmatpush1.bf16.msra.mxu0 0
      %428 = vmatprep.subr.bf16.mxu0 0
      %429 = vmatpush1.bf16.msra.mxu0 0
      %430 = vmatprep.subr.bf16.mxu0 0
      %431 = vmatpush1.bf16.msra.mxu0 0
      %432 = vmatprep.subr.bf16.mxu0 0
      %433 = vmatpush1.bf16.msra.mxu0 0
      %434 = vmatprep.mubr.bf16.mxu0 0
      %435 = vmatmul.mubr.bf16.gmra.mrb[0].mxu0 %v393
      %v436 = vpop.f32.mrb[0].mxu0
      %v437 = vadd.f32 %v389, %v436
      %v438 = vpop.f32.mrb[0].mxu0
      %v439 = vadd.f32 %v389, %v438
      %v440 = vpop.f32.mrb[0].mxu0
      %v441 = vpop.f32.mrb[0].mxu0
      %442 = vdwg.mxu0
      %v443 = vld [vmem:[%s5] sm:$0x1]
      %v444 = vpack.c.bf16 %v437, %v437
      %v445 = vpack.c.bf16 %v439, %v439
      %v446 = vld [vmem:[%s6] sm:$0x3]
      %448 = vset.pattern.permute.xlu0 0
      %449 = vperm.xlu0 %448, %v446
      %v450 = vpop.permute.xlu0 %449
      %vm452 = vcmask 15360
      %v454 = vsel %vm452, %v443, 0
      %vm456 = vcmask 1040384
      %v458 = vsel %vm456, %v444, 0
      %v461 = vsel %vm456, %v445, 0
      %463 = vmatprep.subr.bf16.mxu0 %v461
      %464 = vmatpush1.bf16.msra.mxu0 %v458
      %465 = vmatprep.subr.bf16.mxu0 0
      %466 = vmatpush1.bf16.msra.mxu0 0
      %467 = vmatprep.subr.bf16.mxu0 0
      %468 = vmatpush1.bf16.msra.mxu0 0
      %469 = vmatprep.subr.bf16.mxu0 0
      %470 = vmatpush1.bf16.msra.mxu0 0
      %471 = vmatprep.subr.bf16.mxu0 0
      %472 = vmatpush1.bf16.msra.mxu0 0
      %473 = vmatprep.subr.bf16.mxu0 0
      %474 = vmatpush1.bf16.msra.mxu0 0
      %475 = vmatprep.subr.bf16.mxu0 0
      %476 = vmatpush1.bf16.msra.mxu0 0
      %477 = vmatprep.subr.bf16.mxu0 0
      %478 = vmatpush1.bf16.msra.mxu0 0
      %479 = vmatprep.subr.bf16.mxu0 0
      %480 = vmatpush1.bf16.msra.mxu0 0
      %481 = vmatprep.subr.bf16.mxu0 0
      %482 = vmatpush1.bf16.msra.mxu0 0
      %483 = vmatprep.subr.bf16.mxu0 0
      %484 = vmatpush1.bf16.msra.mxu0 0
      %485 = vmatprep.subr.bf16.mxu0 0
      %486 = vmatpush1.bf16.msra.mxu0 0
      %487 = vmatprep.subr.bf16.mxu0 0
      %488 = vmatpush1.bf16.msra.mxu0 0
      %489 = vmatprep.subr.bf16.mxu0 0
      %490 = vmatpush1.bf16.msra.mxu0 0
      %491 = vmatprep.subr.bf16.mxu0 0
      %492 = vmatpush1.bf16.msra.mxu0 0
      %493 = vmatprep.subr.bf16.mxu0 0
      %494 = vmatpush1.bf16.msra.mxu0 0
      %495 = vmatprep.mubr.bf16.mxu0 0
      %496 = vmatmul.mubr.bf16.gmra.mrb[0].mxu0 %v454
      %v497 = vpop.f32.mrb[0].mxu0
      %v498 = vadd.f32 %v450, %v497
      %v499 = vpop.f32.mrb[0].mxu0
      %v500 = vadd.f32 %v450, %v499
      %v501 = vpop.f32.mrb[0].mxu0
      %v502 = vpop.f32.mrb[0].mxu0
      %503 = vdwg.mxu0
      %v506 = vcombine.low %v498, %v500
      %v508 = vunpack.c.l.s4 1983009808
      %v509 = vunpack.c.0.s8 %v508
      %v510 = vlaneseq
      %v511 = vshrl.u32 %v510, 7
      %v512 = vsub.s32 %v509, %v511
      %v513 = vrot.slane %v506, %v512
      %515 = vst [vmem:[%s316] sm:$0xf] %v513
      %s516 = smul.u32 2, %s23
      %p517 = scmp.lt.s32.totalorder %s22, 1
      %s518 = scalar_select %p517, %s22, 1
      %p519 = scmp.lt.s32.totalorder %s516, 1
      %s520 = scalar_select %p519, %s516, 1
      %s521 = smul.addr %s518, 2
      %s522 = sadd.s32 %s520, %s521
      %s523 = smul.addr %s522, 2
      %s524 = scalar_lea.vmem %s7, %s523
      // Predicated region
      $region49: #{unet_forward.15} parent=47 // pred_check
        %p525 = pneg %p204
      $region50: #{unet_forward.15} parent=47 // pred_check_branch
        %527 = sbr.rel (%p525) target = $region52
      $region51: #{unet_forward.15} parent=47 // pred_region
        %s528 = smul.u32 2, %s23
      $region52: #{unet_forward.15} parent=47 // pred_fallthru
        _
    $region48: #{unet_forward.15} parent=5 // pred_fallthru
      _
    %p529 = scmp.le.s32.totalorder 2, %s13
    // Predicated region
    $region53: #{unet_forward.15} parent=5 // pred_check
      %p530 = pneg %p529
    $region54: #{unet_forward.15} parent=5 // pred_check_branch
      %532 = sbr.rel (%p530) target = $region56
    $region55: #{unet_forward.15} parent=5 // pred_region
      %s533 = ssub.s32 %s13, 2
      // Predicated region
      $region57: #{unet_forward.15} parent=55 // pred_check
        %p534 = pneg %p210
      $region58: #{unet_forward.15} parent=55 // pred_check_branch
        %536 = sbr.rel (%p534) target = $region60
      $region59: #{unet_forward.15} parent=55 // pred_region
        %s537 = smul.u32 2, %s25
        %p538 = scmp.lt.s32.totalorder %s24, 1
        %s539 = scalar_select %p538, %s24, 1
        %p540 = scmp.lt.s32.totalorder %s537, 1
        %s541 = scalar_select %p540, %s537, 1
        %s542 = smul.addr %s539, 2
        %s543 = sadd.s32 %s541, %s542
        %s544 = smul.addr %s543, 2
        %s545 = scalar_lea.vmem %s7, %s544
      $region60: #{unet_forward.15} parent=55 // pred_fallthru
        _
    $region56: #{unet_forward.15} parent=5 // pred_fallthru
      _
  $region6: #{unet_forward.15} parent=0 // loop_footer
    %s17 = sadd.s32 1, %s13
  $region7: #{unet_forward.15} parent=0 // loop_footer_branch
    %12 = sbr.rel target = $region3
  $region8: #{unet_forward.15} parent=0 // loop_exit
    _

// kernel: unet_forward.14
$region0: #{unet_forward.14}
  #allocation0 [shape = 'u32[]', space=smem, size = 0x4, offset = 0x4, fixed_abs, tag = 'smem constant byte address 0x4 - core index']
  #allocation1 [shape = 'u32[144,128]{1,0:T(1,128)}', space=vmem, size = 0x12000, scoped, tag = 'internal scratch']
  %s0 = inlined_call_operand.vmem [shape: bf16[9,256], index: 0, kind: input, shape index: {}]
  %s1 = inlined_call_operand.vmem [shape: f32[2,8,256], index: 1, kind: input, shape index: {}]
  %s2 = inlined_call_operand.vmem [shape: f32[2,8,256], index: 2, kind: input, shape index: {}]
  %s3 = inlined_call_operand.vmem [shape: bf16[8,144], index: 3, kind: input, shape index: {}]
  %s4 = inlined_call_operand.vmem [shape: bf16[8,72], index: 4, kind: input, shape index: {}]
  %s5 = inlined_call_operand.vmem [shape: f32[2,8,256], index: 5, kind: output, shape index: {}]
  %s6 = sld [smem:[#allocation0]]
  $region53: #{unet_forward.14} parent=0
    _
  %s8 = ssub.s32 1, %s6
  %s9 = scalar_select 0, %s8, %s6
  loop: start=0, step=1, limit=4
  $region2: #{unet_forward.14} parent=0 // loop_pre_header
    _
  $region3: #{unet_forward.14} parent=0 // loop_header
    %s11 = sphi 0, %s15
    %p12 = scmp.ge.s32.totalorder %s11, 4
    %s19 = sphi 0, %s19
    %s21 = sphi 0, %s19
    %s22 = sphi 0, %s21
    %s36 = sphi 0, %s22
    %s42 = sphi 0, %s44
    %s45 = sphi 0, %s42
    %s46 = sphi 0, %s45
    %s62 = sphi 0, %s46
    %s68 = sphi 0, %s70
    %s71 = sphi 0, %s68
    %s72 = sphi 0, %s71
    %s88 = sphi 0, %s72
    %s92 = sphi 0, %s92
    %s94 = sphi 0, %s92
    %s95 = sphi 0, %s94
    %s109 = sphi 0, %s95
    %s113 = sphi 0, %s113
    %s115 = sphi 0, %s113
    %s116 = sphi 0, %s115
    %s130 = sphi 0, %s116
    %s136 = sphi 0, %s138
    %s139 = sphi 0, %s136
    %s140 = sphi 0, %s139
    %s156 = sphi 0, %s140
  $region4: #{unet_forward.14} parent=0 // loop_header_branch
    %14 = sbr.rel (%p12) target = $region8
  $region5: #{unet_forward.14} parent=0 // loop_body
    %s16 = ssub.s32 %s11, 1
    %s17 = ssub.s32 %s11, 2
    %s18 = sadd.s32 %s11, 1
    %s20 = sadd.s32 %s19, 1
    %p23 = scmp.eq.s32.totalorder %s11, 1
    %p24 = scmp.ne.s32.totalorder %s19, %s21
    %p25 = scmp.eq.s32.totalorder %s11, 0
    %p26 = por %p24, %p25
    %p27 = scmp.ne.s32.totalorder %s19, %s21
    %p28 = scmp.eq.s32.totalorder %s16, 1
    %p29 = por %p27, %p28
    %p30 = scmp.ne.s32.totalorder %s21, %s22
    %p31 = scmp.eq.s32.totalorder %s16, 0
    %p32 = por %p30, %p31
    %p33 = scmp.ne.s32.totalorder %s21, %s22
    %p34 = scmp.eq.s32.totalorder %s17, 1
    %p35 = por %p33, %p34
    %p37 = scmp.ne.s32.totalorder %s22, %s36
    %p38 = scmp.eq.s32.totalorder %s17, 0
    %p39 = por %p37, %p38
    %s40 = ssub.s32 %s11, %s18
    %p41 = scmp.eq.s32.totalorder %s40, 0
    %s43 = sadd.s32 %s42, 1
    %s44 = scalar_select %p41, %s42, %s43
    %p47 = pneg %p41
    %p48 = scmp.eq.s32.totalorder %s11, 1
    %p49 = por %p47, %p48
    %p50 = scmp.ne.s32.totalorder %s42, %s45
    %p51 = scmp.eq.s32.totalorder %s11, 0
    %p52 = por %p50, %p51
    %p53 = scmp.ne.s32.totalorder %s42, %s45
    %p54 = scmp.eq.s32.totalorder %s16, 1
    %p55 = por %p53, %p54
    %p56 = scmp.ne.s32.totalorder %s45, %s46
    %p57 = scmp.eq.s32.totalorder %s16, 0
    %p58 = por %p56, %p57
    %p59 = scmp.ne.s32.totalorder %s45, %s46
    %p60 = scmp.eq.s32.totalorder %s17, 1
    %p61 = por %p59, %p60
    %p63 = scmp.ne.s32.totalorder %s46, %s62
    %p64 = scmp.eq.s32.totalorder %s17, 0
    %p65 = por %p63, %p64
    %s66 = ssub.s32 %s11, %s18
    %p67 = scmp.eq.s32.totalorder %s66, 0
    %s69 = sadd.s32 %s68, 1
    %s70 = scalar_select %p67, %s68, %s69
    %p73 = pneg %p67
    %p74 = scmp.eq.s32.totalorder %s11, 1
    %p75 = por %p73, %p74
    %p76 = scmp.ne.s32.totalorder %s68, %s71
    %p77 = scmp.eq.s32.totalorder %s11, 0
    %p78 = por %p76, %p77
    %p79 = scmp.ne.s32.totalorder %s68, %s71
    %p80 = scmp.eq.s32.totalorder %s16, 1
    %p81 = por %p79, %p80
    %p82 = scmp.ne.s32.totalorder %s71, %s72
    %p83 = scmp.eq.s32.totalorder %s16, 0
    %p84 = por %p82, %p83
    %p85 = scmp.ne.s32.totalorder %s71, %s72
    %p86 = scmp.eq.s32.totalorder %s17, 1
    %p87 = por %p85, %p86
    %p89 = scmp.ne.s32.totalorder %s72, %s88
    %p90 = scmp.eq.s32.totalorder %s17, 0
    %p91 = por %p89, %p90
    %s93 = sadd.s32 %s92, 1
    %p96 = scmp.eq.s32.totalorder %s11, 1
    %p97 = scmp.ne.s32.totalorder %s92, %s94
    %p98 = scmp.eq.s32.totalorder %s11, 0
    %p99 = por %p97, %p98
    %p100 = scmp.ne.s32.totalorder %s92, %s94
    %p101 = scmp.eq.s32.totalorder %s16, 1
    %p102 = por %p100, %p101
    %p103 = scmp.ne.s32.totalorder %s94, %s95
    %p104 = scmp.eq.s32.totalorder %s16, 0
    %p105 = por %p103, %p104
    %p106 = scmp.ne.s32.totalorder %s94, %s95
    %p107 = scmp.eq.s32.totalorder %s17, 1
    %p108 = por %p106, %p107
    %p110 = scmp.ne.s32.totalorder %s95, %s109
    %p111 = scmp.eq.s32.totalorder %s17, 0
    %p112 = por %p110, %p111
    %s114 = sadd.s32 %s113, 1
    %p117 = scmp.eq.s32.totalorder %s11, 1
    %p118 = scmp.ne.s32.totalorder %s113, %s115
    %p119 = scmp.eq.s32.totalorder %s11, 0
    %p120 = por %p118, %p119
    %p121 = scmp.ne.s32.totalorder %s113, %s115
    %p122 = scmp.eq.s32.totalorder %s16, 1
    %p123 = por %p121, %p122
    %p124 = scmp.ne.s32.totalorder %s115, %s116
    %p125 = scmp.eq.s32.totalorder %s16, 0
    %p126 = por %p124, %p125
    %p127 = scmp.ne.s32.totalorder %s115, %s116
    %p128 = scmp.eq.s32.totalorder %s17, 1
    %p129 = por %p127, %p128
    %p131 = scmp.ne.s32.totalorder %s116, %s130
    %p132 = scmp.eq.s32.totalorder %s17, 0
    %p133 = por %p131, %p132
    %s134 = ssub.s32 %s11, %s18
    %p135 = scmp.eq.s32.totalorder %s134, 0
    %s137 = sadd.s32 %s136, 1
    %s138 = scalar_select %p135, %s136, %s137
    %p141 = pneg %p135
    %p142 = scmp.eq.s32.totalorder %s11, 1
    %p143 = por %p141, %p142
    %p144 = scmp.ne.s32.totalorder %s136, %s139
    %p145 = scmp.eq.s32.totalorder %s11, 0
    %p146 = por %p144, %p145
    %p147 = scmp.ne.s32.totalorder %s136, %s139
    %p148 = scmp.eq.s32.totalorder %s16, 1
    %p149 = por %p147, %p148
    %p150 = scmp.ne.s32.totalorder %s139, %s140
    %p151 = scmp.eq.s32.totalorder %s16, 0
    %p152 = por %p150, %p151
    %p153 = scmp.ne.s32.totalorder %s139, %s140
    %p154 = scmp.eq.s32.totalorder %s17, 1
    %p155 = por %p153, %p154
    %p157 = scmp.ne.s32.totalorder %s140, %s156
    %p158 = scmp.eq.s32.totalorder %s17, 0
    %p159 = por %p157, %p158
    %p160 = scmp.le.s32.totalorder 1, %s11
    %p161 = scmp.lt.s32.totalorder %s11, 3
    %p162 = pnand %p160, %p161
    %p163 = pneg %p162
    // Predicated region
    $region9: #{unet_forward.14} parent=5 // pred_check
      _
    $region10: #{unet_forward.14} parent=5 // pred_check_branch
      %165 = sbr.rel (%p162) target = $region12
    $region11: #{unet_forward.14} parent=5 // pred_region
      %s166 = ssub.s32 %s11, 1
      // Predicated region
      $region13: #{unet_forward.14} parent=11 // pred_check
        %p167 = pneg %p32
      $region14: #{unet_forward.14} parent=11 // pred_check_branch
        %169 = sbr.rel (%p167) target = $region16
      $region15: #{unet_forward.14} parent=11 // pred_region
        _
      $region16: #{unet_forward.14} parent=11 // pred_fallthru
        _
      // Predicated region
      $region17: #{unet_forward.14} parent=11 // pred_check
        %p170 = pneg %p105
      $region18: #{unet_forward.14} parent=11 // pred_check_branch
        %172 = sbr.rel (%p170) target = $region20
      $region19: #{unet_forward.14} parent=11 // pred_region
        _
      $region20: #{unet_forward.14} parent=11 // pred_fallthru
        _
      // Predicated region
      $region21: #{unet_forward.14} parent=11 // pred_check
        %p173 = pneg %p126
      $region22: #{unet_forward.14} parent=11 // pred_check_branch
        %175 = sbr.rel (%p173) target = $region24
      $region23: #{unet_forward.14} parent=11 // pred_region
        _
      $region24: #{unet_forward.14} parent=11 // pred_fallthru
        _
    $region12: #{unet_forward.14} parent=5 // pred_fallthru
      _
    %p176 = scmp.lt.s32.totalorder %s11, 2
    // Predicated region
    $region25: #{unet_forward.14} parent=5 // pred_check
      %p177 = pneg %p176
    $region26: #{unet_forward.14} parent=5 // pred_check_branch
      %179 = sbr.rel (%p177) target = $region28
    $region27: #{unet_forward.14} parent=5 // pred_region
      // Predicated region
      $region29: #{unet_forward.14} parent=27 // pred_check
        %p180 = pneg %p52
      $region30: #{unet_forward.14} parent=27 // pred_check_branch
        %182 = sbr.rel (%p180) target = $region32
      $region31: #{unet_forward.14} parent=27 // pred_region
        %p183 = scmp.lt.s32.totalorder %s11, 1
        %s184 = scalar_select %p183, %s11, 1
        %s185 = smul.addr %s184, 2
        %s186 = smul.addr %s185, 8
        %s187 = scalar_lea.vmem %s1, %s186
      $region32: #{unet_forward.14} parent=27 // pred_fallthru
        _
      // Predicated region
      $region33: #{unet_forward.14} parent=27 // pred_check
        %p188 = pneg %p78
      $region34: #{unet_forward.14} parent=27 // pred_check_branch
        %190 = sbr.rel (%p188) target = $region36
      $region35: #{unet_forward.14} parent=27 // pred_region
        %p191 = scmp.lt.s32.totalorder %s11, 1
        %s192 = scalar_select %p191, %s11, 1
        %s193 = smul.addr %s192, 2
        %s194 = smul.addr %s193, 8
        %s195 = scalar_lea.vmem %s2, %s194
      $region36: #{unet_forward.14} parent=27 // pred_fallthru
        _
    $region28: #{unet_forward.14} parent=5 // pred_fallthru
      _
    %p196 = scmp.le.s32.totalorder 1, %s11
    %p197 = scmp.lt.s32.totalorder %s11, 3
    %p198 = pnand %p196, %p197
    %p199 = pneg %p198
    // Predicated region
    $region37: #{unet_forward.14} parent=5 // pred_check
      _
    $region38: #{unet_forward.14} parent=5 // pred_check_branch
      %201 = sbr.rel (%p198) target = $region40
    $region39: #{unet_forward.14} parent=5 // pred_region
      %s202 = ssub.s32 %s11, 1
      %p203 = pneg %p32
      %p204 = pneg %p29
      %p205 = scmp.lt.s32.totalorder %s16, 1
      %s206 = scalar_select %p205, %s16, 1
      %s207 = smul.addr %s206, 2
      %s208 = smul.addr %s207, 8
      %s209 = scalar_lea.vmem %s1, %s208
      %p210 = pneg %p58
      %p211 = pneg %p55
      %p212 = scmp.lt.s32.totalorder %s16, 1
      %s213 = scalar_select %p212, %s16, 1
      %s214 = smul.addr %s213, 2
      %s215 = smul.addr %s214, 8
      %s216 = scalar_lea.vmem %s2, %s215
      %p217 = pneg %p84
      %p218 = pneg %p81
      %p219 = pneg %p105
      %p220 = pneg %p102
      %p221 = pneg %p126
      %p222 = pneg %p123
      %p223 = pneg %p152
      %p224 = pneg %p149
      %p225 = scmp.lt.s32.totalorder %s16, 1
      %s226 = scalar_select %p225, %s16, 1
      %s227 = smul.addr %s226, 2
      %s228 = smul.addr %s227, 8
      %s229 = scalar_lea.vmem %s5, %s228
      %p230 = scmp.lt.s32.totalorder %s16, 1
      %s231 = scalar_select %p230, %s16, 1
      %s232 = smul.addr %s231, 2
      %s233 = smul.addr %s232, 8
      %s234 = scalar_lea.vmem %s1, %s233
      %p235 = scmp.lt.s32.totalorder %s16, 1
      %s236 = scalar_select %p235, %s16, 1
      %s237 = smul.addr %s236, 2
      %s238 = smul.addr %s237, 8
      %s239 = scalar_lea.vmem %s2, %s238
      %p240 = scmp.lt.s32.totalorder %s16, 1
      %s241 = scalar_select %p240, %s16, 1
      %s242 = smul.addr %s241, 2
      %s243 = smul.addr %s242, 8
      %s244 = scalar_lea.vmem %s5, %s243
      %v246 = vld [vmem:[%s234] sm:$0xff]
      %v247 = vld [vmem:[%s234 + $0x8] sm:$0xff]
      %v248 = vpack.c.bf16 %v246, %v246
      %v249 = vpack.c.bf16 %v247, %v247
      %251 = vrot.lane.b32.xlu0 %v249, 17
      %v252 = vpop.permute.xlu0 %251
      %254 = vrot.lane.b32.xlu0 %v248, 17
      %v255 = vpop.permute.xlu0 %254
      %vm256 = vcmask 138240
      %v257 = vsel %vm256, %v255, %v252
      %vm259 = vcmask 138240
      %v262 = vsel %vm259, %v252, %v255
      %v264 = vld [vmem:[%s0] sm:$0x11]
      %v266 = vunpack.c.l.b16 %v264
      %v267 = vunpack.c.h.b16 %v264
      %v268 = vpack.c.b16 %v266, %v266
      %v269 = vpack.c.b16 %v267, %v267
      %v271 = vpack.i.b16 %v268, %v268
      %v273 = vlaneseq
      %v274 = vshrl.u32 %v273, 7
      %v275 = vsub.s32 0, %v274
      %v276 = vrot.slane %v271, %v275
      %v278 = vpack.i.b16 %v269, %v269
      %v280 = vlaneseq
      %v281 = vshrl.u32 %v280, 7
      %v282 = vsub.s32 0, %v281
      %v283 = vrot.slane %v278, %v282
      %v284 = vmul.bf16 %v262, %v276
      %v285 = vmul.bf16 %v257, %v283
      %286 = vrot.lane.b32.xlu0 %v249, 16
      %v287 = vpop.permute.xlu0 %286
      %288 = vrot.lane.b32.xlu0 %v248, 16
      %v289 = vpop.permute.xlu0 %288
      %vm290 = vcmask 130048
      %v291 = vsel %vm290, %v289, %v287
      %vm293 = vcmask 130048
      %v296 = vsel %vm293, %v287, %v289
      %v298 = vshrl.u32 %v268, 16
      %v299 = vpack.i.b16 %v298, %v298
      %v301 = vlaneseq
      %v302 = vshrl.u32 %v301, 7
      %v303 = vsub.s32 0, %v302
      %v304 = vrot.slane %v299, %v303
      %v305 = vshrl.u32 %v269, 16
      %v306 = vpack.i.b16 %v305, %v305
      %v308 = vlaneseq
      %v309 = vshrl.u32 %v308, 7
      %v310 = vsub.s32 0, %v309
      %v311 = vrot.slane %v306, %v310
      %v312 = vmul.bf16 %v296, %v304
      %v313 = vmul.bf16 %v291, %v311
      %314 = vrot.lane.b32.xlu0 %v249, 15
      %v315 = vpop.permute.xlu0 %314
      %316 = vrot.lane.b32.xlu0 %v248, 15
      %v317 = vpop.permute.xlu0 %316
      %vm318 = vcmask 121856
      %v319 = vsel %vm318, %v317, %v315
      %vm321 = vcmask 121856
      %v324 = vsel %vm321, %v315, %v317
      %v326 = vld [vmem:[%s0] sm:$0x22]
      %v328 = vunpack.c.l.b16 %v326
      %v329 = vunpack.c.h.b16 %v326
      %v330 = vpack.c.b16 %v328, %v328
      %v331 = vpack.c.b16 %v329, %v329
      %v333 = vpack.i.b16 %v330, %v330
      %v335 = vlaneseq
      %v336 = vshrl.u32 %v335, 7
      %v337 = vsub.s32 1, %v336
      %v338 = vrot.slane %v333, %v337
      %v340 = vpack.i.b16 %v331, %v331
      %v342 = vlaneseq
      %v343 = vshrl.u32 %v342, 7
      %v344 = vsub.s32 1, %v343
      %v345 = vrot.slane %v340, %v344
      %v346 = vmul.bf16 %v324, %v338
      %v347 = vmul.bf16 %v319, %v345
      %348 = vrot.lane.b32.xlu0 %v249, 1
      %v349 = vpop.permute.xlu0 %348
      %350 = vrot.lane.b32.xlu0 %v248, 1
      %v351 = vpop.permute.xlu0 %350
      %vm352 = vcmask 7168
      %v353 = vsel %vm352, %v351, %v349
      %vm355 = vcmask 7168
      %v358 = vsel %vm355, %v349, %v351
      %v360 = vshrl.u32 %v330, 16
      %v361 = vpack.i.b16 %v360, %v360
      %v363 = vlaneseq
      %v364 = vshrl.u32 %v363, 7
      %v365 = vsub.s32 1, %v364
      %v366 = vrot.slane %v361, %v365
      %v367 = vshrl.u32 %v331, 16
      %v368 = vpack.i.b16 %v367, %v367
      %v370 = vlaneseq
      %v371 = vshrl.u32 %v370, 7
      %v372 = vsub.s32 1, %v371
      %v373 = vrot.slane %v368, %v372
      %v374 = vmul.bf16 %v358, %v366
      %v375 = vmul.bf16 %v353, %v373
      %376 = vrot.lane.b32.xlu0 %v248, 127
      %v377 = vpop.permute.xlu0 %376
      %378 = vrot.lane.b32.xlu0 %v249, 127
      %v379 = vpop.permute.xlu0 %378
      %vm380 = vcmask 1039360
      %v381 = vsel %vm380, %v377, %v379
      %vm383 = vcmask 1039360
      %v386 = vsel %vm383, %v379, %v377
      %v388 = vld [vmem:[%s0] sm:$0x44]
      %v390 = vunpack.c.l.b16 %v388
      %v391 = vunpack.c.h.b16 %v388
      %v392 = vpack.c.b16 %v390, %v390
      %v393 = vpack.c.b16 %v391, %v391
      %v395 = vshrl.u32 %v392, 16
      %v396 = vpack.i.b16 %v395, %v395
      %v398 = vlaneseq
      %v399 = vshrl.u32 %v398, 7
      %v400 = vsub.s32 2, %v399
      %v401 = vrot.slane %v396, %v400
      %v403 = vshrl.u32 %v393, 16
      %v404 = vpack.i.b16 %v403, %v403
      %v406 = vlaneseq
      %v407 = vshrl.u32 %v406, 7
      %v408 = vsub.s32 2, %v407
      %v409 = vrot.slane %v404, %v408
      %v410 = vmul.bf16 %v381, %v401
      %v411 = vmul.bf16 %v386, %v409
      %412 = vrot.lane.b32.xlu0 %v248, 113
      %v413 = vpop.permute.xlu0 %412
      %414 = vrot.lane.b32.xlu0 %v249, 113
      %v415 = vpop.permute.xlu0 %414
      %vm416 = vcmask 924672
      %v417 = vsel %vm416, %v413, %v415
      %vm419 = vcmask 924672
      %v422 = vsel %vm419, %v415, %v413
      %v424 = vld [vmem:[%s0] sm:$0x88]
      %v426 = vunpack.c.l.b16 %v424
      %v427 = vunpack.c.h.b16 %v424
      %v428 = vpack.c.b16 %v426, %v426
      %v429 = vpack.c.b16 %v427, %v427
      %v431 = vpack.i.b16 %v428, %v428
      %v433 = vlaneseq
      %v434 = vshrl.u32 %v433, 7
      %v435 = vsub.s32 3, %v434
      %v436 = vrot.slane %v431, %v435
      %v438 = vpack.i.b16 %v429, %v429
      %v440 = vlaneseq
      %v441 = vshrl.u32 %v440, 7
      %v442 = vsub.s32 3, %v441
      %v443 = vrot.slane %v438, %v442
      %v444 = vmul.bf16 %v417, %v436
      %v445 = vmul.bf16 %v422, %v443
      %446 = vrot.lane.b32.xlu0 %v248, 112
      %v447 = vpop.permute.xlu0 %446
      %448 = vrot.lane.b32.xlu0 %v249, 112
      %v449 = vpop.permute.xlu0 %448
      %vm450 = vcmask 916480
      %v451 = vsel %vm450, %v447, %v449
      %vm453 = vcmask 916480
      %v456 = vsel %vm453, %v449, %v447
      %v458 = vshrl.u32 %v428, 16
      %v459 = vpack.i.b16 %v458, %v458
      %v461 = vlaneseq
      %v462 = vshrl.u32 %v461, 7
      %v463 = vsub.s32 3, %v462
      %v464 = vrot.slane %v459, %v463
      %v465 = vshrl.u32 %v429, 16
      %v466 = vpack.i.b16 %v465, %v465
      %v468 = vlaneseq
      %v469 = vshrl.u32 %v468, 7
      %v470 = vsub.s32 3, %v469
      %v471 = vrot.slane %v466, %v470
      %v472 = vmul.bf16 %v451, %v464
      %v473 = vmul.bf16 %v456, %v471
      %474 = vrot.lane.b32.xlu0 %v248, 111
      %v475 = vpop.permute.xlu0 %474
      %476 = vrot.lane.b32.xlu0 %v249, 111
      %v477 = vpop.permute.xlu0 %476
      %vm478 = vcmask 908288
      %v479 = vsel %vm478, %v475, %v477
      %vm481 = vcmask 908288
      %v484 = vsel %vm481, %v477, %v475
      %v486 = vld [vmem:[%s0 + $0x8] sm:$0x11]
      %v488 = vunpack.c.l.b16 %v486
      %v489 = vunpack.c.h.b16 %v486
      %v490 = vpack.c.b16 %v488, %v488
      %v491 = vpack.c.b16 %v489, %v489
      %v493 = vpack.i.b16 %v490, %v490
      %v495 = vlaneseq
      %v496 = vshrl.u32 %v495, 7
      %v497 = vsub.s32 0, %v496
      %v498 = vrot.slane %v493, %v497
      %v500 = vpack.i.b16 %v491, %v491
      %v502 = vlaneseq
      %v503 = vshrl.u32 %v502, 7
      %v504 = vsub.s32 0, %v503
      %v505 = vrot.slane %v500, %v504
      %v506 = vmul.bf16 %v479, %v498
      %v507 = vmul.bf16 %v484, %v505
      %v508 = vld [vmem:[%s239] sm:$0xff]
      %v509 = vld [vmem:[%s239 + $0x8] sm:$0xff]
      %v510 = vpack.c.bf16 %v508, %v508
      %v511 = vpack.c.bf16 %v509, %v509
      %513 = vrot.lane.b32.xlu0 %v511, 17
      %v514 = vpop.permute.xlu0 %513
      %516 = vrot.lane.b32.xlu0 %v510, 17
      %v517 = vpop.permute.xlu0 %516
      %v518 = vsel %vm256, %v517, %v514
      %v522 = vsel %vm259, %v514, %v517
      %v524 = vmul.bf16 %v522, %v276
      %v525 = vmul.bf16 %v518, %v283
      %526 = vrot.lane.b32.xlu0 %v511, 16
      %v527 = vpop.permute.xlu0 %526
      %528 = vrot.lane.b32.xlu0 %v510, 16
      %v529 = vpop.permute.xlu0 %528
      %v530 = vsel %vm290, %v529, %v527
      %v534 = vsel %vm293, %v527, %v529
      %v536 = vmul.bf16 %v534, %v304
      %v537 = vmul.bf16 %v530, %v311
      %538 = vrot.lane.b32.xlu0 %v511, 15
      %v539 = vpop.permute.xlu0 %538
      %540 = vrot.lane.b32.xlu0 %v510, 15
      %v541 = vpop.permute.xlu0 %540
      %v542 = vsel %vm318, %v541, %v539
      %v546 = vsel %vm321, %v539, %v541
      %v548 = vmul.bf16 %v546, %v338
      %v549 = vmul.bf16 %v542, %v345
      %550 = vrot.lane.b32.xlu0 %v511, 1
      %v551 = vpop.permute.xlu0 %550
      %552 = vrot.lane.b32.xlu0 %v510, 1
      %v553 = vpop.permute.xlu0 %552
      %v554 = vsel %vm352, %v553, %v551
      %v558 = vsel %vm355, %v551, %v553
      %v560 = vmul.bf16 %v558, %v366
      %v561 = vmul.bf16 %v554, %v373
      %562 = vrot.lane.b32.xlu0 %v510, 127
      %v563 = vpop.permute.xlu0 %562
      %564 = vrot.lane.b32.xlu0 %v511, 127
      %v565 = vpop.permute.xlu0 %564
      %v566 = vsel %vm380, %v563, %v565
      %v570 = vsel %vm383, %v565, %v563
      %v572 = vmul.bf16 %v566, %v401
      %v573 = vmul.bf16 %v570, %v409
      %574 = vrot.lane.b32.xlu0 %v510, 113
      %v575 = vpop.permute.xlu0 %574
      %576 = vrot.lane.b32.xlu0 %v511, 113
      %v577 = vpop.permute.xlu0 %576
      %v578 = vsel %vm416, %v575, %v577
      %v582 = vsel %vm419, %v577, %v575
      %v584 = vmul.bf16 %v578, %v436
      %v585 = vmul.bf16 %v582, %v443
      %586 = vrot.lane.b32.xlu0 %v510, 112
      %v587 = vpop.permute.xlu0 %586
      %588 = vrot.lane.b32.xlu0 %v511, 112
      %v589 = vpop.permute.xlu0 %588
      %v590 = vsel %vm450, %v587, %v589
      %v594 = vsel %vm453, %v589, %v587
      %v596 = vmul.bf16 %v590, %v464
      %v597 = vmul.bf16 %v594, %v471
      %598 = vrot.lane.b32.xlu0 %v510, 111
      %v599 = vpop.permute.xlu0 %598
      %600 = vrot.lane.b32.xlu0 %v511, 111
      %v601 = vpop.permute.xlu0 %600
      %v602 = vsel %vm478, %v599, %v601
      %v606 = vsel %vm481, %v601, %v599
      %v608 = vmul.bf16 %v602, %v498
      %v609 = vmul.bf16 %v606, %v505
      %v612 = vrot.slane %v312, 4
      %v613 = vrot.slane %v313, 4
      %v616 = vrot.slane %v374, 4
      %v617 = vrot.slane %v375, 4
      %v620 = vrot.slane %v410, 4
      %v621 = vrot.slane %v411, 4
      %v624 = vrot.slane %v472, 4
      %v625 = vrot.slane %v473, 4
      %v628 = vrot.slane %v524, 4
      %v629 = vrot.slane %v525, 4
      %v632 = vrot.slane %v548, 4
      %v633 = vrot.slane %v549, 4
      %v634 = vrot.slane %v510, 4
      %v635 = vrot.slane %v511, 4
      %v638 = vrot.slane %v584, 4
      %v639 = vrot.slane %v585, 4
      %vm640 = vcmask 1043456
      %v643 = vsel %vm640, %v284, %v612
      %v647 = vsel %vm640, %v285, %v613
      %v651 = vsel %vm640, %v346, %v616
      %v655 = vsel %vm640, %v347, %v617
      %v659 = vsel %vm640, %v248, %v620
      %v663 = vsel %vm640, %v249, %v621
      %v667 = vsel %vm640, %v444, %v624
      %v671 = vsel %vm640, %v445, %v625
      %v675 = vsel %vm640, %v506, %v628
      %v679 = vsel %vm640, %v507, %v629
      %v683 = vsel %vm640, %v536, %v632
      %v687 = vsel %vm640, %v537, %v633
      %v691 = vsel %vm640, %v560, %v634
      %v695 = vsel %vm640, %v561, %v635
      %v699 = vsel %vm640, %v572, %v638
      %v703 = vsel %vm640, %v573, %v639
      %v707 = vrot.slane %v608, 4
      %v708 = vrot.slane %v609, 4
      %v711 = vsel %vm640, %v596, %v707
      %v715 = vsel %vm640, %v597, %v708
      %v717 = vld [vmem:[%s3] sm:$0xff]
      %v719 = vunpack.c.l.b16 %v717
      %v720 = vunpack.c.h.b16 %v717
      %v721 = vpack.c.b16 %v719, %v719
      %v722 = vpack.c.b16 %v720, %v720
      %v725 = vsel %vm293, %v722, 0
      %727 = vmatprep.subr.bf16.mxu0 %v647
      %728 = vmatpush1.bf16.msra.mxu0 %v643
      %729 = vmatprep.subr.bf16.mxu0 %v655
      %730 = vmatpush1.bf16.msra.mxu0 %v651
      %731 = vmatprep.subr.bf16.mxu0 %v663
      %732 = vmatpush1.bf16.msra.mxu0 %v659
      %733 = vmatprep.subr.bf16.mxu0 %v671
      %734 = vmatpush1.bf16.msra.mxu0 %v667
      %735 = vmatprep.subr.bf16.mxu0 %v679
      %736 = vmatpush1.bf16.msra.mxu0 %v675
      %737 = vmatprep.subr.bf16.mxu0 %v687
      %738 = vmatpush1.bf16.msra.mxu0 %v683
      %739 = vmatprep.subr.bf16.mxu0 %v695
      %740 = vmatpush1.bf16.msra.mxu0 %v691
      %741 = vmatprep.subr.bf16.mxu0 %v703
      %742 = vmatpush1.bf16.msra.mxu0 %v699
      %743 = vmatprep.subr.bf16.mxu0 %v715
      %744 = vmatpush1.bf16.msra.mxu0 %v711
      %745 = vmatprep.subr.bf16.mxu0 0
      %746 = vmatpush1.bf16.msra.mxu0 0
      %747 = vmatprep.subr.bf16.mxu0 0
      %748 = vmatpush1.bf16.msra.mxu0 0
      %749 = vmatprep.subr.bf16.mxu0 0
      %750 = vmatpush1.bf16.msra.mxu0 0
      %751 = vmatprep.subr.bf16.mxu0 0
      %752 = vmatpush1.bf16.msra.mxu0 0
      %753 = vmatprep.subr.bf16.mxu0 0
      %754 = vmatpush1.bf16.msra.mxu0 0
      %755 = vmatprep.subr.bf16.mxu0 0
      %756 = vmatpush1.bf16.msra.mxu0 0
      %757 = vmatprep.subr.bf16.mxu0 0
      %758 = vmatpush1.bf16.msra.mxu0 0
      %759 = vmatprep.mubr.bf16.mxu0 %v725
      %760 = vmatmul.mubr.bf16.gmra.mrb[0].mxu0 %v721
      %v761 = vpop.f32.mrb[0].mxu0
      %v762 = vadd.f32 0.0, %v761
      %v763 = vpop.f32.mrb[0].mxu0
      %v764 = vadd.f32 0.0, %v763
      %v765 = vpop.f32.mrb[0].mxu0
      %v766 = vpop.f32.mrb[0].mxu0
      %767 = vdwg.mxu0
      %v768 = vadd.f32 %v762, %v764
      %769 = vadd.xlane.f32.xlu0 %v768
      %v770 = vpop.xlane.xlu0 %769
      %v771 = vmul.f32 %v762, %v762
      %v772 = vmul.f32 %v764, %v764
      %v773 = vadd.f32 %v771, %v772
      %774 = vadd.xlane.f32.xlu0 %v773
      %v775 = vpop.xlane.xlu0 %774
      %v776 = vmul.f32 %v770, 0.00390625
      %v777 = vmul.f32 %v775, 0.00390625
      %v778 = vmul.f32 %v776, %v776
      %v779 = vsub.f32 %v777, %v778
      %v780 = vmax.f32 %v779, 0.0
      %v781 = vadd.f32 %v780, 1e-05
      %v782 = vrsqrt.pop %v781
      %v783 = vsub.f32 0.0, %v776
      %v784 = vmul.f32 %v783, %v782
      %v785 = vmul.f32 %v762, %v782
      %v786 = vmul.f32 %v764, %v782
      %v787 = vadd.f32 %v785, %v784
      %v788 = vadd.f32 %v786, %v784
      %v789 = vmax.f32 %v787, 0.0
      %v790 = vmax.f32 %v788, 0.0
      %v791 = vpack.c.bf16 %v789, %v789
      %v792 = vpack.c.bf16 %v790, %v790
      %794 = vrot.lane.b32.xlu0 %v792, 17
      %v795 = vpop.permute.xlu0 %794
      %797 = vrot.lane.b32.xlu0 %v791, 17
      %v798 = vpop.permute.xlu0 %797
      %v799 = vsel %vm256, %v798, %v795
      %v803 = vsel %vm259, %v795, %v798
      %v805 = vmul.bf16 %v803, %v276
      %v806 = vmul.bf16 %v799, %v283
      %807 = vrot.lane.b32.xlu0 %v792, 16
      %v808 = vpop.permute.xlu0 %807
      %809 = vrot.lane.b32.xlu0 %v791, 16
      %v810 = vpop.permute.xlu0 %809
      %v811 = vsel %vm290, %v810, %v808
      %v815 = vsel %vm293, %v808, %v810
      %v817 = vmul.bf16 %v815, %v304
      %v818 = vmul.bf16 %v811, %v311
      %819 = vrot.lane.b32.xlu0 %v792, 15
      %v820 = vpop.permute.xlu0 %819
      %821 = vrot.lane.b32.xlu0 %v791, 15
      %v822 = vpop.permute.xlu0 %821
      %v823 = vsel %vm318, %v822, %v820
      %v827 = vsel %vm321, %v820, %v822
      %v829 = vmul.bf16 %v827, %v338
      %v830 = vmul.bf16 %v823, %v345
      %831 = vrot.lane.b32.xlu0 %v792, 1
      %v832 = vpop.permute.xlu0 %831
      %833 = vrot.lane.b32.xlu0 %v791, 1
      %v834 = vpop.permute.xlu0 %833
      %v835 = vsel %vm352, %v834, %v832
      %v839 = vsel %vm355, %v832, %v834
      %v841 = vmul.bf16 %v839, %v366
      %v842 = vmul.bf16 %v835, %v373
      %843 = vrot.lane.b32.xlu0 %v791, 127
      %v844 = vpop.permute.xlu0 %843
      %845 = vrot.lane.b32.xlu0 %v792, 127
      %v846 = vpop.permute.xlu0 %845
      %v847 = vsel %vm380, %v844, %v846
      %v851 = vsel %vm383, %v846, %v844
      %v853 = vmul.bf16 %v847, %v401
      %v854 = vmul.bf16 %v851, %v409
      %855 = vrot.lane.b32.xlu0 %v791, 113
      %v856 = vpop.permute.xlu0 %855
      %857 = vrot.lane.b32.xlu0 %v792, 113
      %v858 = vpop.permute.xlu0 %857
      %v859 = vsel %vm416, %v856, %v858
      %v863 = vsel %vm419, %v858, %v856
      %v865 = vmul.bf16 %v859, %v436
      %v866 = vmul.bf16 %v863, %v443
      %867 = vrot.lane.b32.xlu0 %v791, 112
      %v868 = vpop.permute.xlu0 %867
      %869 = vrot.lane.b32.xlu0 %v792, 112
      %v870 = vpop.permute.xlu0 %869
      %v871 = vsel %vm450, %v868, %v870
      %v875 = vsel %vm453, %v870, %v868
      %v877 = vmul.bf16 %v871, %v464
      %v878 = vmul.bf16 %v875, %v471
      %879 = vrot.lane.b32.xlu0 %v791, 111
      %v880 = vpop.permute.xlu0 %879
      %881 = vrot.lane.b32.xlu0 %v792, 111
      %v882 = vpop.permute.xlu0 %881
      %v883 = vsel %vm478, %v880, %v882
      %v887 = vsel %vm481, %v882, %v880
      %v889 = vmul.bf16 %v883, %v498
      %v890 = vmul.bf16 %v887, %v505
      %v893 = vrot.slane %v817, 4
      %v894 = vrot.slane %v818, 4
      %v897 = vrot.slane %v841, 4
      %v898 = vrot.slane %v842, 4
      %v901 = vrot.slane %v853, 4
      %v902 = vrot.slane %v854, 4
      %v905 = vrot.slane %v877, 4
      %v906 = vrot.slane %v878, 4
      %v909 = vsel %vm640, %v805, %v893
      %v913 = vsel %vm640, %v806, %v894
      %v917 = vsel %vm640, %v829, %v897
      %v921 = vsel %vm640, %v830, %v898
      %v925 = vsel %vm640, %v791, %v901
      %v929 = vsel %vm640, %v792, %v902
      %v933 = vsel %vm640, %v865, %v905
      %v937 = vsel %vm640, %v866, %v906
      %v939 = vld [vmem:[%s4] sm:$0xf]
      %vm940 = vcmask 588800
      %v942 = vsel %vm940, %v939, 0
      %v945 = vsel %vm640, %v889, 0
      %v948 = vsel %vm640, %v890, 0
      %950 = vmatprep.subr.bf16.mxu0 %v913
      %951 = vmatpush1.bf16.msra.mxu0 %v909
      %952 = vmatprep.subr.bf16.mxu0 %v921
      %953 = vmatpush1.bf16.msra.mxu0 %v917
      %954 = vmatprep.subr.bf16.mxu0 %v929
      %955 = vmatpush1.bf16.msra.mxu0 %v925
      %956 = vmatprep.subr.bf16.mxu0 %v937
      %957 = vmatpush1.bf16.msra.mxu0 %v933
      %958 = vmatprep.subr.bf16.mxu0 %v948
      %959 = vmatpush1.bf16.msra.mxu0 %v945
      %960 = vmatprep.subr.bf16.mxu0 0
      %961 = vmatpush1.bf16.msra.mxu0 0
      %962 = vmatprep.subr.bf16.mxu0 0
      %963 = vmatpush1.bf16.msra.mxu0 0
      %964 = vmatprep.subr.bf16.mxu0 0
      %965 = vmatpush1.bf16.msra.mxu0 0
      %966 = vmatprep.subr.bf16.mxu0 0
      %967 = vmatpush1.bf16.msra.mxu0 0
      %968 = vmatprep.subr.bf16.mxu0 0
      %969 = vmatpush1.bf16.msra.mxu0 0
      %970 = vmatprep.subr.bf16.mxu0 0
      %971 = vmatpush1.bf16.msra.mxu0 0
      %972 = vmatprep.subr.bf16.mxu0 0
      %973 = vmatpush1.bf16.msra.mxu0 0
      %974 = vmatprep.subr.bf16.mxu0 0
      %975 = vmatpush1.bf16.msra.mxu0 0
      %976 = vmatprep.subr.bf16.mxu0 0
      %977 = vmatpush1.bf16.msra.mxu0 0
      %978 = vmatprep.subr.bf16.mxu0 0
      %979 = vmatpush1.bf16.msra.mxu0 0
      %980 = vmatprep.subr.bf16.mxu0 0
      %981 = vmatpush1.bf16.msra.mxu0 0
      %982 = vmatprep.mubr.bf16.mxu0 0
      %983 = vmatmul.mubr.bf16.gmra.mrb[0].mxu0 %v942
      %v984 = vpop.f32.mrb[0].mxu0
      %v985 = vadd.f32 0.0, %v984
      %v986 = vpop.f32.mrb[0].mxu0
      %v987 = vadd.f32 0.0, %v986
      %v988 = vpop.f32.mrb[0].mxu0
      %v989 = vpop.f32.mrb[0].mxu0
      %990 = vdwg.mxu0
      %v991 = vadd.f32 %v985, %v987
      %992 = vadd.xlane.f32.xlu0 %v991
      %v993 = vpop.xlane.xlu0 %992
      %v994 = vmul.f32 %v985, %v985
      %v995 = vmul.f32 %v987, %v987
      %v996 = vadd.f32 %v994, %v995
      %997 = vadd.xlane.f32.xlu0 %v996
      %v998 = vpop.xlane.xlu0 %997
      %v999 = vmul.f32 %v993, 0.00390625
      %v1000 = vmul.f32 %v998, 0.00390625
      %v1001 = vmul.f32 %v999, %v999
      %v1002 = vsub.f32 %v1000, %v1001
      %v1003 = vmax.f32 %v1002, 0.0
      %v1004 = vadd.f32 %v1003, 1e-05
      %v1005 = vrsqrt.pop %v1004
      %v1006 = vsub.f32 0.0, %v999
      %v1007 = vmul.f32 %v1006, %v1005
      %v1008 = vmul.f32 %v985, %v1005
      %v1009 = vmul.f32 %v987, %v1005
      %v1010 = vadd.f32 %v1008, %v1007
      %v1011 = vadd.f32 %v1009, %v1007
      %v1012 = vmax.f32 %v1010, 0.0
      %v1013 = vmax.f32 %v1011, 0.0
      %1014 = vst [vmem:[%s244] sm:$0xff] %v1012
      %1015 = vst [vmem:[%s244 + $0x8] sm:$0xff] %v1013
      %p1016 = scmp.lt.s32.totalorder %s16, 1
      %s1017 = scalar_select %p1016, %s16, 1
      %s1018 = smul.addr %s1017, 2
      %s1019 = smul.addr %s1018, 8
      %s1020 = scalar_lea.vmem %s5, %s1019
      // Predicated region
      $region41: #{unet_forward.14} parent=39 // pred_check
        %p1021 = pneg %p149
      $region42: #{unet_forward.14} parent=39 // pred_check_branch
        %1023 = sbr.rel (%p1021) target = $region44
      $region43: #{unet_forward.14} parent=39 // pred_region
        _
      $region44: #{unet_forward.14} parent=39 // pred_fallthru
        _
    $region40: #{unet_forward.14} parent=5 // pred_fallthru
      _
    %p1024 = scmp.le.s32.totalorder 2, %s11
    // Predicated region
    $region45: #{unet_forward.14} parent=5 // pred_check
      %p1025 = pneg %p1024
    $region46: #{unet_forward.14} parent=5 // pred_check_branch
      %1027 = sbr.rel (%p1025) target = $region48
    $region47: #{unet_forward.14} parent=5 // pred_region
      %s1028 = ssub.s32 %s11, 2
      // Predicated region
      $region49: #{unet_forward.14} parent=47 // pred_check
        %p1029 = pneg %p155
      $region50: #{unet_forward.14} parent=47 // pred_check_branch
        %1031 = sbr.rel (%p1029) target = $region52
      $region51: #{unet_forward.14} parent=47 // pred_region
        %p1032 = scmp.lt.s32.totalorder %s17, 1
        %s1033 = scalar_select %p1032, %s17, 1
        %s1034 = smul.addr %s1033, 2
        %s1035 = smul.addr %s1034, 8
        %s1036 = scalar_lea.vmem %s5, %s1035
      $region52: #{unet_forward.14} parent=47 // pred_fallthru
        _
    $region48: #{unet_forward.14} parent=5 // pred_fallthru
      _
  $region6: #{unet_forward.14} parent=0 // loop_footer
    %s15 = sadd.s32 1, %s11
  $region7: #{unet_forward.14} parent=0 // loop_footer_branch
    %10 = sbr.rel target = $region3
  $region8: #{unet_forward.14} parent=0 // loop_exit
    _

</llo_original>
